<compile_context>
chip_gen: v7x
topology: tpu7x:2x2x1
jax: 0.10.0
libtpu: 0.0.40
codegen_flags: <defaults>
</compile_context>

<pallas_src>
import functools

import jax
import jax.numpy as jnp
from jax import lax
from jax.experimental import pallas as pl
from jax.experimental.pallas import tpu as pltpu

_SQRT2_INV = 0.7071067811865476
_LN_EPS = 1e-5


def _gelu(x):
    # exact (erf-based) GELU, matching torch F.gelu / nn.GELU() defaults
    return 0.5 * x * (1.0 + lax.erf(x * _SQRT2_INV))


def _round_up(x, m):
    return (x + m - 1) // m * m


def _cparams(dim_sem=None, vmem_bytes=None):
    kw = {}
    if dim_sem is not None:
        kw["dimension_semantics"] = dim_sem
    if vmem_bytes is not None:
        # stay above the v5e 16 MiB scoped default and safely below v7x's 64 MiB physical VMEM
        kw["vmem_limit_bytes"] = int(min(max(vmem_bytes, 16 * 2**20), 48 * 2**20))
    return pltpu.CompilerParams(**kw)


# --------------------------- tiled matmul (+ fused LN/GELU) ---------------------------

def _mm_kernel(*refs, n_k, true_k, apply_gelu, fuse_ln):
    if fuse_ln:
        a_ref, b_ref, bias_ref, g_ref, beta_ref, o_ref, acc_ref = refs
    else:
        a_ref, b_ref, bias_ref, o_ref, acc_ref = refs

    @pl.when(pl.program_id(2) == 0)
    def _():
        acc_ref[...] = jnp.zeros_like(acc_ref)

    a = a_ref[...]                                            # bf16 block (tm, tk)
    if fuse_ln:
        # LayerNorm over the true K columns (zero padding keeps the sums exact) + GELU,
        # fused as a prologue so the normalized activation never round-trips HBM.
        af = a.astype(jnp.float32)
        inv_k = 1.0 / float(true_k)
        mean = jnp.sum(af, axis=-1, keepdims=True) * inv_k
        msq = jnp.sum(af * af, axis=-1, keepdims=True) * inv_k
        var = jnp.maximum(msq - mean * mean, 0.0)
        y = (af - mean) * lax.rsqrt(var + _LN_EPS)
        y = y * g_ref[...] + beta_ref[...]
        a = _gelu(y).astype(jnp.bfloat16)

    acc_ref[...] += jnp.dot(a, b_ref[...], preferred_element_type=jnp.float32)

    @pl.when(pl.program_id(2) == n_k - 1)
    def _():
        y = acc_ref[...] + bias_ref[...]
        if apply_gelu:
            y = _gelu(y)
        o_ref[...] = y.astype(o_ref.dtype)


def matmul_bias(a, b, bias, *, apply_gelu=False, ln_gamma=None, ln_beta=None):
    """(M, K) @ (K, N) + bias, bf16 MXU operands with f32 accumulation.

    Optional fused LayerNorm(+GELU) prologue over A rows (needs the whole K in one block)
    and optional GELU epilogue.  Dims are zero-padded to lane/sublane-friendly tiles and the
    result is sliced back to (M, N).
    """
    M, K = a.shape
    K2, N = b.shape
    assert K == K2
    fuse_ln = ln_gamma is not None

    tm = min(256, _round_up(M, 8))
    tn = min(256, _round_up(N, 128))
    tk = _round_up(K, 128) if fuse_ln else min(512, _round_up(K, 128))
    Mp, Kp, Np = _round_up(M, tm), _round_up(K, tk), _round_up(N, tn)
    n_k = Kp // tk

    a_p = jnp.pad(a.astype(jnp.bfloat16), ((0, Mp - M), (0, Kp - K)))
    b_p = jnp.pad(b.astype(jnp.bfloat16), ((0, Kp - K), (0, Np - N)))
    bias_p = jnp.pad(bias.reshape(1, N).astype(jnp.float32), ((0, 0), (0, Np - N)))

    operands = [a_p, b_p, bias_p]
    in_specs = [
        pl.BlockSpec((tm, tk), lambda i, j, k: (i, k)),
        pl.BlockSpec((tk, tn), lambda i, j, k: (k, j)),
        pl.BlockSpec((1, tn), lambda i, j, k: (0, j)),
    ]
    if fuse_ln:
        assert n_k == 1
        g_p = jnp.pad(ln_gamma.reshape(1, K).astype(jnp.float32), ((0, 0), (0, Kp - K)))
        be_p = jnp.pad(ln_beta.reshape(1, K).astype(jnp.float32), ((0, 0), (0, Kp - K)))
        operands += [g_p, be_p]
        in_specs += [pl.BlockSpec((1, tk), lambda i, j, k: (0, k)),
                     pl.BlockSpec((1, tk), lambda i, j, k: (0, k))]

    tile_bytes = 2 * (tm * tk * 2 + tk * tn * 2 + tm * tn * 4) + tm * tn * 4
    out = pl.pallas_call(
        functools.partial(_mm_kernel, n_k=n_k, true_k=K,
                          apply_gelu=apply_gelu, fuse_ln=fuse_ln),
        out_shape=jax.ShapeDtypeStruct((Mp, Np), jnp.float32),
        grid=(Mp // tm, Np // tn, n_k),
        in_specs=in_specs,
        out_specs=pl.BlockSpec((tm, tn), lambda i, j, k: (i, j)),
        scratch_shapes=[pltpu.VMEM((tm, tn), jnp.float32)],
        compiler_params=_cparams(("parallel", "parallel", "arbitrary"),
                                 vmem_bytes=4 * tile_bytes),
    )(*operands)
    return out[:M, :N]


# --------------------------- fused ResidualCNN block ---------------------------

def _resblock_kernel(x_ref, g1_ref, be1_ref, w1_ref, b1_ref,
                     g2_ref, be2_ref, w2_ref, b2_ref, o_ref, pad_ref, *, F, T, C):
    x = x_ref[0]                                              # (F, T, C) f32

    def ln_gelu(v, g_ref, b_ref):
        # LayerNorm over the feature axis F (axis 0), per (t, c) — matches CNNlayer.
        mean = jnp.mean(v, axis=0, keepdims=True)
        var = jnp.mean(jnp.square(v - mean), axis=0, keepdims=True)
        y = (v - mean) * lax.rsqrt(var + _LN_EPS)
        return _gelu(y * g_ref[...] + b_ref[...])

    def conv3x3(v, w_ref, b_ref):
        # 'same' 3x3 / stride-1 conv as 9 shifted VMEM matmuls — no HBM im2col tensor.
        pad_ref[...] = jnp.zeros_like(pad_ref)
        pad_ref[1:F + 1, 1:T + 1, :] = v.astype(pad_ref.dtype)
        acc = jnp.zeros((F * T, C), jnp.float32)
        for kh in range(3):
            for kw in range(3):
                patch = pad_ref[kh:kh + F, kw:kw + T, :]      # (F, T, C) bf16
                acc = acc + jnp.dot(patch.reshape(F * T, C), w_ref[kh, kw],
                                    preferred_element_type=jnp.float32)
        return (acc + b_ref[...]).reshape(F, T, C)

    h = ln_gelu(x, g1_ref, be1_ref)
    h = conv3x3(h, w1_ref, b1_ref)
    h = ln_gelu(h, g2_ref, be2_ref)
    h = conv3x3(h, w2_ref, b2_ref)
    o_ref[0] = (h + x).astype(o_ref.dtype)                    # residual add (f32)


def residual_cnn_block(x_cl, p):
    """One fused ResidualCNN block on channels-last activations (B, F, T, C)."""
    B, F, T, C = x_cl.shape

    def cw(w):  # (Cout, Cin, 3, 3) -> (3, 3, Cin, Cout), bf16 for the MXU
        return jnp.transpose(w, (2, 3, 1, 0)).astype(jnp.bfloat16)

    g1 = p["ln1_g"].reshape(F, 1, 1).astype(jnp.float32)
    be1 = p["ln1_b"].reshape(F, 1, 1).astype(jnp.float32)
    g2 = p["ln2_g"].reshape(F, 1, 1).astype(jnp.float32)
    be2 = p["ln2_b"].reshape(F, 1, 1).astype(jnp.float32)
    w1, w2 = cw(p["cnn1_w"]), cw(p["cnn2_w"])
    b1 = p["cnn1_b"].reshape(1, C).astype(jnp.float32)
    b2 = p["cnn2_b"].reshape(1, C).astype(jnp.float32)

    def full(arr):
        nd = arr.ndim
        return pl.BlockSpec(arr.shape, lambda b: (0,) * nd)

    blk = pl.BlockSpec((1, F, T, C), lambda b: (b, 0, 0, 0))
    vmem_bytes = 8 * F * T * C * 4 + 4 * (F + 2) * (T + 2) * C * 2
    # TODO(synk): for long sequences, additionally tile the T axis (with a 1-pixel halo)
    # instead of keeping one whole (F, T, C) slab per batch element resident in VMEM.
    return pl.pallas_call(
        functools.partial(_resblock_kernel, F=F, T=T, C=C),
        out_shape=jax.ShapeDtypeStruct((B, F, T, C), jnp.float32),
        grid=(B,),
        in_specs=[blk, full(g1), full(be1), full(w1), full(b1),
                  full(g2), full(be2), full(w2), full(b2)],
        out_specs=blk,
        scratch_shapes=[pltpu.VMEM((F + 2, T + 2, C), jnp.bfloat16)],
        compiler_params=_cparams(("parallel",), vmem_bytes=vmem_bytes),
    )(x_cl, g1, be1, w1, b1, g2, be2, w2, b2)


# --------------------------- stem conv (one-off, Cin=1) ---------------------------

def _im2col(x, k, stride):
    B, Cc, H, W = x.shape
    pad = k // 2
    xp = jnp.pad(x, ((0, 0), (0, 0), (pad, pad), (pad, pad)))
    Ho = (H + 2 * pad - k) // stride + 1
    Wo = (W + 2 * pad - k) // stride + 1
    cols = []
    for dh in range(k):
        for dw in range(k):
            cols.append(xp[:, :,
                           dh:dh + stride * (Ho - 1) + 1:stride,
                           dw:dw + stride * (Wo - 1) + 1:stride])
    patches = jnp.stack(cols, axis=2)               # (B, C, k*k, Ho, Wo)
    patches = patches.transpose(0, 3, 4, 1, 2)      # (B, Ho, Wo, C, k*k)
    return patches.reshape(B * Ho * Wo, Cc * k * k), Ho, Wo


def stem_conv(x, w, b, stride):
    """Conv2d(1, 32, 3, stride=2, padding=1) -> channels-last (B, F', T', 32).

    The 1-channel stem is a one-off (K = 9), so a tiny im2col + tiled MXU matmul is fine.
    # TODO(synk): fuse the strided stem conv like the residual blocks if it ever matters.
    """
    B, Cin, H, W = x.shape
    Cout = w.shape[0]
    cols, Ho, Wo = _im2col(x, 3, stride)
    wmat = w.reshape(Cout, Cin * 9).T
    y = matmul_bias(cols, wmat, b)
    return y.reshape(B, Ho, Wo, Cout)


# --------------------------- fused bidirectional GRU ---------------------------

def _bigru_kernel(gx_ref, wblk_ref, bhh_ref, of_ref, ob_ref, h_ref, *, T, Hp):
    """Fused bidirectional GRU recurrence (PyTorch gate order r, z, n; h0 = 0).

    gx_ref : (T, Bg, 6*Hp) f32   precomputed x-gates, columns = (direction, gate, Hp)
    wblk_ref: (2*Hp, 6*Hp) bf16  block-diag [padded W_hh_f.T | padded W_hh_b.T]
    bhh_ref: (1, 6*Hp) f32
    of/ob  : (T, Bg, Hp) f32     forward / backward hidden states
    h_ref  : (Bg, 2*Hp) f32      scratch; cols [0:Hp] forward, [Hp:2Hp] backward
    """
    h_ref[...] = jnp.zeros_like(h_ref)

    def one_dir(gx_d, gh_d, h_d):
        r = jax.nn.sigmoid(gx_d[:, 0 * Hp:1 * Hp] + gh_d[:, 0 * Hp:1 * Hp])
        z = jax.nn.sigmoid(gx_d[:, 1 * Hp:2 * Hp] + gh_d[:, 1 * Hp:2 * Hp])
        n = jnp.tanh(gx_d[:, 2 * Hp:3 * Hp] + r * gh_d[:, 2 * Hp:3 * Hp])
        return (1.0 - z) * n + z * h_d

    def one_step(t):
        h = h_ref[...]
        gh = jnp.dot(h.astype(jnp.bfloat16), wblk_ref[...],
                     preferred_element_type=jnp.float32) + bhh_ref[...]   # (Bg, 6*Hp)
        gx_f = gx_ref[t]                      # forward reads time t
        gx_b = gx_ref[T - 1 - t]              # backward reads reversed time (no HBM [::-1])
        h_f = one_dir(gx_f[:, :3 * Hp], gh[:, :3 * Hp], h[:, :Hp])
        h_b = one_dir(gx_b[:, 3 * Hp:], gh[:, 3 * Hp:], h[:, Hp:])
        h_ref[:, :Hp] = h_f
        h_ref[:, Hp:] = h_b
        of_ref[t] = h_f
        ob_ref[T - 1 - t] = h_b

    unroll = 2 if T % 2 == 0 else 1           # manual x2 unroll: scheduler sees 2 steps

    def body(i, carry):
        for u in range(unroll):
            one_step(i * unroll + u)
        return carry

    lax.fori_loop(0, T // unroll, body, 0)


def _prep_bigru_weights(p, H, Hp, D):
    def pad_gates_ih(w):                      # (3H, D) -> (D, 3, Hp)
        wg = jnp.pad(w.reshape(3, H, D), ((0, 0), (0, Hp - H), (0, 0)))
        return jnp.transpose(wg, (2, 0, 1))

    def pad_gates_hh(w):                      # (3H, H) -> (Hp, 3*Hp)  (padded W_hh.T, gate-major)
        wg = jnp.pad(w.reshape(3, H, H), ((0, 0), (0, Hp - H), (0, Hp - H)))
        return jnp.transpose(wg, (2, 0, 1)).reshape(Hp, 3 * Hp)

    def pad_gates_vec(v):                     # (3H,) -> (3, Hp)
        return jnp.pad(v.reshape(3, H), ((0, 0), (0, Hp - H)))

    w_ih = jnp.stack([pad_gates_ih(p["w_ih_f"]), pad_gates_ih(p["w_ih_b"])],
                     axis=1).reshape(D, 6 * Hp)                      # cols = (dir, gate, Hp)
    b_ih = jnp.stack([pad_gates_vec(p["b_ih_f"]), pad_gates_vec(p["b_ih_b"])],
                     axis=0).reshape(6 * Hp)
    whh_f, whh_b = pad_gates_hh(p["w_hh_f"]), pad_gates_hh(p["w_hh_b"])
    zero = jnp.zeros((Hp, 3 * Hp), jnp.float32)
    w_blk = jnp.concatenate([jnp.concatenate([whh_f, zero], axis=1),
                             jnp.concatenate([zero, whh_b], axis=1)], axis=0)   # (2Hp, 6Hp)
    b_hh = jnp.stack([pad_gates_vec(p["b_hh_f"]), pad_gates_vec(p["b_hh_b"])],
                     axis=0).reshape(6 * Hp)
    return w_ih, b_ih, w_blk, b_hh


def bigru_recurrence(gx, w_blk, b_hh, Hp):
    T, Bg, _ = gx.shape
    vmem = pl.BlockSpec(memory_space=pltpu.MemorySpace.VMEM)
    vmem_bytes = 2 * gx.size * 4 + 4 * T * Bg * Hp * 4 + w_blk.size * 2
    # TODO(synk): chunk the T axis (double-buffered gx/out tiles + carried hidden state)
    # once the precomputed gates no longer fit in VMEM for very long sequences.
    return pl.pallas_call(
        functools.partial(_bigru_kernel, T=T, Hp=Hp),
        out_shape=(jax.ShapeDtypeStruct((T, Bg, Hp), jnp.float32),
                   jax.ShapeDtypeStruct((T, Bg, Hp), jnp.float32)),
        in_specs=[vmem, vmem, vmem],
        out_specs=(vmem, vmem),
        scratch_shapes=[pltpu.VMEM((Bg, 2 * Hp), jnp.float32)],
        compiler_params=_cparams(vmem_bytes=vmem_bytes),
    )(gx.astype(jnp.float32), w_blk.astype(jnp.bfloat16),
      b_hh.reshape(1, -1).astype(jnp.float32))


def bigru_layer(x, p, hidden, batch_first):
    """LayerNorm + GELU + bidirectional GRU.

    batch_first=True scans over axis 1; batch_first=False scans over axis 0 (the original
    module feeds a (B, T, D) tensor to batch_first=False GRUs for layers i>0 — that quirk
    is reproduced exactly).
    """
    H = hidden
    Hp = _round_up(H, 128)
    x_tm = jnp.transpose(x, (1, 0, 2)) if batch_first else x     # (T_scan, Bg, D)
    T, Bg, D = x_tm.shape

    w_ih, b_ih, w_blk, b_hh = _prep_bigru_weights(p, H, Hp, D)
    # LN+GELU is fused into the gates matmul; both directions' W_ih share one MXU pass.
    gx = matmul_bias(x_tm.reshape(T * Bg, D), w_ih, b_ih,
                     ln_gamma=p["ln_g"], ln_beta=p["ln_b"])
    gx = gx.reshape(T, Bg, 6 * Hp)
    out_f, out_b = bigru_recurrence(gx, w_blk, b_hh, Hp)
    out = jnp.concatenate([out_f[:, :, :H], out_b[:, :, :H]], axis=-1)   # (T_scan, Bg, 2H)
    return jnp.transpose(out, (1, 0, 2)) if batch_first else out


# --------------------------- full forward pass ---------------------------

def speech_model_forward(x, params, rnn_dim):
    x_cl = stem_conv(x, params["cnn_w"], params["cnn_b"], stride=2)      # (B, F', T', 32)
    for p in params["rescnn"]:
        x_cl = residual_cnn_block(x_cl, p)
    B, F, T, C = x_cl.shape
    # PyTorch: view(B, C*F', T').transpose(1, 2) -> (B, T', C*F'), feature index c*F'+f
    feats = jnp.transpose(x_cl, (0, 2, 3, 1)).reshape(B * T, C * F)
    x = matmul_bias(feats, params["fc_w"].T, params["fc_b"]).reshape(B, T, rnn_dim)
    for i, p in enumerate(params["birnn"]):
        x = bigru_layer(x, p, rnn_dim, batch_first=(i == 0))
    Bc, Tc, Dc = x.shape
    h = matmul_bias(x.reshape(Bc * Tc, Dc), params["cls_w1"].T, params["cls_b1"],
                    apply_gelu=True)
    y = matmul_bias(h, params["cls_w2"].T, params["cls_b2"])
    return y.reshape(Bc, Tc, -1)


# --------------------------- deterministic parameter init ---------------------------

def init_params(key, n_cnn_layer, n_rnn_layer, rnn_dim, n_class, n_feats):
    nf = n_feats // 2
    keys = iter(jax.random.split(key, 256))

    def rnd(shape, scale=0.1):
        return scale * jax.random.normal(next(keys), shape, jnp.float32)

    params = {
        "cnn_w": rnd((32, 1, 3, 3)), "cnn_b": rnd((32,)),
        "rescnn": [],
        "fc_w": rnd((rnn_dim, nf * 32)), "fc_b": rnd((rnn_dim,)),
        "birnn": [],
        "cls_w1": rnd((rnn_dim, rnn_dim * 2)), "cls_b1": rnd((rnn_dim,)),
        "cls_w2": rnd((n_class, rnn_dim)), "cls_b2": rnd((n_class,)),
    }
    for _ in range(n_cnn_layer):
        params["rescnn"].append({
            "ln1_g": 1.0 + rnd((nf,)), "ln1_b": rnd((nf,)),
            "cnn1_w": rnd((32, 32, 3, 3)), "cnn1_b": rnd((32,)),
            "ln2_g": 1.0 + rnd((nf,)), "ln2_b": rnd((nf,)),
            "cnn2_w": rnd((32, 32, 3, 3)), "cnn2_b": rnd((32,)),
        })
    for i in range(n_rnn_layer):
        in_dim = rnn_dim if i == 0 else rnn_dim * 2
        params["birnn"].append({
            "ln_g": 1.0 + rnd((in_dim,)), "ln_b": rnd((in_dim,)),
            "w_ih_f": rnd((3 * rnn_dim, in_dim)), "w_hh_f": rnd((3 * rnn_dim, rnn_dim)),
            "b_ih_f": rnd((3 * rnn_dim,)), "b_hh_f": rnd((3 * rnn_dim,)),
            "w_ih_b": rnd((3 * rnn_dim, in_dim)), "w_hh_b": rnd((3 * rnn_dim, rnn_dim)),
            "b_ih_b": rnd((3 * rnn_dim,)), "b_hh_b": rnd((3 * rnn_dim,)),
        })
    return params


if __name__ == "__main__":
    key = jax.random.PRNGKey(0)
    pkey, xkey = jax.random.split(key)

    n_cnn_layer, n_rnn_layer = 2, 2
    rnn_dim, n_class, n_feats = 32, 10, 16
    B, T = 2, 16

    params = init_params(pkey, n_cnn_layer, n_rnn_layer, rnn_dim, n_class, n_feats)
    x = jax.random.normal(xkey, (B, 1, n_feats, T), jnp.float32)   # NCHW, like PyTorch

    fwd = jax.jit(speech_model_forward, static_argnums=(2,))
    out = jax.block_until_ready(fwd(x, params, rnn_dim))
    assert out.shape == (B, T // 2, n_class), out.shape
    print("KERNEL_OK")
</pallas_src>

<mosaic_0001>
module attributes {stable_mosaic.version = 11 : i64} {
  func.func @_mm_kernel(%arg0: i32, %arg1: i32, %arg2: i32, %arg3: memref<128x128xbf16, #tpu.memory_space<vmem>>, %arg4: memref<128x128xbf16, #tpu.memory_space<vmem>>, %arg5: memref<1x128xf32, #tpu.memory_space<vmem>>, %arg6: memref<128x128xf32, #tpu.memory_space<vmem>>, %arg7: memref<128x128xf32, #tpu.memory_space<vmem>>) attributes {dimension_semantics = [#tpu.dimension_semantics<parallel>, #tpu.dimension_semantics<parallel>, #tpu.dimension_semantics<arbitrary>], iteration_bounds = array<i64: 1, 1, 1>, scalar_prefetch = 0 : i64, scratch_operands = 1 : i64, tpu.core_type = #tpu.core_type<tc>, window_params = [{transform_indices = @transform_0, window_bounds = array<i64: 128, 128>}, {transform_indices = @transform_1, window_bounds = array<i64: 128, 128>}, {transform_indices = @transform_2, window_bounds = array<i64: 1, 128>}, {transform_indices = @transform_3, window_bounds = array<i64: 128, 128>}]} {
    %c0_i32 = arith.constant 0 : i32
    %0 = arith.cmpi eq, %arg2, %c0_i32 : i32
    %1 = arith.extui %0 : i1 to i32
    %c0_i32_0 = arith.constant 0 : i32
    %2 = arith.cmpi ne, %1, %c0_i32_0 : i32
    scf.if %2 {
      %cst_10 = arith.constant 0.000000e+00 : f32
      %12 = vector.broadcast %cst_10 : f32 to vector<128x128xf32>
      %c0_11 = arith.constant 0 : index
      %c0_12 = arith.constant 0 : index
      %13 = vector.load %arg7[%c0_11, %c0_12] : memref<128x128xf32, #tpu.memory_space<vmem>>, vector<128x128xf32>
      tpu.vector_store %arg7[%c0_11, %c0_12], %12 {strides = array<i32>} : memref<128x128xf32, #tpu.memory_space<vmem>>, vector<128x128xf32>,
    } else {
    }
    %c0 = arith.constant 0 : index
    %c0_1 = arith.constant 0 : index
    %3 = vector.load %arg3[%c0, %c0_1] : memref<128x128xbf16, #tpu.memory_space<vmem>>, vector<128x128xbf16>
    %c0_2 = arith.constant 0 : index
    %c0_3 = arith.constant 0 : index
    %4 = vector.load %arg7[%c0_2, %c0_3] : memref<128x128xf32, #tpu.memory_space<vmem>>, vector<128x128xf32>
    %c0_4 = arith.constant 0 : index
    %c0_5 = arith.constant 0 : index
    %5 = vector.load %arg4[%c0_4, %c0_5] : memref<128x128xbf16, #tpu.memory_space<vmem>>, vector<128x128xbf16>
    %cst = arith.constant dense<0.000000e+00> : vector<128x128xf32>
    %6 = tpu.matmul %3, %5, %cst {dimension_numbers = #tpu.dot_dimension_numbers<[1], [0], [0], [1], [0, 0, 1, 1], [], []>} : vector<128x128xbf16>, vector<128x128xbf16>, vector<128x128xf32> -> vector<128x128xf32>
    %7 = arith.addf %4, %6 : vector<128x128xf32>
    %c0_6 = arith.constant 0 : index
    %c0_7 = arith.constant 0 : index
    %8 = vector.load %arg7[%c0_6, %c0_7] : memref<128x128xf32, #tpu.memory_space<vmem>>, vector<128x128xf32>
    tpu.vector_store %arg7[%c0_6, %c0_7], %7 {strides = array<i32>} : memref<128x128xf32, #tpu.memory_space<vmem>>, vector<128x128xf32>,
    %c0_i32_8 = arith.constant 0 : i32
    %9 = arith.cmpi eq, %arg2, %c0_i32_8 : i32
    %10 = arith.extui %9 : i1 to i32
    %c0_i32_9 = arith.constant 0 : i32
    %11 = arith.cmpi ne, %10, %c0_i32_9 : i32
    scf.if %11 {
      %c0_10 = arith.constant 0 : index
      %c0_11 = arith.constant 0 : index
      %12 = vector.load %arg7[%c0_10, %c0_11] : memref<128x128xf32, #tpu.memory_space<vmem>>, vector<128x128xf32>
      %c0_12 = arith.constant 0 : index
      %c0_13 = arith.constant 0 : index
      %13 = vector.load %arg5[%c0_12, %c0_13] : memref<1x128xf32, #tpu.memory_space<vmem>>, vector<1x128xf32>
      %14 = vector.broadcast %13 : vector<1x128xf32> to vector<128x128xf32>
      %15 = arith.addf %12, %14 : vector<128x128xf32>
      %c0_14 = arith.constant 0 : index
      %c0_15 = arith.constant 0 : index
      %16 = vector.load %arg6[%c0_14, %c0_15] : memref<128x128xf32, #tpu.memory_space<vmem>>, vector<128x128xf32>
      tpu.vector_store %arg6[%c0_14, %c0_15], %15 {strides = array<i32>} : memref<128x128xf32, #tpu.memory_space<vmem>>, vector<128x128xf32>,
    } else {
    }
    return
  }
  func.func @transform_0(%arg0: i32, %arg1: i32, %arg2: i32) -> (i32, i32) {
    %c0_i32 = arith.constant 0 : i32
    return %arg0, %arg2 : i32, i32
  }
  func.func @transform_1(%arg0: i32, %arg1: i32, %arg2: i32) -> (i32, i32) {
    %c0_i32 = arith.constant 0 : i32
    return %arg2, %arg1 : i32, i32
  }
  func.func @transform_2(%arg0: i32, %arg1: i32, %arg2: i32) -> (i32, i32) {
    %c0_i32 = arith.constant 0 : i32
    %c0_i32_0 = arith.constant 0 : i32
    return %c0_i32, %arg1 : i32, i32
  }
  func.func @transform_3(%arg0: i32, %arg1: i32, %arg2: i32) -> (i32, i32) {
    %c0_i32 = arith.constant 0 : i32
    return %arg0, %arg1 : i32, i32
  }
}

module attributes {stable_mosaic.version = 11 : i64} {
  func.func @_resblock_kernel(%arg0: i32, %arg1: memref<1x8x8x32xf32, #tpu.memory_space<vmem>>, %arg2: memref<8x1x1xf32, #tpu.memory_space<vmem>>, %arg3: memref<8x1x1xf32, #tpu.memory_space<vmem>>, %arg4: memref<3x3x32x32xbf16, #tpu.memory_space<vmem>>, %arg5: memref<1x32xf32, #tpu.memory_space<vmem>>, %arg6: memref<8x1x1xf32, #tpu.memory_space<vmem>>, %arg7: memref<8x1x1xf32, #tpu.memory_space<vmem>>, %arg8: memref<3x3x32x32xbf16, #tpu.memory_space<vmem>>, %arg9: memref<1x32xf32, #tpu.memory_space<vmem>>, %arg10: memref<1x8x8x32xf32, #tpu.memory_space<vmem>>, %arg11: memref<10x10x32xbf16, #tpu.memory_space<vmem>>) attributes {dimension_semantics = [#tpu.dimension_semantics<parallel>], iteration_bounds = array<i64: 2>, scalar_prefetch = 0 : i64, scratch_operands = 1 : i64, tpu.core_type = #tpu.core_type<tc>, window_params = [{transform_indices = @transform_0, window_bounds = array<i64: 1, 8, 8, 32>}, {pipeline_mode = #tpu.pipeline_mode<synchronous>, transform_indices = @transform_1, window_bounds = array<i64: 8, 1, 1>}, {pipeline_mode = #tpu.pipeline_mode<synchronous>, transform_indices = @transform_2, window_bounds = array<i64: 8, 1, 1>}, {pipeline_mode = #tpu.pipeline_mode<synchronous>, transform_indices = @transform_3, window_bounds = array<i64: 3, 3, 32, 32>}, {pipeline_mode = #tpu.pipeline_mode<synchronous>, transform_indices = @transform_4, window_bounds = array<i64: 1, 32>}, {pipeline_mode = #tpu.pipeline_mode<synchronous>, transform_indices = @transform_5, window_bounds = array<i64: 8, 1, 1>}, {pipeline_mode = #tpu.pipeline_mode<synchronous>, transform_indices = @transform_6, window_bounds = array<i64: 8, 1, 1>}, {pipeline_mode = #tpu.pipeline_mode<synchronous>, transform_indices = @transform_7, window_bounds = array<i64: 3, 3, 32, 32>}, {pipeline_mode = #tpu.pipeline_mode<synchronous>, transform_indices = @transform_8, window_bounds = array<i64: 1, 32>}, {transform_indices = @transform_9, window_bounds = array<i64: 1, 8, 8, 32>}]} {
    %c0 = arith.constant 0 : index
    %c0_0 = arith.constant 0 : index
    %c0_1 = arith.constant 0 : index
    %c0_2 = arith.constant 0 : index
    %0 = vector.load %arg1[%c0, %c0_0, %c0_1, %c0_2] : memref<1x8x8x32xf32, #tpu.memory_space<vmem>>, vector<1x8x8x32xf32>
    %1 = vector.shape_cast %0 : vector<1x8x8x32xf32> to vector<8x8x32xf32>
    %cst = arith.constant dense<0.000000e+00> : vector<8x32xf32>
    %2 = vector.multi_reduction <add>, %1, %cst [0] : vector<8x8x32xf32> to vector<8x32xf32>
    %3 = vector.shape_cast %2 : vector<8x32xf32> to vector<1x8x32xf32>
    %cst_3 = arith.constant 8.000000e+00 : f32
    %4 = vector.broadcast %cst_3 : f32 to vector<1x8x32xf32>
    %5 = arith.divf %3, %4 : vector<1x8x32xf32>
    %6 = vector.broadcast %5 : vector<1x8x32xf32> to vector<8x8x32xf32>
    %7 = arith.subf %1, %6 : vector<8x8x32xf32>
    %8 = arith.mulf %7, %7 : vector<8x8x32xf32>
    %cst_4 = arith.constant dense<0.000000e+00> : vector<8x32xf32>
    %9 = vector.multi_reduction <add>, %8, %cst_4 [0] : vector<8x8x32xf32> to vector<8x32xf32>
    %10 = vector.shape_cast %9 : vector<8x32xf32> to vector<1x8x32xf32>
    %cst_5 = arith.constant 8.000000e+00 : f32
    %11 = vector.broadcast %cst_5 : f32 to vector<1x8x32xf32>
    %12 = arith.divf %10, %11 : vector<1x8x32xf32>
    %13 = vector.broadcast %5 : vector<1x8x32xf32> to vector<8x8x32xf32>
    %14 = arith.subf %1, %13 : vector<8x8x32xf32>
    %cst_6 = arith.constant 9.99999974E-6 : f32
    %15 = vector.broadcast %cst_6 : f32 to vector<1x8x32xf32>
    %16 = arith.addf %12, %15 : vector<1x8x32xf32>
    %17 = math.rsqrt %16 : vector<1x8x32xf32>
    %18 = vector.broadcast %17 : vector<1x8x32xf32> to vector<8x8x32xf32>
    %19 = arith.mulf %14, %18 : vector<8x8x32xf32>
    %c0_7 = arith.constant 0 : index
    %c0_8 = arith.constant 0 : index
    %c0_9 = arith.constant 0 : index
    %20 = vector.load %arg2[%c0_7, %c0_8, %c0_9] : memref<8x1x1xf32, #tpu.memory_space<vmem>>, vector<8x1x1xf32>
    %21 = vector.broadcast %20 : vector<8x1x1xf32> to vector<8x8x32xf32>
    %22 = arith.mulf %19, %21 : vector<8x8x32xf32>
    %c0_10 = arith.constant 0 : index
    %c0_11 = arith.constant 0 : index
    %c0_12 = arith.constant 0 : index
    %23 = vector.load %arg3[%c0_10, %c0_11, %c0_12] : memref<8x1x1xf32, #tpu.memory_space<vmem>>, vector<8x1x1xf32>
    %24 = vector.broadcast %23 : vector<8x1x1xf32> to vector<8x8x32xf32>
    %25 = arith.addf %22, %24 : vector<8x8x32xf32>
    %cst_13 = arith.constant 5.000000e-01 : f32
    %26 = vector.broadcast %cst_13 : f32 to vector<8x8x32xf32>
    %27 = arith.mulf %26, %25 : vector<8x8x32xf32>
    %cst_14 = arith.constant 0.707106769 : f32
    %28 = vector.broadcast %cst_14 : f32 to vector<8x8x32xf32>
    %29 = arith.mulf %25, %28 : vector<8x8x32xf32>
    %30 = math.erf %29 : vector<8x8x32xf32>
    %cst_15 = arith.constant 1.000000e+00 : f32
    %31 = vector.broadcast %cst_15 : f32 to vector<8x8x32xf32>
    %32 = arith.addf %31, %30 : vector<8x8x32xf32>
    %33 = arith.mulf %27, %32 : vector<8x8x32xf32>
    %cst_16 = arith.constant 0.000000e+00 : bf16
    %34 = vector.broadcast %cst_16 : bf16 to vector<10x10x32xbf16>
    %c0_17 = arith.constant 0 : index
    %c0_18 = arith.constant 0 : index
    %c0_19 = arith.constant 0 : index
    %35 = vector.load %arg11[%c0_17, %c0_18, %c0_19] : memref<10x10x32xbf16, #tpu.memory_space<vmem>>, vector<10x10x32xbf16>
    tpu.vector_store %arg11[%c0_17, %c0_18, %c0_19], %34 {strides = array<i32>} : memref<10x10x32xbf16, #tpu.memory_space<vmem>>, vector<10x10x32xbf16>,
    %36 = arith.truncf %33 : vector<8x8x32xf32> to vector<8x8x32xbf16>
    %c1 = arith.constant 1 : index
    %c1_20 = arith.constant 1 : index
    %c0_21 = arith.constant 0 : index
    %37 = vector.load %arg11[%c1, %c1_20, %c0_21] : memref<10x10x32xbf16, #tpu.memory_space<vmem>>, vector<8x8x32xbf16>
    tpu.vector_store %arg11[%c1, %c1_20, %c0_21], %36 {strides = array<i32>} : memref<10x10x32xbf16, #tpu.memory_space<vmem>>, vector<8x8x32xbf16>,
    %cst_22 = arith.constant 0.000000e+00 : f32
    %38 = vector.broadcast %cst_22 : f32 to vector<64x32xf32>
    %c0_23 = arith.constant 0 : index
    %c0_24 = arith.constant 0 : index
    %c0_25 = arith.constant 0 : index
    %39 = vector.load %arg11[%c0_23, %c0_24, %c0_25] : memref<10x10x32xbf16, #tpu.memory_space<vmem>>, vector<8x8x32xbf16>
    %40 = vector.shape_cast %39 : vector<8x8x32xbf16> to vector<64x32xbf16>
    %c0_26 = arith.constant 0 : index
    %c0_27 = arith.constant 0 : index
    %c0_28 = arith.constant 0 : index
    %c0_29 = arith.constant 0 : index
    %41 = vector.load %arg4[%c0_26, %c0_27, %c0_28, %c0_29] : memref<3x3x32x32xbf16, #tpu.memory_space<vmem>>, vector<1x1x32x32xbf16>
    %42 = vector.shape_cast %41 : vector<1x1x32x32xbf16> to vector<32x32xbf16>
    %cst_30 = arith.constant dense<0.000000e+00> : vector<64x32xf32>
    %43 = tpu.matmul %40, %42, %cst_30 {dimension_numbers = #tpu.dot_dimension_numbers<[1], [0], [0], [1], [0, 0, 1, 1], [], []>} : vector<64x32xbf16>, vector<32x32xbf16>, vector<64x32xf32> -> vector<64x32xf32>
    %44 = arith.addf %38, %43 : vector<64x32xf32>
    %c0_31 = arith.constant 0 : index
    %c1_32 = arith.constant 1 : index
    %c0_33 = arith.constant 0 : index
    %45 = vector.load %arg11[%c0_31, %c1_32, %c0_33] : memref<10x10x32xbf16, #tpu.memory_space<vmem>>, vector<8x8x32xbf16>
    %46 = vector.shape_cast %45 : vector<8x8x32xbf16> to vector<64x32xbf16>
    %c0_34 = arith.constant 0 : index
    %c1_35 = arith.constant 1 : index
    %c0_36 = arith.constant 0 : index
    %c0_37 = arith.constant 0 : index
    %47 = vector.load %arg4[%c0_34, %c1_35, %c0_36, %c0_37] : memref<3x3x32x32xbf16, #tpu.memory_space<vmem>>, vector<1x1x32x32xbf16>
    %48 = vector.shape_cast %47 : vector<1x1x32x32xbf16> to vector<32x32xbf16>
    %cst_38 = arith.constant dense<0.000000e+00> : vector<64x32xf32>
    %49 = tpu.matmul %46, %48, %cst_38 {dimension_numbers = #tpu.dot_dimension_numbers<[1], [0], [0], [1], [0, 0, 1, 1], [], []>} : vector<64x32xbf16>, vector<32x32xbf16>, vector<64x32xf32> -> vector<64x32xf32>
    %50 = arith.addf %44, %49 : vector<64x32xf32>
    %c0_39 = arith.constant 0 : index
    %c2 = arith.constant 2 : index
    %c0_40 = arith.constant 0 : index
    %51 = vector.load %arg11[%c0_39, %c2, %c0_40] : memref<10x10x32xbf16, #tpu.memory_space<vmem>>, vector<8x8x32xbf16>
    %52 = vector.shape_cast %51 : vector<8x8x32xbf16> to vector<64x32xbf16>
    %c0_41 = arith.constant 0 : index
    %c2_42 = arith.constant 2 : index
    %c0_43 = arith.constant 0 : index
    %c0_44 = arith.constant 0 : index
    %53 = vector.load %arg4[%c0_41, %c2_42, %c0_43, %c0_44] : memref<3x3x32x32xbf16, #tpu.memory_space<vmem>>, vector<1x1x32x32xbf16>
    %54 = vector.shape_cast %53 : vector<1x1x32x32xbf16> to vector<32x32xbf16>
    %cst_45 = arith.constant dense<0.000000e+00> : vector<64x32xf32>
    %55 = tpu.matmul %52, %54, %cst_45 {dimension_numbers = #tpu.dot_dimension_numbers<[1], [0], [0], [1], [0, 0, 1, 1], [], []>} : vector<64x32xbf16>, vector<32x32xbf16>, vector<64x32xf32> -> vector<64x32xf32>
    %56 = arith.addf %50, %55 : vector<64x32xf32>
    %c1_46 = arith.constant 1 : index
    %c0_47 = arith.constant 0 : index
    %c0_48 = arith.constant 0 : index
    %57 = vector.load %arg11[%c1_46, %c0_47, %c0_48] : memref<10x10x32xbf16, #tpu.memory_space<vmem>>, vector<8x8x32xbf16>
    %58 = vector.shape_cast %57 : vector<8x8x32xbf16> to vector<64x32xbf16>
    %c1_49 = arith.constant 1 : index
    %c0_50 = arith.constant 0 : index
    %c0_51 = arith.constant 0 : index
    %c0_52 = arith.constant 0 : index
    %59 = vector.load %arg4[%c1_49, %c0_50, %c0_51, %c0_52] : memref<3x3x32x32xbf16, #tpu.memory_space<vmem>>, vector<1x1x32x32xbf16>
    %60 = vector.shape_cast %59 : vector<1x1x32x32xbf16> to vector<32x32xbf16>
    %cst_53 = arith.constant dense<0.000000e+00> : vector<64x32xf32>
    %61 = tpu.matmul %58, %60, %cst_53 {dimension_numbers = #tpu.dot_dimension_numbers<[1], [0], [0], [1], [0, 0, 1, 1], [], []>} : vector<64x32xbf16>, vector<32x32xbf16>, vector<64x32xf32> -> vector<64x32xf32>
    %62 = arith.addf %56, %61 : vector<64x32xf32>
    %c1_54 = arith.constant 1 : index
    %c1_55 = arith.constant 1 : index
    %c0_56 = arith.constant 0 : index
    %63 = vector.load %arg11[%c1_54, %c1_55, %c0_56] : memref<10x10x32xbf16, #tpu.memory_space<vmem>>, vector<8x8x32xbf16>
    %64 = vector.shape_cast %63 : vector<8x8x32xbf16> to vector<64x32xbf16>
    %c1_57 = arith.constant 1 : index
    %c1_58 = arith.constant 1 : index
    %c0_59 = arith.constant 0 : index
    %c0_60 = arith.constant 0 : index
    %65 = vector.load %arg4[%c1_57, %c1_58, %c0_59, %c0_60] : memref<3x3x32x32xbf16, #tpu.memory_space<vmem>>, vector<1x1x32x32xbf16>
    %66 = vector.shape_cast %65 : vector<1x1x32x32xbf16> to vector<32x32xbf16>
    %cst_61 = arith.constant dense<0.000000e+00> : vector<64x32xf32>
    %67 = tpu.matmul %64, %66, %cst_61 {dimension_numbers = #tpu.dot_dimension_numbers<[1], [0], [0], [1], [0, 0, 1, 1], [], []>} : vector<64x32xbf16>, vector<32x32xbf16>, vector<64x32xf32> -> vector<64x32xf32>
    %68 = arith.addf %62, %67 : vector<64x32xf32>
    %c1_62 = arith.constant 1 : index
    %c2_63 = arith.constant 2 : index
    %c0_64 = arith.constant 0 : index
    %69 = vector.load %arg11[%c1_62, %c2_63, %c0_64] : memref<10x10x32xbf16, #tpu.memory_space<vmem>>, vector<8x8x32xbf16>
    %70 = vector.shape_cast %69 : vector<8x8x32xbf16> to vector<64x32xbf16>
    %c1_65 = arith.constant 1 : index
    %c2_66 = arith.constant 2 : index
    %c0_67 = arith.constant 0 : index
    %c0_68 = arith.constant 0 : index
    %71 = vector.load %arg4[%c1_65, %c2_66, %c0_67, %c0_68] : memref<3x3x32x32xbf16, #tpu.memory_space<vmem>>, vector<1x1x32x32xbf16>
    %72 = vector.shape_cast %71 : vector<1x1x32x32xbf16> to vector<32x32xbf16>
    %cst_69 = arith.constant dense<0.000000e+00> : vector<64x32xf32>
    %73 = tpu.matmul %70, %72, %cst_69 {dimension_numbers = #tpu.dot_dimension_numbers<[1], [0], [0], [1], [0, 0, 1, 1], [], []>} : vector<64x32xbf16>, vector<32x32xbf16>, vector<64x32xf32> -> vector<64x32xf32>
    %74 = arith.addf %68, %73 : vector<64x32xf32>
    %c2_70 = arith.constant 2 : index
    %c0_71 = arith.constant 0 : index
    %c0_72 = arith.constant 0 : index
    %75 = vector.load %arg11[%c2_70, %c0_71, %c0_72] : memref<10x10x32xbf16, #tpu.memory_space<vmem>>, vector<8x8x32xbf16>
    %76 = vector.shape_cast %75 : vector<8x8x32xbf16> to vector<64x32xbf16>
    %c2_73 = arith.constant 2 : index
    %c0_74 = arith.constant 0 : index
    %c0_75 = arith.constant 0 : index
    %c0_76 = arith.constant 0 : index
    %77 = vector.load %arg4[%c2_73, %c0_74, %c0_75, %c0_76] : memref<3x3x32x32xbf16, #tpu.memory_space<vmem>>, vector<1x1x32x32xbf16>
    %78 = vector.shape_cast %77 : vector<1x1x32x32xbf16> to vector<32x32xbf16>
    %cst_77 = arith.constant dense<0.000000e+00> : vector<64x32xf32>
    %79 = tpu.matmul %76, %78, %cst_77 {dimension_numbers = #tpu.dot_dimension_numbers<[1], [0], [0], [1], [0, 0, 1, 1], [], []>} : vector<64x32xbf16>, vector<32x32xbf16>, vector<64x32xf32> -> vector<64x32xf32>
    %80 = arith.addf %74, %79 : vector<64x32xf32>
    %c2_78 = arith.constant 2 : index
    %c1_79 = arith.constant 1 : index
    %c0_80 = arith.constant 0 : index
    %81 = vector.load %arg11[%c2_78, %c1_79, %c0_80] : memref<10x10x32xbf16, #tpu.memory_space<vmem>>, vector<8x8x32xbf16>
    %82 = vector.shape_cast %81 : vector<8x8x32xbf16> to vector<64x32xbf16>
    %c2_81 = arith.constant 2 : index
    %c1_82 = arith.constant 1 : index
    %c0_83 = arith.constant 0 : index
    %c0_84 = arith.constant 0 : index
    %83 = vector.load %arg4[%c2_81, %c1_82, %c0_83, %c0_84] : memref<3x3x32x32xbf16, #tpu.memory_space<vmem>>, vector<1x1x32x32xbf16>
    %84 = vector.shape_cast %83 : vector<1x1x32x32xbf16> to vector<32x32xbf16>
    %cst_85 = arith.constant dense<0.000000e+00> : vector<64x32xf32>
    %85 = tpu.matmul %82, %84, %cst_85 {dimension_numbers = #tpu.dot_dimension_numbers<[1], [0], [0], [1], [0, 0, 1, 1], [], []>} : vector<64x32xbf16>, vector<32x32xbf16>, vector<64x32xf32> -> vector<64x32xf32>
    %86 = arith.addf %80, %85 : vector<64x32xf32>
    %c2_86 = arith.constant 2 : index
    %c2_87 = arith.constant 2 : index
    %c0_88 = arith.constant 0 : index
    %87 = vector.load %arg11[%c2_86, %c2_87, %c0_88] : memref<10x10x32xbf16, #tpu.memory_space<vmem>>, vector<8x8x32xbf16>
    %88 = vector.shape_cast %87 : vector<8x8x32xbf16> to vector<64x32xbf16>
    %c2_89 = arith.constant 2 : index
    %c2_90 = arith.constant 2 : index
    %c0_91 = arith.constant 0 : index
    %c0_92 = arith.constant 0 : index
    %89 = vector.load %arg4[%c2_89, %c2_90, %c0_91, %c0_92] : memref<3x3x32x32xbf16, #tpu.memory_space<vmem>>, vector<1x1x32x32xbf16>
    %90 = vector.shape_cast %89 : vector<1x1x32x32xbf16> to vector<32x32xbf16>
    %cst_93 = arith.constant dense<0.000000e+00> : vector<64x32xf32>
    %91 = tpu.matmul %88, %90, %cst_93 {dimension_numbers = #tpu.dot_dimension_numbers<[1], [0], [0], [1], [0, 0, 1, 1], [], []>} : vector<64x32xbf16>, vector<32x32xbf16>, vector<64x32xf32> -> vector<64x32xf32>
    %92 = arith.addf %86, %91 : vector<64x32xf32>
    %c0_94 = arith.constant 0 : index
    %c0_95 = arith.constant 0 : index
    %93 = vector.load %arg5[%c0_94, %c0_95] : memref<1x32xf32, #tpu.memory_space<vmem>>, vector<1x32xf32>
    %94 = vector.broadcast %93 : vector<1x32xf32> to vector<64x32xf32>
    %95 = arith.addf %92, %94 : vector<64x32xf32>
    %96 = vector.shape_cast %95 : vector<64x32xf32> to vector<8x8x32xf32>
    %cst_96 = arith.constant dense<0.000000e+00> : vector<8x32xf32>
    %97 = vector.multi_reduction <add>, %96, %cst_96 [0] : vector<8x8x32xf32> to vector<8x32xf32>
    %98 = vector.shape_cast %97 : vector<8x32xf32> to vector<1x8x32xf32>
    %cst_97 = arith.constant 8.000000e+00 : f32
    %99 = vector.broadcast %cst_97 : f32 to vector<1x8x32xf32>
    %100 = arith.divf %98, %99 : vector<1x8x32xf32>
    %101 = vector.broadcast %100 : vector<1x8x32xf32> to vector<8x8x32xf32>
    %102 = arith.subf %96, %101 : vector<8x8x32xf32>
    %103 = arith.mulf %102, %102 : vector<8x8x32xf32>
    %cst_98 = arith.constant dense<0.000000e+00> : vector<8x32xf32>
    %104 = vector.multi_reduction <add>, %103, %cst_98 [0] : vector<8x8x32xf32> to vector<8x32xf32>
    %105 = vector.shape_cast %104 : vector<8x32xf32> to vector<1x8x32xf32>
    %cst_99 = arith.constant 8.000000e+00 : f32
    %106 = vector.broadcast %cst_99 : f32 to vector<1x8x32xf32>
    %107 = arith.divf %105, %106 : vector<1x8x32xf32>
    %108 = vector.broadcast %100 : vector<1x8x32xf32> to vector<8x8x32xf32>
    %109 = arith.subf %96, %108 : vector<8x8x32xf32>
    %cst_100 = arith.constant 9.99999974E-6 : f32
    %110 = vector.broadcast %cst_100 : f32 to vector<1x8x32xf32>
    %111 = arith.addf %107, %110 : vector<1x8x32xf32>
    %112 = math.rsqrt %111 : vector<1x8x32xf32>
    %113 = vector.broadcast %112 : vector<1x8x32xf32> to vector<8x8x32xf32>
    %114 = arith.mulf %109, %113 : vector<8x8x32xf32>
    %c0_101 = arith.constant 0 : index
    %c0_102 = arith.constant 0 : index
    %c0_103 = arith.constant 0 : index
    %115 = vector.load %arg6[%c0_101, %c0_102, %c0_103] : memref<8x1x1xf32, #tpu.memory_space<vmem>>, vector<8x1x1xf32>
    %116 = vector.broadcast %115 : vector<8x1x1xf32> to vector<8x8x32xf32>
    %117 = arith.mulf %114, %116 : vector<8x8x32xf32>
    %c0_104 = arith.constant 0 : index
    %c0_105 = arith.constant 0 : index
    %c0_106 = arith.constant 0 : index
    %118 = vector.load %arg7[%c0_104, %c0_105, %c0_106] : memref<8x1x1xf32, #tpu.memory_space<vmem>>, vector<8x1x1xf32>
    %119 = vector.broadcast %118 : vector<8x1x1xf32> to vector<8x8x32xf32>
    %120 = arith.addf %117, %119 : vector<8x8x32xf32>
    %cst_107 = arith.constant 5.000000e-01 : f32
    %121 = vector.broadcast %cst_107 : f32 to vector<8x8x32xf32>
    %122 = arith.mulf %121, %120 : vector<8x8x32xf32>
    %cst_108 = arith.constant 0.707106769 : f32
    %123 = vector.broadcast %cst_108 : f32 to vector<8x8x32xf32>
    %124 = arith.mulf %120, %123 : vector<8x8x32xf32>
    %125 = math.erf %124 : vector<8x8x32xf32>
    %cst_109 = arith.constant 1.000000e+00 : f32
    %126 = vector.broadcast %cst_109 : f32 to vector<8x8x32xf32>
    %127 = arith.addf %126, %125 : vector<8x8x32xf32>
    %128 = arith.mulf %122, %127 : vector<8x8x32xf32>
    %cst_110 = arith.constant 0.000000e+00 : bf16
    %129 = vector.broadcast %cst_110 : bf16 to vector<10x10x32xbf16>
    %c0_111 = arith.constant 0 : index
    %c0_112 = arith.constant 0 : index
    %c0_113 = arith.constant 0 : index
    %130 = vector.load %arg11[%c0_111, %c0_112, %c0_113] : memref<10x10x32xbf16, #tpu.memory_space<vmem>>, vector<10x10x32xbf16>
    tpu.vector_store %arg11[%c0_111, %c0_112, %c0_113], %129 {strides = array<i32>} : memref<10x10x32xbf16, #tpu.memory_space<vmem>>, vector<10x10x32xbf16>,
    %131 = arith.truncf %128 : vector<8x8x32xf32> to vector<8x8x32xbf16>
    %c1_114 = arith.constant 1 : index
    %c1_115 = arith.constant 1 : index
    %c0_116 = arith.constant 0 : index
    %132 = vector.load %arg11[%c1_114, %c1_115, %c0_116] : memref<10x10x32xbf16, #tpu.memory_space<vmem>>, vector<8x8x32xbf16>
    tpu.vector_store %arg11[%c1_114, %c1_115, %c0_116], %131 {strides = array<i32>} : memref<10x10x32xbf16, #tpu.memory_space<vmem>>, vector<8x8x32xbf16>,
    %cst_117 = arith.constant 0.000000e+00 : f32
    %133 = vector.broadcast %cst_117 : f32 to vector<64x32xf32>
    %c0_118 = arith.constant 0 : index
    %c0_119 = arith.constant 0 : index
    %c0_120 = arith.constant 0 : index
    %134 = vector.load %arg11[%c0_118, %c0_119, %c0_120] : memref<10x10x32xbf16, #tpu.memory_space<vmem>>, vector<8x8x32xbf16>
    %135 = vector.shape_cast %134 : vector<8x8x32xbf16> to vector<64x32xbf16>
    %c0_121 = arith.constant 0 : index
    %c0_122 = arith.constant 0 : index
    %c0_123 = arith.constant 0 : index
    %c0_124 = arith.constant 0 : index
    %136 = vector.load %arg8[%c0_121, %c0_122, %c0_123, %c0_124] : memref<3x3x32x32xbf16, #tpu.memory_space<vmem>>, vector<1x1x32x32xbf16>
    %137 = vector.shape_cast %136 : vector<1x1x32x32xbf16> to vector<32x32xbf16>
    %cst_125 = arith.constant dense<0.000000e+00> : vector<64x32xf32>
    %138 = tpu.matmul %135, %137, %cst_125 {dimension_numbers = #tpu.dot_dimension_numbers<[1], [0], [0], [1], [0, 0, 1, 1], [], []>} : vector<64x32xbf16>, vector<32x32xbf16>, vector<64x32xf32> -> vector<64x32xf32>
    %139 = arith.addf %133, %138 : vector<64x32xf32>
    %c0_126 = arith.constant 0 : index
    %c1_127 = arith.constant 1 : index
    %c0_128 = arith.constant 0 : index
    %140 = vector.load %arg11[%c0_126, %c1_127, %c0_128] : memref<10x10x32xbf16, #tpu.memory_space<vmem>>, vector<8x8x32xbf16>
    %141 = vector.shape_cast %140 : vector<8x8x32xbf16> to vector<64x32xbf16>
    %c0_129 = arith.constant 0 : index
    %c1_130 = arith.constant 1 : index
    %c0_131 = arith.constant 0 : index
    %c0_132 = arith.constant 0 : index
    %142 = vector.load %arg8[%c0_129, %c1_130, %c0_131, %c0_132] : memref<3x3x32x32xbf16, #tpu.memory_space<vmem>>, vector<1x1x32x32xbf16>
    %143 = vector.shape_cast %142 : vector<1x1x32x32xbf16> to vector<32x32xbf16>
    %cst_133 = arith.constant dense<0.000000e+00> : vector<64x32xf32>
    %144 = tpu.matmul %141, %143, %cst_133 {dimension_numbers = #tpu.dot_dimension_numbers<[1], [0], [0], [1], [0, 0, 1, 1], [], []>} : vector<64x32xbf16>, vector<32x32xbf16>, vector<64x32xf32> -> vector<64x32xf32>
    %145 = arith.addf %139, %144 : vector<64x32xf32>
    %c0_134 = arith.constant 0 : index
    %c2_135 = arith.constant 2 : index
    %c0_136 = arith.constant 0 : index
    %146 = vector.load %arg11[%c0_134, %c2_135, %c0_136] : memref<10x10x32xbf16, #tpu.memory_space<vmem>>, vector<8x8x32xbf16>
    %147 = vector.shape_cast %146 : vector<8x8x32xbf16> to vector<64x32xbf16>
    %c0_137 = arith.constant 0 : index
    %c2_138 = arith.constant 2 : index
    %c0_139 = arith.constant 0 : index
    %c0_140 = arith.constant 0 : index
    %148 = vector.load %arg8[%c0_137, %c2_138, %c0_139, %c0_140] : memref<3x3x32x32xbf16, #tpu.memory_space<vmem>>, vector<1x1x32x32xbf16>
    %149 = vector.shape_cast %148 : vector<1x1x32x32xbf16> to vector<32x32xbf16>
    %cst_141 = arith.constant dense<0.000000e+00> : vector<64x32xf32>
    %150 = tpu.matmul %147, %149, %cst_141 {dimension_numbers = #tpu.dot_dimension_numbers<[1], [0], [0], [1], [0, 0, 1, 1], [], []>} : vector<64x32xbf16>, vector<32x32xbf16>, vector<64x32xf32> -> vector<64x32xf32>
    %151 = arith.addf %145, %150 : vector<64x32xf32>
    %c1_142 = arith.constant 1 : index
    %c0_143 = arith.constant 0 : index
    %c0_144 = arith.constant 0 : index
    %152 = vector.load %arg11[%c1_142, %c0_143, %c0_144] : memref<10x10x32xbf16, #tpu.memory_space<vmem>>, vector<8x8x32xbf16>
    %153 = vector.shape_cast %152 : vector<8x8x32xbf16> to vector<64x32xbf16>
    %c1_145 = arith.constant 1 : index
    %c0_146 = arith.constant 0 : index
    %c0_147 = arith.constant 0 : index
    %c0_148 = arith.constant 0 : index
    %154 = vector.load %arg8[%c1_145, %c0_146, %c0_147, %c0_148] : memref<3x3x32x32xbf16, #tpu.memory_space<vmem>>, vector<1x1x32x32xbf16>
    %155 = vector.shape_cast %154 : vector<1x1x32x32xbf16> to vector<32x32xbf16>
    %cst_149 = arith.constant dense<0.000000e+00> : vector<64x32xf32>
    %156 = tpu.matmul %153, %155, %cst_149 {dimension_numbers = #tpu.dot_dimension_numbers<[1], [0], [0], [1], [0, 0, 1, 1], [], []>} : vector<64x32xbf16>, vector<32x32xbf16>, vector<64x32xf32> -> vector<64x32xf32>
    %157 = arith.addf %151, %156 : vector<64x32xf32>
    %c1_150 = arith.constant 1 : index
    %c1_151 = arith.constant 1 : index
    %c0_152 = arith.constant 0 : index
    %158 = vector.load %arg11[%c1_150, %c1_151, %c0_152] : memref<10x10x32xbf16, #tpu.memory_space<vmem>>, vector<8x8x32xbf16>
    %159 = vector.shape_cast %158 : vector<8x8x32xbf16> to vector<64x32xbf16>
    %c1_153 = arith.constant 1 : index
    %c1_154 = arith.constant 1 : index
    %c0_155 = arith.constant 0 : index
    %c0_156 = arith.constant 0 : index
    %160 = vector.load %arg8[%c1_153, %c1_154, %c0_155, %c0_156] : memref<3x3x32x32xbf16, #tpu.memory_space<vmem>>, vector<1x1x32x32xbf16>
    %161 = vector.shape_cast %160 : vector<1x1x32x32xbf16> to vector<32x32xbf16>
    %cst_157 = arith.constant dense<0.000000e+00> : vector<64x32xf32>
    %162 = tpu.matmul %159, %161, %cst_157 {dimension_numbers = #tpu.dot_dimension_numbers<[1], [0], [0], [1], [0, 0, 1, 1], [], []>} : vector<64x32xbf16>, vector<32x32xbf16>, vector<64x32xf32> -> vector<64x32xf32>
    %163 = arith.addf %157, %162 : vector<64x32xf32>
    %c1_158 = arith.constant 1 : index
    %c2_159 = arith.constant 2 : index
    %c0_160 = arith.constant 0 : index
    %164 = vector.load %arg11[%c1_158, %c2_159, %c0_160] : memref<10x10x32xbf16, #tpu.memory_space<vmem>>, vector<8x8x32xbf16>
    %165 = vector.shape_cast %164 : vector<8x8x32xbf16> to vector<64x32xbf16>
    %c1_161 = arith.constant 1 : index
    %c2_162 = arith.constant 2 : index
    %c0_163 = arith.constant 0 : index
    %c0_164 = arith.constant 0 : index
    %166 = vector.load %arg8[%c1_161, %c2_162, %c0_163, %c0_164] : memref<3x3x32x32xbf16, #tpu.memory_space<vmem>>, vector<1x1x32x32xbf16>
    %167 = vector.shape_cast %166 : vector<1x1x32x32xbf16> to vector<32x32xbf16>
    %cst_165 = arith.constant dense<0.000000e+00> : vector<64x32xf32>
    %168 = tpu.matmul %165, %167, %cst_165 {dimension_numbers = #tpu.dot_dimension_numbers<[1], [0], [0], [1], [0, 0, 1, 1], [], []>} : vector<64x32xbf16>, vector<32x32xbf16>, vector<64x32xf32> -> vector<64x32xf32>
    %169 = arith.addf %163, %168 : vector<64x32xf32>
    %c2_166 = arith.constant 2 : index
    %c0_167 = arith.constant 0 : index
    %c0_168 = arith.constant 0 : index
    %170 = vector.load %arg11[%c2_166, %c0_167, %c0_168] : memref<10x10x32xbf16, #tpu.memory_space<vmem>>, vector<8x8x32xbf16>
    %171 = vector.shape_cast %170 : vector<8x8x32xbf16> to vector<64x32xbf16>
    %c2_169 = arith.constant 2 : index
    %c0_170 = arith.constant 0 : index
    %c0_171 = arith.constant 0 : index
    %c0_172 = arith.constant 0 : index
    %172 = vector.load %arg8[%c2_169, %c0_170, %c0_171, %c0_172] : memref<3x3x32x32xbf16, #tpu.memory_space<vmem>>, vector<1x1x32x32xbf16>
    %173 = vector.shape_cast %172 : vector<1x1x32x32xbf16> to vector<32x32xbf16>
    %cst_173 = arith.constant dense<0.000000e+00> : vector<64x32xf32>
    %174 = tpu.matmul %171, %173, %cst_173 {dimension_numbers = #tpu.dot_dimension_numbers<[1], [0], [0], [1], [0, 0, 1, 1], [], []>} : vector<64x32xbf16>, vector<32x32xbf16>, vector<64x32xf32> -> vector<64x32xf32>
    %175 = arith.addf %169, %174 : vector<64x32xf32>
    %c2_174 = arith.constant 2 : index
    %c1_175 = arith.constant 1 : index
    %c0_176 = arith.constant 0 : index
    %176 = vector.load %arg11[%c2_174, %c1_175, %c0_176] : memref<10x10x32xbf16, #tpu.memory_space<vmem>>, vector<8x8x32xbf16>
    %177 = vector.shape_cast %176 : vector<8x8x32xbf16> to vector<64x32xbf16>
    %c2_177 = arith.constant 2 : index
    %c1_178 = arith.constant 1 : index
    %c0_179 = arith.constant 0 : index
    %c0_180 = arith.constant 0 : index
    %178 = vector.load %arg8[%c2_177, %c1_178, %c0_179, %c0_180] : memref<3x3x32x32xbf16, #tpu.memory_space<vmem>>, vector<1x1x32x32xbf16>
    %179 = vector.shape_cast %178 : vector<1x1x32x32xbf16> to vector<32x32xbf16>
    %cst_181 = arith.constant dense<0.000000e+00> : vector<64x32xf32>
    %180 = tpu.matmul %177, %179, %cst_181 {dimension_numbers = #tpu.dot_dimension_numbers<[1], [0], [0], [1], [0, 0, 1, 1], [], []>} : vector<64x32xbf16>, vector<32x32xbf16>, vector<64x32xf32> -> vector<64x32xf32>
    %181 = arith.addf %175, %180 : vector<64x32xf32>
    %c2_182 = arith.constant 2 : index
    %c2_183 = arith.constant 2 : index
    %c0_184 = arith.constant 0 : index
    %182 = vector.load %arg11[%c2_182, %c2_183, %c0_184] : memref<10x10x32xbf16, #tpu.memory_space<vmem>>, vector<8x8x32xbf16>
    %183 = vector.shape_cast %182 : vector<8x8x32xbf16> to vector<64x32xbf16>
    %c2_185 = arith.constant 2 : index
    %c2_186 = arith.constant 2 : index
    %c0_187 = arith.constant 0 : index
    %c0_188 = arith.constant 0 : index
    %184 = vector.load %arg8[%c2_185, %c2_186, %c0_187, %c0_188] : memref<3x3x32x32xbf16, #tpu.memory_space<vmem>>, vector<1x1x32x32xbf16>
    %185 = vector.shape_cast %184 : vector<1x1x32x32xbf16> to vector<32x32xbf16>
    %cst_189 = arith.constant dense<0.000000e+00> : vector<64x32xf32>
    %186 = tpu.matmul %183, %185, %cst_189 {dimension_numbers = #tpu.dot_dimension_numbers<[1], [0], [0], [1], [0, 0, 1, 1], [], []>} : vector<64x32xbf16>, vector<32x32xbf16>, vector<64x32xf32> -> vector<64x32xf32>
    %187 = arith.addf %181, %186 : vector<64x32xf32>
    %c0_190 = arith.constant 0 : index
    %c0_191 = arith.constant 0 : index
    %188 = vector.load %arg9[%c0_190, %c0_191] : memref<1x32xf32, #tpu.memory_space<vmem>>, vector<1x32xf32>
    %189 = vector.broadcast %188 : vector<1x32xf32> to vector<64x32xf32>
    %190 = arith.addf %187, %189 : vector<64x32xf32>
    %191 = vector.shape_cast %190 : vector<64x32xf32> to vector<8x8x32xf32>
    %192 = arith.addf %191, %1 : vector<8x8x32xf32>
    %c0_192 = arith.constant 0 : index
    %c0_193 = arith.constant 0 : index
    %c0_194 = arith.constant 0 : index
    %c0_195 = arith.constant 0 : index
    %193 = vector.load %arg10[%c0_192, %c0_193, %c0_194, %c0_195] : memref<1x8x8x32xf32, #tpu.memory_space<vmem>>, vector<1x8x8x32xf32>
    %194 = vector.shape_cast %193 : vector<1x8x8x32xf32> to vector<8x8x32xf32>
    %195 = vector.shape_cast %192 : vector<8x8x32xf32> to vector<1x8x8x32xf32>
    tpu.vector_store %arg10[%c0_192, %c0_193, %c0_194, %c0_195], %195 {strides = array<i32>} : memref<1x8x8x32xf32, #tpu.memory_space<vmem>>, vector<1x8x8x32xf32>,
    return
  }
  func.func @transform_0(%arg0: i32) -> (i32, i32, i32, i32) {
    %c0_i32 = arith.constant 0 : i32
    %c0_i32_0 = arith.constant 0 : i32
    %c0_i32_1 = arith.constant 0 : i32
    %c0_i32_2 = arith.constant 0 : i32
    return %arg0, %c0_i32, %c0_i32_0, %c0_i32_1 : i32, i32, i32, i32
  }
  func.func @transform_1(%arg0: i32) -> (i32, i32, i32) {
    %c0_i32 = arith.constant 0 : i32
    %c0_i32_0 = arith.constant 0 : i32
    %c0_i32_1 = arith.constant 0 : i32
    %c0_i32_2 = arith.constant 0 : i32
    return %c0_i32, %c0_i32_0, %c0_i32_1 : i32, i32, i32
  }
  func.func @transform_2(%arg0: i32) -> (i32, i32, i32) {
    %c0_i32 = arith.constant 0 : i32
    %c0_i32_0 = arith.constant 0 : i32
    %c0_i32_1 = arith.constant 0 : i32
    %c0_i32_2 = arith.constant 0 : i32
    return %c0_i32, %c0_i32_0, %c0_i32_1 : i32, i32, i32
  }
  func.func @transform_3(%arg0: i32) -> (i32, i32, i32, i32) {
    %c0_i32 = arith.constant 0 : i32
    %c0_i32_0 = arith.constant 0 : i32
    %c0_i32_1 = arith.constant 0 : i32
    %c0_i32_2 = arith.constant 0 : i32
    %c0_i32_3 = arith.constant 0 : i32
    return %c0_i32, %c0_i32_0, %c0_i32_1, %c0_i32_2 : i32, i32, i32, i32
  }
  func.func @transform_4(%arg0: i32) -> (i32, i32) {
    %c0_i32 = arith.constant 0 : i32
    %c0_i32_0 = arith.constant 0 : i32
    %c0_i32_1 = arith.constant 0 : i32
    return %c0_i32, %c0_i32_0 : i32, i32
  }
  func.func @transform_5(%arg0: i32) -> (i32, i32, i32) {
    %c0_i32 = arith.constant 0 : i32
    %c0_i32_0 = arith.constant 0 : i32
    %c0_i32_1 = arith.constant 0 : i32
    %c0_i32_2 = arith.constant 0 : i32
    return %c0_i32, %c0_i32_0, %c0_i32_1 : i32, i32, i32
  }
  func.func @transform_6(%arg0: i32) -> (i32, i32, i32) {
    %c0_i32 = arith.constant 0 : i32
    %c0_i32_0 = arith.constant 0 : i32
    %c0_i32_1 = arith.constant 0 : i32
    %c0_i32_2 = arith.constant 0 : i32
    return %c0_i32, %c0_i32_0, %c0_i32_1 : i32, i32, i32
  }
  func.func @transform_7(%arg0: i32) -> (i32, i32, i32, i32) {
    %c0_i32 = arith.constant 0 : i32
    %c0_i32_0 = arith.constant 0 : i32
    %c0_i32_1 = arith.constant 0 : i32
    %c0_i32_2 = arith.constant 0 : i32
    %c0_i32_3 = arith.constant 0 : i32
    return %c0_i32, %c0_i32_0, %c0_i32_1, %c0_i32_2 : i32, i32, i32, i32
  }
  func.func @transform_8(%arg0: i32) -> (i32, i32) {
    %c0_i32 = arith.constant 0 : i32
    %c0_i32_0 = arith.constant 0 : i32
    %c0_i32_1 = arith.constant 0 : i32
    return %c0_i32, %c0_i32_0 : i32, i32
  }
  func.func @transform_9(%arg0: i32) -> (i32, i32, i32, i32) {
    %c0_i32 = arith.constant 0 : i32
    %c0_i32_0 = arith.constant 0 : i32
    %c0_i32_1 = arith.constant 0 : i32
    %c0_i32_2 = arith.constant 0 : i32
    return %arg0, %c0_i32, %c0_i32_0, %c0_i32_1 : i32, i32, i32, i32
  }
}

module attributes {stable_mosaic.version = 11 : i64} {
  func.func @_mm_kernel(%arg0: i32, %arg1: i32, %arg2: i32, %arg3: memref<16x256xbf16, #tpu.memory_space<vmem>>, %arg4: memref<256x128xbf16, #tpu.memory_space<vmem>>, %arg5: memref<1x128xf32, #tpu.memory_space<vmem>>, %arg6: memref<16x128xf32, #tpu.memory_space<vmem>>, %arg7: memref<16x128xf32, #tpu.memory_space<vmem>>) attributes {dimension_semantics = [#tpu.dimension_semantics<parallel>, #tpu.dimension_semantics<parallel>, #tpu.dimension_semantics<arbitrary>], iteration_bounds = array<i64: 1, 1, 1>, scalar_prefetch = 0 : i64, scratch_operands = 1 : i64, tpu.core_type = #tpu.core_type<tc>, window_params = [{transform_indices = @transform_0, window_bounds = array<i64: 16, 256>}, {transform_indices = @transform_1, window_bounds = array<i64: 256, 128>}, {transform_indices = @transform_2, window_bounds = array<i64: 1, 128>}, {transform_indices = @transform_3, window_bounds = array<i64: 16, 128>}]} {
    %c0_i32 = arith.constant 0 : i32
    %0 = arith.cmpi eq, %arg2, %c0_i32 : i32
    %1 = arith.extui %0 : i1 to i32
    %c0_i32_0 = arith.constant 0 : i32
    %2 = arith.cmpi ne, %1, %c0_i32_0 : i32
    scf.if %2 {
      %cst_10 = arith.constant 0.000000e+00 : f32
      %12 = vector.broadcast %cst_10 : f32 to vector<16x128xf32>
      %c0_11 = arith.constant 0 : index
      %c0_12 = arith.constant 0 : index
      %13 = vector.load %arg7[%c0_11, %c0_12] : memref<16x128xf32, #tpu.memory_space<vmem>>, vector<16x128xf32>
      tpu.vector_store %arg7[%c0_11, %c0_12], %12 {strides = array<i32>} : memref<16x128xf32, #tpu.memory_space<vmem>>, vector<16x128xf32>,
    } else {
    }
    %c0 = arith.constant 0 : index
    %c0_1 = arith.constant 0 : index
    %3 = vector.load %arg3[%c0, %c0_1] : memref<16x256xbf16, #tpu.memory_space<vmem>>, vector<16x256xbf16>
    %c0_2 = arith.constant 0 : index
    %c0_3 = arith.constant 0 : index
    %4 = vector.load %arg7[%c0_2, %c0_3] : memref<16x128xf32, #tpu.memory_space<vmem>>, vector<16x128xf32>
    %c0_4 = arith.constant 0 : index
    %c0_5 = arith.constant 0 : index
    %5 = vector.load %arg4[%c0_4, %c0_5] : memref<256x128xbf16, #tpu.memory_space<vmem>>, vector<256x128xbf16>
    %cst = arith.constant dense<0.000000e+00> : vector<16x128xf32>
    %6 = tpu.matmul %3, %5, %cst {dimension_numbers = #tpu.dot_dimension_numbers<[1], [0], [0], [1], [0, 0, 1, 1], [], []>} : vector<16x256xbf16>, vector<256x128xbf16>, vector<16x128xf32> -> vector<16x128xf32>
    %7 = arith.addf %4, %6 : vector<16x128xf32>
    %c0_6 = arith.constant 0 : index
    %c0_7 = arith.constant 0 : index
    %8 = vector.load %arg7[%c0_6, %c0_7] : memref<16x128xf32, #tpu.memory_space<vmem>>, vector<16x128xf32>
    tpu.vector_store %arg7[%c0_6, %c0_7], %7 {strides = array<i32>} : memref<16x128xf32, #tpu.memory_space<vmem>>, vector<16x128xf32>,
    %c0_i32_8 = arith.constant 0 : i32
    %9 = arith.cmpi eq, %arg2, %c0_i32_8 : i32
    %10 = arith.extui %9 : i1 to i32
    %c0_i32_9 = arith.constant 0 : i32
    %11 = arith.cmpi ne, %10, %c0_i32_9 : i32
    scf.if %11 {
      %c0_10 = arith.constant 0 : index
      %c0_11 = arith.constant 0 : index
      %12 = vector.load %arg7[%c0_10, %c0_11] : memref<16x128xf32, #tpu.memory_space<vmem>>, vector<16x128xf32>
      %c0_12 = arith.constant 0 : index
      %c0_13 = arith.constant 0 : index
      %13 = vector.load %arg5[%c0_12, %c0_13] : memref<1x128xf32, #tpu.memory_space<vmem>>, vector<1x128xf32>
      %14 = vector.broadcast %13 : vector<1x128xf32> to vector<16x128xf32>
      %15 = arith.addf %12, %14 : vector<16x128xf32>
      %c0_14 = arith.constant 0 : index
      %c0_15 = arith.constant 0 : index
      %16 = vector.load %arg6[%c0_14, %c0_15] : memref<16x128xf32, #tpu.memory_space<vmem>>, vector<16x128xf32>
      tpu.vector_store %arg6[%c0_14, %c0_15], %15 {strides = array<i32>} : memref<16x128xf32, #tpu.memory_space<vmem>>, vector<16x128xf32>,
    } else {
    }
    return
  }
  func.func @transform_0(%arg0: i32, %arg1: i32, %arg2: i32) -> (i32, i32) {
    %c0_i32 = arith.constant 0 : i32
    return %arg0, %arg2 : i32, i32
  }
  func.func @transform_1(%arg0: i32, %arg1: i32, %arg2: i32) -> (i32, i32) {
    %c0_i32 = arith.constant 0 : i32
    return %arg2, %arg1 : i32, i32
  }
  func.func @transform_2(%arg0: i32, %arg1: i32, %arg2: i32) -> (i32, i32) {
    %c0_i32 = arith.constant 0 : i32
    %c0_i32_0 = arith.constant 0 : i32
    return %c0_i32, %arg1 : i32, i32
  }
  func.func @transform_3(%arg0: i32, %arg1: i32, %arg2: i32) -> (i32, i32) {
    %c0_i32 = arith.constant 0 : i32
    return %arg0, %arg1 : i32, i32
  }
}

module attributes {stable_mosaic.version = 11 : i64} {
  func.func @_mm_kernel(%arg0: i32, %arg1: i32, %arg2: i32, %arg3: memref<16x128xbf16, #tpu.memory_space<vmem>>, %arg4: memref<128x256xbf16, #tpu.memory_space<vmem>>, %arg5: memref<1x256xf32, #tpu.memory_space<vmem>>, %arg6: memref<1x128xf32, #tpu.memory_space<vmem>>, %arg7: memref<1x128xf32, #tpu.memory_space<vmem>>, %arg8: memref<16x256xf32, #tpu.memory_space<vmem>>, %arg9: memref<16x256xf32, #tpu.memory_space<vmem>>) attributes {dimension_semantics = [#tpu.dimension_semantics<parallel>, #tpu.dimension_semantics<parallel>, #tpu.dimension_semantics<arbitrary>], iteration_bounds = array<i64: 1, 3, 1>, scalar_prefetch = 0 : i64, scratch_operands = 1 : i64, tpu.core_type = #tpu.core_type<tc>, window_params = [{transform_indices = @transform_0, window_bounds = array<i64: 16, 128>}, {transform_indices = @transform_1, window_bounds = array<i64: 128, 256>}, {transform_indices = @transform_2, window_bounds = array<i64: 1, 256>}, {transform_indices = @transform_3, window_bounds = array<i64: 1, 128>}, {transform_indices = @transform_4, window_bounds = array<i64: 1, 128>}, {transform_indices = @transform_5, window_bounds = array<i64: 16, 256>}]} {
    %c0_i32 = arith.constant 0 : i32
    %0 = arith.cmpi eq, %arg2, %c0_i32 : i32
    %1 = arith.extui %0 : i1 to i32
    %c0_i32_0 = arith.constant 0 : i32
    %2 = arith.cmpi ne, %1, %c0_i32_0 : i32
    scf.if %2 {
      %cst_23 = arith.constant 0.000000e+00 : f32
      %48 = vector.broadcast %cst_23 : f32 to vector<16x256xf32>
      %c0_24 = arith.constant 0 : index
      %c0_25 = arith.constant 0 : index
      %49 = vector.load %arg9[%c0_24, %c0_25] : memref<16x256xf32, #tpu.memory_space<vmem>>, vector<16x256xf32>
      tpu.vector_store %arg9[%c0_24, %c0_25], %48 {strides = array<i32>} : memref<16x256xf32, #tpu.memory_space<vmem>>, vector<16x256xf32>,
    } else {
    }
    %c0 = arith.constant 0 : index
    %c0_1 = arith.constant 0 : index
    %3 = vector.load %arg3[%c0, %c0_1] : memref<16x128xbf16, #tpu.memory_space<vmem>>, vector<16x128xbf16>
    %4 = arith.extf %3 : vector<16x128xbf16> to vector<16x128xf32>
    %cst = arith.constant dense<0.000000e+00> : vector<16xf32>
    %5 = vector.multi_reduction <add>, %4, %cst [1] : vector<16x128xf32> to vector<16xf32>
    %6 = vector.shape_cast %5 : vector<16xf32> to vector<16x1xf32>
    %cst_2 = arith.constant 3.125000e-02 : f32
    %7 = vector.broadcast %cst_2 : f32 to vector<16x1xf32>
    %8 = arith.mulf %6, %7 : vector<16x1xf32>
    %9 = arith.mulf %4, %4 : vector<16x128xf32>
    %cst_3 = arith.constant dense<0.000000e+00> : vector<16xf32>
    %10 = vector.multi_reduction <add>, %9, %cst_3 [1] : vector<16x128xf32> to vector<16xf32>
    %11 = vector.shape_cast %10 : vector<16xf32> to vector<16x1xf32>
    %cst_4 = arith.constant 3.125000e-02 : f32
    %12 = vector.broadcast %cst_4 : f32 to vector<16x1xf32>
    %13 = arith.mulf %11, %12 : vector<16x1xf32>
    %14 = arith.mulf %8, %8 : vector<16x1xf32>
    %15 = arith.subf %13, %14 : vector<16x1xf32>
    %cst_5 = arith.constant 0.000000e+00 : f32
    %16 = vector.broadcast %cst_5 : f32 to vector<16x1xf32>
    %17 = arith.maximumf %15, %16 : vector<16x1xf32>
    %18 = vector.broadcast %8 : vector<16x1xf32> to vector<16x128xf32>
    %19 = arith.subf %4, %18 : vector<16x128xf32>
    %cst_6 = arith.constant 9.99999974E-6 : f32
    %20 = vector.broadcast %cst_6 : f32 to vector<16x1xf32>
    %21 = arith.addf %17, %20 : vector<16x1xf32>
    %22 = math.rsqrt %21 : vector<16x1xf32>
    %23 = vector.broadcast %22 : vector<16x1xf32> to vector<16x128xf32>
    %24 = arith.mulf %19, %23 : vector<16x128xf32>
    %c0_7 = arith.constant 0 : index
    %c0_8 = arith.constant 0 : index
    %25 = vector.load %arg6[%c0_7, %c0_8] : memref<1x128xf32, #tpu.memory_space<vmem>>, vector<1x128xf32>
    %26 = vector.broadcast %25 : vector<1x128xf32> to vector<16x128xf32>
    %27 = arith.mulf %24, %26 : vector<16x128xf32>
    %c0_9 = arith.constant 0 : index
    %c0_10 = arith.constant 0 : index
    %28 = vector.load %arg7[%c0_9, %c0_10] : memref<1x128xf32, #tpu.memory_space<vmem>>, vector<1x128xf32>
    %29 = vector.broadcast %28 : vector<1x128xf32> to vector<16x128xf32>
    %30 = arith.addf %27, %29 : vector<16x128xf32>
    %cst_11 = arith.constant 5.000000e-01 : f32
    %31 = vector.broadcast %cst_11 : f32 to vector<16x128xf32>
    %32 = arith.mulf %31, %30 : vector<16x128xf32>
    %cst_12 = arith.constant 0.707106769 : f32
    %33 = vector.broadcast %cst_12 : f32 to vector<16x128xf32>
    %34 = arith.mulf %30, %33 : vector<16x128xf32>
    %35 = math.erf %34 : vector<16x128xf32>
    %cst_13 = arith.constant 1.000000e+00 : f32
    %36 = vector.broadcast %cst_13 : f32 to vector<16x128xf32>
    %37 = arith.addf %36, %35 : vector<16x128xf32>
    %38 = arith.mulf %32, %37 : vector<16x128xf32>
    %39 = arith.truncf %38 : vector<16x128xf32> to vector<16x128xbf16>
    %c0_14 = arith.constant 0 : index
    %c0_15 = arith.constant 0 : index
    %40 = vector.load %arg9[%c0_14, %c0_15] : memref<16x256xf32, #tpu.memory_space<vmem>>, vector<16x256xf32>
    %c0_16 = arith.constant 0 : index
    %c0_17 = arith.constant 0 : index
    %41 = vector.load %arg4[%c0_16, %c0_17] : memref<128x256xbf16, #tpu.memory_space<vmem>>, vector<128x256xbf16>
    %cst_18 = arith.constant dense<0.000000e+00> : vector<16x256xf32>
    %42 = tpu.matmul %39, %41, %cst_18 {dimension_numbers = #tpu.dot_dimension_numbers<[1], [0], [0], [1], [0, 0, 1, 1], [], []>} : vector<16x128xbf16>, vector<128x256xbf16>, vector<16x256xf32> -> vector<16x256xf32>
    %43 = arith.addf %40, %42 : vector<16x256xf32>
    %c0_19 = arith.constant 0 : index
    %c0_20 = arith.constant 0 : index
    %44 = vector.load %arg9[%c0_19, %c0_20] : memref<16x256xf32, #tpu.memory_space<vmem>>, vector<16x256xf32>
    tpu.vector_store %arg9[%c0_19, %c0_20], %43 {strides = array<i32>} : memref<16x256xf32, #tpu.memory_space<vmem>>, vector<16x256xf32>,
    %c0_i32_21 = arith.constant 0 : i32
    %45 = arith.cmpi eq, %arg2, %c0_i32_21 : i32
    %46 = arith.extui %45 : i1 to i32
    %c0_i32_22 = arith.constant 0 : i32
    %47 = arith.cmpi ne, %46, %c0_i32_22 : i32
    scf.if %47 {
      %c0_23 = arith.constant 0 : index
      %c0_24 = arith.constant 0 : index
      %48 = vector.load %arg9[%c0_23, %c0_24] : memref<16x256xf32, #tpu.memory_space<vmem>>, vector<16x256xf32>
      %c0_25 = arith.constant 0 : index
      %c0_26 = arith.constant 0 : index
      %49 = vector.load %arg5[%c0_25, %c0_26] : memref<1x256xf32, #tpu.memory_space<vmem>>, vector<1x256xf32>
      %50 = vector.broadcast %49 : vector<1x256xf32> to vector<16x256xf32>
      %51 = arith.addf %48, %50 : vector<16x256xf32>
      %c0_27 = arith.constant 0 : index
      %c0_28 = arith.constant 0 : index
      %52 = vector.load %arg8[%c0_27, %c0_28] : memref<16x256xf32, #tpu.memory_space<vmem>>, vector<16x256xf32>
      tpu.vector_store %arg8[%c0_27, %c0_28], %51 {strides = array<i32>} : memref<16x256xf32, #tpu.memory_space<vmem>>, vector<16x256xf32>,
    } else {
    }
    return
  }
  func.func @transform_0(%arg0: i32, %arg1: i32, %arg2: i32) -> (i32, i32) {
    %c0_i32 = arith.constant 0 : i32
    return %arg0, %arg2 : i32, i32
  }
  func.func @transform_1(%arg0: i32, %arg1: i32, %arg2: i32) -> (i32, i32) {
    %c0_i32 = arith.constant 0 : i32
    return %arg2, %arg1 : i32, i32
  }
  func.func @transform_2(%arg0: i32, %arg1: i32, %arg2: i32) -> (i32, i32) {
    %c0_i32 = arith.constant 0 : i32
    %c0_i32_0 = arith.constant 0 : i32
    return %c0_i32, %arg1 : i32, i32
  }
  func.func @transform_3(%arg0: i32, %arg1: i32, %arg2: i32) -> (i32, i32) {
    %c0_i32 = arith.constant 0 : i32
    %c0_i32_0 = arith.constant 0 : i32
    return %c0_i32, %arg2 : i32, i32
  }
  func.func @transform_4(%arg0: i32, %arg1: i32, %arg2: i32) -> (i32, i32) {
    %c0_i32 = arith.constant 0 : i32
    %c0_i32_0 = arith.constant 0 : i32
    return %c0_i32, %arg2 : i32, i32
  }
  func.func @transform_5(%arg0: i32, %arg1: i32, %arg2: i32) -> (i32, i32) {
    %c0_i32 = arith.constant 0 : i32
    return %arg0, %arg1 : i32, i32
  }
}

module attributes {stable_mosaic.version = 11 : i64} {
  func.func @_bigru_kernel(%arg0: memref<8x2x768xf32, #tpu.memory_space<vmem>>, %arg1: memref<256x768xbf16, #tpu.memory_space<vmem>>, %arg2: memref<1x768xf32, #tpu.memory_space<vmem>>, %arg3: memref<8x2x128xf32, #tpu.memory_space<vmem>>, %arg4: memref<8x2x128xf32, #tpu.memory_space<vmem>>, %arg5: memref<2x256xf32, #tpu.memory_space<vmem>>) attributes {dimension_semantics = [], scalar_prefetch = 0 : i64, scratch_operands = 1 : i64, tpu.core_type = #tpu.core_type<tc>} {
    %cst = arith.constant 0.000000e+00 : f32
    %0 = vector.broadcast %cst : f32 to vector<2x256xf32>
    %c0 = arith.constant 0 : index
    %c0_0 = arith.constant 0 : index
    %1 = vector.load %arg5[%c0, %c0_0] : memref<2x256xf32, #tpu.memory_space<vmem>>, vector<2x256xf32>
    tpu.vector_store %arg5[%c0, %c0_0], %0 {strides = array<i32>} : memref<2x256xf32, #tpu.memory_space<vmem>>, vector<2x256xf32>,
    %c0_i32 = arith.constant 0 : i32
    %c4_i32 = arith.constant 4 : i32
    %2 = arith.addi %c0_i32, %c4_i32 : i32
    %c1_i32 = arith.constant 1 : i32
    scf.for %arg6 = %c0_i32 to %2 step %c1_i32  : i32 {
      %c2_i32 = arith.constant 2 : i32
      %3 = arith.muli %arg6, %c2_i32 : i32
      %c0_i32_2 = arith.constant 0 : i32
      %4 = arith.addi %3, %c0_i32_2 : i32
      %c0_3 = arith.constant 0 : index
      %c0_4 = arith.constant 0 : index
      %5 = vector.load %arg5[%c0_3, %c0_4] : memref<2x256xf32, #tpu.memory_space<vmem>>, vector<2x256xf32>
      %6 = arith.truncf %5 : vector<2x256xf32> to vector<2x256xbf16>
      %c0_5 = arith.constant 0 : index
      %c0_6 = arith.constant 0 : index
      %7 = vector.load %arg1[%c0_5, %c0_6] : memref<256x768xbf16, #tpu.memory_space<vmem>>, vector<256x768xbf16>
      %cst_7 = arith.constant dense<0.000000e+00> : vector<2x768xf32>
      %8 = tpu.matmul %6, %7, %cst_7 {dimension_numbers = #tpu.dot_dimension_numbers<[1], [0], [0], [1], [0, 0, 1, 1], [], []>} : vector<2x256xbf16>, vector<256x768xbf16>, vector<2x768xf32> -> vector<2x768xf32>
      %c0_8 = arith.constant 0 : index
      %c0_9 = arith.constant 0 : index
      %9 = vector.load %arg2[%c0_8, %c0_9] : memref<1x768xf32, #tpu.memory_space<vmem>>, vector<1x768xf32>
      %10 = vector.broadcast %9 : vector<1x768xf32> to vector<2x768xf32>
      %11 = arith.addf %8, %10 : vector<2x768xf32>
      %12 = arith.index_cast %4 : i32 to index
      %c0_10 = arith.constant 0 : index
      %c0_11 = arith.constant 0 : index
      %13 = vector.load %arg0[%12, %c0_10, %c0_11] : memref<8x2x768xf32, #tpu.memory_space<vmem>>, vector<1x2x768xf32>
      %14 = vector.shape_cast %13 : vector<1x2x768xf32> to vector<2x768xf32>
      %c7_i32 = arith.constant 7 : i32
      %15 = arith.subi %c7_i32, %4 : i32
      %16 = arith.index_cast %15 : i32 to index
      %c0_12 = arith.constant 0 : index
      %c0_13 = arith.constant 0 : index
      %17 = vector.load %arg0[%16, %c0_12, %c0_13] : memref<8x2x768xf32, #tpu.memory_space<vmem>>, vector<1x2x768xf32>
      %18 = vector.shape_cast %17 : vector<1x2x768xf32> to vector<2x768xf32>
      %19 = vector.extract_strided_slice %14 {offsets = [0, 0], sizes = [2, 384], strides = [1, 1]} : vector<2x768xf32> to vector<2x384xf32>
      %20 = vector.extract_strided_slice %11 {offsets = [0, 0], sizes = [2, 384], strides = [1, 1]} : vector<2x768xf32> to vector<2x384xf32>
      %21 = vector.extract_strided_slice %5 {offsets = [0, 0], sizes = [2, 128], strides = [1, 1]} : vector<2x256xf32> to vector<2x128xf32>
      %22 = vector.extract_strided_slice %19 {offsets = [0, 0], sizes = [2, 128], strides = [1, 1]} : vector<2x384xf32> to vector<2x128xf32>
      %23 = vector.extract_strided_slice %20 {offsets = [0, 0], sizes = [2, 128], strides = [1, 1]} : vector<2x384xf32> to vector<2x128xf32>
      %24 = arith.addf %22, %23 : vector<2x128xf32>
      %25 = arith.negf %24 : vector<2x128xf32>
      %26 = math.exp %25 : vector<2x128xf32>
      %cst_14 = arith.constant 1.000000e+00 : f32
      %27 = vector.broadcast %cst_14 : f32 to vector<2x128xf32>
      %28 = arith.addf %27, %26 : vector<2x128xf32>
      %29 = arith.divf %27, %28 : vector<2x128xf32>
      %30 = vector.extract_strided_slice %19 {offsets = [0, 128], sizes = [2, 128], strides = [1, 1]} : vector<2x384xf32> to vector<2x128xf32>
      %31 = vector.extract_strided_slice %20 {offsets = [0, 128], sizes = [2, 128], strides = [1, 1]} : vector<2x384xf32> to vector<2x128xf32>
      %32 = arith.addf %30, %31 : vector<2x128xf32>
      %33 = arith.negf %32 : vector<2x128xf32>
      %34 = math.exp %33 : vector<2x128xf32>
      %cst_15 = arith.constant 1.000000e+00 : f32
      %35 = vector.broadcast %cst_15 : f32 to vector<2x128xf32>
      %36 = arith.addf %35, %34 : vector<2x128xf32>
      %37 = arith.divf %35, %36 : vector<2x128xf32>
      %38 = vector.extract_strided_slice %19 {offsets = [0, 256], sizes = [2, 128], strides = [1, 1]} : vector<2x384xf32> to vector<2x128xf32>
      %39 = vector.extract_strided_slice %20 {offsets = [0, 256], sizes = [2, 128], strides = [1, 1]} : vector<2x384xf32> to vector<2x128xf32>
      %40 = arith.mulf %29, %39 : vector<2x128xf32>
      %41 = arith.addf %38, %40 : vector<2x128xf32>
      %42 = math.tanh %41 : vector<2x128xf32>
      %cst_16 = arith.constant 1.000000e+00 : f32
      %43 = vector.broadcast %cst_16 : f32 to vector<2x128xf32>
      %44 = arith.subf %43, %37 : vector<2x128xf32>
      %45 = arith.mulf %44, %42 : vector<2x128xf32>
      %46 = arith.mulf %37, %21 : vector<2x128xf32>
      %47 = arith.addf %45, %46 : vector<2x128xf32>
      %48 = vector.extract_strided_slice %18 {offsets = [0, 384], sizes = [2, 384], strides = [1, 1]} : vector<2x768xf32> to vector<2x384xf32>
      %49 = vector.extract_strided_slice %11 {offsets = [0, 384], sizes = [2, 384], strides = [1, 1]} : vector<2x768xf32> to vector<2x384xf32>
      %50 = vector.extract_strided_slice %5 {offsets = [0, 128], sizes = [2, 128], strides = [1, 1]} : vector<2x256xf32> to vector<2x128xf32>
      %51 = vector.extract_strided_slice %48 {offsets = [0, 0], sizes = [2, 128], strides = [1, 1]} : vector<2x384xf32> to vector<2x128xf32>
      %52 = vector.extract_strided_slice %49 {offsets = [0, 0], sizes = [2, 128], strides = [1, 1]} : vector<2x384xf32> to vector<2x128xf32>
      %53 = arith.addf %51, %52 : vector<2x128xf32>
      %54 = arith.negf %53 : vector<2x128xf32>
      %55 = math.exp %54 : vector<2x128xf32>
      %cst_17 = arith.constant 1.000000e+00 : f32
      %56 = vector.broadcast %cst_17 : f32 to vector<2x128xf32>
      %57 = arith.addf %56, %55 : vector<2x128xf32>
      %58 = arith.divf %56, %57 : vector<2x128xf32>
      %59 = vector.extract_strided_slice %48 {offsets = [0, 128], sizes = [2, 128], strides = [1, 1]} : vector<2x384xf32> to vector<2x128xf32>
      %60 = vector.extract_strided_slice %49 {offsets = [0, 128], sizes = [2, 128], strides = [1, 1]} : vector<2x384xf32> to vector<2x128xf32>
      %61 = arith.addf %59, %60 : vector<2x128xf32>
      %62 = arith.negf %61 : vector<2x128xf32>
      %63 = math.exp %62 : vector<2x128xf32>
      %cst_18 = arith.constant 1.000000e+00 : f32
      %64 = vector.broadcast %cst_18 : f32 to vector<2x128xf32>
      %65 = arith.addf %64, %63 : vector<2x128xf32>
      %66 = arith.divf %64, %65 : vector<2x128xf32>
      %67 = vector.extract_strided_slice %48 {offsets = [0, 256], sizes = [2, 128], strides = [1, 1]} : vector<2x384xf32> to vector<2x128xf32>
      %68 = vector.extract_strided_slice %49 {offsets = [0, 256], sizes = [2, 128], strides = [1, 1]} : vector<2x384xf32> to vector<2x128xf32>
      %69 = arith.mulf %58, %68 : vector<2x128xf32>
      %70 = arith.addf %67, %69 : vector<2x128xf32>
      %71 = math.tanh %70 : vector<2x128xf32>
      %cst_19 = arith.constant 1.000000e+00 : f32
      %72 = vector.broadcast %cst_19 : f32 to vector<2x128xf32>
      %73 = arith.subf %72, %66 : vector<2x128xf32>
      %74 = arith.mulf %73, %71 : vector<2x128xf32>
      %75 = arith.mulf %66, %50 : vector<2x128xf32>
      %76 = arith.addf %74, %75 : vector<2x128xf32>
      %c0_20 = arith.constant 0 : index
      %c0_21 = arith.constant 0 : index
      %77 = vector.load %arg5[%c0_20, %c0_21] : memref<2x256xf32, #tpu.memory_space<vmem>>, vector<2x128xf32>
      tpu.vector_store %arg5[%c0_20, %c0_21], %47 {strides = array<i32>} : memref<2x256xf32, #tpu.memory_space<vmem>>, vector<2x128xf32>,
      %c0_22 = arith.constant 0 : index
      %c128 = arith.constant 128 : index
      %78 = vector.load %arg5[%c0_22, %c128] : memref<2x256xf32, #tpu.memory_space<vmem>>, vector<2x128xf32>
      tpu.vector_store %arg5[%c0_22, %c128], %76 {strides = array<i32>} : memref<2x256xf32, #tpu.memory_space<vmem>>, vector<2x128xf32>,
      %79 = arith.index_cast %4 : i32 to index
      %c0_23 = arith.constant 0 : index
      %c0_24 = arith.constant 0 : index
      %80 = vector.load %arg3[%79, %c0_23, %c0_24] : memref<8x2x128xf32, #tpu.memory_space<vmem>>, vector<1x2x128xf32>
      %81 = vector.shape_cast %80 : vector<1x2x128xf32> to vector<2x128xf32>
      %82 = vector.shape_cast %47 : vector<2x128xf32> to vector<1x2x128xf32>
      tpu.vector_store %arg3[%79, %c0_23, %c0_24], %82 {strides = array<i32>} : memref<8x2x128xf32, #tpu.memory_space<vmem>>, vector<1x2x128xf32>,
      %c7_i32_25 = arith.constant 7 : i32
      %83 = arith.subi %c7_i32_25, %4 : i32
      %84 = arith.index_cast %83 : i32 to index
      %c0_26 = arith.constant 0 : index
      %c0_27 = arith.constant 0 : index
      %85 = vector.load %arg4[%84, %c0_26, %c0_27] : memref<8x2x128xf32, #tpu.memory_space<vmem>>, vector<1x2x128xf32>
      %86 = vector.shape_cast %85 : vector<1x2x128xf32> to vector<2x128xf32>
      %87 = vector.shape_cast %76 : vector<2x128xf32> to vector<1x2x128xf32>
      tpu.vector_store %arg4[%84, %c0_26, %c0_27], %87 {strides = array<i32>} : memref<8x2x128xf32, #tpu.memory_space<vmem>>, vector<1x2x128xf32>,
      %c2_i32_28 = arith.constant 2 : i32
      %88 = arith.muli %arg6, %c2_i32_28 : i32
      %c1_i32_29 = arith.constant 1 : i32
      %89 = arith.addi %88, %c1_i32_29 : i32
      %c0_30 = arith.constant 0 : index
      %c0_31 = arith.constant 0 : index
      %90 = vector.load %arg5[%c0_30, %c0_31] : memref<2x256xf32, #tpu.memory_space<vmem>>, vector<2x256xf32>
      %91 = arith.truncf %90 : vector<2x256xf32> to vector<2x256xbf16>
      %c0_32 = arith.constant 0 : index
      %c0_33 = arith.constant 0 : index
      %92 = vector.load %arg1[%c0_32, %c0_33] : memref<256x768xbf16, #tpu.memory_space<vmem>>, vector<256x768xbf16>
      %cst_34 = arith.constant dense<0.000000e+00> : vector<2x768xf32>
      %93 = tpu.matmul %91, %92, %cst_34 {dimension_numbers = #tpu.dot_dimension_numbers<[1], [0], [0], [1], [0, 0, 1, 1], [], []>} : vector<2x256xbf16>, vector<256x768xbf16>, vector<2x768xf32> -> vector<2x768xf32>
      %c0_35 = arith.constant 0 : index
      %c0_36 = arith.constant 0 : index
      %94 = vector.load %arg2[%c0_35, %c0_36] : memref<1x768xf32, #tpu.memory_space<vmem>>, vector<1x768xf32>
      %95 = vector.broadcast %94 : vector<1x768xf32> to vector<2x768xf32>
      %96 = arith.addf %93, %95 : vector<2x768xf32>
      %97 = arith.index_cast %89 : i32 to index
      %c0_37 = arith.constant 0 : index
      %c0_38 = arith.constant 0 : index
      %98 = vector.load %arg0[%97, %c0_37, %c0_38] : memref<8x2x768xf32, #tpu.memory_space<vmem>>, vector<1x2x768xf32>
      %99 = vector.shape_cast %98 : vector<1x2x768xf32> to vector<2x768xf32>
      %c7_i32_39 = arith.constant 7 : i32
      %100 = arith.subi %c7_i32_39, %89 : i32
      %101 = arith.index_cast %100 : i32 to index
      %c0_40 = arith.constant 0 : index
      %c0_41 = arith.constant 0 : index
      %102 = vector.load %arg0[%101, %c0_40, %c0_41] : memref<8x2x768xf32, #tpu.memory_space<vmem>>, vector<1x2x768xf32>
      %103 = vector.shape_cast %102 : vector<1x2x768xf32> to vector<2x768xf32>
      %104 = vector.extract_strided_slice %99 {offsets = [0, 0], sizes = [2, 384], strides = [1, 1]} : vector<2x768xf32> to vector<2x384xf32>
      %105 = vector.extract_strided_slice %96 {offsets = [0, 0], sizes = [2, 384], strides = [1, 1]} : vector<2x768xf32> to vector<2x384xf32>
      %106 = vector.extract_strided_slice %90 {offsets = [0, 0], sizes = [2, 128], strides = [1, 1]} : vector<2x256xf32> to vector<2x128xf32>
      %107 = vector.extract_strided_slice %104 {offsets = [0, 0], sizes = [2, 128], strides = [1, 1]} : vector<2x384xf32> to vector<2x128xf32>
      %108 = vector.extract_strided_slice %105 {offsets = [0, 0], sizes = [2, 128], strides = [1, 1]} : vector<2x384xf32> to vector<2x128xf32>
      %109 = arith.addf %107, %108 : vector<2x128xf32>
      %110 = arith.negf %109 : vector<2x128xf32>
      %111 = math.exp %110 : vector<2x128xf32>
      %cst_42 = arith.constant 1.000000e+00 : f32
      %112 = vector.broadcast %cst_42 : f32 to vector<2x128xf32>
      %113 = arith.addf %112, %111 : vector<2x128xf32>
      %114 = arith.divf %112, %113 : vector<2x128xf32>
      %115 = vector.extract_strided_slice %104 {offsets = [0, 128], sizes = [2, 128], strides = [1, 1]} : vector<2x384xf32> to vector<2x128xf32>
      %116 = vector.extract_strided_slice %105 {offsets = [0, 128], sizes = [2, 128], strides = [1, 1]} : vector<2x384xf32> to vector<2x128xf32>
      %117 = arith.addf %115, %116 : vector<2x128xf32>
      %118 = arith.negf %117 : vector<2x128xf32>
      %119 = math.exp %118 : vector<2x128xf32>
      %cst_43 = arith.constant 1.000000e+00 : f32
      %120 = vector.broadcast %cst_43 : f32 to vector<2x128xf32>
      %121 = arith.addf %120, %119 : vector<2x128xf32>
      %122 = arith.divf %120, %121 : vector<2x128xf32>
      %123 = vector.extract_strided_slice %104 {offsets = [0, 256], sizes = [2, 128], strides = [1, 1]} : vector<2x384xf32> to vector<2x128xf32>
      %124 = vector.extract_strided_slice %105 {offsets = [0, 256], sizes = [2, 128], strides = [1, 1]} : vector<2x384xf32> to vector<2x128xf32>
      %125 = arith.mulf %114, %124 : vector<2x128xf32>
      %126 = arith.addf %123, %125 : vector<2x128xf32>
      %127 = math.tanh %126 : vector<2x128xf32>
      %cst_44 = arith.constant 1.000000e+00 : f32
      %128 = vector.broadcast %cst_44 : f32 to vector<2x128xf32>
      %129 = arith.subf %128, %122 : vector<2x128xf32>
      %130 = arith.mulf %129, %127 : vector<2x128xf32>
      %131 = arith.mulf %122, %106 : vector<2x128xf32>
      %132 = arith.addf %130, %131 : vector<2x128xf32>
      %133 = vector.extract_strided_slice %103 {offsets = [0, 384], sizes = [2, 384], strides = [1, 1]} : vector<2x768xf32> to vector<2x384xf32>
      %134 = vector.extract_strided_slice %96 {offsets = [0, 384], sizes = [2, 384], strides = [1, 1]} : vector<2x768xf32> to vector<2x384xf32>
      %135 = vector.extract_strided_slice %90 {offsets = [0, 128], sizes = [2, 128], strides = [1, 1]} : vector<2x256xf32> to vector<2x128xf32>
      %136 = vector.extract_strided_slice %133 {offsets = [0, 0], sizes = [2, 128], strides = [1, 1]} : vector<2x384xf32> to vector<2x128xf32>
      %137 = vector.extract_strided_slice %134 {offsets = [0, 0], sizes = [2, 128], strides = [1, 1]} : vector<2x384xf32> to vector<2x128xf32>
      %138 = arith.addf %136, %137 : vector<2x128xf32>
      %139 = arith.negf %138 : vector<2x128xf32>
      %140 = math.exp %139 : vector<2x128xf32>
      %cst_45 = arith.constant 1.000000e+00 : f32
      %141 = vector.broadcast %cst_45 : f32 to vector<2x128xf32>
      %142 = arith.addf %141, %140 : vector<2x128xf32>
      %143 = arith.divf %141, %142 : vector<2x128xf32>
      %144 = vector.extract_strided_slice %133 {offsets = [0, 128], sizes = [2, 128], strides = [1, 1]} : vector<2x384xf32> to vector<2x128xf32>
      %145 = vector.extract_strided_slice %134 {offsets = [0, 128], sizes = [2, 128], strides = [1, 1]} : vector<2x384xf32> to vector<2x128xf32>
      %146 = arith.addf %144, %145 : vector<2x128xf32>
      %147 = arith.negf %146 : vector<2x128xf32>
      %148 = math.exp %147 : vector<2x128xf32>
      %cst_46 = arith.constant 1.000000e+00 : f32
      %149 = vector.broadcast %cst_46 : f32 to vector<2x128xf32>
      %150 = arith.addf %149, %148 : vector<2x128xf32>
      %151 = arith.divf %149, %150 : vector<2x128xf32>
      %152 = vector.extract_strided_slice %133 {offsets = [0, 256], sizes = [2, 128], strides = [1, 1]} : vector<2x384xf32> to vector<2x128xf32>
      %153 = vector.extract_strided_slice %134 {offsets = [0, 256], sizes = [2, 128], strides = [1, 1]} : vector<2x384xf32> to vector<2x128xf32>
      %154 = arith.mulf %143, %153 : vector<2x128xf32>
      %155 = arith.addf %152, %154 : vector<2x128xf32>
      %156 = math.tanh %155 : vector<2x128xf32>
      %cst_47 = arith.constant 1.000000e+00 : f32
      %157 = vector.broadcast %cst_47 : f32 to vector<2x128xf32>
      %158 = arith.subf %157, %151 : vector<2x128xf32>
      %159 = arith.mulf %158, %156 : vector<2x128xf32>
      %160 = arith.mulf %151, %135 : vector<2x128xf32>
      %161 = arith.addf %159, %160 : vector<2x128xf32>
      %c0_48 = arith.constant 0 : index
      %c0_49 = arith.constant 0 : index
      %162 = vector.load %arg5[%c0_48, %c0_49] : memref<2x256xf32, #tpu.memory_space<vmem>>, vector<2x128xf32>
      tpu.vector_store %arg5[%c0_48, %c0_49], %132 {strides = array<i32>} : memref<2x256xf32, #tpu.memory_space<vmem>>, vector<2x128xf32>,
      %c0_50 = arith.constant 0 : index
      %c128_51 = arith.constant 128 : index
      %163 = vector.load %arg5[%c0_50, %c128_51] : memref<2x256xf32, #tpu.memory_space<vmem>>, vector<2x128xf32>
      tpu.vector_store %arg5[%c0_50, %c128_51], %161 {strides = array<i32>} : memref<2x256xf32, #tpu.memory_space<vmem>>, vector<2x128xf32>,
      %164 = arith.index_cast %89 : i32 to index
      %c0_52 = arith.constant 0 : index
      %c0_53 = arith.constant 0 : index
      %165 = vector.load %arg3[%164, %c0_52, %c0_53] : memref<8x2x128xf32, #tpu.memory_space<vmem>>, vector<1x2x128xf32>
      %166 = vector.shape_cast %165 : vector<1x2x128xf32> to vector<2x128xf32>
      %167 = vector.shape_cast %132 : vector<2x128xf32> to vector<1x2x128xf32>
      tpu.vector_store %arg3[%164, %c0_52, %c0_53], %167 {strides = array<i32>} : memref<8x2x128xf32, #tpu.memory_space<vmem>>, vector<1x2x128xf32>,
      %c7_i32_54 = arith.constant 7 : i32
      %168 = arith.subi %c7_i32_54, %89 : i32
      %169 = arith.index_cast %168 : i32 to index
      %c0_55 = arith.constant 0 : index
      %c0_56 = arith.constant 0 : index
      %170 = vector.load %arg4[%169, %c0_55, %c0_56] : memref<8x2x128xf32, #tpu.memory_space<vmem>>, vector<1x2x128xf32>
      %171 = vector.shape_cast %170 : vector<1x2x128xf32> to vector<2x128xf32>
      %172 = vector.shape_cast %161 : vector<2x128xf32> to vector<1x2x128xf32>
      tpu.vector_store %arg4[%169, %c0_55, %c0_56], %172 {strides = array<i32>} : memref<8x2x128xf32, #tpu.memory_space<vmem>>, vector<1x2x128xf32>,
    }
    %c4_i32_1 = arith.constant 4 : i32
    return
  }
}

module attributes {stable_mosaic.version = 11 : i64} {
  func.func @_mm_kernel(%arg0: i32, %arg1: i32, %arg2: i32, %arg3: memref<16x128xbf16, #tpu.memory_space<vmem>>, %arg4: memref<128x256xbf16, #tpu.memory_space<vmem>>, %arg5: memref<1x256xf32, #tpu.memory_space<vmem>>, %arg6: memref<1x128xf32, #tpu.memory_space<vmem>>, %arg7: memref<1x128xf32, #tpu.memory_space<vmem>>, %arg8: memref<16x256xf32, #tpu.memory_space<vmem>>, %arg9: memref<16x256xf32, #tpu.memory_space<vmem>>) attributes {dimension_semantics = [#tpu.dimension_semantics<parallel>, #tpu.dimension_semantics<parallel>, #tpu.dimension_semantics<arbitrary>], iteration_bounds = array<i64: 1, 3, 1>, scalar_prefetch = 0 : i64, scratch_operands = 1 : i64, tpu.core_type = #tpu.core_type<tc>, window_params = [{transform_indices = @transform_0, window_bounds = array<i64: 16, 128>}, {transform_indices = @transform_1, window_bounds = array<i64: 128, 256>}, {transform_indices = @transform_2, window_bounds = array<i64: 1, 256>}, {transform_indices = @transform_3, window_bounds = array<i64: 1, 128>}, {transform_indices = @transform_4, window_bounds = array<i64: 1, 128>}, {transform_indices = @transform_5, window_bounds = array<i64: 16, 256>}]} {
    %c0_i32 = arith.constant 0 : i32
    %0 = arith.cmpi eq, %arg2, %c0_i32 : i32
    %1 = arith.extui %0 : i1 to i32
    %c0_i32_0 = arith.constant 0 : i32
    %2 = arith.cmpi ne, %1, %c0_i32_0 : i32
    scf.if %2 {
      %cst_23 = arith.constant 0.000000e+00 : f32
      %48 = vector.broadcast %cst_23 : f32 to vector<16x256xf32>
      %c0_24 = arith.constant 0 : index
      %c0_25 = arith.constant 0 : index
      %49 = vector.load %arg9[%c0_24, %c0_25] : memref<16x256xf32, #tpu.memory_space<vmem>>, vector<16x256xf32>
      tpu.vector_store %arg9[%c0_24, %c0_25], %48 {strides = array<i32>} : memref<16x256xf32, #tpu.memory_space<vmem>>, vector<16x256xf32>,
    } else {
    }
    %c0 = arith.constant 0 : index
    %c0_1 = arith.constant 0 : index
    %3 = vector.load %arg3[%c0, %c0_1] : memref<16x128xbf16, #tpu.memory_space<vmem>>, vector<16x128xbf16>
    %4 = arith.extf %3 : vector<16x128xbf16> to vector<16x128xf32>
    %cst = arith.constant dense<0.000000e+00> : vector<16xf32>
    %5 = vector.multi_reduction <add>, %4, %cst [1] : vector<16x128xf32> to vector<16xf32>
    %6 = vector.shape_cast %5 : vector<16xf32> to vector<16x1xf32>
    %cst_2 = arith.constant 1.562500e-02 : f32
    %7 = vector.broadcast %cst_2 : f32 to vector<16x1xf32>
    %8 = arith.mulf %6, %7 : vector<16x1xf32>
    %9 = arith.mulf %4, %4 : vector<16x128xf32>
    %cst_3 = arith.constant dense<0.000000e+00> : vector<16xf32>
    %10 = vector.multi_reduction <add>, %9, %cst_3 [1] : vector<16x128xf32> to vector<16xf32>
    %11 = vector.shape_cast %10 : vector<16xf32> to vector<16x1xf32>
    %cst_4 = arith.constant 1.562500e-02 : f32
    %12 = vector.broadcast %cst_4 : f32 to vector<16x1xf32>
    %13 = arith.mulf %11, %12 : vector<16x1xf32>
    %14 = arith.mulf %8, %8 : vector<16x1xf32>
    %15 = arith.subf %13, %14 : vector<16x1xf32>
    %cst_5 = arith.constant 0.000000e+00 : f32
    %16 = vector.broadcast %cst_5 : f32 to vector<16x1xf32>
    %17 = arith.maximumf %15, %16 : vector<16x1xf32>
    %18 = vector.broadcast %8 : vector<16x1xf32> to vector<16x128xf32>
    %19 = arith.subf %4, %18 : vector<16x128xf32>
    %cst_6 = arith.constant 9.99999974E-6 : f32
    %20 = vector.broadcast %cst_6 : f32 to vector<16x1xf32>
    %21 = arith.addf %17, %20 : vector<16x1xf32>
    %22 = math.rsqrt %21 : vector<16x1xf32>
    %23 = vector.broadcast %22 : vector<16x1xf32> to vector<16x128xf32>
    %24 = arith.mulf %19, %23 : vector<16x128xf32>
    %c0_7 = arith.constant 0 : index
    %c0_8 = arith.constant 0 : index
    %25 = vector.load %arg6[%c0_7, %c0_8] : memref<1x128xf32, #tpu.memory_space<vmem>>, vector<1x128xf32>
    %26 = vector.broadcast %25 : vector<1x128xf32> to vector<16x128xf32>
    %27 = arith.mulf %24, %26 : vector<16x128xf32>
    %c0_9 = arith.constant 0 : index
    %c0_10 = arith.constant 0 : index
    %28 = vector.load %arg7[%c0_9, %c0_10] : memref<1x128xf32, #tpu.memory_space<vmem>>, vector<1x128xf32>
    %29 = vector.broadcast %28 : vector<1x128xf32> to vector<16x128xf32>
    %30 = arith.addf %27, %29 : vector<16x128xf32>
    %cst_11 = arith.constant 5.000000e-01 : f32
    %31 = vector.broadcast %cst_11 : f32 to vector<16x128xf32>
    %32 = arith.mulf %31, %30 : vector<16x128xf32>
    %cst_12 = arith.constant 0.707106769 : f32
    %33 = vector.broadcast %cst_12 : f32 to vector<16x128xf32>
    %34 = arith.mulf %30, %33 : vector<16x128xf32>
    %35 = math.erf %34 : vector<16x128xf32>
    %cst_13 = arith.constant 1.000000e+00 : f32
    %36 = vector.broadcast %cst_13 : f32 to vector<16x128xf32>
    %37 = arith.addf %36, %35 : vector<16x128xf32>
    %38 = arith.mulf %32, %37 : vector<16x128xf32>
    %39 = arith.truncf %38 : vector<16x128xf32> to vector<16x128xbf16>
    %c0_14 = arith.constant 0 : index
    %c0_15 = arith.constant 0 : index
    %40 = vector.load %arg9[%c0_14, %c0_15] : memref<16x256xf32, #tpu.memory_space<vmem>>, vector<16x256xf32>
    %c0_16 = arith.constant 0 : index
    %c0_17 = arith.constant 0 : index
    %41 = vector.load %arg4[%c0_16, %c0_17] : memref<128x256xbf16, #tpu.memory_space<vmem>>, vector<128x256xbf16>
    %cst_18 = arith.constant dense<0.000000e+00> : vector<16x256xf32>
    %42 = tpu.matmul %39, %41, %cst_18 {dimension_numbers = #tpu.dot_dimension_numbers<[1], [0], [0], [1], [0, 0, 1, 1], [], []>} : vector<16x128xbf16>, vector<128x256xbf16>, vector<16x256xf32> -> vector<16x256xf32>
    %43 = arith.addf %40, %42 : vector<16x256xf32>
    %c0_19 = arith.constant 0 : index
    %c0_20 = arith.constant 0 : index
    %44 = vector.load %arg9[%c0_19, %c0_20] : memref<16x256xf32, #tpu.memory_space<vmem>>, vector<16x256xf32>
    tpu.vector_store %arg9[%c0_19, %c0_20], %43 {strides = array<i32>} : memref<16x256xf32, #tpu.memory_space<vmem>>, vector<16x256xf32>,
    %c0_i32_21 = arith.constant 0 : i32
    %45 = arith.cmpi eq, %arg2, %c0_i32_21 : i32
    %46 = arith.extui %45 : i1 to i32
    %c0_i32_22 = arith.constant 0 : i32
    %47 = arith.cmpi ne, %46, %c0_i32_22 : i32
    scf.if %47 {
      %c0_23 = arith.constant 0 : index
      %c0_24 = arith.constant 0 : index
      %48 = vector.load %arg9[%c0_23, %c0_24] : memref<16x256xf32, #tpu.memory_space<vmem>>, vector<16x256xf32>
      %c0_25 = arith.constant 0 : index
      %c0_26 = arith.constant 0 : index
      %49 = vector.load %arg5[%c0_25, %c0_26] : memref<1x256xf32, #tpu.memory_space<vmem>>, vector<1x256xf32>
      %50 = vector.broadcast %49 : vector<1x256xf32> to vector<16x256xf32>
      %51 = arith.addf %48, %50 : vector<16x256xf32>
      %c0_27 = arith.constant 0 : index
      %c0_28 = arith.constant 0 : index
      %52 = vector.load %arg8[%c0_27, %c0_28] : memref<16x256xf32, #tpu.memory_space<vmem>>, vector<16x256xf32>
      tpu.vector_store %arg8[%c0_27, %c0_28], %51 {strides = array<i32>} : memref<16x256xf32, #tpu.memory_space<vmem>>, vector<16x256xf32>,
    } else {
    }
    return
  }
  func.func @transform_0(%arg0: i32, %arg1: i32, %arg2: i32) -> (i32, i32) {
    %c0_i32 = arith.constant 0 : i32
    return %arg0, %arg2 : i32, i32
  }
  func.func @transform_1(%arg0: i32, %arg1: i32, %arg2: i32) -> (i32, i32) {
    %c0_i32 = arith.constant 0 : i32
    return %arg2, %arg1 : i32, i32
  }
  func.func @transform_2(%arg0: i32, %arg1: i32, %arg2: i32) -> (i32, i32) {
    %c0_i32 = arith.constant 0 : i32
    %c0_i32_0 = arith.constant 0 : i32
    return %c0_i32, %arg1 : i32, i32
  }
  func.func @transform_3(%arg0: i32, %arg1: i32, %arg2: i32) -> (i32, i32) {
    %c0_i32 = arith.constant 0 : i32
    %c0_i32_0 = arith.constant 0 : i32
    return %c0_i32, %arg2 : i32, i32
  }
  func.func @transform_4(%arg0: i32, %arg1: i32, %arg2: i32) -> (i32, i32) {
    %c0_i32 = arith.constant 0 : i32
    %c0_i32_0 = arith.constant 0 : i32
    return %c0_i32, %arg2 : i32, i32
  }
  func.func @transform_5(%arg0: i32, %arg1: i32, %arg2: i32) -> (i32, i32) {
    %c0_i32 = arith.constant 0 : i32
    return %arg0, %arg1 : i32, i32
  }
}

module attributes {stable_mosaic.version = 11 : i64} {
  func.func @_bigru_kernel(%arg0: memref<2x8x768xf32, #tpu.memory_space<vmem>>, %arg1: memref<256x768xbf16, #tpu.memory_space<vmem>>, %arg2: memref<1x768xf32, #tpu.memory_space<vmem>>, %arg3: memref<2x8x128xf32, #tpu.memory_space<vmem>>, %arg4: memref<2x8x128xf32, #tpu.memory_space<vmem>>, %arg5: memref<8x256xf32, #tpu.memory_space<vmem>>) attributes {dimension_semantics = [], scalar_prefetch = 0 : i64, scratch_operands = 1 : i64, tpu.core_type = #tpu.core_type<tc>} {
    %cst = arith.constant 0.000000e+00 : f32
    %0 = vector.broadcast %cst : f32 to vector<8x256xf32>
    %c0 = arith.constant 0 : index
    %c0_0 = arith.constant 0 : index
    %1 = vector.load %arg5[%c0, %c0_0] : memref<8x256xf32, #tpu.memory_space<vmem>>, vector<8x256xf32>
    tpu.vector_store %arg5[%c0, %c0_0], %0 {strides = array<i32>} : memref<8x256xf32, #tpu.memory_space<vmem>>, vector<8x256xf32>,
    %c0_i32 = arith.constant 0 : i32
    %c2_i32 = arith.constant 2 : i32
    %2 = arith.muli %c0_i32, %c2_i32 : i32
    %c0_i32_1 = arith.constant 0 : i32
    %3 = arith.addi %2, %c0_i32_1 : i32
    %c0_2 = arith.constant 0 : index
    %c0_3 = arith.constant 0 : index
    %4 = vector.load %arg5[%c0_2, %c0_3] : memref<8x256xf32, #tpu.memory_space<vmem>>, vector<8x256xf32>
    %5 = arith.truncf %4 : vector<8x256xf32> to vector<8x256xbf16>
    %c0_4 = arith.constant 0 : index
    %c0_5 = arith.constant 0 : index
    %6 = vector.load %arg1[%c0_4, %c0_5] : memref<256x768xbf16, #tpu.memory_space<vmem>>, vector<256x768xbf16>
    %cst_6 = arith.constant dense<0.000000e+00> : vector<8x768xf32>
    %7 = tpu.matmul %5, %6, %cst_6 {dimension_numbers = #tpu.dot_dimension_numbers<[1], [0], [0], [1], [0, 0, 1, 1], [], []>} : vector<8x256xbf16>, vector<256x768xbf16>, vector<8x768xf32> -> vector<8x768xf32>
    %c0_7 = arith.constant 0 : index
    %c0_8 = arith.constant 0 : index
    %8 = vector.load %arg2[%c0_7, %c0_8] : memref<1x768xf32, #tpu.memory_space<vmem>>, vector<1x768xf32>
    %9 = vector.broadcast %8 : vector<1x768xf32> to vector<8x768xf32>
    %10 = arith.addf %7, %9 : vector<8x768xf32>
    %11 = arith.index_cast %3 : i32 to index
    %c0_9 = arith.constant 0 : index
    %c0_10 = arith.constant 0 : index
    %12 = vector.load %arg0[%11, %c0_9, %c0_10] : memref<2x8x768xf32, #tpu.memory_space<vmem>>, vector<1x8x768xf32>
    %13 = vector.shape_cast %12 : vector<1x8x768xf32> to vector<8x768xf32>
    %c1_i32 = arith.constant 1 : i32
    %14 = arith.subi %c1_i32, %3 : i32
    %15 = arith.index_cast %14 : i32 to index
    %c0_11 = arith.constant 0 : index
    %c0_12 = arith.constant 0 : index
    %16 = vector.load %arg0[%15, %c0_11, %c0_12] : memref<2x8x768xf32, #tpu.memory_space<vmem>>, vector<1x8x768xf32>
    %17 = vector.shape_cast %16 : vector<1x8x768xf32> to vector<8x768xf32>
    %18 = vector.extract_strided_slice %13 {offsets = [0, 0], sizes = [8, 384], strides = [1, 1]} : vector<8x768xf32> to vector<8x384xf32>
    %19 = vector.extract_strided_slice %10 {offsets = [0, 0], sizes = [8, 384], strides = [1, 1]} : vector<8x768xf32> to vector<8x384xf32>
    %20 = vector.extract_strided_slice %4 {offsets = [0, 0], sizes = [8, 128], strides = [1, 1]} : vector<8x256xf32> to vector<8x128xf32>
    %21 = vector.extract_strided_slice %18 {offsets = [0, 0], sizes = [8, 128], strides = [1, 1]} : vector<8x384xf32> to vector<8x128xf32>
    %22 = vector.extract_strided_slice %19 {offsets = [0, 0], sizes = [8, 128], strides = [1, 1]} : vector<8x384xf32> to vector<8x128xf32>
    %23 = arith.addf %21, %22 : vector<8x128xf32>
    %24 = arith.negf %23 : vector<8x128xf32>
    %25 = math.exp %24 : vector<8x128xf32>
    %cst_13 = arith.constant 1.000000e+00 : f32
    %26 = vector.broadcast %cst_13 : f32 to vector<8x128xf32>
    %27 = arith.addf %26, %25 : vector<8x128xf32>
    %28 = arith.divf %26, %27 : vector<8x128xf32>
    %29 = vector.extract_strided_slice %18 {offsets = [0, 128], sizes = [8, 128], strides = [1, 1]} : vector<8x384xf32> to vector<8x128xf32>
    %30 = vector.extract_strided_slice %19 {offsets = [0, 128], sizes = [8, 128], strides = [1, 1]} : vector<8x384xf32> to vector<8x128xf32>
    %31 = arith.addf %29, %30 : vector<8x128xf32>
    %32 = arith.negf %31 : vector<8x128xf32>
    %33 = math.exp %32 : vector<8x128xf32>
    %cst_14 = arith.constant 1.000000e+00 : f32
    %34 = vector.broadcast %cst_14 : f32 to vector<8x128xf32>
    %35 = arith.addf %34, %33 : vector<8x128xf32>
    %36 = arith.divf %34, %35 : vector<8x128xf32>
    %37 = vector.extract_strided_slice %18 {offsets = [0, 256], sizes = [8, 128], strides = [1, 1]} : vector<8x384xf32> to vector<8x128xf32>
    %38 = vector.extract_strided_slice %19 {offsets = [0, 256], sizes = [8, 128], strides = [1, 1]} : vector<8x384xf32> to vector<8x128xf32>
    %39 = arith.mulf %28, %38 : vector<8x128xf32>
    %40 = arith.addf %37, %39 : vector<8x128xf32>
    %41 = math.tanh %40 : vector<8x128xf32>
    %cst_15 = arith.constant 1.000000e+00 : f32
    %42 = vector.broadcast %cst_15 : f32 to vector<8x128xf32>
    %43 = arith.subf %42, %36 : vector<8x128xf32>
    %44 = arith.mulf %43, %41 : vector<8x128xf32>
    %45 = arith.mulf %36, %20 : vector<8x128xf32>
    %46 = arith.addf %44, %45 : vector<8x128xf32>
    %47 = vector.extract_strided_slice %17 {offsets = [0, 384], sizes = [8, 384], strides = [1, 1]} : vector<8x768xf32> to vector<8x384xf32>
    %48 = vector.extract_strided_slice %10 {offsets = [0, 384], sizes = [8, 384], strides = [1, 1]} : vector<8x768xf32> to vector<8x384xf32>
    %49 = vector.extract_strided_slice %4 {offsets = [0, 128], sizes = [8, 128], strides = [1, 1]} : vector<8x256xf32> to vector<8x128xf32>
    %50 = vector.extract_strided_slice %47 {offsets = [0, 0], sizes = [8, 128], strides = [1, 1]} : vector<8x384xf32> to vector<8x128xf32>
    %51 = vector.extract_strided_slice %48 {offsets = [0, 0], sizes = [8, 128], strides = [1, 1]} : vector<8x384xf32> to vector<8x128xf32>
    %52 = arith.addf %50, %51 : vector<8x128xf32>
    %53 = arith.negf %52 : vector<8x128xf32>
    %54 = math.exp %53 : vector<8x128xf32>
    %cst_16 = arith.constant 1.000000e+00 : f32
    %55 = vector.broadcast %cst_16 : f32 to vector<8x128xf32>
    %56 = arith.addf %55, %54 : vector<8x128xf32>
    %57 = arith.divf %55, %56 : vector<8x128xf32>
    %58 = vector.extract_strided_slice %47 {offsets = [0, 128], sizes = [8, 128], strides = [1, 1]} : vector<8x384xf32> to vector<8x128xf32>
    %59 = vector.extract_strided_slice %48 {offsets = [0, 128], sizes = [8, 128], strides = [1, 1]} : vector<8x384xf32> to vector<8x128xf32>
    %60 = arith.addf %58, %59 : vector<8x128xf32>
    %61 = arith.negf %60 : vector<8x128xf32>
    %62 = math.exp %61 : vector<8x128xf32>
    %cst_17 = arith.constant 1.000000e+00 : f32
    %63 = vector.broadcast %cst_17 : f32 to vector<8x128xf32>
    %64 = arith.addf %63, %62 : vector<8x128xf32>
    %65 = arith.divf %63, %64 : vector<8x128xf32>
    %66 = vector.extract_strided_slice %47 {offsets = [0, 256], sizes = [8, 128], strides = [1, 1]} : vector<8x384xf32> to vector<8x128xf32>
    %67 = vector.extract_strided_slice %48 {offsets = [0, 256], sizes = [8, 128], strides = [1, 1]} : vector<8x384xf32> to vector<8x128xf32>
    %68 = arith.mulf %57, %67 : vector<8x128xf32>
    %69 = arith.addf %66, %68 : vector<8x128xf32>
    %70 = math.tanh %69 : vector<8x128xf32>
    %cst_18 = arith.constant 1.000000e+00 : f32
    %71 = vector.broadcast %cst_18 : f32 to vector<8x128xf32>
    %72 = arith.subf %71, %65 : vector<8x128xf32>
    %73 = arith.mulf %72, %70 : vector<8x128xf32>
    %74 = arith.mulf %65, %49 : vector<8x128xf32>
    %75 = arith.addf %73, %74 : vector<8x128xf32>
    %c0_19 = arith.constant 0 : index
    %c0_20 = arith.constant 0 : index
    %76 = vector.load %arg5[%c0_19, %c0_20] : memref<8x256xf32, #tpu.memory_space<vmem>>, vector<8x128xf32>
    tpu.vector_store %arg5[%c0_19, %c0_20], %46 {strides = array<i32>} : memref<8x256xf32, #tpu.memory_space<vmem>>, vector<8x128xf32>,
    %c0_21 = arith.constant 0 : index
    %c128 = arith.constant 128 : index
    %77 = vector.load %arg5[%c0_21, %c128] : memref<8x256xf32, #tpu.memory_space<vmem>>, vector<8x128xf32>
    tpu.vector_store %arg5[%c0_21, %c128], %75 {strides = array<i32>} : memref<8x256xf32, #tpu.memory_space<vmem>>, vector<8x128xf32>,
    %78 = arith.index_cast %3 : i32 to index
    %c0_22 = arith.constant 0 : index
    %c0_23 = arith.constant 0 : index
    %79 = vector.load %arg3[%78, %c0_22, %c0_23] : memref<2x8x128xf32, #tpu.memory_space<vmem>>, vector<1x8x128xf32>
    %80 = vector.shape_cast %79 : vector<1x8x128xf32> to vector<8x128xf32>
    %81 = vector.shape_cast %46 : vector<8x128xf32> to vector<1x8x128xf32>
    tpu.vector_store %arg3[%78, %c0_22, %c0_23], %81 {strides = array<i32>} : memref<2x8x128xf32, #tpu.memory_space<vmem>>, vector<1x8x128xf32>,
    %c1_i32_24 = arith.constant 1 : i32
    %82 = arith.subi %c1_i32_24, %3 : i32
    %83 = arith.index_cast %82 : i32 to index
    %c0_25 = arith.constant 0 : index
    %c0_26 = arith.constant 0 : index
    %84 = vector.load %arg4[%83, %c0_25, %c0_26] : memref<2x8x128xf32, #tpu.memory_space<vmem>>, vector<1x8x128xf32>
    %85 = vector.shape_cast %84 : vector<1x8x128xf32> to vector<8x128xf32>
    %86 = vector.shape_cast %75 : vector<8x128xf32> to vector<1x8x128xf32>
    tpu.vector_store %arg4[%83, %c0_25, %c0_26], %86 {strides = array<i32>} : memref<2x8x128xf32, #tpu.memory_space<vmem>>, vector<1x8x128xf32>,
    %c2_i32_27 = arith.constant 2 : i32
    %87 = arith.muli %c0_i32, %c2_i32_27 : i32
    %c1_i32_28 = arith.constant 1 : i32
    %88 = arith.addi %87, %c1_i32_28 : i32
    %c0_29 = arith.constant 0 : index
    %c0_30 = arith.constant 0 : index
    %89 = vector.load %arg5[%c0_29, %c0_30] : memref<8x256xf32, #tpu.memory_space<vmem>>, vector<8x256xf32>
    %90 = arith.truncf %89 : vector<8x256xf32> to vector<8x256xbf16>
    %c0_31 = arith.constant 0 : index
    %c0_32 = arith.constant 0 : index
    %91 = vector.load %arg1[%c0_31, %c0_32] : memref<256x768xbf16, #tpu.memory_space<vmem>>, vector<256x768xbf16>
    %cst_33 = arith.constant dense<0.000000e+00> : vector<8x768xf32>
    %92 = tpu.matmul %90, %91, %cst_33 {dimension_numbers = #tpu.dot_dimension_numbers<[1], [0], [0], [1], [0, 0, 1, 1], [], []>} : vector<8x256xbf16>, vector<256x768xbf16>, vector<8x768xf32> -> vector<8x768xf32>
    %c0_34 = arith.constant 0 : index
    %c0_35 = arith.constant 0 : index
    %93 = vector.load %arg2[%c0_34, %c0_35] : memref<1x768xf32, #tpu.memory_space<vmem>>, vector<1x768xf32>
    %94 = vector.broadcast %93 : vector<1x768xf32> to vector<8x768xf32>
    %95 = arith.addf %92, %94 : vector<8x768xf32>
    %96 = arith.index_cast %88 : i32 to index
    %c0_36 = arith.constant 0 : index
    %c0_37 = arith.constant 0 : index
    %97 = vector.load %arg0[%96, %c0_36, %c0_37] : memref<2x8x768xf32, #tpu.memory_space<vmem>>, vector<1x8x768xf32>
    %98 = vector.shape_cast %97 : vector<1x8x768xf32> to vector<8x768xf32>
    %c1_i32_38 = arith.constant 1 : i32
    %99 = arith.subi %c1_i32_38, %88 : i32
    %100 = arith.index_cast %99 : i32 to index
    %c0_39 = arith.constant 0 : index
    %c0_40 = arith.constant 0 : index
    %101 = vector.load %arg0[%100, %c0_39, %c0_40] : memref<2x8x768xf32, #tpu.memory_space<vmem>>, vector<1x8x768xf32>
    %102 = vector.shape_cast %101 : vector<1x8x768xf32> to vector<8x768xf32>
    %103 = vector.extract_strided_slice %98 {offsets = [0, 0], sizes = [8, 384], strides = [1, 1]} : vector<8x768xf32> to vector<8x384xf32>
    %104 = vector.extract_strided_slice %95 {offsets = [0, 0], sizes = [8, 384], strides = [1, 1]} : vector<8x768xf32> to vector<8x384xf32>
    %105 = vector.extract_strided_slice %89 {offsets = [0, 0], sizes = [8, 128], strides = [1, 1]} : vector<8x256xf32> to vector<8x128xf32>
    %106 = vector.extract_strided_slice %103 {offsets = [0, 0], sizes = [8, 128], strides = [1, 1]} : vector<8x384xf32> to vector<8x128xf32>
    %107 = vector.extract_strided_slice %104 {offsets = [0, 0], sizes = [8, 128], strides = [1, 1]} : vector<8x384xf32> to vector<8x128xf32>
    %108 = arith.addf %106, %107 : vector<8x128xf32>
    %109 = arith.negf %108 : vector<8x128xf32>
    %110 = math.exp %109 : vector<8x128xf32>
    %cst_41 = arith.constant 1.000000e+00 : f32
    %111 = vector.broadcast %cst_41 : f32 to vector<8x128xf32>
    %112 = arith.addf %111, %110 : vector<8x128xf32>
    %113 = arith.divf %111, %112 : vector<8x128xf32>
    %114 = vector.extract_strided_slice %103 {offsets = [0, 128], sizes = [8, 128], strides = [1, 1]} : vector<8x384xf32> to vector<8x128xf32>
    %115 = vector.extract_strided_slice %104 {offsets = [0, 128], sizes = [8, 128], strides = [1, 1]} : vector<8x384xf32> to vector<8x128xf32>
    %116 = arith.addf %114, %115 : vector<8x128xf32>
    %117 = arith.negf %116 : vector<8x128xf32>
    %118 = math.exp %117 : vector<8x128xf32>
    %cst_42 = arith.constant 1.000000e+00 : f32
    %119 = vector.broadcast %cst_42 : f32 to vector<8x128xf32>
    %120 = arith.addf %119, %118 : vector<8x128xf32>
    %121 = arith.divf %119, %120 : vector<8x128xf32>
    %122 = vector.extract_strided_slice %103 {offsets = [0, 256], sizes = [8, 128], strides = [1, 1]} : vector<8x384xf32> to vector<8x128xf32>
    %123 = vector.extract_strided_slice %104 {offsets = [0, 256], sizes = [8, 128], strides = [1, 1]} : vector<8x384xf32> to vector<8x128xf32>
    %124 = arith.mulf %113, %123 : vector<8x128xf32>
    %125 = arith.addf %122, %124 : vector<8x128xf32>
    %126 = math.tanh %125 : vector<8x128xf32>
    %cst_43 = arith.constant 1.000000e+00 : f32
    %127 = vector.broadcast %cst_43 : f32 to vector<8x128xf32>
    %128 = arith.subf %127, %121 : vector<8x128xf32>
    %129 = arith.mulf %128, %126 : vector<8x128xf32>
    %130 = arith.mulf %121, %105 : vector<8x128xf32>
    %131 = arith.addf %129, %130 : vector<8x128xf32>
    %132 = vector.extract_strided_slice %102 {offsets = [0, 384], sizes = [8, 384], strides = [1, 1]} : vector<8x768xf32> to vector<8x384xf32>
    %133 = vector.extract_strided_slice %95 {offsets = [0, 384], sizes = [8, 384], strides = [1, 1]} : vector<8x768xf32> to vector<8x384xf32>
    %134 = vector.extract_strided_slice %89 {offsets = [0, 128], sizes = [8, 128], strides = [1, 1]} : vector<8x256xf32> to vector<8x128xf32>
    %135 = vector.extract_strided_slice %132 {offsets = [0, 0], sizes = [8, 128], strides = [1, 1]} : vector<8x384xf32> to vector<8x128xf32>
    %136 = vector.extract_strided_slice %133 {offsets = [0, 0], sizes = [8, 128], strides = [1, 1]} : vector<8x384xf32> to vector<8x128xf32>
    %137 = arith.addf %135, %136 : vector<8x128xf32>
    %138 = arith.negf %137 : vector<8x128xf32>
    %139 = math.exp %138 : vector<8x128xf32>
    %cst_44 = arith.constant 1.000000e+00 : f32
    %140 = vector.broadcast %cst_44 : f32 to vector<8x128xf32>
    %141 = arith.addf %140, %139 : vector<8x128xf32>
    %142 = arith.divf %140, %141 : vector<8x128xf32>
    %143 = vector.extract_strided_slice %132 {offsets = [0, 128], sizes = [8, 128], strides = [1, 1]} : vector<8x384xf32> to vector<8x128xf32>
    %144 = vector.extract_strided_slice %133 {offsets = [0, 128], sizes = [8, 128], strides = [1, 1]} : vector<8x384xf32> to vector<8x128xf32>
    %145 = arith.addf %143, %144 : vector<8x128xf32>
    %146 = arith.negf %145 : vector<8x128xf32>
    %147 = math.exp %146 : vector<8x128xf32>
    %cst_45 = arith.constant 1.000000e+00 : f32
    %148 = vector.broadcast %cst_45 : f32 to vector<8x128xf32>
    %149 = arith.addf %148, %147 : vector<8x128xf32>
    %150 = arith.divf %148, %149 : vector<8x128xf32>
    %151 = vector.extract_strided_slice %132 {offsets = [0, 256], sizes = [8, 128], strides = [1, 1]} : vector<8x384xf32> to vector<8x128xf32>
    %152 = vector.extract_strided_slice %133 {offsets = [0, 256], sizes = [8, 128], strides = [1, 1]} : vector<8x384xf32> to vector<8x128xf32>
    %153 = arith.mulf %142, %152 : vector<8x128xf32>
    %154 = arith.addf %151, %153 : vector<8x128xf32>
    %155 = math.tanh %154 : vector<8x128xf32>
    %cst_46 = arith.constant 1.000000e+00 : f32
    %156 = vector.broadcast %cst_46 : f32 to vector<8x128xf32>
    %157 = arith.subf %156, %150 : vector<8x128xf32>
    %158 = arith.mulf %157, %155 : vector<8x128xf32>
    %159 = arith.mulf %150, %134 : vector<8x128xf32>
    %160 = arith.addf %158, %159 : vector<8x128xf32>
    %c0_47 = arith.constant 0 : index
    %c0_48 = arith.constant 0 : index
    %161 = vector.load %arg5[%c0_47, %c0_48] : memref<8x256xf32, #tpu.memory_space<vmem>>, vector<8x128xf32>
    tpu.vector_store %arg5[%c0_47, %c0_48], %131 {strides = array<i32>} : memref<8x256xf32, #tpu.memory_space<vmem>>, vector<8x128xf32>,
    %c0_49 = arith.constant 0 : index
    %c128_50 = arith.constant 128 : index
    %162 = vector.load %arg5[%c0_49, %c128_50] : memref<8x256xf32, #tpu.memory_space<vmem>>, vector<8x128xf32>
    tpu.vector_store %arg5[%c0_49, %c128_50], %160 {strides = array<i32>} : memref<8x256xf32, #tpu.memory_space<vmem>>, vector<8x128xf32>,
    %163 = arith.index_cast %88 : i32 to index
    %c0_51 = arith.constant 0 : index
    %c0_52 = arith.constant 0 : index
    %164 = vector.load %arg3[%163, %c0_51, %c0_52] : memref<2x8x128xf32, #tpu.memory_space<vmem>>, vector<1x8x128xf32>
    %165 = vector.shape_cast %164 : vector<1x8x128xf32> to vector<8x128xf32>
    %166 = vector.shape_cast %131 : vector<8x128xf32> to vector<1x8x128xf32>
    tpu.vector_store %arg3[%163, %c0_51, %c0_52], %166 {strides = array<i32>} : memref<2x8x128xf32, #tpu.memory_space<vmem>>, vector<1x8x128xf32>,
    %c1_i32_53 = arith.constant 1 : i32
    %167 = arith.subi %c1_i32_53, %88 : i32
    %168 = arith.index_cast %167 : i32 to index
    %c0_54 = arith.constant 0 : index
    %c0_55 = arith.constant 0 : index
    %169 = vector.load %arg4[%168, %c0_54, %c0_55] : memref<2x8x128xf32, #tpu.memory_space<vmem>>, vector<1x8x128xf32>
    %170 = vector.shape_cast %169 : vector<1x8x128xf32> to vector<8x128xf32>
    %171 = vector.shape_cast %160 : vector<8x128xf32> to vector<1x8x128xf32>
    tpu.vector_store %arg4[%168, %c0_54, %c0_55], %171 {strides = array<i32>} : memref<2x8x128xf32, #tpu.memory_space<vmem>>, vector<1x8x128xf32>,
    %c1_i32_56 = arith.constant 1 : i32
    return
  }
}

module attributes {stable_mosaic.version = 11 : i64} {
  func.func @_mm_kernel(%arg0: i32, %arg1: i32, %arg2: i32, %arg3: memref<16x128xbf16, #tpu.memory_space<vmem>>, %arg4: memref<128x128xbf16, #tpu.memory_space<vmem>>, %arg5: memref<1x128xf32, #tpu.memory_space<vmem>>, %arg6: memref<16x128xf32, #tpu.memory_space<vmem>>, %arg7: memref<16x128xf32, #tpu.memory_space<vmem>>) attributes {dimension_semantics = [#tpu.dimension_semantics<parallel>, #tpu.dimension_semantics<parallel>, #tpu.dimension_semantics<arbitrary>], iteration_bounds = array<i64: 1, 1, 1>, scalar_prefetch = 0 : i64, scratch_operands = 1 : i64, tpu.core_type = #tpu.core_type<tc>, window_params = [{transform_indices = @transform_0, window_bounds = array<i64: 16, 128>}, {transform_indices = @transform_1, window_bounds = array<i64: 128, 128>}, {transform_indices = @transform_2, window_bounds = array<i64: 1, 128>}, {transform_indices = @transform_3, window_bounds = array<i64: 16, 128>}]} {
    %c0_i32 = arith.constant 0 : i32
    %0 = arith.cmpi eq, %arg2, %c0_i32 : i32
    %1 = arith.extui %0 : i1 to i32
    %c0_i32_0 = arith.constant 0 : i32
    %2 = arith.cmpi ne, %1, %c0_i32_0 : i32
    scf.if %2 {
      %cst_10 = arith.constant 0.000000e+00 : f32
      %12 = vector.broadcast %cst_10 : f32 to vector<16x128xf32>
      %c0_11 = arith.constant 0 : index
      %c0_12 = arith.constant 0 : index
      %13 = vector.load %arg7[%c0_11, %c0_12] : memref<16x128xf32, #tpu.memory_space<vmem>>, vector<16x128xf32>
      tpu.vector_store %arg7[%c0_11, %c0_12], %12 {strides = array<i32>} : memref<16x128xf32, #tpu.memory_space<vmem>>, vector<16x128xf32>,
    } else {
    }
    %c0 = arith.constant 0 : index
    %c0_1 = arith.constant 0 : index
    %3 = vector.load %arg3[%c0, %c0_1] : memref<16x128xbf16, #tpu.memory_space<vmem>>, vector<16x128xbf16>
    %c0_2 = arith.constant 0 : index
    %c0_3 = arith.constant 0 : index
    %4 = vector.load %arg7[%c0_2, %c0_3] : memref<16x128xf32, #tpu.memory_space<vmem>>, vector<16x128xf32>
    %c0_4 = arith.constant 0 : index
    %c0_5 = arith.constant 0 : index
    %5 = vector.load %arg4[%c0_4, %c0_5] : memref<128x128xbf16, #tpu.memory_space<vmem>>, vector<128x128xbf16>
    %cst = arith.constant dense<0.000000e+00> : vector<16x128xf32>
    %6 = tpu.matmul %3, %5, %cst {dimension_numbers = #tpu.dot_dimension_numbers<[1], [0], [0], [1], [0, 0, 1, 1], [], []>} : vector<16x128xbf16>, vector<128x128xbf16>, vector<16x128xf32> -> vector<16x128xf32>
    %7 = arith.addf %4, %6 : vector<16x128xf32>
    %c0_6 = arith.constant 0 : index
    %c0_7 = arith.constant 0 : index
    %8 = vector.load %arg7[%c0_6, %c0_7] : memref<16x128xf32, #tpu.memory_space<vmem>>, vector<16x128xf32>
    tpu.vector_store %arg7[%c0_6, %c0_7], %7 {strides = array<i32>} : memref<16x128xf32, #tpu.memory_space<vmem>>, vector<16x128xf32>,
    %c0_i32_8 = arith.constant 0 : i32
    %9 = arith.cmpi eq, %arg2, %c0_i32_8 : i32
    %10 = arith.extui %9 : i1 to i32
    %c0_i32_9 = arith.constant 0 : i32
    %11 = arith.cmpi ne, %10, %c0_i32_9 : i32
    scf.if %11 {
      %c0_10 = arith.constant 0 : index
      %c0_11 = arith.constant 0 : index
      %12 = vector.load %arg7[%c0_10, %c0_11] : memref<16x128xf32, #tpu.memory_space<vmem>>, vector<16x128xf32>
      %c0_12 = arith.constant 0 : index
      %c0_13 = arith.constant 0 : index
      %13 = vector.load %arg5[%c0_12, %c0_13] : memref<1x128xf32, #tpu.memory_space<vmem>>, vector<1x128xf32>
      %14 = vector.broadcast %13 : vector<1x128xf32> to vector<16x128xf32>
      %15 = arith.addf %12, %14 : vector<16x128xf32>
      %cst_14 = arith.constant 5.000000e-01 : f32
      %16 = vector.broadcast %cst_14 : f32 to vector<16x128xf32>
      %17 = arith.mulf %16, %15 : vector<16x128xf32>
      %cst_15 = arith.constant 0.707106769 : f32
      %18 = vector.broadcast %cst_15 : f32 to vector<16x128xf32>
      %19 = arith.mulf %15, %18 : vector<16x128xf32>
      %20 = math.erf %19 : vector<16x128xf32>
      %cst_16 = arith.constant 1.000000e+00 : f32
      %21 = vector.broadcast %cst_16 : f32 to vector<16x128xf32>
      %22 = arith.addf %21, %20 : vector<16x128xf32>
      %23 = arith.mulf %17, %22 : vector<16x128xf32>
      %c0_17 = arith.constant 0 : index
      %c0_18 = arith.constant 0 : index
      %24 = vector.load %arg6[%c0_17, %c0_18] : memref<16x128xf32, #tpu.memory_space<vmem>>, vector<16x128xf32>
      tpu.vector_store %arg6[%c0_17, %c0_18], %23 {strides = array<i32>} : memref<16x128xf32, #tpu.memory_space<vmem>>, vector<16x128xf32>,
    } else {
    }
    return
  }
  func.func @transform_0(%arg0: i32, %arg1: i32, %arg2: i32) -> (i32, i32) {
    %c0_i32 = arith.constant 0 : i32
    return %arg0, %arg2 : i32, i32
  }
  func.func @transform_1(%arg0: i32, %arg1: i32, %arg2: i32) -> (i32, i32) {
    %c0_i32 = arith.constant 0 : i32
    return %arg2, %arg1 : i32, i32
  }
  func.func @transform_2(%arg0: i32, %arg1: i32, %arg2: i32) -> (i32, i32) {
    %c0_i32 = arith.constant 0 : i32
    %c0_i32_0 = arith.constant 0 : i32
    return %c0_i32, %arg1 : i32, i32
  }
  func.func @transform_3(%arg0: i32, %arg1: i32, %arg2: i32) -> (i32, i32) {
    %c0_i32 = arith.constant 0 : i32
    return %arg0, %arg1 : i32, i32
  }
}

module attributes {stable_mosaic.version = 11 : i64} {
  func.func @_mm_kernel(%arg0: i32, %arg1: i32, %arg2: i32, %arg3: memref<16x128xbf16, #tpu.memory_space<vmem>>, %arg4: memref<128x128xbf16, #tpu.memory_space<vmem>>, %arg5: memref<1x128xf32, #tpu.memory_space<vmem>>, %arg6: memref<16x128xf32, #tpu.memory_space<vmem>>, %arg7: memref<16x128xf32, #tpu.memory_space<vmem>>) attributes {dimension_semantics = [#tpu.dimension_semantics<parallel>, #tpu.dimension_semantics<parallel>, #tpu.dimension_semantics<arbitrary>], iteration_bounds = array<i64: 1, 1, 1>, scalar_prefetch = 0 : i64, scratch_operands = 1 : i64, tpu.core_type = #tpu.core_type<tc>, window_params = [{transform_indices = @transform_0, window_bounds = array<i64: 16, 128>}, {transform_indices = @transform_1, window_bounds = array<i64: 128, 128>}, {transform_indices = @transform_2, window_bounds = array<i64: 1, 128>}, {transform_indices = @transform_3, window_bounds = array<i64: 16, 128>}]} {
    %c0_i32 = arith.constant 0 : i32
    %0 = arith.cmpi eq, %arg2, %c0_i32 : i32
    %1 = arith.extui %0 : i1 to i32
    %c0_i32_0 = arith.constant 0 : i32
    %2 = arith.cmpi ne, %1, %c0_i32_0 : i32
    scf.if %2 {
      %cst_10 = arith.constant 0.000000e+00 : f32
      %12 = vector.broadcast %cst_10 : f32 to vector<16x128xf32>
      %c0_11 = arith.constant 0 : index
      %c0_12 = arith.constant 0 : index
      %13 = vector.load %arg7[%c0_11, %c0_12] : memref<16x128xf32, #tpu.memory_space<vmem>>, vector<16x128xf32>
      tpu.vector_store %arg7[%c0_11, %c0_12], %12 {strides = array<i32>} : memref<16x128xf32, #tpu.memory_space<vmem>>, vector<16x128xf32>,
    } else {
    }
    %c0 = arith.constant 0 : index
    %c0_1 = arith.constant 0 : index
    %3 = vector.load %arg3[%c0, %c0_1] : memref<16x128xbf16, #tpu.memory_space<vmem>>, vector<16x128xbf16>
    %c0_2 = arith.constant 0 : index
    %c0_3 = arith.constant 0 : index
    %4 = vector.load %arg7[%c0_2, %c0_3] : memref<16x128xf32, #tpu.memory_space<vmem>>, vector<16x128xf32>
    %c0_4 = arith.constant 0 : index
    %c0_5 = arith.constant 0 : index
    %5 = vector.load %arg4[%c0_4, %c0_5] : memref<128x128xbf16, #tpu.memory_space<vmem>>, vector<128x128xbf16>
    %cst = arith.constant dense<0.000000e+00> : vector<16x128xf32>
    %6 = tpu.matmul %3, %5, %cst {dimension_numbers = #tpu.dot_dimension_numbers<[1], [0], [0], [1], [0, 0, 1, 1], [], []>} : vector<16x128xbf16>, vector<128x128xbf16>, vector<16x128xf32> -> vector<16x128xf32>
    %7 = arith.addf %4, %6 : vector<16x128xf32>
    %c0_6 = arith.constant 0 : index
    %c0_7 = arith.constant 0 : index
    %8 = vector.load %arg7[%c0_6, %c0_7] : memref<16x128xf32, #tpu.memory_space<vmem>>, vector<16x128xf32>
    tpu.vector_store %arg7[%c0_6, %c0_7], %7 {strides = array<i32>} : memref<16x128xf32, #tpu.memory_space<vmem>>, vector<16x128xf32>,
    %c0_i32_8 = arith.constant 0 : i32
    %9 = arith.cmpi eq, %arg2, %c0_i32_8 : i32
    %10 = arith.extui %9 : i1 to i32
    %c0_i32_9 = arith.constant 0 : i32
    %11 = arith.cmpi ne, %10, %c0_i32_9 : i32
    scf.if %11 {
      %c0_10 = arith.constant 0 : index
      %c0_11 = arith.constant 0 : index
      %12 = vector.load %arg7[%c0_10, %c0_11] : memref<16x128xf32, #tpu.memory_space<vmem>>, vector<16x128xf32>
      %c0_12 = arith.constant 0 : index
      %c0_13 = arith.constant 0 : index
      %13 = vector.load %arg5[%c0_12, %c0_13] : memref<1x128xf32, #tpu.memory_space<vmem>>, vector<1x128xf32>
      %14 = vector.broadcast %13 : vector<1x128xf32> to vector<16x128xf32>
      %15 = arith.addf %12, %14 : vector<16x128xf32>
      %c0_14 = arith.constant 0 : index
      %c0_15 = arith.constant 0 : index
      %16 = vector.load %arg6[%c0_14, %c0_15] : memref<16x128xf32, #tpu.memory_space<vmem>>, vector<16x128xf32>
      tpu.vector_store %arg6[%c0_14, %c0_15], %15 {strides = array<i32>} : memref<16x128xf32, #tpu.memory_space<vmem>>, vector<16x128xf32>,
    } else {
    }
    return
  }
  func.func @transform_0(%arg0: i32, %arg1: i32, %arg2: i32) -> (i32, i32) {
    %c0_i32 = arith.constant 0 : i32
    return %arg0, %arg2 : i32, i32
  }
  func.func @transform_1(%arg0: i32, %arg1: i32, %arg2: i32) -> (i32, i32) {
    %c0_i32 = arith.constant 0 : i32
    return %arg2, %arg1 : i32, i32
  }
  func.func @transform_2(%arg0: i32, %arg1: i32, %arg2: i32) -> (i32, i32) {
    %c0_i32 = arith.constant 0 : i32
    %c0_i32_0 = arith.constant 0 : i32
    return %c0_i32, %arg1 : i32, i32
  }
  func.func @transform_3(%arg0: i32, %arg1: i32, %arg2: i32) -> (i32, i32) {
    %c0_i32 = arith.constant 0 : i32
    return %arg0, %arg1 : i32, i32
  }
}

</mosaic_0001>

<llo_original>
// kernel: speech_model_forward.10
$region0: #{speech_model_forward.10}
  #allocation0 [shape = 'u32[]', space=smem, size = 0x4, offset = 0x4, fixed_abs, tag = 'smem constant byte address 0x4 - core index']
  #allocation1 [shape = 'u32[144,128]{1,0:T(1,128)}', space=vmem, size = 0x12000, scoped, tag = 'internal scratch']
  #allocation2 [shape = 'f32[128,128]{1,0:T(8,128)}', space=vmem, size = 0x10000, scoped, tag = 'scratch operand']
  %s0 = inlined_call_operand.vmem [shape: bf16[128,128], index: 0, kind: input, shape index: {}]
  %s1 = inlined_call_operand.vmem [shape: bf16[128,128], index: 1, kind: input, shape index: {}]
  %s2 = inlined_call_operand.vmem [shape: f32[1,128], index: 2, kind: input, shape index: {}]
  %s3 = inlined_call_operand.vmem [shape: f32[128,128], index: 3, kind: output, shape index: {}]
  %s4 = sld [smem:[#allocation0]]
  $region30: #{speech_model_forward.10} parent=0
    _
  %s6 = ssub.s32 1, %s4
  %s7 = scalar_select 0, %s6, %s4
  // Predicated region
  $region2: #{speech_model_forward.10} parent=0 // pred_check
    _
  $region3: #{speech_model_forward.10} parent=0 // pred_check_branch
    %9 = sbr.rel (0) target = $region5
  $region4: #{speech_model_forward.10} parent=0 // pred_region
    _
  $region5: #{speech_model_forward.10} parent=0 // pred_fallthru
    _
  // Predicated region
  $region6: #{speech_model_forward.10} parent=0 // pred_check
    _
  $region7: #{speech_model_forward.10} parent=0 // pred_check_branch
    %11 = sbr.rel (0) target = $region9
  $region8: #{speech_model_forward.10} parent=0 // pred_region
    _
  $region9: #{speech_model_forward.10} parent=0 // pred_fallthru
    _
  // Predicated region
  $region10: #{speech_model_forward.10} parent=0 // pred_check
    _
  $region11: #{speech_model_forward.10} parent=0 // pred_check_branch
    %13 = sbr.rel (0) target = $region13
  $region12: #{speech_model_forward.10} parent=0 // pred_region
    _
  $region13: #{speech_model_forward.10} parent=0 // pred_fallthru
    _
  %p15 = scmp.eq.s32.totalorder 0, 0
  // Predicated region
  $region14: #{speech_model_forward.10} parent=0 // pred_check
    %p16 = pneg %p15
  $region15: #{speech_model_forward.10} parent=0 // pred_check_branch
    %18 = sbr.rel (%p16) target = $region17
  $region16: #{speech_model_forward.10} parent=0 // pred_region
    %19 = vst [vmem:[#allocation2] sm:$0xff] 0.0
    %20 = vst [vmem:[#allocation2 + $0x8] sm:$0xff] 0.0
    %21 = vst [vmem:[#allocation2 + $0x10] sm:$0xff] 0.0
    %22 = vst [vmem:[#allocation2 + $0x18] sm:$0xff] 0.0
    %23 = vst [vmem:[#allocation2 + $0x20] sm:$0xff] 0.0
    %24 = vst [vmem:[#allocation2 + $0x28] sm:$0xff] 0.0
    %25 = vst [vmem:[#allocation2 + $0x30] sm:$0xff] 0.0
    %26 = vst [vmem:[#allocation2 + $0x38] sm:$0xff] 0.0
    %27 = vst [vmem:[#allocation2 + $0x40] sm:$0xff] 0.0
    %28 = vst [vmem:[#allocation2 + $0x48] sm:$0xff] 0.0
    %29 = vst [vmem:[#allocation2 + $0x50] sm:$0xff] 0.0
    %30 = vst [vmem:[#allocation2 + $0x58] sm:$0xff] 0.0
    %31 = vst [vmem:[#allocation2 + $0x60] sm:$0xff] 0.0
    %32 = vst [vmem:[#allocation2 + $0x68] sm:$0xff] 0.0
    %33 = vst [vmem:[#allocation2 + $0x70] sm:$0xff] 0.0
    %34 = vst [vmem:[#allocation2 + $0x78] sm:$0xff] 0.0
  $region17: #{speech_model_forward.10} parent=0 // pred_fallthru
    _
  %v35 = vld [vmem:[%s0] sm:$0xf]
  %v36 = vld [vmem:[%s0 + $0x4] sm:$0xf]
  %v37 = vld [vmem:[%s0 + $0x8] sm:$0xf]
  %v38 = vld [vmem:[%s0 + $0xc] sm:$0xf]
  %v39 = vld [vmem:[%s0 + $0x10] sm:$0xf]
  %v40 = vld [vmem:[%s0 + $0x14] sm:$0xf]
  %v41 = vld [vmem:[%s0 + $0x18] sm:$0xf]
  %v42 = vld [vmem:[%s0 + $0x1c] sm:$0xf]
  %v43 = vld [vmem:[%s0 + $0x20] sm:$0xf]
  %v44 = vld [vmem:[%s0 + $0x24] sm:$0xf]
  %v45 = vld [vmem:[%s0 + $0x28] sm:$0xf]
  %v46 = vld [vmem:[%s0 + $0x2c] sm:$0xf]
  %v47 = vld [vmem:[%s0 + $0x30] sm:$0xf]
  %v48 = vld [vmem:[%s0 + $0x34] sm:$0xf]
  %v49 = vld [vmem:[%s0 + $0x38] sm:$0xf]
  %v50 = vld [vmem:[%s0 + $0x3c] sm:$0xf]
  %v51 = vld [vmem:[#allocation2] sm:$0xff]
  %v52 = vld [vmem:[#allocation2 + $0x8] sm:$0xff]
  %v53 = vld [vmem:[#allocation2 + $0x10] sm:$0xff]
  %v54 = vld [vmem:[#allocation2 + $0x18] sm:$0xff]
  %v55 = vld [vmem:[#allocation2 + $0x20] sm:$0xff]
  %v56 = vld [vmem:[#allocation2 + $0x28] sm:$0xff]
  %v57 = vld [vmem:[#allocation2 + $0x30] sm:$0xff]
  %v58 = vld [vmem:[#allocation2 + $0x38] sm:$0xff]
  %v59 = vld [vmem:[#allocation2 + $0x40] sm:$0xff]
  %v60 = vld [vmem:[#allocation2 + $0x48] sm:$0xff]
  %v61 = vld [vmem:[#allocation2 + $0x50] sm:$0xff]
  %v62 = vld [vmem:[#allocation2 + $0x58] sm:$0xff]
  %v63 = vld [vmem:[#allocation2 + $0x60] sm:$0xff]
  %v64 = vld [vmem:[#allocation2 + $0x68] sm:$0xff]
  %v65 = vld [vmem:[#allocation2 + $0x70] sm:$0xff]
  %v66 = vld [vmem:[#allocation2 + $0x78] sm:$0xff]
  %v67 = vld [vmem:[%s1] sm:$0xf]
  %v68 = vld [vmem:[%s1 + $0x4] sm:$0xf]
  %v69 = vld [vmem:[%s1 + $0x8] sm:$0xf]
  %v70 = vld [vmem:[%s1 + $0xc] sm:$0xf]
  %v71 = vld [vmem:[%s1 + $0x10] sm:$0xf]
  %v72 = vld [vmem:[%s1 + $0x14] sm:$0xf]
  %v73 = vld [vmem:[%s1 + $0x18] sm:$0xf]
  %v74 = vld [vmem:[%s1 + $0x1c] sm:$0xf]
  %v75 = vld [vmem:[%s1 + $0x20] sm:$0xf]
  %v76 = vld [vmem:[%s1 + $0x24] sm:$0xf]
  %v77 = vld [vmem:[%s1 + $0x28] sm:$0xf]
  %v78 = vld [vmem:[%s1 + $0x2c] sm:$0xf]
  %v79 = vld [vmem:[%s1 + $0x30] sm:$0xf]
  %v80 = vld [vmem:[%s1 + $0x34] sm:$0xf]
  %v81 = vld [vmem:[%s1 + $0x38] sm:$0xf]
  %v82 = vld [vmem:[%s1 + $0x3c] sm:$0xf]
  %v99 = vunpack.c.l.b16 %v35
  %v100 = vunpack.c.l.b16 %v36
  %v101 = vunpack.c.l.b16 %v37
  %v102 = vunpack.c.l.b16 %v38
  %v103 = vunpack.c.l.b16 %v39
  %v104 = vunpack.c.l.b16 %v40
  %v105 = vunpack.c.l.b16 %v41
  %v106 = vunpack.c.l.b16 %v42
  %v107 = vunpack.c.l.b16 %v43
  %v108 = vunpack.c.l.b16 %v44
  %v109 = vunpack.c.l.b16 %v45
  %v110 = vunpack.c.l.b16 %v46
  %v111 = vunpack.c.l.b16 %v47
  %v112 = vunpack.c.l.b16 %v48
  %v113 = vunpack.c.l.b16 %v49
  %v114 = vunpack.c.l.b16 %v50
  %v115 = vpack.c.b16 %v100, %v99
  %v116 = vpack.c.b16 %v102, %v101
  %v117 = vpack.c.b16 %v104, %v103
  %v118 = vpack.c.b16 %v106, %v105
  %v119 = vpack.c.b16 %v108, %v107
  %v120 = vpack.c.b16 %v110, %v109
  %v121 = vpack.c.b16 %v112, %v111
  %v122 = vpack.c.b16 %v114, %v113
  %v147 = vunpack.c.l.b16 %v67
  %v148 = vunpack.c.l.b16 %v68
  %v149 = vunpack.c.l.b16 %v69
  %v150 = vunpack.c.l.b16 %v70
  %v151 = vunpack.c.l.b16 %v71
  %v152 = vunpack.c.l.b16 %v72
  %v153 = vunpack.c.l.b16 %v73
  %v154 = vunpack.c.l.b16 %v74
  %v155 = vunpack.c.l.b16 %v75
  %v156 = vunpack.c.l.b16 %v76
  %v157 = vunpack.c.l.b16 %v77
  %v158 = vunpack.c.l.b16 %v78
  %v159 = vunpack.c.l.b16 %v79
  %v160 = vunpack.c.l.b16 %v80
  %v161 = vunpack.c.l.b16 %v81
  %v162 = vunpack.c.l.b16 %v82
  %v163 = vpack.c.b16 %v148, %v147
  %v164 = vpack.c.b16 %v150, %v149
  %v165 = vpack.c.b16 %v152, %v151
  %v166 = vpack.c.b16 %v154, %v153
  %v167 = vpack.c.b16 %v156, %v155
  %v168 = vpack.c.b16 %v158, %v157
  %v169 = vpack.c.b16 %v160, %v159
  %v170 = vpack.c.b16 %v162, %v161
  %179 = vmatprep.subr.bf16.mxu0 0
  %180 = vmatpush1.bf16.msra.mxu0 %v163
  %181 = vmatprep.subr.bf16.mxu0 0
  %182 = vmatpush1.bf16.msra.mxu0 %v164
  %183 = vmatprep.subr.bf16.mxu0 0
  %184 = vmatpush1.bf16.msra.mxu0 %v165
  %185 = vmatprep.subr.bf16.mxu0 0
  %186 = vmatpush1.bf16.msra.mxu0 %v166
  %187 = vmatprep.subr.bf16.mxu0 0
  %188 = vmatpush1.bf16.msra.mxu0 %v167
  %189 = vmatprep.subr.bf16.mxu0 0
  %190 = vmatpush1.bf16.msra.mxu0 %v168
  %191 = vmatprep.subr.bf16.mxu0 0
  %192 = vmatpush1.bf16.msra.mxu0 %v169
  %193 = vmatprep.subr.bf16.mxu0 0
  %194 = vmatpush1.bf16.msra.mxu0 %v170
  %195 = vmatprep.subr.bf16.mxu0 0
  %196 = vmatpush1.bf16.msra.mxu0 0
  %197 = vmatprep.subr.bf16.mxu0 0
  %198 = vmatpush1.bf16.msra.mxu0 0
  %199 = vmatprep.subr.bf16.mxu0 0
  %200 = vmatpush1.bf16.msra.mxu0 0
  %201 = vmatprep.subr.bf16.mxu0 0
  %202 = vmatpush1.bf16.msra.mxu0 0
  %203 = vmatprep.subr.bf16.mxu0 0
  %204 = vmatpush1.bf16.msra.mxu0 0
  %205 = vmatprep.subr.bf16.mxu0 0
  %206 = vmatpush1.bf16.msra.mxu0 0
  %207 = vmatprep.subr.bf16.mxu0 0
  %208 = vmatpush1.bf16.msra.mxu0 0
  %209 = vmatprep.subr.bf16.mxu0 0
  %210 = vmatpush1.bf16.msra.mxu0 0
  %211 = vmatprep.mubr.bf16.mxu0 0
  %212 = vmatmul.mubr.bf16.gmra.mrb[0].mxu0 %v115
  %v213 = vpop.f32.mrb[0].mxu0
  %v214 = vadd.f32 0.0, %v213
  %v215 = vpop.f32.mrb[0].mxu0
  %v216 = vpop.f32.mrb[0].mxu0
  %v217 = vadd.f32 0.0, %v216
  %v218 = vpop.f32.mrb[0].mxu0
  %219 = vmatprep.mubr.bf16.mxu0 0
  %220 = vmatmul.mubr.bf16.gmra.mrb[0].mxu0 %v116
  %v221 = vpop.f32.mrb[0].mxu0
  %v222 = vadd.f32 0.0, %v221
  %v223 = vpop.f32.mrb[0].mxu0
  %v224 = vpop.f32.mrb[0].mxu0
  %v225 = vadd.f32 0.0, %v224
  %v226 = vpop.f32.mrb[0].mxu0
  %227 = vmatprep.mubr.bf16.mxu0 0
  %228 = vmatmul.mubr.bf16.gmra.mrb[0].mxu0 %v117
  %v229 = vpop.f32.mrb[0].mxu0
  %v230 = vadd.f32 0.0, %v229
  %v231 = vpop.f32.mrb[0].mxu0
  %v232 = vpop.f32.mrb[0].mxu0
  %v233 = vadd.f32 0.0, %v232
  %v234 = vpop.f32.mrb[0].mxu0
  %235 = vmatprep.mubr.bf16.mxu0 0
  %236 = vmatmul.mubr.bf16.gmra.mrb[0].mxu0 %v118
  %v237 = vpop.f32.mrb[0].mxu0
  %v238 = vadd.f32 0.0, %v237
  %v239 = vpop.f32.mrb[0].mxu0
  %v240 = vpop.f32.mrb[0].mxu0
  %v241 = vadd.f32 0.0, %v240
  %v242 = vpop.f32.mrb[0].mxu0
  %243 = vmatprep.mubr.bf16.mxu0 0
  %244 = vmatmul.mubr.bf16.gmra.mrb[0].mxu0 %v119
  %v245 = vpop.f32.mrb[0].mxu0
  %v246 = vadd.f32 0.0, %v245
  %v247 = vpop.f32.mrb[0].mxu0
  %v248 = vpop.f32.mrb[0].mxu0
  %v249 = vadd.f32 0.0, %v248
  %v250 = vpop.f32.mrb[0].mxu0
  %251 = vmatprep.mubr.bf16.mxu0 0
  %252 = vmatmul.mubr.bf16.gmra.mrb[0].mxu0 %v120
  %v253 = vpop.f32.mrb[0].mxu0
  %v254 = vadd.f32 0.0, %v253
  %v255 = vpop.f32.mrb[0].mxu0
  %v256 = vpop.f32.mrb[0].mxu0
  %v257 = vadd.f32 0.0, %v256
  %v258 = vpop.f32.mrb[0].mxu0
  %259 = vmatprep.mubr.bf16.mxu0 0
  %260 = vmatmul.mubr.bf16.gmra.mrb[0].mxu0 %v121
  %v261 = vpop.f32.mrb[0].mxu0
  %v262 = vadd.f32 0.0, %v261
  %v263 = vpop.f32.mrb[0].mxu0
  %v264 = vpop.f32.mrb[0].mxu0
  %v265 = vadd.f32 0.0, %v264
  %v266 = vpop.f32.mrb[0].mxu0
  %267 = vmatprep.mubr.bf16.mxu0 0
  %268 = vmatmul.mubr.bf16.gmra.mrb[0].mxu0 %v122
  %v269 = vpop.f32.mrb[0].mxu0
  %v270 = vadd.f32 0.0, %v269
  %v271 = vpop.f32.mrb[0].mxu0
  %v272 = vpop.f32.mrb[0].mxu0
  %v273 = vadd.f32 0.0, %v272
  %v274 = vpop.f32.mrb[0].mxu0
  %275 = vdwg.mxu0
  %v276 = vadd.f32 %v51, %v214
  %v277 = vadd.f32 %v52, %v217
  %v278 = vadd.f32 %v53, %v222
  %v279 = vadd.f32 %v54, %v225
  %v280 = vadd.f32 %v55, %v230
  %v281 = vadd.f32 %v56, %v233
  %v282 = vadd.f32 %v57, %v238
  %v283 = vadd.f32 %v58, %v241
  %v284 = vadd.f32 %v59, %v246
  %v285 = vadd.f32 %v60, %v249
  %v286 = vadd.f32 %v61, %v254
  %v287 = vadd.f32 %v62, %v257
  %v288 = vadd.f32 %v63, %v262
  %v289 = vadd.f32 %v64, %v265
  %v290 = vadd.f32 %v65, %v270
  %v291 = vadd.f32 %v66, %v273
  %292 = vst [vmem:[#allocation2] sm:$0xff] %v276
  %293 = vst [vmem:[#allocation2 + $0x8] sm:$0xff] %v277
  %294 = vst [vmem:[#allocation2 + $0x10] sm:$0xff] %v278
  %295 = vst [vmem:[#allocation2 + $0x18] sm:$0xff] %v279
  %296 = vst [vmem:[#allocation2 + $0x20] sm:$0xff] %v280
  %297 = vst [vmem:[#allocation2 + $0x28] sm:$0xff] %v281
  %298 = vst [vmem:[#allocation2 + $0x30] sm:$0xff] %v282
  %299 = vst [vmem:[#allocation2 + $0x38] sm:$0xff] %v283
  %300 = vst [vmem:[#allocation2 + $0x40] sm:$0xff] %v284
  %301 = vst [vmem:[#allocation2 + $0x48] sm:$0xff] %v285
  %302 = vst [vmem:[#allocation2 + $0x50] sm:$0xff] %v286
  %303 = vst [vmem:[#allocation2 + $0x58] sm:$0xff] %v287
  %304 = vst [vmem:[#allocation2 + $0x60] sm:$0xff] %v288
  %305 = vst [vmem:[#allocation2 + $0x68] sm:$0xff] %v289
  %306 = vst [vmem:[#allocation2 + $0x70] sm:$0xff] %v290
  %307 = vst [vmem:[#allocation2 + $0x78] sm:$0xff] %v291
  // Predicated region
  $region18: #{speech_model_forward.10} parent=0 // pred_check
    %p308 = pneg %p15
  $region19: #{speech_model_forward.10} parent=0 // pred_check_branch
    %310 = sbr.rel (%p308) target = $region21
  $region20: #{speech_model_forward.10} parent=0 // pred_region
    %v311 = vld [vmem:[#allocation2] sm:$0xff]
    %v312 = vld [vmem:[#allocation2 + $0x8] sm:$0xff]
    %v313 = vld [vmem:[#allocation2 + $0x10] sm:$0xff]
    %v314 = vld [vmem:[#allocation2 + $0x18] sm:$0xff]
    %v315 = vld [vmem:[#allocation2 + $0x20] sm:$0xff]
    %v316 = vld [vmem:[#allocation2 + $0x28] sm:$0xff]
    %v317 = vld [vmem:[#allocation2 + $0x30] sm:$0xff]
    %v318 = vld [vmem:[#allocation2 + $0x38] sm:$0xff]
    %v319 = vld [vmem:[#allocation2 + $0x40] sm:$0xff]
    %v320 = vld [vmem:[#allocation2 + $0x48] sm:$0xff]
    %v321 = vld [vmem:[#allocation2 + $0x50] sm:$0xff]
    %v322 = vld [vmem:[#allocation2 + $0x58] sm:$0xff]
    %v323 = vld [vmem:[#allocation2 + $0x60] sm:$0xff]
    %v324 = vld [vmem:[#allocation2 + $0x68] sm:$0xff]
    %v325 = vld [vmem:[#allocation2 + $0x70] sm:$0xff]
    %v326 = vld [vmem:[#allocation2 + $0x78] sm:$0xff]
    %v327 = vld [vmem:[%s2] sm:$0x1]
    %v329 = vlaneseq
    %v330 = vshrl.u32 %v329, 7
    %v331 = vsub.s32 0, %v330
    %v332 = vrot.slane %v327, %v331
    %v334 = vadd.f32 %v311, %v332
    %v335 = vadd.f32 %v312, %v332
    %v336 = vadd.f32 %v313, %v332
    %v337 = vadd.f32 %v314, %v332
    %v338 = vadd.f32 %v315, %v332
    %v339 = vadd.f32 %v316, %v332
    %v340 = vadd.f32 %v317, %v332
    %v341 = vadd.f32 %v318, %v332
    %v342 = vadd.f32 %v319, %v332
    %v343 = vadd.f32 %v320, %v332
    %v344 = vadd.f32 %v321, %v332
    %v345 = vadd.f32 %v322, %v332
    %v346 = vadd.f32 %v323, %v332
    %v347 = vadd.f32 %v324, %v332
    %v348 = vadd.f32 %v325, %v332
    %v349 = vadd.f32 %v326, %v332
    %350 = vst [vmem:[%s3] sm:$0xff] %v334
    %351 = vst [vmem:[%s3 + $0x8] sm:$0xff] %v335
    %352 = vst [vmem:[%s3 + $0x10] sm:$0xff] %v336
    %353 = vst [vmem:[%s3 + $0x18] sm:$0xff] %v337
    %354 = vst [vmem:[%s3 + $0x20] sm:$0xff] %v338
    %355 = vst [vmem:[%s3 + $0x28] sm:$0xff] %v339
    %356 = vst [vmem:[%s3 + $0x30] sm:$0xff] %v340
    %357 = vst [vmem:[%s3 + $0x38] sm:$0xff] %v341
    %358 = vst [vmem:[%s3 + $0x40] sm:$0xff] %v342
    %359 = vst [vmem:[%s3 + $0x48] sm:$0xff] %v343
    %360 = vst [vmem:[%s3 + $0x50] sm:$0xff] %v344
    %361 = vst [vmem:[%s3 + $0x58] sm:$0xff] %v345
    %362 = vst [vmem:[%s3 + $0x60] sm:$0xff] %v346
    %363 = vst [vmem:[%s3 + $0x68] sm:$0xff] %v347
    %364 = vst [vmem:[%s3 + $0x70] sm:$0xff] %v348
    %365 = vst [vmem:[%s3 + $0x78] sm:$0xff] %v349
  $region21: #{speech_model_forward.10} parent=0 // pred_fallthru
    _
  // Predicated region
  $region22: #{speech_model_forward.10} parent=0 // pred_check
    _
  $region23: #{speech_model_forward.10} parent=0 // pred_check_branch
    %367 = sbr.rel (0) target = $region25
  $region24: #{speech_model_forward.10} parent=0 // pred_region
    _
  $region25: #{speech_model_forward.10} parent=0 // pred_fallthru
    _
  // Predicated region
  $region26: #{speech_model_forward.10} parent=0 // pred_check
    _
  $region27: #{speech_model_forward.10} parent=0 // pred_check_branch
    %369 = sbr.rel (0) target = $region29
  $region28: #{speech_model_forward.10} parent=0 // pred_region
    _
  $region29: #{speech_model_forward.10} parent=0 // pred_fallthru
    _

// kernel: speech_model_forward.13
$region0: #{speech_model_forward.13}
  #allocation0 [shape = 'u32[]', space=smem, size = 0x4, offset = 0x4, fixed_abs, tag = 'smem constant byte address 0x4 - core index']
  #allocation1 [shape = 'u32[144,128]{1,0:T(1,128)}', space=vmem, size = 0x12000, scoped, tag = 'internal scratch']
  #allocation2 [shape = 'f32[16,128]{1,0:T(8,128)}', space=vmem, size = 0x2000, scoped, tag = 'scratch operand']
  %s0 = inlined_call_operand.vmem [shape: bf16[16,256], index: 0, kind: input, shape index: {}]
  %s1 = inlined_call_operand.vmem [shape: bf16[256,128], index: 1, kind: input, shape index: {}]
  %s2 = inlined_call_operand.vmem [shape: f32[1,128], index: 2, kind: input, shape index: {}]
  %s3 = inlined_call_operand.vmem [shape: f32[16,128], index: 3, kind: output, shape index: {}]
  %s4 = sld [smem:[#allocation0]]
  $region30: #{speech_model_forward.13} parent=0
    _
  %s6 = ssub.s32 1, %s4
  %s7 = scalar_select 0, %s6, %s4
  // Predicated region
  $region2: #{speech_model_forward.13} parent=0 // pred_check
    _
  $region3: #{speech_model_forward.13} parent=0 // pred_check_branch
    %9 = sbr.rel (0) target = $region5
  $region4: #{speech_model_forward.13} parent=0 // pred_region
    _
  $region5: #{speech_model_forward.13} parent=0 // pred_fallthru
    _
  // Predicated region
  $region6: #{speech_model_forward.13} parent=0 // pred_check
    _
  $region7: #{speech_model_forward.13} parent=0 // pred_check_branch
    %11 = sbr.rel (0) target = $region9
  $region8: #{speech_model_forward.13} parent=0 // pred_region
    _
  $region9: #{speech_model_forward.13} parent=0 // pred_fallthru
    _
  // Predicated region
  $region10: #{speech_model_forward.13} parent=0 // pred_check
    _
  $region11: #{speech_model_forward.13} parent=0 // pred_check_branch
    %13 = sbr.rel (0) target = $region13
  $region12: #{speech_model_forward.13} parent=0 // pred_region
    _
  $region13: #{speech_model_forward.13} parent=0 // pred_fallthru
    _
  %p15 = scmp.eq.s32.totalorder 0, 0
  // Predicated region
  $region14: #{speech_model_forward.13} parent=0 // pred_check
    %p16 = pneg %p15
  $region15: #{speech_model_forward.13} parent=0 // pred_check_branch
    %18 = sbr.rel (%p16) target = $region17
  $region16: #{speech_model_forward.13} parent=0 // pred_region
    %19 = vst [vmem:[#allocation2] sm:$0xff] 0.0
    %20 = vst [vmem:[#allocation2 + $0x8] sm:$0xff] 0.0
  $region17: #{speech_model_forward.13} parent=0 // pred_fallthru
    _
  %v21 = vld [vmem:[%s0] sm:$0xff]
  %v22 = vld [vmem:[%s0 + $0x8] sm:$0xff]
  %v23 = vld [vmem:[#allocation2] sm:$0xff]
  %v24 = vld [vmem:[#allocation2 + $0x8] sm:$0xff]
  %v25 = vld [vmem:[%s1] sm:$0xf]
  %v26 = vld [vmem:[%s1 + $0x4] sm:$0xf]
  %v27 = vld [vmem:[%s1 + $0x8] sm:$0xf]
  %v28 = vld [vmem:[%s1 + $0xc] sm:$0xf]
  %v29 = vld [vmem:[%s1 + $0x10] sm:$0xf]
  %v30 = vld [vmem:[%s1 + $0x14] sm:$0xf]
  %v31 = vld [vmem:[%s1 + $0x18] sm:$0xf]
  %v32 = vld [vmem:[%s1 + $0x1c] sm:$0xf]
  %v33 = vld [vmem:[%s1 + $0x20] sm:$0xf]
  %v34 = vld [vmem:[%s1 + $0x24] sm:$0xf]
  %v35 = vld [vmem:[%s1 + $0x28] sm:$0xf]
  %v36 = vld [vmem:[%s1 + $0x2c] sm:$0xf]
  %v37 = vld [vmem:[%s1 + $0x30] sm:$0xf]
  %v38 = vld [vmem:[%s1 + $0x34] sm:$0xf]
  %v39 = vld [vmem:[%s1 + $0x38] sm:$0xf]
  %v40 = vld [vmem:[%s1 + $0x3c] sm:$0xf]
  %v41 = vld [vmem:[%s1 + $0x40] sm:$0xf]
  %v42 = vld [vmem:[%s1 + $0x44] sm:$0xf]
  %v43 = vld [vmem:[%s1 + $0x48] sm:$0xf]
  %v44 = vld [vmem:[%s1 + $0x4c] sm:$0xf]
  %v45 = vld [vmem:[%s1 + $0x50] sm:$0xf]
  %v46 = vld [vmem:[%s1 + $0x54] sm:$0xf]
  %v47 = vld [vmem:[%s1 + $0x58] sm:$0xf]
  %v48 = vld [vmem:[%s1 + $0x5c] sm:$0xf]
  %v49 = vld [vmem:[%s1 + $0x60] sm:$0xf]
  %v50 = vld [vmem:[%s1 + $0x64] sm:$0xf]
  %v51 = vld [vmem:[%s1 + $0x68] sm:$0xf]
  %v52 = vld [vmem:[%s1 + $0x6c] sm:$0xf]
  %v53 = vld [vmem:[%s1 + $0x70] sm:$0xf]
  %v54 = vld [vmem:[%s1 + $0x74] sm:$0xf]
  %v55 = vld [vmem:[%s1 + $0x78] sm:$0xf]
  %v56 = vld [vmem:[%s1 + $0x7c] sm:$0xf]
  %v59 = vunpack.c.l.b16 %v21
  %v60 = vunpack.c.h.b16 %v21
  %v61 = vunpack.c.l.b16 %v22
  %v62 = vunpack.c.h.b16 %v22
  %v63 = vpack.c.b16 %v61, %v59
  %v64 = vpack.c.b16 %v62, %v60
  %v99 = vunpack.c.l.b16 %v25
  %v100 = vunpack.c.l.b16 %v26
  %v101 = vunpack.c.l.b16 %v27
  %v102 = vunpack.c.l.b16 %v28
  %v103 = vunpack.c.l.b16 %v29
  %v104 = vunpack.c.l.b16 %v30
  %v105 = vunpack.c.l.b16 %v31
  %v106 = vunpack.c.l.b16 %v32
  %v107 = vunpack.c.l.b16 %v33
  %v108 = vunpack.c.l.b16 %v34
  %v109 = vunpack.c.l.b16 %v35
  %v110 = vunpack.c.l.b16 %v36
  %v111 = vunpack.c.l.b16 %v37
  %v112 = vunpack.c.l.b16 %v38
  %v113 = vunpack.c.l.b16 %v39
  %v114 = vunpack.c.l.b16 %v40
  %v115 = vunpack.c.l.b16 %v41
  %v116 = vunpack.c.l.b16 %v42
  %v117 = vunpack.c.l.b16 %v43
  %v118 = vunpack.c.l.b16 %v44
  %v119 = vunpack.c.l.b16 %v45
  %v120 = vunpack.c.l.b16 %v46
  %v121 = vunpack.c.l.b16 %v47
  %v122 = vunpack.c.l.b16 %v48
  %v123 = vunpack.c.l.b16 %v49
  %v124 = vunpack.c.l.b16 %v50
  %v125 = vunpack.c.l.b16 %v51
  %v126 = vunpack.c.l.b16 %v52
  %v127 = vunpack.c.l.b16 %v53
  %v128 = vunpack.c.l.b16 %v54
  %v129 = vunpack.c.l.b16 %v55
  %v130 = vunpack.c.l.b16 %v56
  %v131 = vpack.c.b16 %v100, %v99
  %v132 = vpack.c.b16 %v102, %v101
  %v133 = vpack.c.b16 %v104, %v103
  %v134 = vpack.c.b16 %v106, %v105
  %v135 = vpack.c.b16 %v108, %v107
  %v136 = vpack.c.b16 %v110, %v109
  %v137 = vpack.c.b16 %v112, %v111
  %v138 = vpack.c.b16 %v114, %v113
  %v139 = vpack.c.b16 %v116, %v115
  %v140 = vpack.c.b16 %v118, %v117
  %v141 = vpack.c.b16 %v120, %v119
  %v142 = vpack.c.b16 %v122, %v121
  %v143 = vpack.c.b16 %v124, %v123
  %v144 = vpack.c.b16 %v126, %v125
  %v145 = vpack.c.b16 %v128, %v127
  %v146 = vpack.c.b16 %v130, %v129
  %163 = vmatprep.subr.bf16.mxu0 0
  %164 = vmatpush1.bf16.msra.mxu0 %v131
  %165 = vmatprep.subr.bf16.mxu0 0
  %166 = vmatpush1.bf16.msra.mxu0 %v132
  %167 = vmatprep.subr.bf16.mxu0 0
  %168 = vmatpush1.bf16.msra.mxu0 %v133
  %169 = vmatprep.subr.bf16.mxu0 0
  %170 = vmatpush1.bf16.msra.mxu0 %v134
  %171 = vmatprep.subr.bf16.mxu0 0
  %172 = vmatpush1.bf16.msra.mxu0 %v135
  %173 = vmatprep.subr.bf16.mxu0 0
  %174 = vmatpush1.bf16.msra.mxu0 %v136
  %175 = vmatprep.subr.bf16.mxu0 0
  %176 = vmatpush1.bf16.msra.mxu0 %v137
  %177 = vmatprep.subr.bf16.mxu0 0
  %178 = vmatpush1.bf16.msra.mxu0 %v138
  %179 = vmatprep.subr.bf16.mxu0 0
  %180 = vmatpush1.bf16.msra.mxu0 %v139
  %181 = vmatprep.subr.bf16.mxu0 0
  %182 = vmatpush1.bf16.msra.mxu0 %v140
  %183 = vmatprep.subr.bf16.mxu0 0
  %184 = vmatpush1.bf16.msra.mxu0 %v141
  %185 = vmatprep.subr.bf16.mxu0 0
  %186 = vmatpush1.bf16.msra.mxu0 %v142
  %187 = vmatprep.subr.bf16.mxu0 0
  %188 = vmatpush1.bf16.msra.mxu0 %v143
  %189 = vmatprep.subr.bf16.mxu0 0
  %190 = vmatpush1.bf16.msra.mxu0 %v144
  %191 = vmatprep.subr.bf16.mxu0 0
  %192 = vmatpush1.bf16.msra.mxu0 %v145
  %193 = vmatprep.subr.bf16.mxu0 0
  %194 = vmatpush1.bf16.msra.mxu0 %v146
  %195 = vmatprep.mubr.bf16.mxu0 %v64
  %196 = vmatmul.mubr.bf16.gmra.mrb[0].mxu0 %v63
  %v197 = vpop.f32.mrb[0].mxu0
  %v198 = vadd.f32 0.0, %v197
  %v199 = vpop.f32.mrb[0].mxu0
  %v200 = vpop.f32.mrb[0].mxu0
  %v201 = vadd.f32 0.0, %v200
  %v202 = vpop.f32.mrb[0].mxu0
  %203 = vdwg.mxu0
  %v204 = vadd.f32 %v23, %v198
  %v205 = vadd.f32 %v24, %v201
  %206 = vst [vmem:[#allocation2] sm:$0xff] %v204
  %207 = vst [vmem:[#allocation2 + $0x8] sm:$0xff] %v205
  // Predicated region
  $region18: #{speech_model_forward.13} parent=0 // pred_check
    %p208 = pneg %p15
  $region19: #{speech_model_forward.13} parent=0 // pred_check_branch
    %210 = sbr.rel (%p208) target = $region21
  $region20: #{speech_model_forward.13} parent=0 // pred_region
    %v211 = vld [vmem:[#allocation2] sm:$0xff]
    %v212 = vld [vmem:[#allocation2 + $0x8] sm:$0xff]
    %v213 = vld [vmem:[%s2] sm:$0x1]
    %v215 = vlaneseq
    %v216 = vshrl.u32 %v215, 7
    %v217 = vsub.s32 0, %v216
    %v218 = vrot.slane %v213, %v217
    %v220 = vadd.f32 %v211, %v218
    %v221 = vadd.f32 %v212, %v218
    %222 = vst [vmem:[%s3] sm:$0xff] %v220
    %223 = vst [vmem:[%s3 + $0x8] sm:$0xff] %v221
  $region21: #{speech_model_forward.13} parent=0 // pred_fallthru
    _
  // Predicated region
  $region22: #{speech_model_forward.13} parent=0 // pred_check
    _
  $region23: #{speech_model_forward.13} parent=0 // pred_check_branch
    %225 = sbr.rel (0) target = $region25
  $region24: #{speech_model_forward.13} parent=0 // pred_region
    _
  $region25: #{speech_model_forward.13} parent=0 // pred_fallthru
    _
  // Predicated region
  $region26: #{speech_model_forward.13} parent=0 // pred_check
    _
  $region27: #{speech_model_forward.13} parent=0 // pred_check_branch
    %227 = sbr.rel (0) target = $region29
  $region28: #{speech_model_forward.13} parent=0 // pred_region
    _
  $region29: #{speech_model_forward.13} parent=0 // pred_fallthru
    _

// kernel: speech_model_forward.11
$region0: #{speech_model_forward.11}
  #allocation0 [shape = 'u32[]', space=smem, size = 0x4, offset = 0x4, fixed_abs, tag = 'smem constant byte address 0x4 - core index']
  #allocation1 [shape = 'u32[144,128]{1,0:T(1,128)}', space=vmem, size = 0x12000, scoped, tag = 'internal scratch']
  #allocation2 [shape = 'bf16[10,10,32]{2,1,0:T(8,128)(2,1)}', space=vmem, size = 0xa000, scoped, tag = 'scratch operand']
  %s0 = inlined_call_operand.vmem [shape: f32[2,8,8,32], index: 0, kind: input, shape index: {}]
  %s1 = inlined_call_operand.vmem [shape: f32[8,1,1], index: 1, kind: input, shape index: {}]
  %s2 = inlined_call_operand.vmem [shape: f32[8,1,1], index: 2, kind: input, shape index: {}]
  %s3 = inlined_call_operand.vmem [shape: bf16[3,3,32,32], index: 3, kind: input, shape index: {}]
  %s4 = inlined_call_operand.vmem [shape: f32[1,32], index: 4, kind: input, shape index: {}]
  %s5 = inlined_call_operand.vmem [shape: f32[8,1,1], index: 5, kind: input, shape index: {}]
  %s6 = inlined_call_operand.vmem [shape: f32[8,1,1], index: 6, kind: input, shape index: {}]
  %s7 = inlined_call_operand.vmem [shape: bf16[3,3,32,32], index: 7, kind: input, shape index: {}]
  %s8 = inlined_call_operand.vmem [shape: f32[1,32], index: 8, kind: input, shape index: {}]
  %s9 = inlined_call_operand.vmem [shape: f32[2,8,8,32], index: 9, kind: output, shape index: {}]
  %s10 = sld [smem:[#allocation0]]
  $region69: #{speech_model_forward.11} parent=0
    _
  %s12 = ssub.s32 1, %s10
  %s13 = scalar_select 0, %s12, %s10
  loop: start=0, step=1, limit=4
  $region2: #{speech_model_forward.11} parent=0 // loop_pre_header
    _
  $region3: #{speech_model_forward.11} parent=0 // loop_header
    %s15 = sphi 0, %s19
    %p16 = scmp.ge.s32.totalorder %s15, 4
    %s25 = sphi 0, %s27
    %s28 = sphi 0, %s25
    %s29 = sphi 0, %s28
    %s45 = sphi 0, %s29
    %s49 = sphi 0, %s49
    %s51 = sphi 0, %s49
    %s52 = sphi 0, %s51
    %s66 = sphi 0, %s52
    %s70 = sphi 0, %s70
    %s72 = sphi 0, %s70
    %s73 = sphi 0, %s72
    %s87 = sphi 0, %s73
    %s91 = sphi 0, %s91
    %s93 = sphi 0, %s91
    %s94 = sphi 0, %s93
    %s108 = sphi 0, %s94
    %s112 = sphi 0, %s112
    %s114 = sphi 0, %s112
    %s115 = sphi 0, %s114
    %s129 = sphi 0, %s115
    %s133 = sphi 0, %s133
    %s135 = sphi 0, %s133
    %s136 = sphi 0, %s135
    %s150 = sphi 0, %s136
    %s154 = sphi 0, %s154
    %s156 = sphi 0, %s154
    %s157 = sphi 0, %s156
    %s171 = sphi 0, %s157
    %s175 = sphi 0, %s175
    %s177 = sphi 0, %s175
    %s178 = sphi 0, %s177
    %s192 = sphi 0, %s178
    %s196 = sphi 0, %s196
    %s198 = sphi 0, %s196
    %s199 = sphi 0, %s198
    %s213 = sphi 0, %s199
    %s219 = sphi 0, %s221
    %s222 = sphi 0, %s219
    %s223 = sphi 0, %s222
    %s239 = sphi 0, %s223
  $region4: #{speech_model_forward.11} parent=0 // loop_header_branch
    %18 = sbr.rel (%p16) target = $region8
  $region5: #{speech_model_forward.11} parent=0 // loop_body
    %s20 = ssub.s32 %s15, 1
    %s21 = ssub.s32 %s15, 2
    %s22 = sadd.s32 %s15, 1
    %s23 = ssub.s32 %s15, %s22
    %p24 = scmp.eq.s32.totalorder %s23, 0
    %s26 = sadd.s32 %s25, 1
    %s27 = scalar_select %p24, %s25, %s26
    %p30 = pneg %p24
    %p31 = scmp.eq.s32.totalorder %s15, 1
    %p32 = por %p30, %p31
    %p33 = scmp.ne.s32.totalorder %s25, %s28
    %p34 = scmp.eq.s32.totalorder %s15, 0
    %p35 = por %p33, %p34
    %p36 = scmp.ne.s32.totalorder %s25, %s28
    %p37 = scmp.eq.s32.totalorder %s20, 1
    %p38 = por %p36, %p37
    %p39 = scmp.ne.s32.totalorder %s28, %s29
    %p40 = scmp.eq.s32.totalorder %s20, 0
    %p41 = por %p39, %p40
    %p42 = scmp.ne.s32.totalorder %s28, %s29
    %p43 = scmp.eq.s32.totalorder %s21, 1
    %p44 = por %p42, %p43
    %p46 = scmp.ne.s32.totalorder %s29, %s45
    %p47 = scmp.eq.s32.totalorder %s21, 0
    %p48 = por %p46, %p47
    %s50 = sadd.s32 %s49, 1
    %p53 = scmp.eq.s32.totalorder %s15, 1
    %p54 = scmp.ne.s32.totalorder %s49, %s51
    %p55 = scmp.eq.s32.totalorder %s15, 0
    %p56 = por %p54, %p55
    %p57 = scmp.ne.s32.totalorder %s49, %s51
    %p58 = scmp.eq.s32.totalorder %s20, 1
    %p59 = por %p57, %p58
    %p60 = scmp.ne.s32.totalorder %s51, %s52
    %p61 = scmp.eq.s32.totalorder %s20, 0
    %p62 = por %p60, %p61
    %p63 = scmp.ne.s32.totalorder %s51, %s52
    %p64 = scmp.eq.s32.totalorder %s21, 1
    %p65 = por %p63, %p64
    %p67 = scmp.ne.s32.totalorder %s52, %s66
    %p68 = scmp.eq.s32.totalorder %s21, 0
    %p69 = por %p67, %p68
    %s71 = sadd.s32 %s70, 1
    %p74 = scmp.eq.s32.totalorder %s15, 1
    %p75 = scmp.ne.s32.totalorder %s70, %s72
    %p76 = scmp.eq.s32.totalorder %s15, 0
    %p77 = por %p75, %p76
    %p78 = scmp.ne.s32.totalorder %s70, %s72
    %p79 = scmp.eq.s32.totalorder %s20, 1
    %p80 = por %p78, %p79
    %p81 = scmp.ne.s32.totalorder %s72, %s73
    %p82 = scmp.eq.s32.totalorder %s20, 0
    %p83 = por %p81, %p82
    %p84 = scmp.ne.s32.totalorder %s72, %s73
    %p85 = scmp.eq.s32.totalorder %s21, 1
    %p86 = por %p84, %p85
    %p88 = scmp.ne.s32.totalorder %s73, %s87
    %p89 = scmp.eq.s32.totalorder %s21, 0
    %p90 = por %p88, %p89
    %s92 = sadd.s32 %s91, 1
    %p95 = scmp.eq.s32.totalorder %s15, 1
    %p96 = scmp.ne.s32.totalorder %s91, %s93
    %p97 = scmp.eq.s32.totalorder %s15, 0
    %p98 = por %p96, %p97
    %p99 = scmp.ne.s32.totalorder %s91, %s93
    %p100 = scmp.eq.s32.totalorder %s20, 1
    %p101 = por %p99, %p100
    %p102 = scmp.ne.s32.totalorder %s93, %s94
    %p103 = scmp.eq.s32.totalorder %s20, 0
    %p104 = por %p102, %p103
    %p105 = scmp.ne.s32.totalorder %s93, %s94
    %p106 = scmp.eq.s32.totalorder %s21, 1
    %p107 = por %p105, %p106
    %p109 = scmp.ne.s32.totalorder %s94, %s108
    %p110 = scmp.eq.s32.totalorder %s21, 0
    %p111 = por %p109, %p110
    %s113 = sadd.s32 %s112, 1
    %p116 = scmp.eq.s32.totalorder %s15, 1
    %p117 = scmp.ne.s32.totalorder %s112, %s114
    %p118 = scmp.eq.s32.totalorder %s15, 0
    %p119 = por %p117, %p118
    %p120 = scmp.ne.s32.totalorder %s112, %s114
    %p121 = scmp.eq.s32.totalorder %s20, 1
    %p122 = por %p120, %p121
    %p123 = scmp.ne.s32.totalorder %s114, %s115
    %p124 = scmp.eq.s32.totalorder %s20, 0
    %p125 = por %p123, %p124
    %p126 = scmp.ne.s32.totalorder %s114, %s115
    %p127 = scmp.eq.s32.totalorder %s21, 1
    %p128 = por %p126, %p127
    %p130 = scmp.ne.s32.totalorder %s115, %s129
    %p131 = scmp.eq.s32.totalorder %s21, 0
    %p132 = por %p130, %p131
    %s134 = sadd.s32 %s133, 1
    %p137 = scmp.eq.s32.totalorder %s15, 1
    %p138 = scmp.ne.s32.totalorder %s133, %s135
    %p139 = scmp.eq.s32.totalorder %s15, 0
    %p140 = por %p138, %p139
    %p141 = scmp.ne.s32.totalorder %s133, %s135
    %p142 = scmp.eq.s32.totalorder %s20, 1
    %p143 = por %p141, %p142
    %p144 = scmp.ne.s32.totalorder %s135, %s136
    %p145 = scmp.eq.s32.totalorder %s20, 0
    %p146 = por %p144, %p145
    %p147 = scmp.ne.s32.totalorder %s135, %s136
    %p148 = scmp.eq.s32.totalorder %s21, 1
    %p149 = por %p147, %p148
    %p151 = scmp.ne.s32.totalorder %s136, %s150
    %p152 = scmp.eq.s32.totalorder %s21, 0
    %p153 = por %p151, %p152
    %s155 = sadd.s32 %s154, 1
    %p158 = scmp.eq.s32.totalorder %s15, 1
    %p159 = scmp.ne.s32.totalorder %s154, %s156
    %p160 = scmp.eq.s32.totalorder %s15, 0
    %p161 = por %p159, %p160
    %p162 = scmp.ne.s32.totalorder %s154, %s156
    %p163 = scmp.eq.s32.totalorder %s20, 1
    %p164 = por %p162, %p163
    %p165 = scmp.ne.s32.totalorder %s156, %s157
    %p166 = scmp.eq.s32.totalorder %s20, 0
    %p167 = por %p165, %p166
    %p168 = scmp.ne.s32.totalorder %s156, %s157
    %p169 = scmp.eq.s32.totalorder %s21, 1
    %p170 = por %p168, %p169
    %p172 = scmp.ne.s32.totalorder %s157, %s171
    %p173 = scmp.eq.s32.totalorder %s21, 0
    %p174 = por %p172, %p173
    %s176 = sadd.s32 %s175, 1
    %p179 = scmp.eq.s32.totalorder %s15, 1
    %p180 = scmp.ne.s32.totalorder %s175, %s177
    %p181 = scmp.eq.s32.totalorder %s15, 0
    %p182 = por %p180, %p181
    %p183 = scmp.ne.s32.totalorder %s175, %s177
    %p184 = scmp.eq.s32.totalorder %s20, 1
    %p185 = por %p183, %p184
    %p186 = scmp.ne.s32.totalorder %s177, %s178
    %p187 = scmp.eq.s32.totalorder %s20, 0
    %p188 = por %p186, %p187
    %p189 = scmp.ne.s32.totalorder %s177, %s178
    %p190 = scmp.eq.s32.totalorder %s21, 1
    %p191 = por %p189, %p190
    %p193 = scmp.ne.s32.totalorder %s178, %s192
    %p194 = scmp.eq.s32.totalorder %s21, 0
    %p195 = por %p193, %p194
    %s197 = sadd.s32 %s196, 1
    %p200 = scmp.eq.s32.totalorder %s15, 1
    %p201 = scmp.ne.s32.totalorder %s196, %s198
    %p202 = scmp.eq.s32.totalorder %s15, 0
    %p203 = por %p201, %p202
    %p204 = scmp.ne.s32.totalorder %s196, %s198
    %p205 = scmp.eq.s32.totalorder %s20, 1
    %p206 = por %p204, %p205
    %p207 = scmp.ne.s32.totalorder %s198, %s199
    %p208 = scmp.eq.s32.totalorder %s20, 0
    %p209 = por %p207, %p208
    %p210 = scmp.ne.s32.totalorder %s198, %s199
    %p211 = scmp.eq.s32.totalorder %s21, 1
    %p212 = por %p210, %p211
    %p214 = scmp.ne.s32.totalorder %s199, %s213
    %p215 = scmp.eq.s32.totalorder %s21, 0
    %p216 = por %p214, %p215
    %s217 = ssub.s32 %s15, %s22
    %p218 = scmp.eq.s32.totalorder %s217, 0
    %s220 = sadd.s32 %s219, 1
    %s221 = scalar_select %p218, %s219, %s220
    %p224 = pneg %p218
    %p225 = scmp.eq.s32.totalorder %s15, 1
    %p226 = por %p224, %p225
    %p227 = scmp.ne.s32.totalorder %s219, %s222
    %p228 = scmp.eq.s32.totalorder %s15, 0
    %p229 = por %p227, %p228
    %p230 = scmp.ne.s32.totalorder %s219, %s222
    %p231 = scmp.eq.s32.totalorder %s20, 1
    %p232 = por %p230, %p231
    %p233 = scmp.ne.s32.totalorder %s222, %s223
    %p234 = scmp.eq.s32.totalorder %s20, 0
    %p235 = por %p233, %p234
    %p236 = scmp.ne.s32.totalorder %s222, %s223
    %p237 = scmp.eq.s32.totalorder %s21, 1
    %p238 = por %p236, %p237
    %p240 = scmp.ne.s32.totalorder %s223, %s239
    %p241 = scmp.eq.s32.totalorder %s21, 0
    %p242 = por %p240, %p241
    %p243 = scmp.le.s32.totalorder 1, %s15
    %p244 = scmp.lt.s32.totalorder %s15, 3
    %p245 = pnand %p243, %p244
    %p246 = pneg %p245
    // Predicated region
    $region9: #{speech_model_forward.11} parent=5 // pred_check
      _
    $region10: #{speech_model_forward.11} parent=5 // pred_check_branch
      %248 = sbr.rel (%p245) target = $region12
    $region11: #{speech_model_forward.11} parent=5 // pred_region
      %s249 = ssub.s32 %s15, 1
      // Predicated region
      $region13: #{speech_model_forward.11} parent=11 // pred_check
        %p250 = pneg %p62
      $region14: #{speech_model_forward.11} parent=11 // pred_check_branch
        %252 = sbr.rel (%p250) target = $region16
      $region15: #{speech_model_forward.11} parent=11 // pred_region
        _
      $region16: #{speech_model_forward.11} parent=11 // pred_fallthru
        _
      // Predicated region
      $region17: #{speech_model_forward.11} parent=11 // pred_check
        %p253 = pneg %p83
      $region18: #{speech_model_forward.11} parent=11 // pred_check_branch
        %255 = sbr.rel (%p253) target = $region20
      $region19: #{speech_model_forward.11} parent=11 // pred_region
        _
      $region20: #{speech_model_forward.11} parent=11 // pred_fallthru
        _
      // Predicated region
      $region21: #{speech_model_forward.11} parent=11 // pred_check
        %p256 = pneg %p104
      $region22: #{speech_model_forward.11} parent=11 // pred_check_branch
        %258 = sbr.rel (%p256) target = $region24
      $region23: #{speech_model_forward.11} parent=11 // pred_region
        _
      $region24: #{speech_model_forward.11} parent=11 // pred_fallthru
        _
      // Predicated region
      $region25: #{speech_model_forward.11} parent=11 // pred_check
        %p259 = pneg %p125
      $region26: #{speech_model_forward.11} parent=11 // pred_check_branch
        %261 = sbr.rel (%p259) target = $region28
      $region27: #{speech_model_forward.11} parent=11 // pred_region
        _
      $region28: #{speech_model_forward.11} parent=11 // pred_fallthru
        _
      // Predicated region
      $region29: #{speech_model_forward.11} parent=11 // pred_check
        %p262 = pneg %p146
      $region30: #{speech_model_forward.11} parent=11 // pred_check_branch
        %264 = sbr.rel (%p262) target = $region32
      $region31: #{speech_model_forward.11} parent=11 // pred_region
        _
      $region32: #{speech_model_forward.11} parent=11 // pred_fallthru
        _
      // Predicated region
      $region33: #{speech_model_forward.11} parent=11 // pred_check
        %p265 = pneg %p167
      $region34: #{speech_model_forward.11} parent=11 // pred_check_branch
        %267 = sbr.rel (%p265) target = $region36
      $region35: #{speech_model_forward.11} parent=11 // pred_region
        _
      $region36: #{speech_model_forward.11} parent=11 // pred_fallthru
        _
      // Predicated region
      $region37: #{speech_model_forward.11} parent=11 // pred_check
        %p268 = pneg %p188
      $region38: #{speech_model_forward.11} parent=11 // pred_check_branch
        %270 = sbr.rel (%p268) target = $region40
      $region39: #{speech_model_forward.11} parent=11 // pred_region
        _
      $region40: #{speech_model_forward.11} parent=11 // pred_fallthru
        _
      // Predicated region
      $region41: #{speech_model_forward.11} parent=11 // pred_check
        %p271 = pneg %p209
      $region42: #{speech_model_forward.11} parent=11 // pred_check_branch
        %273 = sbr.rel (%p271) target = $region44
      $region43: #{speech_model_forward.11} parent=11 // pred_region
        _
      $region44: #{speech_model_forward.11} parent=11 // pred_fallthru
        _
    $region12: #{speech_model_forward.11} parent=5 // pred_fallthru
      _
    %p274 = scmp.lt.s32.totalorder %s15, 2
    // Predicated region
    $region45: #{speech_model_forward.11} parent=5 // pred_check
      %p275 = pneg %p274
    $region46: #{speech_model_forward.11} parent=5 // pred_check_branch
      %277 = sbr.rel (%p275) target = $region48
    $region47: #{speech_model_forward.11} parent=5 // pred_region
      // Predicated region
      $region49: #{speech_model_forward.11} parent=47 // pred_check
        %p278 = pneg %p35
      $region50: #{speech_model_forward.11} parent=47 // pred_check_branch
        %280 = sbr.rel (%p278) target = $region52
      $region51: #{speech_model_forward.11} parent=47 // pred_region
        %p281 = scmp.lt.s32.totalorder %s15, 1
        %s282 = scalar_select %p281, %s15, 1
        %s283 = smul.addr %s282, 8
        %s284 = smul.addr %s283, 8
        %s285 = scalar_lea.vmem %s0, %s284
      $region52: #{speech_model_forward.11} parent=47 // pred_fallthru
        _
    $region48: #{speech_model_forward.11} parent=5 // pred_fallthru
      _
    %p286 = scmp.le.s32.totalorder 1, %s15
    %p287 = scmp.lt.s32.totalorder %s15, 3
    %p288 = pnand %p286, %p287
    %p289 = pneg %p288
    // Predicated region
    $region53: #{speech_model_forward.11} parent=5 // pred_check
      _
    $region54: #{speech_model_forward.11} parent=5 // pred_check_branch
      %291 = sbr.rel (%p288) target = $region56
    $region55: #{speech_model_forward.11} parent=5 // pred_region
      %s292 = ssub.s32 %s15, 1
      %p293 = scmp.lt.s32.totalorder %s20, 1
      %s294 = scalar_select %p293, %s20, 1
      %s295 = smul.addr %s294, 8
      %s296 = smul.addr %s295, 8
      %s297 = scalar_lea.vmem %s0, %s296
      %p298 = pneg %p41
      %p299 = pneg %p38
      %p300 = pneg %p62
      %p301 = pneg %p59
      %p302 = pneg %p83
      %p303 = pneg %p80
      %p304 = pneg %p104
      %p305 = pneg %p101
      %p306 = pneg %p125
      %p307 = pneg %p122
      %p308 = pneg %p146
      %p309 = pneg %p143
      %p310 = pneg %p167
      %p311 = pneg %p164
      %p312 = pneg %p188
      %p313 = pneg %p185
      %p314 = pneg %p209
      %p315 = pneg %p206
      %p316 = pneg %p235
      %p317 = pneg %p232
      %p318 = scmp.lt.s32.totalorder %s20, 1
      %s319 = scalar_select %p318, %s20, 1
      %s320 = smul.addr %s319, 8
      %s321 = smul.addr %s320, 8
      %s322 = scalar_lea.vmem %s9, %s321
      %p323 = scmp.lt.s32.totalorder %s20, 1
      %s324 = scalar_select %p323, %s20, 1
      %s325 = smul.addr %s324, 8
      %s326 = smul.addr %s325, 8
      %s327 = scalar_lea.vmem %s0, %s326
      %p328 = scmp.lt.s32.totalorder %s20, 1
      %s329 = scalar_select %p328, %s20, 1
      %s330 = smul.addr %s329, 8
      %s331 = smul.addr %s330, 8
      %s332 = scalar_lea.vmem %s9, %s331
      %v334 = vld [vmem:[%s327] sm:$0xff]
      %v335 = vld [vmem:[%s327 + $0x8] sm:$0xff]
      %v336 = vld [vmem:[%s327 + $0x10] sm:$0xff]
      %v337 = vld [vmem:[%s327 + $0x18] sm:$0xff]
      %v338 = vld [vmem:[%s327 + $0x20] sm:$0xff]
      %v339 = vld [vmem:[%s327 + $0x28] sm:$0xff]
      %v340 = vld [vmem:[%s327 + $0x30] sm:$0xff]
      %v341 = vld [vmem:[%s327 + $0x38] sm:$0xff]
      %vm342 = vcmask 261120
      %v343 = vsel %vm342, %v334, 0.0
      %v344 = vsel %vm342, %v335, 0.0
      %v345 = vadd.f32 %v343, %v344
      %v346 = vsel %vm342, %v336, 0.0
      %v347 = vadd.f32 %v345, %v346
      %v348 = vsel %vm342, %v337, 0.0
      %v349 = vadd.f32 %v347, %v348
      %v350 = vsel %vm342, %v338, 0.0
      %v351 = vadd.f32 %v349, %v350
      %v352 = vsel %vm342, %v339, 0.0
      %v353 = vadd.f32 %v351, %v352
      %v354 = vsel %vm342, %v340, 0.0
      %v355 = vadd.f32 %v353, %v354
      %v356 = vsel %vm342, %v341, 0.0
      %v357 = vadd.f32 %v355, %v356
      %v358 = vrcp.pop 8.0
      %v359 = vmul.f32 %v357, %v358
      %v360 = vsub.f32 %v334, %v359
      %v361 = vsub.f32 %v335, %v359
      %v362 = vsub.f32 %v336, %v359
      %v363 = vsub.f32 %v337, %v359
      %v364 = vsub.f32 %v338, %v359
      %v365 = vsub.f32 %v339, %v359
      %v366 = vsub.f32 %v340, %v359
      %v367 = vsub.f32 %v341, %v359
      %v368 = vmul.f32 %v360, %v360
      %v369 = vmul.f32 %v361, %v361
      %v370 = vmul.f32 %v362, %v362
      %v371 = vmul.f32 %v363, %v363
      %v372 = vmul.f32 %v364, %v364
      %v373 = vmul.f32 %v365, %v365
      %v374 = vmul.f32 %v366, %v366
      %v375 = vmul.f32 %v367, %v367
      %v376 = vsel %vm342, %v368, 0.0
      %v377 = vsel %vm342, %v369, 0.0
      %v378 = vadd.f32 %v376, %v377
      %v379 = vsel %vm342, %v370, 0.0
      %v380 = vadd.f32 %v378, %v379
      %v381 = vsel %vm342, %v371, 0.0
      %v382 = vadd.f32 %v380, %v381
      %v383 = vsel %vm342, %v372, 0.0
      %v384 = vadd.f32 %v382, %v383
      %v385 = vsel %vm342, %v373, 0.0
      %v386 = vadd.f32 %v384, %v385
      %v387 = vsel %vm342, %v374, 0.0
      %v388 = vadd.f32 %v386, %v387
      %v389 = vsel %vm342, %v375, 0.0
      %v390 = vadd.f32 %v388, %v389
      %v391 = vmul.f32 %v390, %v358
      %v392 = vadd.f32 %v391, 1e-05
      %v393 = vrsqrt.pop %v392
      %v394 = vmul.f32 %v360, %v393
      %v395 = vmul.f32 %v361, %v393
      %v396 = vmul.f32 %v362, %v393
      %v397 = vmul.f32 %v363, %v393
      %v398 = vmul.f32 %v364, %v393
      %v399 = vmul.f32 %v365, %v393
      %v400 = vmul.f32 %v366, %v393
      %v401 = vmul.f32 %v367, %v393
      %v402 = vld [vmem:[%s1] sm:$0x1]
      %v403 = vld [vmem:[%s1 + $0x1] sm:$0x1]
      %v404 = vld [vmem:[%s1 + $0x2] sm:$0x1]
      %v405 = vld [vmem:[%s1 + $0x3] sm:$0x1]
      %v406 = vld [vmem:[%s1 + $0x4] sm:$0x1]
      %v407 = vld [vmem:[%s1 + $0x5] sm:$0x1]
      %v408 = vld [vmem:[%s1 + $0x6] sm:$0x1]
      %v409 = vld [vmem:[%s1 + $0x7] sm:$0x1]
      %v418 = vlaneseq
      %v419 = vshrl.u32 %v418, 7
      %v420 = vsub.s32 0, %v419
      %v421 = vrot.slane %v402, %v420
      %v422 = vlaneseq
      %v423 = vshrl.u32 %v422, 7
      %v424 = vsub.s32 0, %v423
      %v425 = vrot.slane %v403, %v424
      %v426 = vlaneseq
      %v427 = vshrl.u32 %v426, 7
      %v428 = vsub.s32 0, %v427
      %v429 = vrot.slane %v404, %v428
      %v430 = vlaneseq
      %v431 = vshrl.u32 %v430, 7
      %v432 = vsub.s32 0, %v431
      %v433 = vrot.slane %v405, %v432
      %v434 = vlaneseq
      %v435 = vshrl.u32 %v434, 7
      %v436 = vsub.s32 0, %v435
      %v437 = vrot.slane %v406, %v436
      %v438 = vlaneseq
      %v439 = vshrl.u32 %v438, 7
      %v440 = vsub.s32 0, %v439
      %v441 = vrot.slane %v407, %v440
      %v442 = vlaneseq
      %v443 = vshrl.u32 %v442, 7
      %v444 = vsub.s32 0, %v443
      %v445 = vrot.slane %v408, %v444
      %v446 = vlaneseq
      %v447 = vshrl.u32 %v446, 7
      %v448 = vsub.s32 0, %v447
      %v449 = vrot.slane %v409, %v448
      %450 = vset.pattern.permute.xlu0 0
      %451 = vperm.xlu0 %450, %v421
      %v452 = vpop.permute.xlu0 %451
      %454 = vset.pattern.permute.xlu0 0
      %455 = vperm.xlu0 %454, %v425
      %v456 = vpop.permute.xlu0 %455
      %458 = vset.pattern.permute.xlu0 0
      %459 = vperm.xlu0 %458, %v429
      %v460 = vpop.permute.xlu0 %459
      %462 = vset.pattern.permute.xlu0 0
      %463 = vperm.xlu0 %462, %v433
      %v464 = vpop.permute.xlu0 %463
      %466 = vset.pattern.permute.xlu0 0
      %467 = vperm.xlu0 %466, %v437
      %v468 = vpop.permute.xlu0 %467
      %470 = vset.pattern.permute.xlu0 0
      %471 = vperm.xlu0 %470, %v441
      %v472 = vpop.permute.xlu0 %471
      %474 = vset.pattern.permute.xlu0 0
      %475 = vperm.xlu0 %474, %v445
      %v476 = vpop.permute.xlu0 %475
      %478 = vset.pattern.permute.xlu0 0
      %479 = vperm.xlu0 %478, %v449
      %v480 = vpop.permute.xlu0 %479
      %v482 = vmul.f32 %v394, %v452
      %v483 = vmul.f32 %v395, %v456
      %v484 = vmul.f32 %v396, %v460
      %v485 = vmul.f32 %v397, %v464
      %v486 = vmul.f32 %v398, %v468
      %v487 = vmul.f32 %v399, %v472
      %v488 = vmul.f32 %v400, %v476
      %v489 = vmul.f32 %v401, %v480
      %v490 = vld [vmem:[%s2] sm:$0x1]
      %v491 = vld [vmem:[%s2 + $0x1] sm:$0x1]
      %v492 = vld [vmem:[%s2 + $0x2] sm:$0x1]
      %v493 = vld [vmem:[%s2 + $0x3] sm:$0x1]
      %v494 = vld [vmem:[%s2 + $0x4] sm:$0x1]
      %v495 = vld [vmem:[%s2 + $0x5] sm:$0x1]
      %v496 = vld [vmem:[%s2 + $0x6] sm:$0x1]
      %v497 = vld [vmem:[%s2 + $0x7] sm:$0x1]
      %v506 = vlaneseq
      %v507 = vshrl.u32 %v506, 7
      %v508 = vsub.s32 0, %v507
      %v509 = vrot.slane %v490, %v508
      %v510 = vlaneseq
      %v511 = vshrl.u32 %v510, 7
      %v512 = vsub.s32 0, %v511
      %v513 = vrot.slane %v491, %v512
      %v514 = vlaneseq
      %v515 = vshrl.u32 %v514, 7
      %v516 = vsub.s32 0, %v515
      %v517 = vrot.slane %v492, %v516
      %v518 = vlaneseq
      %v519 = vshrl.u32 %v518, 7
      %v520 = vsub.s32 0, %v519
      %v521 = vrot.slane %v493, %v520
      %v522 = vlaneseq
      %v523 = vshrl.u32 %v522, 7
      %v524 = vsub.s32 0, %v523
      %v525 = vrot.slane %v494, %v524
      %v526 = vlaneseq
      %v527 = vshrl.u32 %v526, 7
      %v528 = vsub.s32 0, %v527
      %v529 = vrot.slane %v495, %v528
      %v530 = vlaneseq
      %v531 = vshrl.u32 %v530, 7
      %v532 = vsub.s32 0, %v531
      %v533 = vrot.slane %v496, %v532
      %v534 = vlaneseq
      %v535 = vshrl.u32 %v534, 7
      %v536 = vsub.s32 0, %v535
      %v537 = vrot.slane %v497, %v536
      %538 = vset.pattern.permute.xlu0 0
      %539 = vperm.xlu0 %538, %v509
      %v540 = vpop.permute.xlu0 %539
      %542 = vset.pattern.permute.xlu0 0
      %543 = vperm.xlu0 %542, %v513
      %v544 = vpop.permute.xlu0 %543
      %546 = vset.pattern.permute.xlu0 0
      %547 = vperm.xlu0 %546, %v517
      %v548 = vpop.permute.xlu0 %547
      %550 = vset.pattern.permute.xlu0 0
      %551 = vperm.xlu0 %550, %v521
      %v552 = vpop.permute.xlu0 %551
      %554 = vset.pattern.permute.xlu0 0
      %555 = vperm.xlu0 %554, %v525
      %v556 = vpop.permute.xlu0 %555
      %558 = vset.pattern.permute.xlu0 0
      %559 = vperm.xlu0 %558, %v529
      %v560 = vpop.permute.xlu0 %559
      %562 = vset.pattern.permute.xlu0 0
      %563 = vperm.xlu0 %562, %v533
      %v564 = vpop.permute.xlu0 %563
      %566 = vset.pattern.permute.xlu0 0
      %567 = vperm.xlu0 %566, %v537
      %v568 = vpop.permute.xlu0 %567
      %v570 = vadd.f32 %v482, %v540
      %v571 = vadd.f32 %v483, %v544
      %v572 = vadd.f32 %v484, %v548
      %v573 = vadd.f32 %v485, %v552
      %v574 = vadd.f32 %v486, %v556
      %v575 = vadd.f32 %v487, %v560
      %v576 = vadd.f32 %v488, %v564
      %v577 = vadd.f32 %v489, %v568
      %v578 = vmul.f32 %v570, 0.5
      %v579 = vmul.f32 %v571, 0.5
      %v580 = vmul.f32 %v572, 0.5
      %v581 = vmul.f32 %v573, 0.5
      %v582 = vmul.f32 %v574, 0.5
      %v583 = vmul.f32 %v575, 0.5
      %v584 = vmul.f32 %v576, 0.5
      %v585 = vmul.f32 %v577, 0.5
      %v586 = vmul.f32 %v570, 0.70710677
      %v587 = vmul.f32 %v571, 0.70710677
      %v588 = vmul.f32 %v572, 0.70710677
      %v589 = vmul.f32 %v573, 0.70710677
      %v590 = vmul.f32 %v574, 0.70710677
      %v591 = vmul.f32 %v575, 0.70710677
      %v592 = vmul.f32 %v576, 0.70710677
      %v593 = vmul.f32 %v577, 0.70710677
      %v594 = verf.f32.pop %v586
      %v595 = verf.f32.pop %v587
      %v596 = verf.f32.pop %v588
      %v597 = verf.f32.pop %v589
      %v598 = verf.f32.pop %v590
      %v599 = verf.f32.pop %v591
      %v600 = verf.f32.pop %v592
      %v601 = verf.f32.pop %v593
      %v602 = vadd.f32 %v594, 1.0
      %v603 = vadd.f32 %v595, 1.0
      %v604 = vadd.f32 %v596, 1.0
      %v605 = vadd.f32 %v597, 1.0
      %v606 = vadd.f32 %v598, 1.0
      %v607 = vadd.f32 %v599, 1.0
      %v608 = vadd.f32 %v600, 1.0
      %v609 = vadd.f32 %v601, 1.0
      %v610 = vmul.f32 %v578, %v602
      %v611 = vmul.f32 %v579, %v603
      %v612 = vmul.f32 %v580, %v604
      %v613 = vmul.f32 %v581, %v605
      %v614 = vmul.f32 %v582, %v606
      %v615 = vmul.f32 %v583, %v607
      %v616 = vmul.f32 %v584, %v608
      %v617 = vmul.f32 %v585, %v609
      %vm618 = vcmask 257024
      %619 = vst.msk [vmem:[#allocation2] sm:$0xf] %vm618, 0
      %vm620 = vcmask 253952
      %621 = vst.msk [vmem:[#allocation2 + $0x4] sm:$0x1] %vm620, 0
      %622 = vst.msk [vmem:[#allocation2 + $0x8] sm:$0xf] %vm618, 0
      %623 = vst.msk [vmem:[#allocation2 + $0xc] sm:$0x1] %vm620, 0
      %624 = vst.msk [vmem:[#allocation2 + $0x10] sm:$0xf] %vm618, 0
      %625 = vst.msk [vmem:[#allocation2 + $0x14] sm:$0x1] %vm620, 0
      %626 = vst.msk [vmem:[#allocation2 + $0x18] sm:$0xf] %vm618, 0
      %627 = vst.msk [vmem:[#allocation2 + $0x1c] sm:$0x1] %vm620, 0
      %628 = vst.msk [vmem:[#allocation2 + $0x20] sm:$0xf] %vm618, 0
      %629 = vst.msk [vmem:[#allocation2 + $0x24] sm:$0x1] %vm620, 0
      %630 = vst.msk [vmem:[#allocation2 + $0x28] sm:$0xf] %vm618, 0
      %631 = vst.msk [vmem:[#allocation2 + $0x2c] sm:$0x1] %vm620, 0
      %632 = vst.msk [vmem:[#allocation2 + $0x30] sm:$0xf] %vm618, 0
      %633 = vst.msk [vmem:[#allocation2 + $0x34] sm:$0x1] %vm620, 0
      %634 = vst.msk [vmem:[#allocation2 + $0x38] sm:$0xf] %vm618, 0
      %635 = vst.msk [vmem:[#allocation2 + $0x3c] sm:$0x1] %vm620, 0
      %636 = vst.msk [vmem:[#allocation2 + $0x40] sm:$0xf] %vm618, 0
      %637 = vst.msk [vmem:[#allocation2 + $0x44] sm:$0x1] %vm620, 0
      %638 = vst.msk [vmem:[#allocation2 + $0x48] sm:$0xf] %vm618, 0
      %639 = vst.msk [vmem:[#allocation2 + $0x4c] sm:$0x1] %vm620, 0
      %v640 = vpack.c.bf16 %v610, %v610
      %v641 = vpack.c.bf16 %v611, %v611
      %v642 = vpack.c.bf16 %v612, %v612
      %v643 = vpack.c.bf16 %v613, %v613
      %v644 = vpack.c.bf16 %v614, %v614
      %v645 = vpack.c.bf16 %v615, %v615
      %v646 = vpack.c.bf16 %v616, %v616
      %v647 = vpack.c.bf16 %v617, %v617
      %v656 = vunpack.c.l.b16 %v640
      %v657 = vunpack.c.l.b16 %v641
      %v658 = vunpack.c.l.b16 %v642
      %v659 = vunpack.c.l.b16 %v643
      %v660 = vunpack.c.l.b16 %v644
      %v661 = vunpack.c.l.b16 %v645
      %v662 = vunpack.c.l.b16 %v646
      %v663 = vunpack.c.l.b16 %v647
      %v664 = vpack.c.b16 %v656, %v656
      %v665 = vpack.c.b16 %v657, %v657
      %v666 = vpack.c.b16 %v658, %v658
      %v667 = vpack.c.b16 %v659, %v659
      %v668 = vpack.c.b16 %v660, %v660
      %v669 = vpack.c.b16 %v661, %v661
      %v670 = vpack.c.b16 %v662, %v662
      %v671 = vpack.c.b16 %v663, %v663
      %v673 = vshrl.u32 %v664, 16
      %v675 = vrot.slane %v673, 7
      %v676 = vshll.u32 %v664, 16
      %v678 = vor.u32 %v675, %v676
      %v679 = vrot.slane %v675, 4
      %v681 = vshrl.u32 %v665, 16
      %v683 = vrot.slane %v681, 7
      %v684 = vshll.u32 %v665, 16
      %v686 = vor.u32 %v683, %v684
      %v687 = vrot.slane %v683, 4
      %v689 = vshrl.u32 %v666, 16
      %v691 = vrot.slane %v689, 7
      %v692 = vshll.u32 %v666, 16
      %v694 = vor.u32 %v691, %v692
      %v695 = vrot.slane %v691, 4
      %v697 = vshrl.u32 %v667, 16
      %v699 = vrot.slane %v697, 7
      %v700 = vshll.u32 %v667, 16
      %v702 = vor.u32 %v699, %v700
      %v703 = vrot.slane %v699, 4
      %v705 = vshrl.u32 %v668, 16
      %v707 = vrot.slane %v705, 7
      %v708 = vshll.u32 %v668, 16
      %v710 = vor.u32 %v707, %v708
      %v711 = vrot.slane %v707, 4
      %v713 = vshrl.u32 %v669, 16
      %v715 = vrot.slane %v713, 7
      %v716 = vshll.u32 %v669, 16
      %v718 = vor.u32 %v715, %v716
      %v719 = vrot.slane %v715, 4
      %v721 = vshrl.u32 %v670, 16
      %v723 = vrot.slane %v721, 7
      %v724 = vshll.u32 %v670, 16
      %v726 = vor.u32 %v723, %v724
      %v727 = vrot.slane %v723, 4
      %v729 = vshrl.u32 %v671, 16
      %v731 = vrot.slane %v729, 7
      %v732 = vshll.u32 %v671, 16
      %v734 = vor.u32 %v731, %v732
      %v735 = vrot.slane %v731, 4
      %s752 = scalar_lea.vmem [#allocation2], 8
      %vm753 = vcmask 257024
      %vm754 = vsmask.f32 7938
      %vm755 = vmand %vm753, %vm754
      %v756 = vld [vmem:[%s752] sm:$0xf]
      %v757 = vsel %vm755, %v678, %v756
      %758 = vst [vmem:[%s752] sm:$0xf] %v757
      %vm759 = vcmask 253952
      %vm760 = vsmask.f32 256
      %vm761 = vmand %vm759, %vm760
      %v762 = vld [vmem:[%s752 + $0x4] sm:$0x1]
      %v763 = vsel %vm761, %v679, %v762
      %764 = vst [vmem:[%s752 + $0x4] sm:$0x1] %v763
      %v765 = vld [vmem:[%s752 + $0x8] sm:$0xf]
      %v766 = vsel %vm755, %v686, %v765
      %767 = vst [vmem:[%s752 + $0x8] sm:$0xf] %v766
      %v768 = vld [vmem:[%s752 + $0xc] sm:$0x1]
      %v769 = vsel %vm761, %v687, %v768
      %770 = vst [vmem:[%s752 + $0xc] sm:$0x1] %v769
      %v771 = vld [vmem:[%s752 + $0x10] sm:$0xf]
      %v772 = vsel %vm755, %v694, %v771
      %773 = vst [vmem:[%s752 + $0x10] sm:$0xf] %v772
      %v774 = vld [vmem:[%s752 + $0x14] sm:$0x1]
      %v775 = vsel %vm761, %v695, %v774
      %776 = vst [vmem:[%s752 + $0x14] sm:$0x1] %v775
      %v777 = vld [vmem:[%s752 + $0x18] sm:$0xf]
      %v778 = vsel %vm755, %v702, %v777
      %779 = vst [vmem:[%s752 + $0x18] sm:$0xf] %v778
      %v780 = vld [vmem:[%s752 + $0x1c] sm:$0x1]
      %v781 = vsel %vm761, %v703, %v780
      %782 = vst [vmem:[%s752 + $0x1c] sm:$0x1] %v781
      %v783 = vld [vmem:[%s752 + $0x20] sm:$0xf]
      %v784 = vsel %vm755, %v710, %v783
      %785 = vst [vmem:[%s752 + $0x20] sm:$0xf] %v784
      %v786 = vld [vmem:[%s752 + $0x24] sm:$0x1]
      %v787 = vsel %vm761, %v711, %v786
      %788 = vst [vmem:[%s752 + $0x24] sm:$0x1] %v787
      %v789 = vld [vmem:[%s752 + $0x28] sm:$0xf]
      %v790 = vsel %vm755, %v718, %v789
      %791 = vst [vmem:[%s752 + $0x28] sm:$0xf] %v790
      %v792 = vld [vmem:[%s752 + $0x2c] sm:$0x1]
      %v793 = vsel %vm761, %v719, %v792
      %794 = vst [vmem:[%s752 + $0x2c] sm:$0x1] %v793
      %v795 = vld [vmem:[%s752 + $0x30] sm:$0xf]
      %v796 = vsel %vm755, %v726, %v795
      %797 = vst [vmem:[%s752 + $0x30] sm:$0xf] %v796
      %v798 = vld [vmem:[%s752 + $0x34] sm:$0x1]
      %v799 = vsel %vm761, %v727, %v798
      %800 = vst [vmem:[%s752 + $0x34] sm:$0x1] %v799
      %v801 = vld [vmem:[%s752 + $0x38] sm:$0xf]
      %v802 = vsel %vm755, %v734, %v801
      %803 = vst [vmem:[%s752 + $0x38] sm:$0xf] %v802
      %v804 = vld [vmem:[%s752 + $0x3c] sm:$0x1]
      %v805 = vsel %vm761, %v735, %v804
      %806 = vst [vmem:[%s752 + $0x3c] sm:$0x1] %v805
      %v807 = vld [vmem:[#allocation2] sm:$0xf]
      %v808 = vld [vmem:[#allocation2 + $0x8] sm:$0xf]
      %v809 = vld [vmem:[#allocation2 + $0x10] sm:$0xf]
      %v810 = vld [vmem:[#allocation2 + $0x18] sm:$0xf]
      %v811 = vld [vmem:[#allocation2 + $0x20] sm:$0xf]
      %v812 = vld [vmem:[#allocation2 + $0x28] sm:$0xf]
      %v813 = vld [vmem:[#allocation2 + $0x30] sm:$0xf]
      %v814 = vld [vmem:[#allocation2 + $0x38] sm:$0xf]
      %v815 = vld [vmem:[%s3] sm:$0xf]
      %v816 = vld [vmem:[%s3 + $0x4] sm:$0xf]
      %v817 = vld [vmem:[%s3 + $0x8] sm:$0xf]
      %v818 = vld [vmem:[%s3 + $0xc] sm:$0xf]
      %v819 = vld [vmem:[#allocation2 + $0x4] sm:$0x1]
      %v820 = vld [vmem:[#allocation2 + $0xc] sm:$0x1]
      %v821 = vld [vmem:[#allocation2 + $0x14] sm:$0x1]
      %v822 = vld [vmem:[#allocation2 + $0x1c] sm:$0x1]
      %v823 = vld [vmem:[#allocation2 + $0x24] sm:$0x1]
      %v824 = vld [vmem:[#allocation2 + $0x2c] sm:$0x1]
      %v825 = vld [vmem:[#allocation2 + $0x34] sm:$0x1]
      %v826 = vld [vmem:[#allocation2 + $0x3c] sm:$0x1]
      %vm827 = vsmask.f32 3328
      %vm828 = vsmask.f32 7440
      %vm829 = vmor %vm827, %vm828
      %v831 = vshrl.u32 %v807, 16
      %v833 = vrot.slane %v831, 4
      %v834 = vshll.u32 %v807, 16
      %v836 = vrot.slane %v834, 5
      %v837 = vor.u32 %v833, %v836
      %v838 = vrot.slane %v837, 4
      %v840 = vshll.u32 %v819, 16
      %v842 = vrot.slane %v840, 5
      %v843 = vsel %vm829, %v838, %v842
      %v845 = vshrl.u32 %v808, 16
      %v847 = vrot.slane %v845, 4
      %v848 = vshll.u32 %v808, 16
      %v850 = vrot.slane %v848, 5
      %v851 = vor.u32 %v847, %v850
      %v852 = vrot.slane %v851, 4
      %v854 = vshll.u32 %v820, 16
      %v856 = vrot.slane %v854, 5
      %v857 = vsel %vm829, %v852, %v856
      %v859 = vshrl.u32 %v809, 16
      %v861 = vrot.slane %v859, 4
      %v862 = vshll.u32 %v809, 16
      %v864 = vrot.slane %v862, 5
      %v865 = vor.u32 %v861, %v864
      %v866 = vrot.slane %v865, 4
      %v868 = vshll.u32 %v821, 16
      %v870 = vrot.slane %v868, 5
      %v871 = vsel %vm829, %v866, %v870
      %v873 = vshrl.u32 %v810, 16
      %v875 = vrot.slane %v873, 4
      %v876 = vshll.u32 %v810, 16
      %v878 = vrot.slane %v876, 5
      %v879 = vor.u32 %v875, %v878
      %v880 = vrot.slane %v879, 4
      %v882 = vshll.u32 %v822, 16
      %v884 = vrot.slane %v882, 5
      %v885 = vsel %vm829, %v880, %v884
      %v887 = vshrl.u32 %v811, 16
      %v889 = vrot.slane %v887, 4
      %v890 = vshll.u32 %v811, 16
      %v892 = vrot.slane %v890, 5
      %v893 = vor.u32 %v889, %v892
      %v894 = vrot.slane %v893, 4
      %v896 = vshll.u32 %v823, 16
      %v898 = vrot.slane %v896, 5
      %v899 = vsel %vm829, %v894, %v898
      %v901 = vshrl.u32 %v812, 16
      %v903 = vrot.slane %v901, 4
      %v904 = vshll.u32 %v812, 16
      %v906 = vrot.slane %v904, 5
      %v907 = vor.u32 %v903, %v906
      %v908 = vrot.slane %v907, 4
      %v910 = vshll.u32 %v824, 16
      %v912 = vrot.slane %v910, 5
      %v913 = vsel %vm829, %v908, %v912
      %v915 = vshrl.u32 %v813, 16
      %v917 = vrot.slane %v915, 4
      %v918 = vshll.u32 %v813, 16
      %v920 = vrot.slane %v918, 5
      %v921 = vor.u32 %v917, %v920
      %v922 = vrot.slane %v921, 4
      %v924 = vshll.u32 %v825, 16
      %v926 = vrot.slane %v924, 5
      %v927 = vsel %vm829, %v922, %v926
      %v929 = vshrl.u32 %v814, 16
      %v931 = vrot.slane %v929, 4
      %v932 = vshll.u32 %v814, 16
      %v934 = vrot.slane %v932, 5
      %v935 = vor.u32 %v931, %v934
      %v936 = vrot.slane %v935, 4
      %v938 = vshll.u32 %v826, 16
      %v940 = vrot.slane %v938, 5
      %v941 = vsel %vm829, %v936, %v940
      %s942 = scalar_lea.vmem %s3, 16
      %v943 = vld [vmem:[%s942] sm:$0xf]
      %v944 = vld [vmem:[%s942 + $0x4] sm:$0xf]
      %v945 = vld [vmem:[%s942 + $0x8] sm:$0xf]
      %v946 = vld [vmem:[%s942 + $0xc] sm:$0xf]
      %v947 = vunpack.c.l.b16 %v843
      %v948 = vunpack.c.l.b16 %v857
      %v949 = vunpack.c.l.b16 %v871
      %v950 = vunpack.c.l.b16 %v885
      %v951 = vunpack.c.l.b16 %v899
      %v952 = vunpack.c.l.b16 %v913
      %v953 = vunpack.c.l.b16 %v927
      %v954 = vunpack.c.l.b16 %v941
      %v955 = vpack.c.b16 %v948, %v947
      %v956 = vpack.c.b16 %v950, %v949
      %v957 = vpack.c.b16 %v952, %v951
      %v958 = vpack.c.b16 %v954, %v953
      %v963 = vunpack.c.l.b16 %v943
      %v964 = vunpack.c.l.b16 %v944
      %v965 = vunpack.c.l.b16 %v945
      %v966 = vunpack.c.l.b16 %v946
      %v967 = vpack.c.b16 %v964, %v963
      %v968 = vpack.c.b16 %v966, %v965
      %v972 = vsel %vm342, %v955, 0
      %v975 = vsel %vm342, %v956, 0
      %v978 = vsel %vm342, %v957, 0
      %v981 = vsel %vm342, %v958, 0
      %983 = vmatprep.subr.bf16.mxu0 0
      %984 = vmatpush1.bf16.msra.mxu0 %v967
      %985 = vmatprep.subr.bf16.mxu0 0
      %986 = vmatpush1.bf16.msra.mxu0 %v968
      %987 = vmatprep.subr.bf16.mxu0 0
      %988 = vmatpush1.bf16.msra.mxu0 0
      %989 = vmatprep.subr.bf16.mxu0 0
      %990 = vmatpush1.bf16.msra.mxu0 0
      %991 = vmatprep.subr.bf16.mxu0 0
      %992 = vmatpush1.bf16.msra.mxu0 0
      %993 = vmatprep.subr.bf16.mxu0 0
      %994 = vmatpush1.bf16.msra.mxu0 0
      %995 = vmatprep.subr.bf16.mxu0 0
      %996 = vmatpush1.bf16.msra.mxu0 0
      %997 = vmatprep.subr.bf16.mxu0 0
      %998 = vmatpush1.bf16.msra.mxu0 0
      %999 = vmatprep.subr.bf16.mxu0 0
      %1000 = vmatpush1.bf16.msra.mxu0 0
      %1001 = vmatprep.subr.bf16.mxu0 0
      %1002 = vmatpush1.bf16.msra.mxu0 0
      %1003 = vmatprep.subr.bf16.mxu0 0
      %1004 = vmatpush1.bf16.msra.mxu0 0
      %1005 = vmatprep.subr.bf16.mxu0 0
      %1006 = vmatpush1.bf16.msra.mxu0 0
      %1007 = vmatprep.subr.bf16.mxu0 0
      %1008 = vmatpush1.bf16.msra.mxu0 0
      %1009 = vmatprep.subr.bf16.mxu0 0
      %1010 = vmatpush1.bf16.msra.mxu0 0
      %1011 = vmatprep.subr.bf16.mxu0 0
      %1012 = vmatpush1.bf16.msra.mxu0 0
      %1013 = vmatprep.subr.bf16.mxu0 0
      %1014 = vmatpush1.bf16.msra.mxu0 0
      %1015 = vmatprep.mubr.bf16.mxu0 0
      %1016 = vmatmul.mubr.bf16.gmra.mrb[0].mxu0 %v972
      %v1017 = vpop.f32.mrb[0].mxu0
      %v1018 = vadd.f32 0.0, %v1017
      %v1019 = vpop.f32.mrb[0].mxu0
      %v1020 = vpop.f32.mrb[0].mxu0
      %v1021 = vadd.f32 0.0, %v1020
      %v1022 = vpop.f32.mrb[0].mxu0
      %1023 = vmatprep.mubr.bf16.mxu0 0
      %1024 = vmatmul.mubr.bf16.gmra.mrb[0].mxu0 %v975
      %v1025 = vpop.f32.mrb[0].mxu0
      %v1026 = vadd.f32 0.0, %v1025
      %v1027 = vpop.f32.mrb[0].mxu0
      %v1028 = vpop.f32.mrb[0].mxu0
      %v1029 = vadd.f32 0.0, %v1028
      %v1030 = vpop.f32.mrb[0].mxu0
      %1031 = vmatprep.mubr.bf16.mxu0 0
      %1032 = vmatmul.mubr.bf16.gmra.mrb[0].mxu0 %v978
      %v1033 = vpop.f32.mrb[0].mxu0
      %v1034 = vadd.f32 0.0, %v1033
      %v1035 = vpop.f32.mrb[0].mxu0
      %v1036 = vpop.f32.mrb[0].mxu0
      %v1037 = vadd.f32 0.0, %v1036
      %v1038 = vpop.f32.mrb[0].mxu0
      %1039 = vmatprep.mubr.bf16.mxu0 0
      %1040 = vmatmul.mubr.bf16.gmra.mrb[0].mxu0 %v981
      %v1041 = vpop.f32.mrb[0].mxu0
      %v1042 = vadd.f32 0.0, %v1041
      %v1043 = vpop.f32.mrb[0].mxu0
      %v1044 = vpop.f32.mrb[0].mxu0
      %v1045 = vadd.f32 0.0, %v1044
      %v1046 = vpop.f32.mrb[0].mxu0
      %1047 = vdwg.mxu0
      %v1056 = vunpack.c.l.b16 %v807
      %v1057 = vunpack.c.l.b16 %v808
      %v1058 = vunpack.c.l.b16 %v809
      %v1059 = vunpack.c.l.b16 %v810
      %v1060 = vunpack.c.l.b16 %v811
      %v1061 = vunpack.c.l.b16 %v812
      %v1062 = vunpack.c.l.b16 %v813
      %v1063 = vunpack.c.l.b16 %v814
      %v1064 = vpack.c.b16 %v1057, %v1056
      %v1065 = vpack.c.b16 %v1059, %v1058
      %v1066 = vpack.c.b16 %v1061, %v1060
      %v1067 = vpack.c.b16 %v1063, %v1062
      %v1072 = vunpack.c.l.b16 %v815
      %v1073 = vunpack.c.l.b16 %v816
      %v1074 = vunpack.c.l.b16 %v817
      %v1075 = vunpack.c.l.b16 %v818
      %v1076 = vpack.c.b16 %v1073, %v1072
      %v1077 = vpack.c.b16 %v1075, %v1074
      %v1081 = vsel %vm342, %v1064, 0
      %v1084 = vsel %vm342, %v1065, 0
      %v1087 = vsel %vm342, %v1066, 0
      %v1090 = vsel %vm342, %v1067, 0
      %1092 = vmatprep.subr.bf16.mxu0 0
      %1093 = vmatpush1.bf16.msra.mxu0 %v1076
      %1094 = vmatprep.subr.bf16.mxu0 0
      %1095 = vmatpush1.bf16.msra.mxu0 %v1077
      %1096 = vmatprep.subr.bf16.mxu0 0
      %1097 = vmatpush1.bf16.msra.mxu0 0
      %1098 = vmatprep.subr.bf16.mxu0 0
      %1099 = vmatpush1.bf16.msra.mxu0 0
      %1100 = vmatprep.subr.bf16.mxu0 0
      %1101 = vmatpush1.bf16.msra.mxu0 0
      %1102 = vmatprep.subr.bf16.mxu0 0
      %1103 = vmatpush1.bf16.msra.mxu0 0
      %1104 = vmatprep.subr.bf16.mxu0 0
      %1105 = vmatpush1.bf16.msra.mxu0 0
      %1106 = vmatprep.subr.bf16.mxu0 0
      %1107 = vmatpush1.bf16.msra.mxu0 0
      %1108 = vmatprep.subr.bf16.mxu0 0
      %1109 = vmatpush1.bf16.msra.mxu0 0
      %1110 = vmatprep.subr.bf16.mxu0 0
      %1111 = vmatpush1.bf16.msra.mxu0 0
      %1112 = vmatprep.subr.bf16.mxu0 0
      %1113 = vmatpush1.bf16.msra.mxu0 0
      %1114 = vmatprep.subr.bf16.mxu0 0
      %1115 = vmatpush1.bf16.msra.mxu0 0
      %1116 = vmatprep.subr.bf16.mxu0 0
      %1117 = vmatpush1.bf16.msra.mxu0 0
      %1118 = vmatprep.subr.bf16.mxu0 0
      %1119 = vmatpush1.bf16.msra.mxu0 0
      %1120 = vmatprep.subr.bf16.mxu0 0
      %1121 = vmatpush1.bf16.msra.mxu0 0
      %1122 = vmatprep.subr.bf16.mxu0 0
      %1123 = vmatpush1.bf16.msra.mxu0 0
      %1124 = vmatprep.mubr.bf16.mxu0 0
      %1125 = vmatmul.mubr.bf16.gmra.mrb[0].mxu0 %v1081
      %v1126 = vpop.f32.mrb[0].mxu0
      %v1127 = vadd.f32 %v1018, %v1126
      %v1128 = vpop.f32.mrb[0].mxu0
      %v1129 = vpop.f32.mrb[0].mxu0
      %v1130 = vadd.f32 %v1021, %v1129
      %v1131 = vpop.f32.mrb[0].mxu0
      %1132 = vmatprep.mubr.bf16.mxu0 0
      %1133 = vmatmul.mubr.bf16.gmra.mrb[0].mxu0 %v1084
      %v1134 = vpop.f32.mrb[0].mxu0
      %v1135 = vadd.f32 %v1026, %v1134
      %v1136 = vpop.f32.mrb[0].mxu0
      %v1137 = vpop.f32.mrb[0].mxu0
      %v1138 = vadd.f32 %v1029, %v1137
      %v1139 = vpop.f32.mrb[0].mxu0
      %1140 = vmatprep.mubr.bf16.mxu0 0
      %1141 = vmatmul.mubr.bf16.gmra.mrb[0].mxu0 %v1087
      %v1142 = vpop.f32.mrb[0].mxu0
      %v1143 = vadd.f32 %v1034, %v1142
      %v1144 = vpop.f32.mrb[0].mxu0
      %v1145 = vpop.f32.mrb[0].mxu0
      %v1146 = vadd.f32 %v1037, %v1145
      %v1147 = vpop.f32.mrb[0].mxu0
      %1148 = vmatprep.mubr.bf16.mxu0 0
      %1149 = vmatmul.mubr.bf16.gmra.mrb[0].mxu0 %v1090
      %v1150 = vpop.f32.mrb[0].mxu0
      %v1151 = vadd.f32 %v1042, %v1150
      %v1152 = vpop.f32.mrb[0].mxu0
      %v1153 = vpop.f32.mrb[0].mxu0
      %v1154 = vadd.f32 %v1045, %v1153
      %v1155 = vpop.f32.mrb[0].mxu0
      %1156 = vdwg.mxu0
      %v1157 = vld [vmem:[#allocation2] sm:$0xe]
      %v1158 = vld [vmem:[#allocation2 + $0x8] sm:$0xe]
      %v1159 = vld [vmem:[#allocation2 + $0x10] sm:$0xe]
      %v1160 = vld [vmem:[#allocation2 + $0x18] sm:$0xe]
      %v1161 = vld [vmem:[#allocation2 + $0x20] sm:$0xe]
      %v1162 = vld [vmem:[#allocation2 + $0x28] sm:$0xe]
      %v1163 = vld [vmem:[#allocation2 + $0x30] sm:$0xe]
      %v1164 = vld [vmem:[#allocation2 + $0x38] sm:$0xe]
      %vm1181 = vcmask 1042432
      %vm1182 = vcmask 1046532
      %vm1183 = vmor %vm1181, %vm1182
      %v1184 = vrot.slane %v1157, 5
      %v1185 = vrot.slane %v1184, 4
      %v1186 = vrot.slane %v819, 5
      %v1187 = vsel %vm1183, %v1185, %v1186
      %v1188 = vrot.slane %v1158, 5
      %v1189 = vrot.slane %v1188, 4
      %v1190 = vrot.slane %v820, 5
      %v1191 = vsel %vm1183, %v1189, %v1190
      %v1192 = vrot.slane %v1159, 5
      %v1193 = vrot.slane %v1192, 4
      %v1194 = vrot.slane %v821, 5
      %v1195 = vsel %vm1183, %v1193, %v1194
      %v1196 = vrot.slane %v1160, 5
      %v1197 = vrot.slane %v1196, 4
      %v1198 = vrot.slane %v822, 5
      %v1199 = vsel %vm1183, %v1197, %v1198
      %v1200 = vrot.slane %v1161, 5
      %v1201 = vrot.slane %v1200, 4
      %v1202 = vrot.slane %v823, 5
      %v1203 = vsel %vm1183, %v1201, %v1202
      %v1204 = vrot.slane %v1162, 5
      %v1205 = vrot.slane %v1204, 4
      %v1206 = vrot.slane %v824, 5
      %v1207 = vsel %vm1183, %v1205, %v1206
      %v1208 = vrot.slane %v1163, 5
      %v1209 = vrot.slane %v1208, 4
      %v1210 = vrot.slane %v825, 5
      %v1211 = vsel %vm1183, %v1209, %v1210
      %v1212 = vrot.slane %v1164, 5
      %v1213 = vrot.slane %v1212, 4
      %v1214 = vrot.slane %v826, 5
      %v1215 = vsel %vm1183, %v1213, %v1214
      %s1216 = scalar_lea.vmem %s3, 32
      %v1217 = vld [vmem:[%s1216] sm:$0xf]
      %v1218 = vld [vmem:[%s1216 + $0x4] sm:$0xf]
      %v1219 = vld [vmem:[%s1216 + $0x8] sm:$0xf]
      %v1220 = vld [vmem:[%s1216 + $0xc] sm:$0xf]
      %v1221 = vunpack.c.l.b16 %v1187
      %v1222 = vunpack.c.l.b16 %v1191
      %v1223 = vunpack.c.l.b16 %v1195
      %v1224 = vunpack.c.l.b16 %v1199
      %v1225 = vunpack.c.l.b16 %v1203
      %v1226 = vunpack.c.l.b16 %v1207
      %v1227 = vunpack.c.l.b16 %v1211
      %v1228 = vunpack.c.l.b16 %v1215
      %v1229 = vpack.c.b16 %v1222, %v1221
      %v1230 = vpack.c.b16 %v1224, %v1223
      %v1231 = vpack.c.b16 %v1226, %v1225
      %v1232 = vpack.c.b16 %v1228, %v1227
      %v1237 = vunpack.c.l.b16 %v1217
      %v1238 = vunpack.c.l.b16 %v1218
      %v1239 = vunpack.c.l.b16 %v1219
      %v1240 = vunpack.c.l.b16 %v1220
      %v1241 = vpack.c.b16 %v1238, %v1237
      %v1242 = vpack.c.b16 %v1240, %v1239
      %v1246 = vsel %vm342, %v1229, 0
      %v1249 = vsel %vm342, %v1230, 0
      %v1252 = vsel %vm342, %v1231, 0
      %v1255 = vsel %vm342, %v1232, 0
      %1257 = vmatprep.subr.bf16.mxu0 0
      %1258 = vmatpush1.bf16.msra.mxu0 %v1241
      %1259 = vmatprep.subr.bf16.mxu0 0
      %1260 = vmatpush1.bf16.msra.mxu0 %v1242
      %1261 = vmatprep.subr.bf16.mxu0 0
      %1262 = vmatpush1.bf16.msra.mxu0 0
      %1263 = vmatprep.subr.bf16.mxu0 0
      %1264 = vmatpush1.bf16.msra.mxu0 0
      %1265 = vmatprep.subr.bf16.mxu0 0
      %1266 = vmatpush1.bf16.msra.mxu0 0
      %1267 = vmatprep.subr.bf16.mxu0 0
      %1268 = vmatpush1.bf16.msra.mxu0 0
      %1269 = vmatprep.subr.bf16.mxu0 0
      %1270 = vmatpush1.bf16.msra.mxu0 0
      %1271 = vmatprep.subr.bf16.mxu0 0
      %1272 = vmatpush1.bf16.msra.mxu0 0
      %1273 = vmatprep.subr.bf16.mxu0 0
      %1274 = vmatpush1.bf16.msra.mxu0 0
      %1275 = vmatprep.subr.bf16.mxu0 0
      %1276 = vmatpush1.bf16.msra.mxu0 0
      %1277 = vmatprep.subr.bf16.mxu0 0
      %1278 = vmatpush1.bf16.msra.mxu0 0
      %1279 = vmatprep.subr.bf16.mxu0 0
      %1280 = vmatpush1.bf16.msra.mxu0 0
      %1281 = vmatprep.subr.bf16.mxu0 0
      %1282 = vmatpush1.bf16.msra.mxu0 0
      %1283 = vmatprep.subr.bf16.mxu0 0
      %1284 = vmatpush1.bf16.msra.mxu0 0
      %1285 = vmatprep.subr.bf16.mxu0 0
      %1286 = vmatpush1.bf16.msra.mxu0 0
      %1287 = vmatprep.subr.bf16.mxu0 0
      %1288 = vmatpush1.bf16.msra.mxu0 0
      %1289 = vmatprep.mubr.bf16.mxu0 0
      %1290 = vmatmul.mubr.bf16.gmra.mrb[0].mxu0 %v1246
      %v1291 = vpop.f32.mrb[0].mxu0
      %v1292 = vadd.f32 0.0, %v1291
      %v1293 = vpop.f32.mrb[0].mxu0
      %v1294 = vpop.f32.mrb[0].mxu0
      %v1295 = vadd.f32 0.0, %v1294
      %v1296 = vpop.f32.mrb[0].mxu0
      %1297 = vmatprep.mubr.bf16.mxu0 0
      %1298 = vmatmul.mubr.bf16.gmra.mrb[0].mxu0 %v1249
      %v1299 = vpop.f32.mrb[0].mxu0
      %v1300 = vadd.f32 0.0, %v1299
      %v1301 = vpop.f32.mrb[0].mxu0
      %v1302 = vpop.f32.mrb[0].mxu0
      %v1303 = vadd.f32 0.0, %v1302
      %v1304 = vpop.f32.mrb[0].mxu0
      %1305 = vmatprep.mubr.bf16.mxu0 0
      %1306 = vmatmul.mubr.bf16.gmra.mrb[0].mxu0 %v1252
      %v1307 = vpop.f32.mrb[0].mxu0
      %v1308 = vadd.f32 0.0, %v1307
      %v1309 = vpop.f32.mrb[0].mxu0
      %v1310 = vpop.f32.mrb[0].mxu0
      %v1311 = vadd.f32 0.0, %v1310
      %v1312 = vpop.f32.mrb[0].mxu0
      %1313 = vmatprep.mubr.bf16.mxu0 0
      %1314 = vmatmul.mubr.bf16.gmra.mrb[0].mxu0 %v1255
      %v1315 = vpop.f32.mrb[0].mxu0
      %v1316 = vadd.f32 0.0, %v1315
      %v1317 = vpop.f32.mrb[0].mxu0
      %v1318 = vpop.f32.mrb[0].mxu0
      %v1319 = vadd.f32 0.0, %v1318
      %v1320 = vpop.f32.mrb[0].mxu0
      %1321 = vdwg.mxu0
      %v1322 = vadd.f32 %v1127, %v1292
      %v1323 = vadd.f32 %v1130, %v1295
      %v1324 = vadd.f32 %v1135, %v1300
      %v1325 = vadd.f32 %v1138, %v1303
      %v1326 = vadd.f32 %v1143, %v1308
      %v1327 = vadd.f32 %v1146, %v1311
      %v1328 = vadd.f32 %v1151, %v1316
      %v1329 = vadd.f32 %v1154, %v1319
      %v1330 = vld [vmem:[%s752] sm:$0xf]
      %v1331 = vld [vmem:[%s752 + $0x8] sm:$0xf]
      %v1332 = vld [vmem:[%s752 + $0x10] sm:$0xf]
      %v1333 = vld [vmem:[%s752 + $0x18] sm:$0xf]
      %v1334 = vld [vmem:[%s752 + $0x20] sm:$0xf]
      %v1335 = vld [vmem:[%s752 + $0x28] sm:$0xf]
      %v1336 = vld [vmem:[%s752 + $0x30] sm:$0xf]
      %v1337 = vld [vmem:[%s752 + $0x38] sm:$0xf]
      %s1338 = scalar_lea.vmem %s3, 48
      %v1339 = vld [vmem:[%s1338] sm:$0xf]
      %v1340 = vld [vmem:[%s1338 + $0x4] sm:$0xf]
      %v1341 = vld [vmem:[%s1338 + $0x8] sm:$0xf]
      %v1342 = vld [vmem:[%s1338 + $0xc] sm:$0xf]
      %v1351 = vunpack.c.l.b16 %v1330
      %v1352 = vunpack.c.l.b16 %v1331
      %v1353 = vunpack.c.l.b16 %v1332
      %v1354 = vunpack.c.l.b16 %v1333
      %v1355 = vunpack.c.l.b16 %v1334
      %v1356 = vunpack.c.l.b16 %v1335
      %v1357 = vunpack.c.l.b16 %v1336
      %v1358 = vunpack.c.l.b16 %v1337
      %v1359 = vpack.c.b16 %v1352, %v1351
      %v1360 = vpack.c.b16 %v1354, %v1353
      %v1361 = vpack.c.b16 %v1356, %v1355
      %v1362 = vpack.c.b16 %v1358, %v1357
      %v1367 = vunpack.c.l.b16 %v1339
      %v1368 = vunpack.c.l.b16 %v1340
      %v1369 = vunpack.c.l.b16 %v1341
      %v1370 = vunpack.c.l.b16 %v1342
      %v1371 = vpack.c.b16 %v1368, %v1367
      %v1372 = vpack.c.b16 %v1370, %v1369
      %v1376 = vsel %vm342, %v1359, 0
      %v1379 = vsel %vm342, %v1360, 0
      %v1382 = vsel %vm342, %v1361, 0
      %v1385 = vsel %vm342, %v1362, 0
      %1387 = vmatprep.subr.bf16.mxu0 0
      %1388 = vmatpush1.bf16.msra.mxu0 %v1371
      %1389 = vmatprep.subr.bf16.mxu0 0
      %1390 = vmatpush1.bf16.msra.mxu0 %v1372
      %1391 = vmatprep.subr.bf16.mxu0 0
      %1392 = vmatpush1.bf16.msra.mxu0 0
      %1393 = vmatprep.subr.bf16.mxu0 0
      %1394 = vmatpush1.bf16.msra.mxu0 0
      %1395 = vmatprep.subr.bf16.mxu0 0
      %1396 = vmatpush1.bf16.msra.mxu0 0
      %1397 = vmatprep.subr.bf16.mxu0 0
      %1398 = vmatpush1.bf16.msra.mxu0 0
      %1399 = vmatprep.subr.bf16.mxu0 0
      %1400 = vmatpush1.bf16.msra.mxu0 0
      %1401 = vmatprep.subr.bf16.mxu0 0
      %1402 = vmatpush1.bf16.msra.mxu0 0
      %1403 = vmatprep.subr.bf16.mxu0 0
      %1404 = vmatpush1.bf16.msra.mxu0 0
      %1405 = vmatprep.subr.bf16.mxu0 0
      %1406 = vmatpush1.bf16.msra.mxu0 0
      %1407 = vmatprep.subr.bf16.mxu0 0
      %1408 = vmatpush1.bf16.msra.mxu0 0
      %1409 = vmatprep.subr.bf16.mxu0 0
      %1410 = vmatpush1.bf16.msra.mxu0 0
      %1411 = vmatprep.subr.bf16.mxu0 0
      %1412 = vmatpush1.bf16.msra.mxu0 0
      %1413 = vmatprep.subr.bf16.mxu0 0
      %1414 = vmatpush1.bf16.msra.mxu0 0
      %1415 = vmatprep.subr.bf16.mxu0 0
      %1416 = vmatpush1.bf16.msra.mxu0 0
      %1417 = vmatprep.subr.bf16.mxu0 0
      %1418 = vmatpush1.bf16.msra.mxu0 0
      %1419 = vmatprep.mubr.bf16.mxu0 0
      %1420 = vmatmul.mubr.bf16.gmra.mrb[0].mxu0 %v1376
      %v1421 = vpop.f32.mrb[0].mxu0
      %v1422 = vadd.f32 0.0, %v1421
      %v1423 = vpop.f32.mrb[0].mxu0
      %v1424 = vpop.f32.mrb[0].mxu0
      %v1425 = vadd.f32 0.0, %v1424
      %v1426 = vpop.f32.mrb[0].mxu0
      %1427 = vmatprep.mubr.bf16.mxu0 0
      %1428 = vmatmul.mubr.bf16.gmra.mrb[0].mxu0 %v1379
      %v1429 = vpop.f32.mrb[0].mxu0
      %v1430 = vadd.f32 0.0, %v1429
      %v1431 = vpop.f32.mrb[0].mxu0
      %v1432 = vpop.f32.mrb[0].mxu0
      %v1433 = vadd.f32 0.0, %v1432
      %v1434 = vpop.f32.mrb[0].mxu0
      %1435 = vmatprep.mubr.bf16.mxu0 0
      %1436 = vmatmul.mubr.bf16.gmra.mrb[0].mxu0 %v1382
      %v1437 = vpop.f32.mrb[0].mxu0
      %v1438 = vadd.f32 0.0, %v1437
      %v1439 = vpop.f32.mrb[0].mxu0
      %v1440 = vpop.f32.mrb[0].mxu0
      %v1441 = vadd.f32 0.0, %v1440
      %v1442 = vpop.f32.mrb[0].mxu0
      %1443 = vmatprep.mubr.bf16.mxu0 0
      %1444 = vmatmul.mubr.bf16.gmra.mrb[0].mxu0 %v1385
      %v1445 = vpop.f32.mrb[0].mxu0
      %v1446 = vadd.f32 0.0, %v1445
      %v1447 = vpop.f32.mrb[0].mxu0
      %v1448 = vpop.f32.mrb[0].mxu0
      %v1449 = vadd.f32 0.0, %v1448
      %v1450 = vpop.f32.mrb[0].mxu0
      %1451 = vdwg.mxu0
      %v1452 = vadd.f32 %v1322, %v1422
      %v1453 = vadd.f32 %v1323, %v1425
      %v1454 = vadd.f32 %v1324, %v1430
      %v1455 = vadd.f32 %v1325, %v1433
      %v1456 = vadd.f32 %v1326, %v1438
      %v1457 = vadd.f32 %v1327, %v1441
      %v1458 = vadd.f32 %v1328, %v1446
      %v1459 = vadd.f32 %v1329, %v1449
      %v1460 = vld [vmem:[%s752] sm:$0xf]
      %v1461 = vld [vmem:[%s752 + $0x4] sm:$0x1]
      %v1462 = vld [vmem:[%s752 + $0x8] sm:$0xf]
      %v1463 = vld [vmem:[%s752 + $0xc] sm:$0x1]
      %v1464 = vld [vmem:[%s752 + $0x10] sm:$0xf]
      %v1465 = vld [vmem:[%s752 + $0x14] sm:$0x1]
      %v1466 = vld [vmem:[%s752 + $0x18] sm:$0xf]
      %v1467 = vld [vmem:[%s752 + $0x1c] sm:$0x1]
      %v1468 = vld [vmem:[%s752 + $0x20] sm:$0xf]
      %v1469 = vld [vmem:[%s752 + $0x24] sm:$0x1]
      %v1470 = vld [vmem:[%s752 + $0x28] sm:$0xf]
      %v1471 = vld [vmem:[%s752 + $0x2c] sm:$0x1]
      %v1472 = vld [vmem:[%s752 + $0x30] sm:$0xf]
      %v1473 = vld [vmem:[%s752 + $0x34] sm:$0x1]
      %v1474 = vld [vmem:[%s752 + $0x38] sm:$0xf]
      %v1475 = vld [vmem:[%s752 + $0x3c] sm:$0x1]
      %v1477 = vshrl.u32 %v1460, 16
      %v1479 = vrot.slane %v1477, 4
      %v1480 = vshll.u32 %v1460, 16
      %v1482 = vrot.slane %v1480, 5
      %v1483 = vor.u32 %v1479, %v1482
      %v1484 = vrot.slane %v1483, 4
      %v1486 = vshll.u32 %v1461, 16
      %v1488 = vrot.slane %v1486, 5
      %v1489 = vsel %vm829, %v1484, %v1488
      %v1491 = vshrl.u32 %v1462, 16
      %v1493 = vrot.slane %v1491, 4
      %v1494 = vshll.u32 %v1462, 16
      %v1496 = vrot.slane %v1494, 5
      %v1497 = vor.u32 %v1493, %v1496
      %v1498 = vrot.slane %v1497, 4
      %v1500 = vshll.u32 %v1463, 16
      %v1502 = vrot.slane %v1500, 5
      %v1503 = vsel %vm829, %v1498, %v1502
      %v1505 = vshrl.u32 %v1464, 16
      %v1507 = vrot.slane %v1505, 4
      %v1508 = vshll.u32 %v1464, 16
      %v1510 = vrot.slane %v1508, 5
      %v1511 = vor.u32 %v1507, %v1510
      %v1512 = vrot.slane %v1511, 4
      %v1514 = vshll.u32 %v1465, 16
      %v1516 = vrot.slane %v1514, 5
      %v1517 = vsel %vm829, %v1512, %v1516
      %v1519 = vshrl.u32 %v1466, 16
      %v1521 = vrot.slane %v1519, 4
      %v1522 = vshll.u32 %v1466, 16
      %v1524 = vrot.slane %v1522, 5
      %v1525 = vor.u32 %v1521, %v1524
      %v1526 = vrot.slane %v1525, 4
      %v1528 = vshll.u32 %v1467, 16
      %v1530 = vrot.slane %v1528, 5
      %v1531 = vsel %vm829, %v1526, %v1530
      %v1533 = vshrl.u32 %v1468, 16
      %v1535 = vrot.slane %v1533, 4
      %v1536 = vshll.u32 %v1468, 16
      %v1538 = vrot.slane %v1536, 5
      %v1539 = vor.u32 %v1535, %v1538
      %v1540 = vrot.slane %v1539, 4
      %v1542 = vshll.u32 %v1469, 16
      %v1544 = vrot.slane %v1542, 5
      %v1545 = vsel %vm829, %v1540, %v1544
      %v1547 = vshrl.u32 %v1470, 16
      %v1549 = vrot.slane %v1547, 4
      %v1550 = vshll.u32 %v1470, 16
      %v1552 = vrot.slane %v1550, 5
      %v1553 = vor.u32 %v1549, %v1552
      %v1554 = vrot.slane %v1553, 4
      %v1556 = vshll.u32 %v1471, 16
      %v1558 = vrot.slane %v1556, 5
      %v1559 = vsel %vm829, %v1554, %v1558
      %v1561 = vshrl.u32 %v1472, 16
      %v1563 = vrot.slane %v1561, 4
      %v1564 = vshll.u32 %v1472, 16
      %v1566 = vrot.slane %v1564, 5
      %v1567 = vor.u32 %v1563, %v1566
      %v1568 = vrot.slane %v1567, 4
      %v1570 = vshll.u32 %v1473, 16
      %v1572 = vrot.slane %v1570, 5
      %v1573 = vsel %vm829, %v1568, %v1572
      %v1575 = vshrl.u32 %v1474, 16
      %v1577 = vrot.slane %v1575, 4
      %v1578 = vshll.u32 %v1474, 16
      %v1580 = vrot.slane %v1578, 5
      %v1581 = vor.u32 %v1577, %v1580
      %v1582 = vrot.slane %v1581, 4
      %v1584 = vshll.u32 %v1475, 16
      %v1586 = vrot.slane %v1584, 5
      %v1587 = vsel %vm829, %v1582, %v1586
      %s1588 = scalar_lea.vmem %s3, 64
      %v1589 = vld [vmem:[%s1588] sm:$0xf]
      %v1590 = vld [vmem:[%s1588 + $0x4] sm:$0xf]
      %v1591 = vld [vmem:[%s1588 + $0x8] sm:$0xf]
      %v1592 = vld [vmem:[%s1588 + $0xc] sm:$0xf]
      %v1593 = vunpack.c.l.b16 %v1489
      %v1594 = vunpack.c.l.b16 %v1503
      %v1595 = vunpack.c.l.b16 %v1517
      %v1596 = vunpack.c.l.b16 %v1531
      %v1597 = vunpack.c.l.b16 %v1545
      %v1598 = vunpack.c.l.b16 %v1559
      %v1599 = vunpack.c.l.b16 %v1573
      %v1600 = vunpack.c.l.b16 %v1587
      %v1601 = vpack.c.b16 %v1594, %v1593
      %v1602 = vpack.c.b16 %v1596, %v1595
      %v1603 = vpack.c.b16 %v1598, %v1597
      %v1604 = vpack.c.b16 %v1600, %v1599
      %v1609 = vunpack.c.l.b16 %v1589
      %v1610 = vunpack.c.l.b16 %v1590
      %v1611 = vunpack.c.l.b16 %v1591
      %v1612 = vunpack.c.l.b16 %v1592
      %v1613 = vpack.c.b16 %v1610, %v1609
      %v1614 = vpack.c.b16 %v1612, %v1611
      %v1618 = vsel %vm342, %v1601, 0
      %v1621 = vsel %vm342, %v1602, 0
      %v1624 = vsel %vm342, %v1603, 0
      %v1627 = vsel %vm342, %v1604, 0
      %1629 = vmatprep.subr.bf16.mxu0 0
      %1630 = vmatpush1.bf16.msra.mxu0 %v1613
      %1631 = vmatprep.subr.bf16.mxu0 0
      %1632 = vmatpush1.bf16.msra.mxu0 %v1614
      %1633 = vmatprep.subr.bf16.mxu0 0
      %1634 = vmatpush1.bf16.msra.mxu0 0
      %1635 = vmatprep.subr.bf16.mxu0 0
      %1636 = vmatpush1.bf16.msra.mxu0 0
      %1637 = vmatprep.subr.bf16.mxu0 0
      %1638 = vmatpush1.bf16.msra.mxu0 0
      %1639 = vmatprep.subr.bf16.mxu0 0
      %1640 = vmatpush1.bf16.msra.mxu0 0
      %1641 = vmatprep.subr.bf16.mxu0 0
      %1642 = vmatpush1.bf16.msra.mxu0 0
      %1643 = vmatprep.subr.bf16.mxu0 0
      %1644 = vmatpush1.bf16.msra.mxu0 0
      %1645 = vmatprep.subr.bf16.mxu0 0
      %1646 = vmatpush1.bf16.msra.mxu0 0
      %1647 = vmatprep.subr.bf16.mxu0 0
      %1648 = vmatpush1.bf16.msra.mxu0 0
      %1649 = vmatprep.subr.bf16.mxu0 0
      %1650 = vmatpush1.bf16.msra.mxu0 0
      %1651 = vmatprep.subr.bf16.mxu0 0
      %1652 = vmatpush1.bf16.msra.mxu0 0
      %1653 = vmatprep.subr.bf16.mxu0 0
      %1654 = vmatpush1.bf16.msra.mxu0 0
      %1655 = vmatprep.subr.bf16.mxu0 0
      %1656 = vmatpush1.bf16.msra.mxu0 0
      %1657 = vmatprep.subr.bf16.mxu0 0
      %1658 = vmatpush1.bf16.msra.mxu0 0
      %1659 = vmatprep.subr.bf16.mxu0 0
      %1660 = vmatpush1.bf16.msra.mxu0 0
      %1661 = vmatprep.mubr.bf16.mxu0 0
      %1662 = vmatmul.mubr.bf16.gmra.mrb[0].mxu0 %v1618
      %v1663 = vpop.f32.mrb[0].mxu0
      %v1664 = vadd.f32 0.0, %v1663
      %v1665 = vpop.f32.mrb[0].mxu0
      %v1666 = vpop.f32.mrb[0].mxu0
      %v1667 = vadd.f32 0.0, %v1666
      %v1668 = vpop.f32.mrb[0].mxu0
      %1669 = vmatprep.mubr.bf16.mxu0 0
      %1670 = vmatmul.mubr.bf16.gmra.mrb[0].mxu0 %v1621
      %v1671 = vpop.f32.mrb[0].mxu0
      %v1672 = vadd.f32 0.0, %v1671
      %v1673 = vpop.f32.mrb[0].mxu0
      %v1674 = vpop.f32.mrb[0].mxu0
      %v1675 = vadd.f32 0.0, %v1674
      %v1676 = vpop.f32.mrb[0].mxu0
      %1677 = vmatprep.mubr.bf16.mxu0 0
      %1678 = vmatmul.mubr.bf16.gmra.mrb[0].mxu0 %v1624
      %v1679 = vpop.f32.mrb[0].mxu0
      %v1680 = vadd.f32 0.0, %v1679
      %v1681 = vpop.f32.mrb[0].mxu0
      %v1682 = vpop.f32.mrb[0].mxu0
      %v1683 = vadd.f32 0.0, %v1682
      %v1684 = vpop.f32.mrb[0].mxu0
      %1685 = vmatprep.mubr.bf16.mxu0 0
      %1686 = vmatmul.mubr.bf16.gmra.mrb[0].mxu0 %v1627
      %v1687 = vpop.f32.mrb[0].mxu0
      %v1688 = vadd.f32 0.0, %v1687
      %v1689 = vpop.f32.mrb[0].mxu0
      %v1690 = vpop.f32.mrb[0].mxu0
      %v1691 = vadd.f32 0.0, %v1690
      %v1692 = vpop.f32.mrb[0].mxu0
      %1693 = vdwg.mxu0
      %v1694 = vadd.f32 %v1452, %v1664
      %v1695 = vadd.f32 %v1453, %v1667
      %v1696 = vadd.f32 %v1454, %v1672
      %v1697 = vadd.f32 %v1455, %v1675
      %v1698 = vadd.f32 %v1456, %v1680
      %v1699 = vadd.f32 %v1457, %v1683
      %v1700 = vadd.f32 %v1458, %v1688
      %v1701 = vadd.f32 %v1459, %v1691
      %v1702 = vld [vmem:[%s752] sm:$0xe]
      %v1703 = vld [vmem:[%s752 + $0x8] sm:$0xe]
      %v1704 = vld [vmem:[%s752 + $0x10] sm:$0xe]
      %v1705 = vld [vmem:[%s752 + $0x18] sm:$0xe]
      %v1706 = vld [vmem:[%s752 + $0x20] sm:$0xe]
      %v1707 = vld [vmem:[%s752 + $0x28] sm:$0xe]
      %v1708 = vld [vmem:[%s752 + $0x30] sm:$0xe]
      %v1709 = vld [vmem:[%s752 + $0x38] sm:$0xe]
      %v1726 = vrot.slane %v1702, 5
      %v1727 = vrot.slane %v1726, 4
      %v1728 = vrot.slane %v1461, 5
      %v1729 = vsel %vm1183, %v1727, %v1728
      %v1730 = vrot.slane %v1703, 5
      %v1731 = vrot.slane %v1730, 4
      %v1732 = vrot.slane %v1463, 5
      %v1733 = vsel %vm1183, %v1731, %v1732
      %v1734 = vrot.slane %v1704, 5
      %v1735 = vrot.slane %v1734, 4
      %v1736 = vrot.slane %v1465, 5
      %v1737 = vsel %vm1183, %v1735, %v1736
      %v1738 = vrot.slane %v1705, 5
      %v1739 = vrot.slane %v1738, 4
      %v1740 = vrot.slane %v1467, 5
      %v1741 = vsel %vm1183, %v1739, %v1740
      %v1742 = vrot.slane %v1706, 5
      %v1743 = vrot.slane %v1742, 4
      %v1744 = vrot.slane %v1469, 5
      %v1745 = vsel %vm1183, %v1743, %v1744
      %v1746 = vrot.slane %v1707, 5
      %v1747 = vrot.slane %v1746, 4
      %v1748 = vrot.slane %v1471, 5
      %v1749 = vsel %vm1183, %v1747, %v1748
      %v1750 = vrot.slane %v1708, 5
      %v1751 = vrot.slane %v1750, 4
      %v1752 = vrot.slane %v1473, 5
      %v1753 = vsel %vm1183, %v1751, %v1752
      %v1754 = vrot.slane %v1709, 5
      %v1755 = vrot.slane %v1754, 4
      %v1756 = vrot.slane %v1475, 5
      %v1757 = vsel %vm1183, %v1755, %v1756
      %s1758 = scalar_lea.vmem %s3, 80
      %v1759 = vld [vmem:[%s1758] sm:$0xf]
      %v1760 = vld [vmem:[%s1758 + $0x4] sm:$0xf]
      %v1761 = vld [vmem:[%s1758 + $0x8] sm:$0xf]
      %v1762 = vld [vmem:[%s1758 + $0xc] sm:$0xf]
      %v1763 = vunpack.c.l.b16 %v1729
      %v1764 = vunpack.c.l.b16 %v1733
      %v1765 = vunpack.c.l.b16 %v1737
      %v1766 = vunpack.c.l.b16 %v1741
      %v1767 = vunpack.c.l.b16 %v1745
      %v1768 = vunpack.c.l.b16 %v1749
      %v1769 = vunpack.c.l.b16 %v1753
      %v1770 = vunpack.c.l.b16 %v1757
      %v1771 = vpack.c.b16 %v1764, %v1763
      %v1772 = vpack.c.b16 %v1766, %v1765
      %v1773 = vpack.c.b16 %v1768, %v1767
      %v1774 = vpack.c.b16 %v1770, %v1769
      %v1779 = vunpack.c.l.b16 %v1759
      %v1780 = vunpack.c.l.b16 %v1760
      %v1781 = vunpack.c.l.b16 %v1761
      %v1782 = vunpack.c.l.b16 %v1762
      %v1783 = vpack.c.b16 %v1780, %v1779
      %v1784 = vpack.c.b16 %v1782, %v1781
      %v1788 = vsel %vm342, %v1771, 0
      %v1791 = vsel %vm342, %v1772, 0
      %v1794 = vsel %vm342, %v1773, 0
      %v1797 = vsel %vm342, %v1774, 0
      %1799 = vmatprep.subr.bf16.mxu0 0
      %1800 = vmatpush1.bf16.msra.mxu0 %v1783
      %1801 = vmatprep.subr.bf16.mxu0 0
      %1802 = vmatpush1.bf16.msra.mxu0 %v1784
      %1803 = vmatprep.subr.bf16.mxu0 0
      %1804 = vmatpush1.bf16.msra.mxu0 0
      %1805 = vmatprep.subr.bf16.mxu0 0
      %1806 = vmatpush1.bf16.msra.mxu0 0
      %1807 = vmatprep.subr.bf16.mxu0 0
      %1808 = vmatpush1.bf16.msra.mxu0 0
      %1809 = vmatprep.subr.bf16.mxu0 0
      %1810 = vmatpush1.bf16.msra.mxu0 0
      %1811 = vmatprep.subr.bf16.mxu0 0
      %1812 = vmatpush1.bf16.msra.mxu0 0
      %1813 = vmatprep.subr.bf16.mxu0 0
      %1814 = vmatpush1.bf16.msra.mxu0 0
      %1815 = vmatprep.subr.bf16.mxu0 0
      %1816 = vmatpush1.bf16.msra.mxu0 0
      %1817 = vmatprep.subr.bf16.mxu0 0
      %1818 = vmatpush1.bf16.msra.mxu0 0
      %1819 = vmatprep.subr.bf16.mxu0 0
      %1820 = vmatpush1.bf16.msra.mxu0 0
      %1821 = vmatprep.subr.bf16.mxu0 0
      %1822 = vmatpush1.bf16.msra.mxu0 0
      %1823 = vmatprep.subr.bf16.mxu0 0
      %1824 = vmatpush1.bf16.msra.mxu0 0
      %1825 = vmatprep.subr.bf16.mxu0 0
      %1826 = vmatpush1.bf16.msra.mxu0 0
      %1827 = vmatprep.subr.bf16.mxu0 0
      %1828 = vmatpush1.bf16.msra.mxu0 0
      %1829 = vmatprep.subr.bf16.mxu0 0
      %1830 = vmatpush1.bf16.msra.mxu0 0
      %1831 = vmatprep.mubr.bf16.mxu0 0
      %1832 = vmatmul.mubr.bf16.gmra.mrb[0].mxu0 %v1788
      %v1833 = vpop.f32.mrb[0].mxu0
      %v1834 = vadd.f32 0.0, %v1833
      %v1835 = vpop.f32.mrb[0].mxu0
      %v1836 = vpop.f32.mrb[0].mxu0
      %v1837 = vadd.f32 0.0, %v1836
      %v1838 = vpop.f32.mrb[0].mxu0
      %1839 = vmatprep.mubr.bf16.mxu0 0
      %1840 = vmatmul.mubr.bf16.gmra.mrb[0].mxu0 %v1791
      %v1841 = vpop.f32.mrb[0].mxu0
      %v1842 = vadd.f32 0.0, %v1841
      %v1843 = vpop.f32.mrb[0].mxu0
      %v1844 = vpop.f32.mrb[0].mxu0
      %v1845 = vadd.f32 0.0, %v1844
      %v1846 = vpop.f32.mrb[0].mxu0
      %1847 = vmatprep.mubr.bf16.mxu0 0
      %1848 = vmatmul.mubr.bf16.gmra.mrb[0].mxu0 %v1794
      %v1849 = vpop.f32.mrb[0].mxu0
      %v1850 = vadd.f32 0.0, %v1849
      %v1851 = vpop.f32.mrb[0].mxu0
      %v1852 = vpop.f32.mrb[0].mxu0
      %v1853 = vadd.f32 0.0, %v1852
      %v1854 = vpop.f32.mrb[0].mxu0
      %1855 = vmatprep.mubr.bf16.mxu0 0
      %1856 = vmatmul.mubr.bf16.gmra.mrb[0].mxu0 %v1797
      %v1857 = vpop.f32.mrb[0].mxu0
      %v1858 = vadd.f32 0.0, %v1857
      %v1859 = vpop.f32.mrb[0].mxu0
      %v1860 = vpop.f32.mrb[0].mxu0
      %v1861 = vadd.f32 0.0, %v1860
      %v1862 = vpop.f32.mrb[0].mxu0
      %1863 = vdwg.mxu0
      %v1864 = vadd.f32 %v1694, %v1834
      %v1865 = vadd.f32 %v1695, %v1837
      %v1866 = vadd.f32 %v1696, %v1842
      %v1867 = vadd.f32 %v1697, %v1845
      %v1868 = vadd.f32 %v1698, %v1850
      %v1869 = vadd.f32 %v1699, %v1853
      %v1870 = vadd.f32 %v1700, %v1858
      %v1871 = vadd.f32 %v1701, %v1861
      %s1872 = scalar_lea.vmem [#allocation2], 16
      %v1873 = vld [vmem:[%s1872] sm:$0xf]
      %v1874 = vld [vmem:[%s1872 + $0x8] sm:$0xf]
      %v1875 = vld [vmem:[%s1872 + $0x10] sm:$0xf]
      %v1876 = vld [vmem:[%s1872 + $0x18] sm:$0xf]
      %v1877 = vld [vmem:[%s1872 + $0x20] sm:$0xf]
      %v1878 = vld [vmem:[%s1872 + $0x28] sm:$0xf]
      %v1879 = vld [vmem:[%s1872 + $0x30] sm:$0xf]
      %v1880 = vld [vmem:[%s1872 + $0x38] sm:$0xf]
      %s1881 = scalar_lea.vmem %s3, 96
      %v1882 = vld [vmem:[%s1881] sm:$0xf]
      %v1883 = vld [vmem:[%s1881 + $0x4] sm:$0xf]
      %v1884 = vld [vmem:[%s1881 + $0x8] sm:$0xf]
      %v1885 = vld [vmem:[%s1881 + $0xc] sm:$0xf]
      %v1894 = vunpack.c.l.b16 %v1873
      %v1895 = vunpack.c.l.b16 %v1874
      %v1896 = vunpack.c.l.b16 %v1875
      %v1897 = vunpack.c.l.b16 %v1876
      %v1898 = vunpack.c.l.b16 %v1877
      %v1899 = vunpack.c.l.b16 %v1878
      %v1900 = vunpack.c.l.b16 %v1879
      %v1901 = vunpack.c.l.b16 %v1880
      %v1902 = vpack.c.b16 %v1895, %v1894
      %v1903 = vpack.c.b16 %v1897, %v1896
      %v1904 = vpack.c.b16 %v1899, %v1898
      %v1905 = vpack.c.b16 %v1901, %v1900
      %v1910 = vunpack.c.l.b16 %v1882
      %v1911 = vunpack.c.l.b16 %v1883
      %v1912 = vunpack.c.l.b16 %v1884
      %v1913 = vunpack.c.l.b16 %v1885
      %v1914 = vpack.c.b16 %v1911, %v1910
      %v1915 = vpack.c.b16 %v1913, %v1912
      %v1919 = vsel %vm342, %v1902, 0
      %v1922 = vsel %vm342, %v1903, 0
      %v1925 = vsel %vm342, %v1904, 0
      %v1928 = vsel %vm342, %v1905, 0
      %1930 = vmatprep.subr.bf16.mxu0 0
      %1931 = vmatpush1.bf16.msra.mxu0 %v1914
      %1932 = vmatprep.subr.bf16.mxu0 0
      %1933 = vmatpush1.bf16.msra.mxu0 %v1915
      %1934 = vmatprep.subr.bf16.mxu0 0
      %1935 = vmatpush1.bf16.msra.mxu0 0
      %1936 = vmatprep.subr.bf16.mxu0 0
      %1937 = vmatpush1.bf16.msra.mxu0 0
      %1938 = vmatprep.subr.bf16.mxu0 0
      %1939 = vmatpush1.bf16.msra.mxu0 0
      %1940 = vmatprep.subr.bf16.mxu0 0
      %1941 = vmatpush1.bf16.msra.mxu0 0
      %1942 = vmatprep.subr.bf16.mxu0 0
      %1943 = vmatpush1.bf16.msra.mxu0 0
      %1944 = vmatprep.subr.bf16.mxu0 0
      %1945 = vmatpush1.bf16.msra.mxu0 0
      %1946 = vmatprep.subr.bf16.mxu0 0
      %1947 = vmatpush1.bf16.msra.mxu0 0
      %1948 = vmatprep.subr.bf16.mxu0 0
      %1949 = vmatpush1.bf16.msra.mxu0 0
      %1950 = vmatprep.subr.bf16.mxu0 0
      %1951 = vmatpush1.bf16.msra.mxu0 0
      %1952 = vmatprep.subr.bf16.mxu0 0
      %1953 = vmatpush1.bf16.msra.mxu0 0
      %1954 = vmatprep.subr.bf16.mxu0 0
      %1955 = vmatpush1.bf16.msra.mxu0 0
      %1956 = vmatprep.subr.bf16.mxu0 0
      %1957 = vmatpush1.bf16.msra.mxu0 0
      %1958 = vmatprep.subr.bf16.mxu0 0
      %1959 = vmatpush1.bf16.msra.mxu0 0
      %1960 = vmatprep.subr.bf16.mxu0 0
      %1961 = vmatpush1.bf16.msra.mxu0 0
      %1962 = vmatprep.mubr.bf16.mxu0 0
      %1963 = vmatmul.mubr.bf16.gmra.mrb[0].mxu0 %v1919
      %v1964 = vpop.f32.mrb[0].mxu0
      %v1965 = vadd.f32 0.0, %v1964
      %v1966 = vpop.f32.mrb[0].mxu0
      %v1967 = vpop.f32.mrb[0].mxu0
      %v1968 = vadd.f32 0.0, %v1967
      %v1969 = vpop.f32.mrb[0].mxu0
      %1970 = vmatprep.mubr.bf16.mxu0 0
      %1971 = vmatmul.mubr.bf16.gmra.mrb[0].mxu0 %v1922
      %v1972 = vpop.f32.mrb[0].mxu0
      %v1973 = vadd.f32 0.0, %v1972
      %v1974 = vpop.f32.mrb[0].mxu0
      %v1975 = vpop.f32.mrb[0].mxu0
      %v1976 = vadd.f32 0.0, %v1975
      %v1977 = vpop.f32.mrb[0].mxu0
      %1978 = vmatprep.mubr.bf16.mxu0 0
      %1979 = vmatmul.mubr.bf16.gmra.mrb[0].mxu0 %v1925
      %v1980 = vpop.f32.mrb[0].mxu0
      %v1981 = vadd.f32 0.0, %v1980
      %v1982 = vpop.f32.mrb[0].mxu0
      %v1983 = vpop.f32.mrb[0].mxu0
      %v1984 = vadd.f32 0.0, %v1983
      %v1985 = vpop.f32.mrb[0].mxu0
      %1986 = vmatprep.mubr.bf16.mxu0 0
      %1987 = vmatmul.mubr.bf16.gmra.mrb[0].mxu0 %v1928
      %v1988 = vpop.f32.mrb[0].mxu0
      %v1989 = vadd.f32 0.0, %v1988
      %v1990 = vpop.f32.mrb[0].mxu0
      %v1991 = vpop.f32.mrb[0].mxu0
      %v1992 = vadd.f32 0.0, %v1991
      %v1993 = vpop.f32.mrb[0].mxu0
      %1994 = vdwg.mxu0
      %v1995 = vadd.f32 %v1864, %v1965
      %v1996 = vadd.f32 %v1865, %v1968
      %v1997 = vadd.f32 %v1866, %v1973
      %v1998 = vadd.f32 %v1867, %v1976
      %v1999 = vadd.f32 %v1868, %v1981
      %v2000 = vadd.f32 %v1869, %v1984
      %v2001 = vadd.f32 %v1870, %v1989
      %v2002 = vadd.f32 %v1871, %v1992
      %v2003 = vld [vmem:[%s1872] sm:$0xf]
      %v2004 = vld [vmem:[%s1872 + $0x4] sm:$0x1]
      %v2005 = vld [vmem:[%s1872 + $0x8] sm:$0xf]
      %v2006 = vld [vmem:[%s1872 + $0xc] sm:$0x1]
      %v2007 = vld [vmem:[%s1872 + $0x10] sm:$0xf]
      %v2008 = vld [vmem:[%s1872 + $0x14] sm:$0x1]
      %v2009 = vld [vmem:[%s1872 + $0x18] sm:$0xf]
      %v2010 = vld [vmem:[%s1872 + $0x1c] sm:$0x1]
      %v2011 = vld [vmem:[%s1872 + $0x20] sm:$0xf]
      %v2012 = vld [vmem:[%s1872 + $0x24] sm:$0x1]
      %v2013 = vld [vmem:[%s1872 + $0x28] sm:$0xf]
      %v2014 = vld [vmem:[%s1872 + $0x2c] sm:$0x1]
      %v2015 = vld [vmem:[%s1872 + $0x30] sm:$0xf]
      %v2016 = vld [vmem:[%s1872 + $0x34] sm:$0x1]
      %v2017 = vld [vmem:[%s1872 + $0x38] sm:$0xf]
      %v2018 = vld [vmem:[%s1872 + $0x3c] sm:$0x1]
      %v2020 = vshrl.u32 %v2003, 16
      %v2022 = vrot.slane %v2020, 4
      %v2023 = vshll.u32 %v2003, 16
      %v2025 = vrot.slane %v2023, 5
      %v2026 = vor.u32 %v2022, %v2025
      %v2027 = vrot.slane %v2026, 4
      %v2029 = vshll.u32 %v2004, 16
      %v2031 = vrot.slane %v2029, 5
      %v2032 = vsel %vm829, %v2027, %v2031
      %v2034 = vshrl.u32 %v2005, 16
      %v2036 = vrot.slane %v2034, 4
      %v2037 = vshll.u32 %v2005, 16
      %v2039 = vrot.slane %v2037, 5
      %v2040 = vor.u32 %v2036, %v2039
      %v2041 = vrot.slane %v2040, 4
      %v2043 = vshll.u32 %v2006, 16
      %v2045 = vrot.slane %v2043, 5
      %v2046 = vsel %vm829, %v2041, %v2045
      %v2048 = vshrl.u32 %v2007, 16
      %v2050 = vrot.slane %v2048, 4
      %v2051 = vshll.u32 %v2007, 16
      %v2053 = vrot.slane %v2051, 5
      %v2054 = vor.u32 %v2050, %v2053
      %v2055 = vrot.slane %v2054, 4
      %v2057 = vshll.u32 %v2008, 16
      %v2059 = vrot.slane %v2057, 5
      %v2060 = vsel %vm829, %v2055, %v2059
      %v2062 = vshrl.u32 %v2009, 16
      %v2064 = vrot.slane %v2062, 4
      %v2065 = vshll.u32 %v2009, 16
      %v2067 = vrot.slane %v2065, 5
      %v2068 = vor.u32 %v2064, %v2067
      %v2069 = vrot.slane %v2068, 4
      %v2071 = vshll.u32 %v2010, 16
      %v2073 = vrot.slane %v2071, 5
      %v2074 = vsel %vm829, %v2069, %v2073
      %v2076 = vshrl.u32 %v2011, 16
      %v2078 = vrot.slane %v2076, 4
      %v2079 = vshll.u32 %v2011, 16
      %v2081 = vrot.slane %v2079, 5
      %v2082 = vor.u32 %v2078, %v2081
      %v2083 = vrot.slane %v2082, 4
      %v2085 = vshll.u32 %v2012, 16
      %v2087 = vrot.slane %v2085, 5
      %v2088 = vsel %vm829, %v2083, %v2087
      %v2090 = vshrl.u32 %v2013, 16
      %v2092 = vrot.slane %v2090, 4
      %v2093 = vshll.u32 %v2013, 16
      %v2095 = vrot.slane %v2093, 5
      %v2096 = vor.u32 %v2092, %v2095
      %v2097 = vrot.slane %v2096, 4
      %v2099 = vshll.u32 %v2014, 16
      %v2101 = vrot.slane %v2099, 5
      %v2102 = vsel %vm829, %v2097, %v2101
      %v2104 = vshrl.u32 %v2015, 16
      %v2106 = vrot.slane %v2104, 4
      %v2107 = vshll.u32 %v2015, 16
      %v2109 = vrot.slane %v2107, 5
      %v2110 = vor.u32 %v2106, %v2109
      %v2111 = vrot.slane %v2110, 4
      %v2113 = vshll.u32 %v2016, 16
      %v2115 = vrot.slane %v2113, 5
      %v2116 = vsel %vm829, %v2111, %v2115
      %v2118 = vshrl.u32 %v2017, 16
      %v2120 = vrot.slane %v2118, 4
      %v2121 = vshll.u32 %v2017, 16
      %v2123 = vrot.slane %v2121, 5
      %v2124 = vor.u32 %v2120, %v2123
      %v2125 = vrot.slane %v2124, 4
      %v2127 = vshll.u32 %v2018, 16
      %v2129 = vrot.slane %v2127, 5
      %v2130 = vsel %vm829, %v2125, %v2129
      %s2131 = scalar_lea.vmem %s3, 112
      %v2132 = vld [vmem:[%s2131] sm:$0xf]
      %v2133 = vld [vmem:[%s2131 + $0x4] sm:$0xf]
      %v2134 = vld [vmem:[%s2131 + $0x8] sm:$0xf]
      %v2135 = vld [vmem:[%s2131 + $0xc] sm:$0xf]
      %v2136 = vunpack.c.l.b16 %v2032
      %v2137 = vunpack.c.l.b16 %v2046
      %v2138 = vunpack.c.l.b16 %v2060
      %v2139 = vunpack.c.l.b16 %v2074
      %v2140 = vunpack.c.l.b16 %v2088
      %v2141 = vunpack.c.l.b16 %v2102
      %v2142 = vunpack.c.l.b16 %v2116
      %v2143 = vunpack.c.l.b16 %v2130
      %v2144 = vpack.c.b16 %v2137, %v2136
      %v2145 = vpack.c.b16 %v2139, %v2138
      %v2146 = vpack.c.b16 %v2141, %v2140
      %v2147 = vpack.c.b16 %v2143, %v2142
      %v2152 = vunpack.c.l.b16 %v2132
      %v2153 = vunpack.c.l.b16 %v2133
      %v2154 = vunpack.c.l.b16 %v2134
      %v2155 = vunpack.c.l.b16 %v2135
      %v2156 = vpack.c.b16 %v2153, %v2152
      %v2157 = vpack.c.b16 %v2155, %v2154
      %v2161 = vsel %vm342, %v2144, 0
      %v2164 = vsel %vm342, %v2145, 0
      %v2167 = vsel %vm342, %v2146, 0
      %v2170 = vsel %vm342, %v2147, 0
      %2172 = vmatprep.subr.bf16.mxu0 0
      %2173 = vmatpush1.bf16.msra.mxu0 %v2156
      %2174 = vmatprep.subr.bf16.mxu0 0
      %2175 = vmatpush1.bf16.msra.mxu0 %v2157
      %2176 = vmatprep.subr.bf16.mxu0 0
      %2177 = vmatpush1.bf16.msra.mxu0 0
      %2178 = vmatprep.subr.bf16.mxu0 0
      %2179 = vmatpush1.bf16.msra.mxu0 0
      %2180 = vmatprep.subr.bf16.mxu0 0
      %2181 = vmatpush1.bf16.msra.mxu0 0
      %2182 = vmatprep.subr.bf16.mxu0 0
      %2183 = vmatpush1.bf16.msra.mxu0 0
      %2184 = vmatprep.subr.bf16.mxu0 0
      %2185 = vmatpush1.bf16.msra.mxu0 0
      %2186 = vmatprep.subr.bf16.mxu0 0
      %2187 = vmatpush1.bf16.msra.mxu0 0
      %2188 = vmatprep.subr.bf16.mxu0 0
      %2189 = vmatpush1.bf16.msra.mxu0 0
      %2190 = vmatprep.subr.bf16.mxu0 0
      %2191 = vmatpush1.bf16.msra.mxu0 0
      %2192 = vmatprep.subr.bf16.mxu0 0
      %2193 = vmatpush1.bf16.msra.mxu0 0
      %2194 = vmatprep.subr.bf16.mxu0 0
      %2195 = vmatpush1.bf16.msra.mxu0 0
      %2196 = vmatprep.subr.bf16.mxu0 0
      %2197 = vmatpush1.bf16.msra.mxu0 0
      %2198 = vmatprep.subr.bf16.mxu0 0
      %2199 = vmatpush1.bf16.msra.mxu0 0
      %2200 = vmatprep.subr.bf16.mxu0 0
      %2201 = vmatpush1.bf16.msra.mxu0 0
      %2202 = vmatprep.subr.bf16.mxu0 0
      %2203 = vmatpush1.bf16.msra.mxu0 0
      %2204 = vmatprep.mubr.bf16.mxu0 0
      %2205 = vmatmul.mubr.bf16.gmra.mrb[0].mxu0 %v2161
      %v2206 = vpop.f32.mrb[0].mxu0
      %v2207 = vadd.f32 0.0, %v2206
      %v2208 = vpop.f32.mrb[0].mxu0
      %v2209 = vpop.f32.mrb[0].mxu0
      %v2210 = vadd.f32 0.0, %v2209
      %v2211 = vpop.f32.mrb[0].mxu0
      %2212 = vmatprep.mubr.bf16.mxu0 0
      %2213 = vmatmul.mubr.bf16.gmra.mrb[0].mxu0 %v2164
      %v2214 = vpop.f32.mrb[0].mxu0
      %v2215 = vadd.f32 0.0, %v2214
      %v2216 = vpop.f32.mrb[0].mxu0
      %v2217 = vpop.f32.mrb[0].mxu0
      %v2218 = vadd.f32 0.0, %v2217
      %v2219 = vpop.f32.mrb[0].mxu0
      %2220 = vmatprep.mubr.bf16.mxu0 0
      %2221 = vmatmul.mubr.bf16.gmra.mrb[0].mxu0 %v2167
      %v2222 = vpop.f32.mrb[0].mxu0
      %v2223 = vadd.f32 0.0, %v2222
      %v2224 = vpop.f32.mrb[0].mxu0
      %v2225 = vpop.f32.mrb[0].mxu0
      %v2226 = vadd.f32 0.0, %v2225
      %v2227 = vpop.f32.mrb[0].mxu0
      %2228 = vmatprep.mubr.bf16.mxu0 0
      %2229 = vmatmul.mubr.bf16.gmra.mrb[0].mxu0 %v2170
      %v2230 = vpop.f32.mrb[0].mxu0
      %v2231 = vadd.f32 0.0, %v2230
      %v2232 = vpop.f32.mrb[0].mxu0
      %v2233 = vpop.f32.mrb[0].mxu0
      %v2234 = vadd.f32 0.0, %v2233
      %v2235 = vpop.f32.mrb[0].mxu0
      %2236 = vdwg.mxu0
      %v2237 = vadd.f32 %v1995, %v2207
      %v2238 = vadd.f32 %v1996, %v2210
      %v2239 = vadd.f32 %v1997, %v2215
      %v2240 = vadd.f32 %v1998, %v2218
      %v2241 = vadd.f32 %v1999, %v2223
      %v2242 = vadd.f32 %v2000, %v2226
      %v2243 = vadd.f32 %v2001, %v2231
      %v2244 = vadd.f32 %v2002, %v2234
      %v2245 = vld [vmem:[%s1872] sm:$0xe]
      %v2246 = vld [vmem:[%s1872 + $0x8] sm:$0xe]
      %v2247 = vld [vmem:[%s1872 + $0x10] sm:$0xe]
      %v2248 = vld [vmem:[%s1872 + $0x18] sm:$0xe]
      %v2249 = vld [vmem:[%s1872 + $0x20] sm:$0xe]
      %v2250 = vld [vmem:[%s1872 + $0x28] sm:$0xe]
      %v2251 = vld [vmem:[%s1872 + $0x30] sm:$0xe]
      %v2252 = vld [vmem:[%s1872 + $0x38] sm:$0xe]
      %v2269 = vrot.slane %v2245, 5
      %v2270 = vrot.slane %v2269, 4
      %v2271 = vrot.slane %v2004, 5
      %v2272 = vsel %vm1183, %v2270, %v2271
      %v2273 = vrot.slane %v2246, 5
      %v2274 = vrot.slane %v2273, 4
      %v2275 = vrot.slane %v2006, 5
      %v2276 = vsel %vm1183, %v2274, %v2275
      %v2277 = vrot.slane %v2247, 5
      %v2278 = vrot.slane %v2277, 4
      %v2279 = vrot.slane %v2008, 5
      %v2280 = vsel %vm1183, %v2278, %v2279
      %v2281 = vrot.slane %v2248, 5
      %v2282 = vrot.slane %v2281, 4
      %v2283 = vrot.slane %v2010, 5
      %v2284 = vsel %vm1183, %v2282, %v2283
      %v2285 = vrot.slane %v2249, 5
      %v2286 = vrot.slane %v2285, 4
      %v2287 = vrot.slane %v2012, 5
      %v2288 = vsel %vm1183, %v2286, %v2287
      %v2289 = vrot.slane %v2250, 5
      %v2290 = vrot.slane %v2289, 4
      %v2291 = vrot.slane %v2014, 5
      %v2292 = vsel %vm1183, %v2290, %v2291
      %v2293 = vrot.slane %v2251, 5
      %v2294 = vrot.slane %v2293, 4
      %v2295 = vrot.slane %v2016, 5
      %v2296 = vsel %vm1183, %v2294, %v2295
      %v2297 = vrot.slane %v2252, 5
      %v2298 = vrot.slane %v2297, 4
      %v2299 = vrot.slane %v2018, 5
      %v2300 = vsel %vm1183, %v2298, %v2299
      %s2301 = scalar_lea.vmem %s3, 128
      %v2302 = vld [vmem:[%s2301] sm:$0xf]
      %v2303 = vld [vmem:[%s2301 + $0x4] sm:$0xf]
      %v2304 = vld [vmem:[%s2301 + $0x8] sm:$0xf]
      %v2305 = vld [vmem:[%s2301 + $0xc] sm:$0xf]
      %v2306 = vunpack.c.l.b16 %v2272
      %v2307 = vunpack.c.l.b16 %v2276
      %v2308 = vunpack.c.l.b16 %v2280
      %v2309 = vunpack.c.l.b16 %v2284
      %v2310 = vunpack.c.l.b16 %v2288
      %v2311 = vunpack.c.l.b16 %v2292
      %v2312 = vunpack.c.l.b16 %v2296
      %v2313 = vunpack.c.l.b16 %v2300
      %v2314 = vpack.c.b16 %v2307, %v2306
      %v2315 = vpack.c.b16 %v2309, %v2308
      %v2316 = vpack.c.b16 %v2311, %v2310
      %v2317 = vpack.c.b16 %v2313, %v2312
      %v2322 = vunpack.c.l.b16 %v2302
      %v2323 = vunpack.c.l.b16 %v2303
      %v2324 = vunpack.c.l.b16 %v2304
      %v2325 = vunpack.c.l.b16 %v2305
      %v2326 = vpack.c.b16 %v2323, %v2322
      %v2327 = vpack.c.b16 %v2325, %v2324
      %v2331 = vsel %vm342, %v2314, 0
      %v2334 = vsel %vm342, %v2315, 0
      %v2337 = vsel %vm342, %v2316, 0
      %v2340 = vsel %vm342, %v2317, 0
      %2342 = vmatprep.subr.bf16.mxu0 0
      %2343 = vmatpush1.bf16.msra.mxu0 %v2326
      %2344 = vmatprep.subr.bf16.mxu0 0
      %2345 = vmatpush1.bf16.msra.mxu0 %v2327
      %2346 = vmatprep.subr.bf16.mxu0 0
      %2347 = vmatpush1.bf16.msra.mxu0 0
      %2348 = vmatprep.subr.bf16.mxu0 0
      %2349 = vmatpush1.bf16.msra.mxu0 0
      %2350 = vmatprep.subr.bf16.mxu0 0
      %2351 = vmatpush1.bf16.msra.mxu0 0
      %2352 = vmatprep.subr.bf16.mxu0 0
      %2353 = vmatpush1.bf16.msra.mxu0 0
      %2354 = vmatprep.subr.bf16.mxu0 0
      %2355 = vmatpush1.bf16.msra.mxu0 0
      %2356 = vmatprep.subr.bf16.mxu0 0
      %2357 = vmatpush1.bf16.msra.mxu0 0
      %2358 = vmatprep.subr.bf16.mxu0 0
      %2359 = vmatpush1.bf16.msra.mxu0 0
      %2360 = vmatprep.subr.bf16.mxu0 0
      %2361 = vmatpush1.bf16.msra.mxu0 0
      %2362 = vmatprep.subr.bf16.mxu0 0
      %2363 = vmatpush1.bf16.msra.mxu0 0
      %2364 = vmatprep.subr.bf16.mxu0 0
      %2365 = vmatpush1.bf16.msra.mxu0 0
      %2366 = vmatprep.subr.bf16.mxu0 0
      %2367 = vmatpush1.bf16.msra.mxu0 0
      %2368 = vmatprep.subr.bf16.mxu0 0
      %2369 = vmatpush1.bf16.msra.mxu0 0
      %2370 = vmatprep.subr.bf16.mxu0 0
      %2371 = vmatpush1.bf16.msra.mxu0 0
      %2372 = vmatprep.subr.bf16.mxu0 0
      %2373 = vmatpush1.bf16.msra.mxu0 0
      %2374 = vmatprep.mubr.bf16.mxu0 0
      %2375 = vmatmul.mubr.bf16.gmra.mrb[0].mxu0 %v2331
      %v2376 = vpop.f32.mrb[0].mxu0
      %v2377 = vadd.f32 0.0, %v2376
      %v2378 = vpop.f32.mrb[0].mxu0
      %v2379 = vpop.f32.mrb[0].mxu0
      %v2380 = vadd.f32 0.0, %v2379
      %v2381 = vpop.f32.mrb[0].mxu0
      %2382 = vmatprep.mubr.bf16.mxu0 0
      %2383 = vmatmul.mubr.bf16.gmra.mrb[0].mxu0 %v2334
      %v2384 = vpop.f32.mrb[0].mxu0
      %v2385 = vadd.f32 0.0, %v2384
      %v2386 = vpop.f32.mrb[0].mxu0
      %v2387 = vpop.f32.mrb[0].mxu0
      %v2388 = vadd.f32 0.0, %v2387
      %v2389 = vpop.f32.mrb[0].mxu0
      %2390 = vmatprep.mubr.bf16.mxu0 0
      %2391 = vmatmul.mubr.bf16.gmra.mrb[0].mxu0 %v2337
      %v2392 = vpop.f32.mrb[0].mxu0
      %v2393 = vadd.f32 0.0, %v2392
      %v2394 = vpop.f32.mrb[0].mxu0
      %v2395 = vpop.f32.mrb[0].mxu0
      %v2396 = vadd.f32 0.0, %v2395
      %v2397 = vpop.f32.mrb[0].mxu0
      %2398 = vmatprep.mubr.bf16.mxu0 0
      %2399 = vmatmul.mubr.bf16.gmra.mrb[0].mxu0 %v2340
      %v2400 = vpop.f32.mrb[0].mxu0
      %v2401 = vadd.f32 0.0, %v2400
      %v2402 = vpop.f32.mrb[0].mxu0
      %v2403 = vpop.f32.mrb[0].mxu0
      %v2404 = vadd.f32 0.0, %v2403
      %v2405 = vpop.f32.mrb[0].mxu0
      %2406 = vdwg.mxu0
      %v2407 = vadd.f32 %v2237, %v2377
      %v2408 = vadd.f32 %v2238, %v2380
      %v2409 = vadd.f32 %v2239, %v2385
      %v2410 = vadd.f32 %v2240, %v2388
      %v2411 = vadd.f32 %v2241, %v2393
      %v2412 = vadd.f32 %v2242, %v2396
      %v2413 = vadd.f32 %v2243, %v2401
      %v2414 = vadd.f32 %v2244, %v2404
      %v2415 = vld [vmem:[%s4] sm:$0x1]
      %v2417 = vlaneseq
      %v2418 = vshrl.u32 %v2417, 7
      %v2419 = vsub.s32 0, %v2418
      %v2420 = vrot.slane %v2415, %v2419
      %v2422 = vadd.f32 %v2407, %v2420
      %v2423 = vadd.f32 %v2408, %v2420
      %v2424 = vadd.f32 %v2409, %v2420
      %v2425 = vadd.f32 %v2410, %v2420
      %v2426 = vadd.f32 %v2411, %v2420
      %v2427 = vadd.f32 %v2412, %v2420
      %v2428 = vadd.f32 %v2413, %v2420
      %v2429 = vadd.f32 %v2414, %v2420
      %v2430 = vsel %vm342, %v2422, 0.0
      %v2431 = vsel %vm342, %v2423, 0.0
      %v2432 = vadd.f32 %v2430, %v2431
      %v2433 = vsel %vm342, %v2424, 0.0
      %v2434 = vadd.f32 %v2432, %v2433
      %v2435 = vsel %vm342, %v2425, 0.0
      %v2436 = vadd.f32 %v2434, %v2435
      %v2437 = vsel %vm342, %v2426, 0.0
      %v2438 = vadd.f32 %v2436, %v2437
      %v2439 = vsel %vm342, %v2427, 0.0
      %v2440 = vadd.f32 %v2438, %v2439
      %v2441 = vsel %vm342, %v2428, 0.0
      %v2442 = vadd.f32 %v2440, %v2441
      %v2443 = vsel %vm342, %v2429, 0.0
      %v2444 = vadd.f32 %v2442, %v2443
      %v2445 = vmul.f32 %v2444, %v358
      %v2446 = vsub.f32 %v2422, %v2445
      %v2447 = vsub.f32 %v2423, %v2445
      %v2448 = vsub.f32 %v2424, %v2445
      %v2449 = vsub.f32 %v2425, %v2445
      %v2450 = vsub.f32 %v2426, %v2445
      %v2451 = vsub.f32 %v2427, %v2445
      %v2452 = vsub.f32 %v2428, %v2445
      %v2453 = vsub.f32 %v2429, %v2445
      %v2454 = vmul.f32 %v2446, %v2446
      %v2455 = vmul.f32 %v2447, %v2447
      %v2456 = vmul.f32 %v2448, %v2448
      %v2457 = vmul.f32 %v2449, %v2449
      %v2458 = vmul.f32 %v2450, %v2450
      %v2459 = vmul.f32 %v2451, %v2451
      %v2460 = vmul.f32 %v2452, %v2452
      %v2461 = vmul.f32 %v2453, %v2453
      %v2462 = vsel %vm342, %v2454, 0.0
      %v2463 = vsel %vm342, %v2455, 0.0
      %v2464 = vadd.f32 %v2462, %v2463
      %v2465 = vsel %vm342, %v2456, 0.0
      %v2466 = vadd.f32 %v2464, %v2465
      %v2467 = vsel %vm342, %v2457, 0.0
      %v2468 = vadd.f32 %v2466, %v2467
      %v2469 = vsel %vm342, %v2458, 0.0
      %v2470 = vadd.f32 %v2468, %v2469
      %v2471 = vsel %vm342, %v2459, 0.0
      %v2472 = vadd.f32 %v2470, %v2471
      %v2473 = vsel %vm342, %v2460, 0.0
      %v2474 = vadd.f32 %v2472, %v2473
      %v2475 = vsel %vm342, %v2461, 0.0
      %v2476 = vadd.f32 %v2474, %v2475
      %v2477 = vmul.f32 %v2476, %v358
      %v2478 = vadd.f32 %v2477, 1e-05
      %v2479 = vrsqrt.pop %v2478
      %v2480 = vmul.f32 %v2446, %v2479
      %v2481 = vmul.f32 %v2447, %v2479
      %v2482 = vmul.f32 %v2448, %v2479
      %v2483 = vmul.f32 %v2449, %v2479
      %v2484 = vmul.f32 %v2450, %v2479
      %v2485 = vmul.f32 %v2451, %v2479
      %v2486 = vmul.f32 %v2452, %v2479
      %v2487 = vmul.f32 %v2453, %v2479
      %v2488 = vld [vmem:[%s5] sm:$0x1]
      %v2489 = vld [vmem:[%s5 + $0x1] sm:$0x1]
      %v2490 = vld [vmem:[%s5 + $0x2] sm:$0x1]
      %v2491 = vld [vmem:[%s5 + $0x3] sm:$0x1]
      %v2492 = vld [vmem:[%s5 + $0x4] sm:$0x1]
      %v2493 = vld [vmem:[%s5 + $0x5] sm:$0x1]
      %v2494 = vld [vmem:[%s5 + $0x6] sm:$0x1]
      %v2495 = vld [vmem:[%s5 + $0x7] sm:$0x1]
      %v2504 = vlaneseq
      %v2505 = vshrl.u32 %v2504, 7
      %v2506 = vsub.s32 0, %v2505
      %v2507 = vrot.slane %v2488, %v2506
      %v2508 = vlaneseq
      %v2509 = vshrl.u32 %v2508, 7
      %v2510 = vsub.s32 0, %v2509
      %v2511 = vrot.slane %v2489, %v2510
      %v2512 = vlaneseq
      %v2513 = vshrl.u32 %v2512, 7
      %v2514 = vsub.s32 0, %v2513
      %v2515 = vrot.slane %v2490, %v2514
      %v2516 = vlaneseq
      %v2517 = vshrl.u32 %v2516, 7
      %v2518 = vsub.s32 0, %v2517
      %v2519 = vrot.slane %v2491, %v2518
      %v2520 = vlaneseq
      %v2521 = vshrl.u32 %v2520, 7
      %v2522 = vsub.s32 0, %v2521
      %v2523 = vrot.slane %v2492, %v2522
      %v2524 = vlaneseq
      %v2525 = vshrl.u32 %v2524, 7
      %v2526 = vsub.s32 0, %v2525
      %v2527 = vrot.slane %v2493, %v2526
      %v2528 = vlaneseq
      %v2529 = vshrl.u32 %v2528, 7
      %v2530 = vsub.s32 0, %v2529
      %v2531 = vrot.slane %v2494, %v2530
      %v2532 = vlaneseq
      %v2533 = vshrl.u32 %v2532, 7
      %v2534 = vsub.s32 0, %v2533
      %v2535 = vrot.slane %v2495, %v2534
      %2536 = vset.pattern.permute.xlu0 0
      %2537 = vperm.xlu0 %2536, %v2507
      %v2538 = vpop.permute.xlu0 %2537
      %2540 = vset.pattern.permute.xlu0 0
      %2541 = vperm.xlu0 %2540, %v2511
      %v2542 = vpop.permute.xlu0 %2541
      %2544 = vset.pattern.permute.xlu0 0
      %2545 = vperm.xlu0 %2544, %v2515
      %v2546 = vpop.permute.xlu0 %2545
      %2548 = vset.pattern.permute.xlu0 0
      %2549 = vperm.xlu0 %2548, %v2519
      %v2550 = vpop.permute.xlu0 %2549
      %2552 = vset.pattern.permute.xlu0 0
      %2553 = vperm.xlu0 %2552, %v2523
      %v2554 = vpop.permute.xlu0 %2553
      %2556 = vset.pattern.permute.xlu0 0
      %2557 = vperm.xlu0 %2556, %v2527
      %v2558 = vpop.permute.xlu0 %2557
      %2560 = vset.pattern.permute.xlu0 0
      %2561 = vperm.xlu0 %2560, %v2531
      %v2562 = vpop.permute.xlu0 %2561
      %2564 = vset.pattern.permute.xlu0 0
      %2565 = vperm.xlu0 %2564, %v2535
      %v2566 = vpop.permute.xlu0 %2565
      %v2568 = vmul.f32 %v2480, %v2538
      %v2569 = vmul.f32 %v2481, %v2542
      %v2570 = vmul.f32 %v2482, %v2546
      %v2571 = vmul.f32 %v2483, %v2550
      %v2572 = vmul.f32 %v2484, %v2554
      %v2573 = vmul.f32 %v2485, %v2558
      %v2574 = vmul.f32 %v2486, %v2562
      %v2575 = vmul.f32 %v2487, %v2566
      %v2576 = vld [vmem:[%s6] sm:$0x1]
      %v2577 = vld [vmem:[%s6 + $0x1] sm:$0x1]
      %v2578 = vld [vmem:[%s6 + $0x2] sm:$0x1]
      %v2579 = vld [vmem:[%s6 + $0x3] sm:$0x1]
      %v2580 = vld [vmem:[%s6 + $0x4] sm:$0x1]
      %v2581 = vld [vmem:[%s6 + $0x5] sm:$0x1]
      %v2582 = vld [vmem:[%s6 + $0x6] sm:$0x1]
      %v2583 = vld [vmem:[%s6 + $0x7] sm:$0x1]
      %v2592 = vlaneseq
      %v2593 = vshrl.u32 %v2592, 7
      %v2594 = vsub.s32 0, %v2593
      %v2595 = vrot.slane %v2576, %v2594
      %v2596 = vlaneseq
      %v2597 = vshrl.u32 %v2596, 7
      %v2598 = vsub.s32 0, %v2597
      %v2599 = vrot.slane %v2577, %v2598
      %v2600 = vlaneseq
      %v2601 = vshrl.u32 %v2600, 7
      %v2602 = vsub.s32 0, %v2601
      %v2603 = vrot.slane %v2578, %v2602
      %v2604 = vlaneseq
      %v2605 = vshrl.u32 %v2604, 7
      %v2606 = vsub.s32 0, %v2605
      %v2607 = vrot.slane %v2579, %v2606
      %v2608 = vlaneseq
      %v2609 = vshrl.u32 %v2608, 7
      %v2610 = vsub.s32 0, %v2609
      %v2611 = vrot.slane %v2580, %v2610
      %v2612 = vlaneseq
      %v2613 = vshrl.u32 %v2612, 7
      %v2614 = vsub.s32 0, %v2613
      %v2615 = vrot.slane %v2581, %v2614
      %v2616 = vlaneseq
      %v2617 = vshrl.u32 %v2616, 7
      %v2618 = vsub.s32 0, %v2617
      %v2619 = vrot.slane %v2582, %v2618
      %v2620 = vlaneseq
      %v2621 = vshrl.u32 %v2620, 7
      %v2622 = vsub.s32 0, %v2621
      %v2623 = vrot.slane %v2583, %v2622
      %2624 = vset.pattern.permute.xlu0 0
      %2625 = vperm.xlu0 %2624, %v2595
      %v2626 = vpop.permute.xlu0 %2625
      %2628 = vset.pattern.permute.xlu0 0
      %2629 = vperm.xlu0 %2628, %v2599
      %v2630 = vpop.permute.xlu0 %2629
      %2632 = vset.pattern.permute.xlu0 0
      %2633 = vperm.xlu0 %2632, %v2603
      %v2634 = vpop.permute.xlu0 %2633
      %2636 = vset.pattern.permute.xlu0 0
      %2637 = vperm.xlu0 %2636, %v2607
      %v2638 = vpop.permute.xlu0 %2637
      %2640 = vset.pattern.permute.xlu0 0
      %2641 = vperm.xlu0 %2640, %v2611
      %v2642 = vpop.permute.xlu0 %2641
      %2644 = vset.pattern.permute.xlu0 0
      %2645 = vperm.xlu0 %2644, %v2615
      %v2646 = vpop.permute.xlu0 %2645
      %2648 = vset.pattern.permute.xlu0 0
      %2649 = vperm.xlu0 %2648, %v2619
      %v2650 = vpop.permute.xlu0 %2649
      %2652 = vset.pattern.permute.xlu0 0
      %2653 = vperm.xlu0 %2652, %v2623
      %v2654 = vpop.permute.xlu0 %2653
      %v2656 = vadd.f32 %v2568, %v2626
      %v2657 = vadd.f32 %v2569, %v2630
      %v2658 = vadd.f32 %v2570, %v2634
      %v2659 = vadd.f32 %v2571, %v2638
      %v2660 = vadd.f32 %v2572, %v2642
      %v2661 = vadd.f32 %v2573, %v2646
      %v2662 = vadd.f32 %v2574, %v2650
      %v2663 = vadd.f32 %v2575, %v2654
      %v2664 = vmul.f32 %v2656, 0.5
      %v2665 = vmul.f32 %v2657, 0.5
      %v2666 = vmul.f32 %v2658, 0.5
      %v2667 = vmul.f32 %v2659, 0.5
      %v2668 = vmul.f32 %v2660, 0.5
      %v2669 = vmul.f32 %v2661, 0.5
      %v2670 = vmul.f32 %v2662, 0.5
      %v2671 = vmul.f32 %v2663, 0.5
      %v2672 = vmul.f32 %v2656, 0.70710677
      %v2673 = vmul.f32 %v2657, 0.70710677
      %v2674 = vmul.f32 %v2658, 0.70710677
      %v2675 = vmul.f32 %v2659, 0.70710677
      %v2676 = vmul.f32 %v2660, 0.70710677
      %v2677 = vmul.f32 %v2661, 0.70710677
      %v2678 = vmul.f32 %v2662, 0.70710677
      %v2679 = vmul.f32 %v2663, 0.70710677
      %v2680 = verf.f32.pop %v2672
      %v2681 = verf.f32.pop %v2673
      %v2682 = verf.f32.pop %v2674
      %v2683 = verf.f32.pop %v2675
      %v2684 = verf.f32.pop %v2676
      %v2685 = verf.f32.pop %v2677
      %v2686 = verf.f32.pop %v2678
      %v2687 = verf.f32.pop %v2679
      %v2688 = vadd.f32 %v2680, 1.0
      %v2689 = vadd.f32 %v2681, 1.0
      %v2690 = vadd.f32 %v2682, 1.0
      %v2691 = vadd.f32 %v2683, 1.0
      %v2692 = vadd.f32 %v2684, 1.0
      %v2693 = vadd.f32 %v2685, 1.0
      %v2694 = vadd.f32 %v2686, 1.0
      %v2695 = vadd.f32 %v2687, 1.0
      %v2696 = vmul.f32 %v2664, %v2688
      %v2697 = vmul.f32 %v2665, %v2689
      %v2698 = vmul.f32 %v2666, %v2690
      %v2699 = vmul.f32 %v2667, %v2691
      %v2700 = vmul.f32 %v2668, %v2692
      %v2701 = vmul.f32 %v2669, %v2693
      %v2702 = vmul.f32 %v2670, %v2694
      %v2703 = vmul.f32 %v2671, %v2695
      %2704 = vst.msk [vmem:[#allocation2] sm:$0xf] %vm618, 0
      %2705 = vst.msk [vmem:[#allocation2 + $0x4] sm:$0x1] %vm620, 0
      %2706 = vst.msk [vmem:[#allocation2 + $0x8] sm:$0xf] %vm618, 0
      %2707 = vst.msk [vmem:[#allocation2 + $0xc] sm:$0x1] %vm620, 0
      %2708 = vst.msk [vmem:[#allocation2 + $0x10] sm:$0xf] %vm618, 0
      %2709 = vst.msk [vmem:[#allocation2 + $0x14] sm:$0x1] %vm620, 0
      %2710 = vst.msk [vmem:[#allocation2 + $0x18] sm:$0xf] %vm618, 0
      %2711 = vst.msk [vmem:[#allocation2 + $0x1c] sm:$0x1] %vm620, 0
      %2712 = vst.msk [vmem:[#allocation2 + $0x20] sm:$0xf] %vm618, 0
      %2713 = vst.msk [vmem:[#allocation2 + $0x24] sm:$0x1] %vm620, 0
      %2714 = vst.msk [vmem:[#allocation2 + $0x28] sm:$0xf] %vm618, 0
      %2715 = vst.msk [vmem:[#allocation2 + $0x2c] sm:$0x1] %vm620, 0
      %2716 = vst.msk [vmem:[#allocation2 + $0x30] sm:$0xf] %vm618, 0
      %2717 = vst.msk [vmem:[#allocation2 + $0x34] sm:$0x1] %vm620, 0
      %2718 = vst.msk [vmem:[#allocation2 + $0x38] sm:$0xf] %vm618, 0
      %2719 = vst.msk [vmem:[#allocation2 + $0x3c] sm:$0x1] %vm620, 0
      %2720 = vst.msk [vmem:[#allocation2 + $0x40] sm:$0xf] %vm618, 0
      %2721 = vst.msk [vmem:[#allocation2 + $0x44] sm:$0x1] %vm620, 0
      %2722 = vst.msk [vmem:[#allocation2 + $0x48] sm:$0xf] %vm618, 0
      %2723 = vst.msk [vmem:[#allocation2 + $0x4c] sm:$0x1] %vm620, 0
      %v2724 = vpack.c.bf16 %v2696, %v2696
      %v2725 = vpack.c.bf16 %v2697, %v2697
      %v2726 = vpack.c.bf16 %v2698, %v2698
      %v2727 = vpack.c.bf16 %v2699, %v2699
      %v2728 = vpack.c.bf16 %v2700, %v2700
      %v2729 = vpack.c.bf16 %v2701, %v2701
      %v2730 = vpack.c.bf16 %v2702, %v2702
      %v2731 = vpack.c.bf16 %v2703, %v2703
      %v2740 = vunpack.c.l.b16 %v2724
      %v2741 = vunpack.c.l.b16 %v2725
      %v2742 = vunpack.c.l.b16 %v2726
      %v2743 = vunpack.c.l.b16 %v2727
      %v2744 = vunpack.c.l.b16 %v2728
      %v2745 = vunpack.c.l.b16 %v2729
      %v2746 = vunpack.c.l.b16 %v2730
      %v2747 = vunpack.c.l.b16 %v2731
      %v2748 = vpack.c.b16 %v2740, %v2740
      %v2749 = vpack.c.b16 %v2741, %v2741
      %v2750 = vpack.c.b16 %v2742, %v2742
      %v2751 = vpack.c.b16 %v2743, %v2743
      %v2752 = vpack.c.b16 %v2744, %v2744
      %v2753 = vpack.c.b16 %v2745, %v2745
      %v2754 = vpack.c.b16 %v2746, %v2746
      %v2755 = vpack.c.b16 %v2747, %v2747
      %v2757 = vshrl.u32 %v2748, 16
      %v2759 = vrot.slane %v2757, 7
      %v2760 = vshll.u32 %v2748, 16
      %v2762 = vor.u32 %v2759, %v2760
      %v2763 = vrot.slane %v2759, 4
      %v2765 = vshrl.u32 %v2749, 16
      %v2767 = vrot.slane %v2765, 7
      %v2768 = vshll.u32 %v2749, 16
      %v2770 = vor.u32 %v2767, %v2768
      %v2771 = vrot.slane %v2767, 4
      %v2773 = vshrl.u32 %v2750, 16
      %v2775 = vrot.slane %v2773, 7
      %v2776 = vshll.u32 %v2750, 16
      %v2778 = vor.u32 %v2775, %v2776
      %v2779 = vrot.slane %v2775, 4
      %v2781 = vshrl.u32 %v2751, 16
      %v2783 = vrot.slane %v2781, 7
      %v2784 = vshll.u32 %v2751, 16
      %v2786 = vor.u32 %v2783, %v2784
      %v2787 = vrot.slane %v2783, 4
      %v2789 = vshrl.u32 %v2752, 16
      %v2791 = vrot.slane %v2789, 7
      %v2792 = vshll.u32 %v2752, 16
      %v2794 = vor.u32 %v2791, %v2792
      %v2795 = vrot.slane %v2791, 4
      %v2797 = vshrl.u32 %v2753, 16
      %v2799 = vrot.slane %v2797, 7
      %v2800 = vshll.u32 %v2753, 16
      %v2802 = vor.u32 %v2799, %v2800
      %v2803 = vrot.slane %v2799, 4
      %v2805 = vshrl.u32 %v2754, 16
      %v2807 = vrot.slane %v2805, 7
      %v2808 = vshll.u32 %v2754, 16
      %v2810 = vor.u32 %v2807, %v2808
      %v2811 = vrot.slane %v2807, 4
      %v2813 = vshrl.u32 %v2755, 16
      %v2815 = vrot.slane %v2813, 7
      %v2816 = vshll.u32 %v2755, 16
      %v2818 = vor.u32 %v2815, %v2816
      %v2819 = vrot.slane %v2815, 4
      %v2836 = vld [vmem:[%s752] sm:$0xf]
      %v2837 = vsel %vm755, %v2762, %v2836
      %2838 = vst [vmem:[%s752] sm:$0xf] %v2837
      %v2839 = vld [vmem:[%s752 + $0x4] sm:$0x1]
      %v2840 = vsel %vm761, %v2763, %v2839
      %2841 = vst [vmem:[%s752 + $0x4] sm:$0x1] %v2840
      %v2842 = vld [vmem:[%s752 + $0x8] sm:$0xf]
      %v2843 = vsel %vm755, %v2770, %v2842
      %2844 = vst [vmem:[%s752 + $0x8] sm:$0xf] %v2843
      %v2845 = vld [vmem:[%s752 + $0xc] sm:$0x1]
      %v2846 = vsel %vm761, %v2771, %v2845
      %2847 = vst [vmem:[%s752 + $0xc] sm:$0x1] %v2846
      %v2848 = vld [vmem:[%s752 + $0x10] sm:$0xf]
      %v2849 = vsel %vm755, %v2778, %v2848
      %2850 = vst [vmem:[%s752 + $0x10] sm:$0xf] %v2849
      %v2851 = vld [vmem:[%s752 + $0x14] sm:$0x1]
      %v2852 = vsel %vm761, %v2779, %v2851
      %2853 = vst [vmem:[%s752 + $0x14] sm:$0x1] %v2852
      %v2854 = vld [vmem:[%s752 + $0x18] sm:$0xf]
      %v2855 = vsel %vm755, %v2786, %v2854
      %2856 = vst [vmem:[%s752 + $0x18] sm:$0xf] %v2855
      %v2857 = vld [vmem:[%s752 + $0x1c] sm:$0x1]
      %v2858 = vsel %vm761, %v2787, %v2857
      %2859 = vst [vmem:[%s752 + $0x1c] sm:$0x1] %v2858
      %v2860 = vld [vmem:[%s752 + $0x20] sm:$0xf]
      %v2861 = vsel %vm755, %v2794, %v2860
      %2862 = vst [vmem:[%s752 + $0x20] sm:$0xf] %v2861
      %v2863 = vld [vmem:[%s752 + $0x24] sm:$0x1]
      %v2864 = vsel %vm761, %v2795, %v2863
      %2865 = vst [vmem:[%s752 + $0x24] sm:$0x1] %v2864
      %v2866 = vld [vmem:[%s752 + $0x28] sm:$0xf]
      %v2867 = vsel %vm755, %v2802, %v2866
      %2868 = vst [vmem:[%s752 + $0x28] sm:$0xf] %v2867
      %v2869 = vld [vmem:[%s752 + $0x2c] sm:$0x1]
      %v2870 = vsel %vm761, %v2803, %v2869
      %2871 = vst [vmem:[%s752 + $0x2c] sm:$0x1] %v2870
      %v2872 = vld [vmem:[%s752 + $0x30] sm:$0xf]
      %v2873 = vsel %vm755, %v2810, %v2872
      %2874 = vst [vmem:[%s752 + $0x30] sm:$0xf] %v2873
      %v2875 = vld [vmem:[%s752 + $0x34] sm:$0x1]
      %v2876 = vsel %vm761, %v2811, %v2875
      %2877 = vst [vmem:[%s752 + $0x34] sm:$0x1] %v2876
      %v2878 = vld [vmem:[%s752 + $0x38] sm:$0xf]
      %v2879 = vsel %vm755, %v2818, %v2878
      %2880 = vst [vmem:[%s752 + $0x38] sm:$0xf] %v2879
      %v2881 = vld [vmem:[%s752 + $0x3c] sm:$0x1]
      %v2882 = vsel %vm761, %v2819, %v2881
      %2883 = vst [vmem:[%s752 + $0x3c] sm:$0x1] %v2882
      %v2884 = vld [vmem:[#allocation2] sm:$0xf]
      %v2885 = vld [vmem:[#allocation2 + $0x8] sm:$0xf]
      %v2886 = vld [vmem:[#allocation2 + $0x10] sm:$0xf]
      %v2887 = vld [vmem:[#allocation2 + $0x18] sm:$0xf]
      %v2888 = vld [vmem:[#allocation2 + $0x20] sm:$0xf]
      %v2889 = vld [vmem:[#allocation2 + $0x28] sm:$0xf]
      %v2890 = vld [vmem:[#allocation2 + $0x30] sm:$0xf]
      %v2891 = vld [vmem:[#allocation2 + $0x38] sm:$0xf]
      %v2892 = vld [vmem:[%s7] sm:$0xf]
      %v2893 = vld [vmem:[%s7 + $0x4] sm:$0xf]
      %v2894 = vld [vmem:[%s7 + $0x8] sm:$0xf]
      %v2895 = vld [vmem:[%s7 + $0xc] sm:$0xf]
      %v2896 = vld [vmem:[#allocation2 + $0x4] sm:$0x1]
      %v2897 = vld [vmem:[#allocation2 + $0xc] sm:$0x1]
      %v2898 = vld [vmem:[#allocation2 + $0x14] sm:$0x1]
      %v2899 = vld [vmem:[#allocation2 + $0x1c] sm:$0x1]
      %v2900 = vld [vmem:[#allocation2 + $0x24] sm:$0x1]
      %v2901 = vld [vmem:[#allocation2 + $0x2c] sm:$0x1]
      %v2902 = vld [vmem:[#allocation2 + $0x34] sm:$0x1]
      %v2903 = vld [vmem:[#allocation2 + $0x3c] sm:$0x1]
      %v2905 = vshrl.u32 %v2884, 16
      %v2907 = vrot.slane %v2905, 4
      %v2908 = vshll.u32 %v2884, 16
      %v2910 = vrot.slane %v2908, 5
      %v2911 = vor.u32 %v2907, %v2910
      %v2912 = vrot.slane %v2911, 4
      %v2914 = vshll.u32 %v2896, 16
      %v2916 = vrot.slane %v2914, 5
      %v2917 = vsel %vm829, %v2912, %v2916
      %v2919 = vshrl.u32 %v2885, 16
      %v2921 = vrot.slane %v2919, 4
      %v2922 = vshll.u32 %v2885, 16
      %v2924 = vrot.slane %v2922, 5
      %v2925 = vor.u32 %v2921, %v2924
      %v2926 = vrot.slane %v2925, 4
      %v2928 = vshll.u32 %v2897, 16
      %v2930 = vrot.slane %v2928, 5
      %v2931 = vsel %vm829, %v2926, %v2930
      %v2933 = vshrl.u32 %v2886, 16
      %v2935 = vrot.slane %v2933, 4
      %v2936 = vshll.u32 %v2886, 16
      %v2938 = vrot.slane %v2936, 5
      %v2939 = vor.u32 %v2935, %v2938
      %v2940 = vrot.slane %v2939, 4
      %v2942 = vshll.u32 %v2898, 16
      %v2944 = vrot.slane %v2942, 5
      %v2945 = vsel %vm829, %v2940, %v2944
      %v2947 = vshrl.u32 %v2887, 16
      %v2949 = vrot.slane %v2947, 4
      %v2950 = vshll.u32 %v2887, 16
      %v2952 = vrot.slane %v2950, 5
      %v2953 = vor.u32 %v2949, %v2952
      %v2954 = vrot.slane %v2953, 4
      %v2956 = vshll.u32 %v2899, 16
      %v2958 = vrot.slane %v2956, 5
      %v2959 = vsel %vm829, %v2954, %v2958
      %v2961 = vshrl.u32 %v2888, 16
      %v2963 = vrot.slane %v2961, 4
      %v2964 = vshll.u32 %v2888, 16
      %v2966 = vrot.slane %v2964, 5
      %v2967 = vor.u32 %v2963, %v2966
      %v2968 = vrot.slane %v2967, 4
      %v2970 = vshll.u32 %v2900, 16
      %v2972 = vrot.slane %v2970, 5
      %v2973 = vsel %vm829, %v2968, %v2972
      %v2975 = vshrl.u32 %v2889, 16
      %v2977 = vrot.slane %v2975, 4
      %v2978 = vshll.u32 %v2889, 16
      %v2980 = vrot.slane %v2978, 5
      %v2981 = vor.u32 %v2977, %v2980
      %v2982 = vrot.slane %v2981, 4
      %v2984 = vshll.u32 %v2901, 16
      %v2986 = vrot.slane %v2984, 5
      %v2987 = vsel %vm829, %v2982, %v2986
      %v2989 = vshrl.u32 %v2890, 16
      %v2991 = vrot.slane %v2989, 4
      %v2992 = vshll.u32 %v2890, 16
      %v2994 = vrot.slane %v2992, 5
      %v2995 = vor.u32 %v2991, %v2994
      %v2996 = vrot.slane %v2995, 4
      %v2998 = vshll.u32 %v2902, 16
      %v3000 = vrot.slane %v2998, 5
      %v3001 = vsel %vm829, %v2996, %v3000
      %v3003 = vshrl.u32 %v2891, 16
      %v3005 = vrot.slane %v3003, 4
      %v3006 = vshll.u32 %v2891, 16
      %v3008 = vrot.slane %v3006, 5
      %v3009 = vor.u32 %v3005, %v3008
      %v3010 = vrot.slane %v3009, 4
      %v3012 = vshll.u32 %v2903, 16
      %v3014 = vrot.slane %v3012, 5
      %v3015 = vsel %vm829, %v3010, %v3014
      %s3016 = scalar_lea.vmem %s7, 16
      %v3017 = vld [vmem:[%s3016] sm:$0xf]
      %v3018 = vld [vmem:[%s3016 + $0x4] sm:$0xf]
      %v3019 = vld [vmem:[%s3016 + $0x8] sm:$0xf]
      %v3020 = vld [vmem:[%s3016 + $0xc] sm:$0xf]
      %v3021 = vunpack.c.l.b16 %v2917
      %v3022 = vunpack.c.l.b16 %v2931
      %v3023 = vunpack.c.l.b16 %v2945
      %v3024 = vunpack.c.l.b16 %v2959
      %v3025 = vunpack.c.l.b16 %v2973
      %v3026 = vunpack.c.l.b16 %v2987
      %v3027 = vunpack.c.l.b16 %v3001
      %v3028 = vunpack.c.l.b16 %v3015
      %v3029 = vpack.c.b16 %v3022, %v3021
      %v3030 = vpack.c.b16 %v3024, %v3023
      %v3031 = vpack.c.b16 %v3026, %v3025
      %v3032 = vpack.c.b16 %v3028, %v3027
      %v3037 = vunpack.c.l.b16 %v3017
      %v3038 = vunpack.c.l.b16 %v3018
      %v3039 = vunpack.c.l.b16 %v3019
      %v3040 = vunpack.c.l.b16 %v3020
      %v3041 = vpack.c.b16 %v3038, %v3037
      %v3042 = vpack.c.b16 %v3040, %v3039
      %v3046 = vsel %vm342, %v3029, 0
      %v3049 = vsel %vm342, %v3030, 0
      %v3052 = vsel %vm342, %v3031, 0
      %v3055 = vsel %vm342, %v3032, 0
      %3057 = vmatprep.subr.bf16.mxu0 0
      %3058 = vmatpush1.bf16.msra.mxu0 %v3041
      %3059 = vmatprep.subr.bf16.mxu0 0
      %3060 = vmatpush1.bf16.msra.mxu0 %v3042
      %3061 = vmatprep.subr.bf16.mxu0 0
      %3062 = vmatpush1.bf16.msra.mxu0 0
      %3063 = vmatprep.subr.bf16.mxu0 0
      %3064 = vmatpush1.bf16.msra.mxu0 0
      %3065 = vmatprep.subr.bf16.mxu0 0
      %3066 = vmatpush1.bf16.msra.mxu0 0
      %3067 = vmatprep.subr.bf16.mxu0 0
      %3068 = vmatpush1.bf16.msra.mxu0 0
      %3069 = vmatprep.subr.bf16.mxu0 0
      %3070 = vmatpush1.bf16.msra.mxu0 0
      %3071 = vmatprep.subr.bf16.mxu0 0
      %3072 = vmatpush1.bf16.msra.mxu0 0
      %3073 = vmatprep.subr.bf16.mxu0 0
      %3074 = vmatpush1.bf16.msra.mxu0 0
      %3075 = vmatprep.subr.bf16.mxu0 0
      %3076 = vmatpush1.bf16.msra.mxu0 0
      %3077 = vmatprep.subr.bf16.mxu0 0
      %3078 = vmatpush1.bf16.msra.mxu0 0
      %3079 = vmatprep.subr.bf16.mxu0 0
      %3080 = vmatpush1.bf16.msra.mxu0 0
      %3081 = vmatprep.subr.bf16.mxu0 0
      %3082 = vmatpush1.bf16.msra.mxu0 0
      %3083 = vmatprep.subr.bf16.mxu0 0
      %3084 = vmatpush1.bf16.msra.mxu0 0
      %3085 = vmatprep.subr.bf16.mxu0 0
      %3086 = vmatpush1.bf16.msra.mxu0 0
      %3087 = vmatprep.subr.bf16.mxu0 0
      %3088 = vmatpush1.bf16.msra.mxu0 0
      %3089 = vmatprep.mubr.bf16.mxu0 0
      %3090 = vmatmul.mubr.bf16.gmra.mrb[0].mxu0 %v3046
      %v3091 = vpop.f32.mrb[0].mxu0
      %v3092 = vadd.f32 0.0, %v3091
      %v3093 = vpop.f32.mrb[0].mxu0
      %v3094 = vpop.f32.mrb[0].mxu0
      %v3095 = vadd.f32 0.0, %v3094
      %v3096 = vpop.f32.mrb[0].mxu0
      %3097 = vmatprep.mubr.bf16.mxu0 0
      %3098 = vmatmul.mubr.bf16.gmra.mrb[0].mxu0 %v3049
      %v3099 = vpop.f32.mrb[0].mxu0
      %v3100 = vadd.f32 0.0, %v3099
      %v3101 = vpop.f32.mrb[0].mxu0
      %v3102 = vpop.f32.mrb[0].mxu0
      %v3103 = vadd.f32 0.0, %v3102
      %v3104 = vpop.f32.mrb[0].mxu0
      %3105 = vmatprep.mubr.bf16.mxu0 0
      %3106 = vmatmul.mubr.bf16.gmra.mrb[0].mxu0 %v3052
      %v3107 = vpop.f32.mrb[0].mxu0
      %v3108 = vadd.f32 0.0, %v3107
      %v3109 = vpop.f32.mrb[0].mxu0
      %v3110 = vpop.f32.mrb[0].mxu0
      %v3111 = vadd.f32 0.0, %v3110
      %v3112 = vpop.f32.mrb[0].mxu0
      %3113 = vmatprep.mubr.bf16.mxu0 0
      %3114 = vmatmul.mubr.bf16.gmra.mrb[0].mxu0 %v3055
      %v3115 = vpop.f32.mrb[0].mxu0
      %v3116 = vadd.f32 0.0, %v3115
      %v3117 = vpop.f32.mrb[0].mxu0
      %v3118 = vpop.f32.mrb[0].mxu0
      %v3119 = vadd.f32 0.0, %v3118
      %v3120 = vpop.f32.mrb[0].mxu0
      %3121 = vdwg.mxu0
      %v3130 = vunpack.c.l.b16 %v2884
      %v3131 = vunpack.c.l.b16 %v2885
      %v3132 = vunpack.c.l.b16 %v2886
      %v3133 = vunpack.c.l.b16 %v2887
      %v3134 = vunpack.c.l.b16 %v2888
      %v3135 = vunpack.c.l.b16 %v2889
      %v3136 = vunpack.c.l.b16 %v2890
      %v3137 = vunpack.c.l.b16 %v2891
      %v3138 = vpack.c.b16 %v3131, %v3130
      %v3139 = vpack.c.b16 %v3133, %v3132
      %v3140 = vpack.c.b16 %v3135, %v3134
      %v3141 = vpack.c.b16 %v3137, %v3136
      %v3146 = vunpack.c.l.b16 %v2892
      %v3147 = vunpack.c.l.b16 %v2893
      %v3148 = vunpack.c.l.b16 %v2894
      %v3149 = vunpack.c.l.b16 %v2895
      %v3150 = vpack.c.b16 %v3147, %v3146
      %v3151 = vpack.c.b16 %v3149, %v3148
      %v3155 = vsel %vm342, %v3138, 0
      %v3158 = vsel %vm342, %v3139, 0
      %v3161 = vsel %vm342, %v3140, 0
      %v3164 = vsel %vm342, %v3141, 0
      %3166 = vmatprep.subr.bf16.mxu0 0
      %3167 = vmatpush1.bf16.msra.mxu0 %v3150
      %3168 = vmatprep.subr.bf16.mxu0 0
      %3169 = vmatpush1.bf16.msra.mxu0 %v3151
      %3170 = vmatprep.subr.bf16.mxu0 0
      %3171 = vmatpush1.bf16.msra.mxu0 0
      %3172 = vmatprep.subr.bf16.mxu0 0
      %3173 = vmatpush1.bf16.msra.mxu0 0
      %3174 = vmatprep.subr.bf16.mxu0 0
      %3175 = vmatpush1.bf16.msra.mxu0 0
      %3176 = vmatprep.subr.bf16.mxu0 0
      %3177 = vmatpush1.bf16.msra.mxu0 0
      %3178 = vmatprep.subr.bf16.mxu0 0
      %3179 = vmatpush1.bf16.msra.mxu0 0
      %3180 = vmatprep.subr.bf16.mxu0 0
      %3181 = vmatpush1.bf16.msra.mxu0 0
      %3182 = vmatprep.subr.bf16.mxu0 0
      %3183 = vmatpush1.bf16.msra.mxu0 0
      %3184 = vmatprep.subr.bf16.mxu0 0
      %3185 = vmatpush1.bf16.msra.mxu0 0
      %3186 = vmatprep.subr.bf16.mxu0 0
      %3187 = vmatpush1.bf16.msra.mxu0 0
      %3188 = vmatprep.subr.bf16.mxu0 0
      %3189 = vmatpush1.bf16.msra.mxu0 0
      %3190 = vmatprep.subr.bf16.mxu0 0
      %3191 = vmatpush1.bf16.msra.mxu0 0
      %3192 = vmatprep.subr.bf16.mxu0 0
      %3193 = vmatpush1.bf16.msra.mxu0 0
      %3194 = vmatprep.subr.bf16.mxu0 0
      %3195 = vmatpush1.bf16.msra.mxu0 0
      %3196 = vmatprep.subr.bf16.mxu0 0
      %3197 = vmatpush1.bf16.msra.mxu0 0
      %3198 = vmatprep.mubr.bf16.mxu0 0
      %3199 = vmatmul.mubr.bf16.gmra.mrb[0].mxu0 %v3155
      %v3200 = vpop.f32.mrb[0].mxu0
      %v3201 = vadd.f32 %v3092, %v3200
      %v3202 = vpop.f32.mrb[0].mxu0
      %v3203 = vpop.f32.mrb[0].mxu0
      %v3204 = vadd.f32 %v3095, %v3203
      %v3205 = vpop.f32.mrb[0].mxu0
      %3206 = vmatprep.mubr.bf16.mxu0 0
      %3207 = vmatmul.mubr.bf16.gmra.mrb[0].mxu0 %v3158
      %v3208 = vpop.f32.mrb[0].mxu0
      %v3209 = vadd.f32 %v3100, %v3208
      %v3210 = vpop.f32.mrb[0].mxu0
      %v3211 = vpop.f32.mrb[0].mxu0
      %v3212 = vadd.f32 %v3103, %v3211
      %v3213 = vpop.f32.mrb[0].mxu0
      %3214 = vmatprep.mubr.bf16.mxu0 0
      %3215 = vmatmul.mubr.bf16.gmra.mrb[0].mxu0 %v3161
      %v3216 = vpop.f32.mrb[0].mxu0
      %v3217 = vadd.f32 %v3108, %v3216
      %v3218 = vpop.f32.mrb[0].mxu0
      %v3219 = vpop.f32.mrb[0].mxu0
      %v3220 = vadd.f32 %v3111, %v3219
      %v3221 = vpop.f32.mrb[0].mxu0
      %3222 = vmatprep.mubr.bf16.mxu0 0
      %3223 = vmatmul.mubr.bf16.gmra.mrb[0].mxu0 %v3164
      %v3224 = vpop.f32.mrb[0].mxu0
      %v3225 = vadd.f32 %v3116, %v3224
      %v3226 = vpop.f32.mrb[0].mxu0
      %v3227 = vpop.f32.mrb[0].mxu0
      %v3228 = vadd.f32 %v3119, %v3227
      %v3229 = vpop.f32.mrb[0].mxu0
      %3230 = vdwg.mxu0
      %v3231 = vld [vmem:[#allocation2] sm:$0xe]
      %v3232 = vld [vmem:[#allocation2 + $0x8] sm:$0xe]
      %v3233 = vld [vmem:[#allocation2 + $0x10] sm:$0xe]
      %v3234 = vld [vmem:[#allocation2 + $0x18] sm:$0xe]
      %v3235 = vld [vmem:[#allocation2 + $0x20] sm:$0xe]
      %v3236 = vld [vmem:[#allocation2 + $0x28] sm:$0xe]
      %v3237 = vld [vmem:[#allocation2 + $0x30] sm:$0xe]
      %v3238 = vld [vmem:[#allocation2 + $0x38] sm:$0xe]
      %v3255 = vrot.slane %v3231, 5
      %v3256 = vrot.slane %v3255, 4
      %v3257 = vrot.slane %v2896, 5
      %v3258 = vsel %vm1183, %v3256, %v3257
      %v3259 = vrot.slane %v3232, 5
      %v3260 = vrot.slane %v3259, 4
      %v3261 = vrot.slane %v2897, 5
      %v3262 = vsel %vm1183, %v3260, %v3261
      %v3263 = vrot.slane %v3233, 5
      %v3264 = vrot.slane %v3263, 4
      %v3265 = vrot.slane %v2898, 5
      %v3266 = vsel %vm1183, %v3264, %v3265
      %v3267 = vrot.slane %v3234, 5
      %v3268 = vrot.slane %v3267, 4
      %v3269 = vrot.slane %v2899, 5
      %v3270 = vsel %vm1183, %v3268, %v3269
      %v3271 = vrot.slane %v3235, 5
      %v3272 = vrot.slane %v3271, 4
      %v3273 = vrot.slane %v2900, 5
      %v3274 = vsel %vm1183, %v3272, %v3273
      %v3275 = vrot.slane %v3236, 5
      %v3276 = vrot.slane %v3275, 4
      %v3277 = vrot.slane %v2901, 5
      %v3278 = vsel %vm1183, %v3276, %v3277
      %v3279 = vrot.slane %v3237, 5
      %v3280 = vrot.slane %v3279, 4
      %v3281 = vrot.slane %v2902, 5
      %v3282 = vsel %vm1183, %v3280, %v3281
      %v3283 = vrot.slane %v3238, 5
      %v3284 = vrot.slane %v3283, 4
      %v3285 = vrot.slane %v2903, 5
      %v3286 = vsel %vm1183, %v3284, %v3285
      %s3287 = scalar_lea.vmem %s7, 32
      %v3288 = vld [vmem:[%s3287] sm:$0xf]
      %v3289 = vld [vmem:[%s3287 + $0x4] sm:$0xf]
      %v3290 = vld [vmem:[%s3287 + $0x8] sm:$0xf]
      %v3291 = vld [vmem:[%s3287 + $0xc] sm:$0xf]
      %v3292 = vunpack.c.l.b16 %v3258
      %v3293 = vunpack.c.l.b16 %v3262
      %v3294 = vunpack.c.l.b16 %v3266
      %v3295 = vunpack.c.l.b16 %v3270
      %v3296 = vunpack.c.l.b16 %v3274
      %v3297 = vunpack.c.l.b16 %v3278
      %v3298 = vunpack.c.l.b16 %v3282
      %v3299 = vunpack.c.l.b16 %v3286
      %v3300 = vpack.c.b16 %v3293, %v3292
      %v3301 = vpack.c.b16 %v3295, %v3294
      %v3302 = vpack.c.b16 %v3297, %v3296
      %v3303 = vpack.c.b16 %v3299, %v3298
      %v3308 = vunpack.c.l.b16 %v3288
      %v3309 = vunpack.c.l.b16 %v3289
      %v3310 = vunpack.c.l.b16 %v3290
      %v3311 = vunpack.c.l.b16 %v3291
      %v3312 = vpack.c.b16 %v3309, %v3308
      %v3313 = vpack.c.b16 %v3311, %v3310
      %v3317 = vsel %vm342, %v3300, 0
      %v3320 = vsel %vm342, %v3301, 0
      %v3323 = vsel %vm342, %v3302, 0
      %v3326 = vsel %vm342, %v3303, 0
      %3328 = vmatprep.subr.bf16.mxu0 0
      %3329 = vmatpush1.bf16.msra.mxu0 %v3312
      %3330 = vmatprep.subr.bf16.mxu0 0
      %3331 = vmatpush1.bf16.msra.mxu0 %v3313
      %3332 = vmatprep.subr.bf16.mxu0 0
      %3333 = vmatpush1.bf16.msra.mxu0 0
      %3334 = vmatprep.subr.bf16.mxu0 0
      %3335 = vmatpush1.bf16.msra.mxu0 0
      %3336 = vmatprep.subr.bf16.mxu0 0
      %3337 = vmatpush1.bf16.msra.mxu0 0
      %3338 = vmatprep.subr.bf16.mxu0 0
      %3339 = vmatpush1.bf16.msra.mxu0 0
      %3340 = vmatprep.subr.bf16.mxu0 0
      %3341 = vmatpush1.bf16.msra.mxu0 0
      %3342 = vmatprep.subr.bf16.mxu0 0
      %3343 = vmatpush1.bf16.msra.mxu0 0
      %3344 = vmatprep.subr.bf16.mxu0 0
      %3345 = vmatpush1.bf16.msra.mxu0 0
      %3346 = vmatprep.subr.bf16.mxu0 0
      %3347 = vmatpush1.bf16.msra.mxu0 0
      %3348 = vmatprep.subr.bf16.mxu0 0
      %3349 = vmatpush1.bf16.msra.mxu0 0
      %3350 = vmatprep.subr.bf16.mxu0 0
      %3351 = vmatpush1.bf16.msra.mxu0 0
      %3352 = vmatprep.subr.bf16.mxu0 0
      %3353 = vmatpush1.bf16.msra.mxu0 0
      %3354 = vmatprep.subr.bf16.mxu0 0
      %3355 = vmatpush1.bf16.msra.mxu0 0
      %3356 = vmatprep.subr.bf16.mxu0 0
      %3357 = vmatpush1.bf16.msra.mxu0 0
      %3358 = vmatprep.subr.bf16.mxu0 0
      %3359 = vmatpush1.bf16.msra.mxu0 0
      %3360 = vmatprep.mubr.bf16.mxu0 0
      %3361 = vmatmul.mubr.bf16.gmra.mrb[0].mxu0 %v3317
      %v3362 = vpop.f32.mrb[0].mxu0
      %v3363 = vadd.f32 0.0, %v3362
      %v3364 = vpop.f32.mrb[0].mxu0
      %v3365 = vpop.f32.mrb[0].mxu0
      %v3366 = vadd.f32 0.0, %v3365
      %v3367 = vpop.f32.mrb[0].mxu0
      %3368 = vmatprep.mubr.bf16.mxu0 0
      %3369 = vmatmul.mubr.bf16.gmra.mrb[0].mxu0 %v3320
      %v3370 = vpop.f32.mrb[0].mxu0
      %v3371 = vadd.f32 0.0, %v3370
      %v3372 = vpop.f32.mrb[0].mxu0
      %v3373 = vpop.f32.mrb[0].mxu0
      %v3374 = vadd.f32 0.0, %v3373
      %v3375 = vpop.f32.mrb[0].mxu0
      %3376 = vmatprep.mubr.bf16.mxu0 0
      %3377 = vmatmul.mubr.bf16.gmra.mrb[0].mxu0 %v3323
      %v3378 = vpop.f32.mrb[0].mxu0
      %v3379 = vadd.f32 0.0, %v3378
      %v3380 = vpop.f32.mrb[0].mxu0
      %v3381 = vpop.f32.mrb[0].mxu0
      %v3382 = vadd.f32 0.0, %v3381
      %v3383 = vpop.f32.mrb[0].mxu0
      %3384 = vmatprep.mubr.bf16.mxu0 0
      %3385 = vmatmul.mubr.bf16.gmra.mrb[0].mxu0 %v3326
      %v3386 = vpop.f32.mrb[0].mxu0
      %v3387 = vadd.f32 0.0, %v3386
      %v3388 = vpop.f32.mrb[0].mxu0
      %v3389 = vpop.f32.mrb[0].mxu0
      %v3390 = vadd.f32 0.0, %v3389
      %v3391 = vpop.f32.mrb[0].mxu0
      %3392 = vdwg.mxu0
      %v3393 = vadd.f32 %v3201, %v3363
      %v3394 = vadd.f32 %v3204, %v3366
      %v3395 = vadd.f32 %v3209, %v3371
      %v3396 = vadd.f32 %v3212, %v3374
      %v3397 = vadd.f32 %v3217, %v3379
      %v3398 = vadd.f32 %v3220, %v3382
      %v3399 = vadd.f32 %v3225, %v3387
      %v3400 = vadd.f32 %v3228, %v3390
      %v3401 = vld [vmem:[%s752] sm:$0xf]
      %v3402 = vld [vmem:[%s752 + $0x8] sm:$0xf]
      %v3403 = vld [vmem:[%s752 + $0x10] sm:$0xf]
      %v3404 = vld [vmem:[%s752 + $0x18] sm:$0xf]
      %v3405 = vld [vmem:[%s752 + $0x20] sm:$0xf]
      %v3406 = vld [vmem:[%s752 + $0x28] sm:$0xf]
      %v3407 = vld [vmem:[%s752 + $0x30] sm:$0xf]
      %v3408 = vld [vmem:[%s752 + $0x38] sm:$0xf]
      %s3409 = scalar_lea.vmem %s7, 48
      %v3410 = vld [vmem:[%s3409] sm:$0xf]
      %v3411 = vld [vmem:[%s3409 + $0x4] sm:$0xf]
      %v3412 = vld [vmem:[%s3409 + $0x8] sm:$0xf]
      %v3413 = vld [vmem:[%s3409 + $0xc] sm:$0xf]
      %v3422 = vunpack.c.l.b16 %v3401
      %v3423 = vunpack.c.l.b16 %v3402
      %v3424 = vunpack.c.l.b16 %v3403
      %v3425 = vunpack.c.l.b16 %v3404
      %v3426 = vunpack.c.l.b16 %v3405
      %v3427 = vunpack.c.l.b16 %v3406
      %v3428 = vunpack.c.l.b16 %v3407
      %v3429 = vunpack.c.l.b16 %v3408
      %v3430 = vpack.c.b16 %v3423, %v3422
      %v3431 = vpack.c.b16 %v3425, %v3424
      %v3432 = vpack.c.b16 %v3427, %v3426
      %v3433 = vpack.c.b16 %v3429, %v3428
      %v3438 = vunpack.c.l.b16 %v3410
      %v3439 = vunpack.c.l.b16 %v3411
      %v3440 = vunpack.c.l.b16 %v3412
      %v3441 = vunpack.c.l.b16 %v3413
      %v3442 = vpack.c.b16 %v3439, %v3438
      %v3443 = vpack.c.b16 %v3441, %v3440
      %v3447 = vsel %vm342, %v3430, 0
      %v3450 = vsel %vm342, %v3431, 0
      %v3453 = vsel %vm342, %v3432, 0
      %v3456 = vsel %vm342, %v3433, 0
      %3458 = vmatprep.subr.bf16.mxu0 0
      %3459 = vmatpush1.bf16.msra.mxu0 %v3442
      %3460 = vmatprep.subr.bf16.mxu0 0
      %3461 = vmatpush1.bf16.msra.mxu0 %v3443
      %3462 = vmatprep.subr.bf16.mxu0 0
      %3463 = vmatpush1.bf16.msra.mxu0 0
      %3464 = vmatprep.subr.bf16.mxu0 0
      %3465 = vmatpush1.bf16.msra.mxu0 0
      %3466 = vmatprep.subr.bf16.mxu0 0
      %3467 = vmatpush1.bf16.msra.mxu0 0
      %3468 = vmatprep.subr.bf16.mxu0 0
      %3469 = vmatpush1.bf16.msra.mxu0 0
      %3470 = vmatprep.subr.bf16.mxu0 0
      %3471 = vmatpush1.bf16.msra.mxu0 0
      %3472 = vmatprep.subr.bf16.mxu0 0
      %3473 = vmatpush1.bf16.msra.mxu0 0
      %3474 = vmatprep.subr.bf16.mxu0 0
      %3475 = vmatpush1.bf16.msra.mxu0 0
      %3476 = vmatprep.subr.bf16.mxu0 0
      %3477 = vmatpush1.bf16.msra.mxu0 0
      %3478 = vmatprep.subr.bf16.mxu0 0
      %3479 = vmatpush1.bf16.msra.mxu0 0
      %3480 = vmatprep.subr.bf16.mxu0 0
      %3481 = vmatpush1.bf16.msra.mxu0 0
      %3482 = vmatprep.subr.bf16.mxu0 0
      %3483 = vmatpush1.bf16.msra.mxu0 0
      %3484 = vmatprep.subr.bf16.mxu0 0
      %3485 = vmatpush1.bf16.msra.mxu0 0
      %3486 = vmatprep.subr.bf16.mxu0 0
      %3487 = vmatpush1.bf16.msra.mxu0 0
      %3488 = vmatprep.subr.bf16.mxu0 0
      %3489 = vmatpush1.bf16.msra.mxu0 0
      %3490 = vmatprep.mubr.bf16.mxu0 0
      %3491 = vmatmul.mubr.bf16.gmra.mrb[0].mxu0 %v3447
      %v3492 = vpop.f32.mrb[0].mxu0
      %v3493 = vadd.f32 0.0, %v3492
      %v3494 = vpop.f32.mrb[0].mxu0
      %v3495 = vpop.f32.mrb[0].mxu0
      %v3496 = vadd.f32 0.0, %v3495
      %v3497 = vpop.f32.mrb[0].mxu0
      %3498 = vmatprep.mubr.bf16.mxu0 0
      %3499 = vmatmul.mubr.bf16.gmra.mrb[0].mxu0 %v3450
      %v3500 = vpop.f32.mrb[0].mxu0
      %v3501 = vadd.f32 0.0, %v3500
      %v3502 = vpop.f32.mrb[0].mxu0
      %v3503 = vpop.f32.mrb[0].mxu0
      %v3504 = vadd.f32 0.0, %v3503
      %v3505 = vpop.f32.mrb[0].mxu0
      %3506 = vmatprep.mubr.bf16.mxu0 0
      %3507 = vmatmul.mubr.bf16.gmra.mrb[0].mxu0 %v3453
      %v3508 = vpop.f32.mrb[0].mxu0
      %v3509 = vadd.f32 0.0, %v3508
      %v3510 = vpop.f32.mrb[0].mxu0
      %v3511 = vpop.f32.mrb[0].mxu0
      %v3512 = vadd.f32 0.0, %v3511
      %v3513 = vpop.f32.mrb[0].mxu0
      %3514 = vmatprep.mubr.bf16.mxu0 0
      %3515 = vmatmul.mubr.bf16.gmra.mrb[0].mxu0 %v3456
      %v3516 = vpop.f32.mrb[0].mxu0
      %v3517 = vadd.f32 0.0, %v3516
      %v3518 = vpop.f32.mrb[0].mxu0
      %v3519 = vpop.f32.mrb[0].mxu0
      %v3520 = vadd.f32 0.0, %v3519
      %v3521 = vpop.f32.mrb[0].mxu0
      %3522 = vdwg.mxu0
      %v3523 = vadd.f32 %v3393, %v3493
      %v3524 = vadd.f32 %v3394, %v3496
      %v3525 = vadd.f32 %v3395, %v3501
      %v3526 = vadd.f32 %v3396, %v3504
      %v3527 = vadd.f32 %v3397, %v3509
      %v3528 = vadd.f32 %v3398, %v3512
      %v3529 = vadd.f32 %v3399, %v3517
      %v3530 = vadd.f32 %v3400, %v3520
      %v3531 = vld [vmem:[%s752] sm:$0xf]
      %v3532 = vld [vmem:[%s752 + $0x4] sm:$0x1]
      %v3533 = vld [vmem:[%s752 + $0x8] sm:$0xf]
      %v3534 = vld [vmem:[%s752 + $0xc] sm:$0x1]
      %v3535 = vld [vmem:[%s752 + $0x10] sm:$0xf]
      %v3536 = vld [vmem:[%s752 + $0x14] sm:$0x1]
      %v3537 = vld [vmem:[%s752 + $0x18] sm:$0xf]
      %v3538 = vld [vmem:[%s752 + $0x1c] sm:$0x1]
      %v3539 = vld [vmem:[%s752 + $0x20] sm:$0xf]
      %v3540 = vld [vmem:[%s752 + $0x24] sm:$0x1]
      %v3541 = vld [vmem:[%s752 + $0x28] sm:$0xf]
      %v3542 = vld [vmem:[%s752 + $0x2c] sm:$0x1]
      %v3543 = vld [vmem:[%s752 + $0x30] sm:$0xf]
      %v3544 = vld [vmem:[%s752 + $0x34] sm:$0x1]
      %v3545 = vld [vmem:[%s752 + $0x38] sm:$0xf]
      %v3546 = vld [vmem:[%s752 + $0x3c] sm:$0x1]
      %v3548 = vshrl.u32 %v3531, 16
      %v3550 = vrot.slane %v3548, 4
      %v3551 = vshll.u32 %v3531, 16
      %v3553 = vrot.slane %v3551, 5
      %v3554 = vor.u32 %v3550, %v3553
      %v3555 = vrot.slane %v3554, 4
      %v3557 = vshll.u32 %v3532, 16
      %v3559 = vrot.slane %v3557, 5
      %v3560 = vsel %vm829, %v3555, %v3559
      %v3562 = vshrl.u32 %v3533, 16
      %v3564 = vrot.slane %v3562, 4
      %v3565 = vshll.u32 %v3533, 16
      %v3567 = vrot.slane %v3565, 5
      %v3568 = vor.u32 %v3564, %v3567
      %v3569 = vrot.slane %v3568, 4
      %v3571 = vshll.u32 %v3534, 16
      %v3573 = vrot.slane %v3571, 5
      %v3574 = vsel %vm829, %v3569, %v3573
      %v3576 = vshrl.u32 %v3535, 16
      %v3578 = vrot.slane %v3576, 4
      %v3579 = vshll.u32 %v3535, 16
      %v3581 = vrot.slane %v3579, 5
      %v3582 = vor.u32 %v3578, %v3581
      %v3583 = vrot.slane %v3582, 4
      %v3585 = vshll.u32 %v3536, 16
      %v3587 = vrot.slane %v3585, 5
      %v3588 = vsel %vm829, %v3583, %v3587
      %v3590 = vshrl.u32 %v3537, 16
      %v3592 = vrot.slane %v3590, 4
      %v3593 = vshll.u32 %v3537, 16
      %v3595 = vrot.slane %v3593, 5
      %v3596 = vor.u32 %v3592, %v3595
      %v3597 = vrot.slane %v3596, 4
      %v3599 = vshll.u32 %v3538, 16
      %v3601 = vrot.slane %v3599, 5
      %v3602 = vsel %vm829, %v3597, %v3601
      %v3604 = vshrl.u32 %v3539, 16
      %v3606 = vrot.slane %v3604, 4
      %v3607 = vshll.u32 %v3539, 16
      %v3609 = vrot.slane %v3607, 5
      %v3610 = vor.u32 %v3606, %v3609
      %v3611 = vrot.slane %v3610, 4
      %v3613 = vshll.u32 %v3540, 16
      %v3615 = vrot.slane %v3613, 5
      %v3616 = vsel %vm829, %v3611, %v3615
      %v3618 = vshrl.u32 %v3541, 16
      %v3620 = vrot.slane %v3618, 4
      %v3621 = vshll.u32 %v3541, 16
      %v3623 = vrot.slane %v3621, 5
      %v3624 = vor.u32 %v3620, %v3623
      %v3625 = vrot.slane %v3624, 4
      %v3627 = vshll.u32 %v3542, 16
      %v3629 = vrot.slane %v3627, 5
      %v3630 = vsel %vm829, %v3625, %v3629
      %v3632 = vshrl.u32 %v3543, 16
      %v3634 = vrot.slane %v3632, 4
      %v3635 = vshll.u32 %v3543, 16
      %v3637 = vrot.slane %v3635, 5
      %v3638 = vor.u32 %v3634, %v3637
      %v3639 = vrot.slane %v3638, 4
      %v3641 = vshll.u32 %v3544, 16
      %v3643 = vrot.slane %v3641, 5
      %v3644 = vsel %vm829, %v3639, %v3643
      %v3646 = vshrl.u32 %v3545, 16
      %v3648 = vrot.slane %v3646, 4
      %v3649 = vshll.u32 %v3545, 16
      %v3651 = vrot.slane %v3649, 5
      %v3652 = vor.u32 %v3648, %v3651
      %v3653 = vrot.slane %v3652, 4
      %v3655 = vshll.u32 %v3546, 16
      %v3657 = vrot.slane %v3655, 5
      %v3658 = vsel %vm829, %v3653, %v3657
      %s3659 = scalar_lea.vmem %s7, 64
      %v3660 = vld [vmem:[%s3659] sm:$0xf]
      %v3661 = vld [vmem:[%s3659 + $0x4] sm:$0xf]
      %v3662 = vld [vmem:[%s3659 + $0x8] sm:$0xf]
      %v3663 = vld [vmem:[%s3659 + $0xc] sm:$0xf]
      %v3664 = vunpack.c.l.b16 %v3560
      %v3665 = vunpack.c.l.b16 %v3574
      %v3666 = vunpack.c.l.b16 %v3588
      %v3667 = vunpack.c.l.b16 %v3602
      %v3668 = vunpack.c.l.b16 %v3616
      %v3669 = vunpack.c.l.b16 %v3630
      %v3670 = vunpack.c.l.b16 %v3644
      %v3671 = vunpack.c.l.b16 %v3658
      %v3672 = vpack.c.b16 %v3665, %v3664
      %v3673 = vpack.c.b16 %v3667, %v3666
      %v3674 = vpack.c.b16 %v3669, %v3668
      %v3675 = vpack.c.b16 %v3671, %v3670
      %v3680 = vunpack.c.l.b16 %v3660
      %v3681 = vunpack.c.l.b16 %v3661
      %v3682 = vunpack.c.l.b16 %v3662
      %v3683 = vunpack.c.l.b16 %v3663
      %v3684 = vpack.c.b16 %v3681, %v3680
      %v3685 = vpack.c.b16 %v3683, %v3682
      %v3689 = vsel %vm342, %v3672, 0
      %v3692 = vsel %vm342, %v3673, 0
      %v3695 = vsel %vm342, %v3674, 0
      %v3698 = vsel %vm342, %v3675, 0
      %3700 = vmatprep.subr.bf16.mxu0 0
      %3701 = vmatpush1.bf16.msra.mxu0 %v3684
      %3702 = vmatprep.subr.bf16.mxu0 0
      %3703 = vmatpush1.bf16.msra.mxu0 %v3685
      %3704 = vmatprep.subr.bf16.mxu0 0
      %3705 = vmatpush1.bf16.msra.mxu0 0
      %3706 = vmatprep.subr.bf16.mxu0 0
      %3707 = vmatpush1.bf16.msra.mxu0 0
      %3708 = vmatprep.subr.bf16.mxu0 0
      %3709 = vmatpush1.bf16.msra.mxu0 0
      %3710 = vmatprep.subr.bf16.mxu0 0
      %3711 = vmatpush1.bf16.msra.mxu0 0
      %3712 = vmatprep.subr.bf16.mxu0 0
      %3713 = vmatpush1.bf16.msra.mxu0 0
      %3714 = vmatprep.subr.bf16.mxu0 0
      %3715 = vmatpush1.bf16.msra.mxu0 0
      %3716 = vmatprep.subr.bf16.mxu0 0
      %3717 = vmatpush1.bf16.msra.mxu0 0
      %3718 = vmatprep.subr.bf16.mxu0 0
      %3719 = vmatpush1.bf16.msra.mxu0 0
      %3720 = vmatprep.subr.bf16.mxu0 0
      %3721 = vmatpush1.bf16.msra.mxu0 0
      %3722 = vmatprep.subr.bf16.mxu0 0
      %3723 = vmatpush1.bf16.msra.mxu0 0
      %3724 = vmatprep.subr.bf16.mxu0 0
      %3725 = vmatpush1.bf16.msra.mxu0 0
      %3726 = vmatprep.subr.bf16.mxu0 0
      %3727 = vmatpush1.bf16.msra.mxu0 0
      %3728 = vmatprep.subr.bf16.mxu0 0
      %3729 = vmatpush1.bf16.msra.mxu0 0
      %3730 = vmatprep.subr.bf16.mxu0 0
      %3731 = vmatpush1.bf16.msra.mxu0 0
      %3732 = vmatprep.mubr.bf16.mxu0 0
      %3733 = vmatmul.mubr.bf16.gmra.mrb[0].mxu0 %v3689
      %v3734 = vpop.f32.mrb[0].mxu0
      %v3735 = vadd.f32 0.0, %v3734
      %v3736 = vpop.f32.mrb[0].mxu0
      %v3737 = vpop.f32.mrb[0].mxu0
      %v3738 = vadd.f32 0.0, %v3737
      %v3739 = vpop.f32.mrb[0].mxu0
      %3740 = vmatprep.mubr.bf16.mxu0 0
      %3741 = vmatmul.mubr.bf16.gmra.mrb[0].mxu0 %v3692
      %v3742 = vpop.f32.mrb[0].mxu0
      %v3743 = vadd.f32 0.0, %v3742
      %v3744 = vpop.f32.mrb[0].mxu0
      %v3745 = vpop.f32.mrb[0].mxu0
      %v3746 = vadd.f32 0.0, %v3745
      %v3747 = vpop.f32.mrb[0].mxu0
      %3748 = vmatprep.mubr.bf16.mxu0 0
      %3749 = vmatmul.mubr.bf16.gmra.mrb[0].mxu0 %v3695
      %v3750 = vpop.f32.mrb[0].mxu0
      %v3751 = vadd.f32 0.0, %v3750
      %v3752 = vpop.f32.mrb[0].mxu0
      %v3753 = vpop.f32.mrb[0].mxu0
      %v3754 = vadd.f32 0.0, %v3753
      %v3755 = vpop.f32.mrb[0].mxu0
      %3756 = vmatprep.mubr.bf16.mxu0 0
      %3757 = vmatmul.mubr.bf16.gmra.mrb[0].mxu0 %v3698
      %v3758 = vpop.f32.mrb[0].mxu0
      %v3759 = vadd.f32 0.0, %v3758
      %v3760 = vpop.f32.mrb[0].mxu0
      %v3761 = vpop.f32.mrb[0].mxu0
      %v3762 = vadd.f32 0.0, %v3761
      %v3763 = vpop.f32.mrb[0].mxu0
      %3764 = vdwg.mxu0
      %v3765 = vadd.f32 %v3523, %v3735
      %v3766 = vadd.f32 %v3524, %v3738
      %v3767 = vadd.f32 %v3525, %v3743
      %v3768 = vadd.f32 %v3526, %v3746
      %v3769 = vadd.f32 %v3527, %v3751
      %v3770 = vadd.f32 %v3528, %v3754
      %v3771 = vadd.f32 %v3529, %v3759
      %v3772 = vadd.f32 %v3530, %v3762
      %v3773 = vld [vmem:[%s752] sm:$0xe]
      %v3774 = vld [vmem:[%s752 + $0x8] sm:$0xe]
      %v3775 = vld [vmem:[%s752 + $0x10] sm:$0xe]
      %v3776 = vld [vmem:[%s752 + $0x18] sm:$0xe]
      %v3777 = vld [vmem:[%s752 + $0x20] sm:$0xe]
      %v3778 = vld [vmem:[%s752 + $0x28] sm:$0xe]
      %v3779 = vld [vmem:[%s752 + $0x30] sm:$0xe]
      %v3780 = vld [vmem:[%s752 + $0x38] sm:$0xe]
      %v3797 = vrot.slane %v3773, 5
      %v3798 = vrot.slane %v3797, 4
      %v3799 = vrot.slane %v3532, 5
      %v3800 = vsel %vm1183, %v3798, %v3799
      %v3801 = vrot.slane %v3774, 5
      %v3802 = vrot.slane %v3801, 4
      %v3803 = vrot.slane %v3534, 5
      %v3804 = vsel %vm1183, %v3802, %v3803
      %v3805 = vrot.slane %v3775, 5
      %v3806 = vrot.slane %v3805, 4
      %v3807 = vrot.slane %v3536, 5
      %v3808 = vsel %vm1183, %v3806, %v3807
      %v3809 = vrot.slane %v3776, 5
      %v3810 = vrot.slane %v3809, 4
      %v3811 = vrot.slane %v3538, 5
      %v3812 = vsel %vm1183, %v3810, %v3811
      %v3813 = vrot.slane %v3777, 5
      %v3814 = vrot.slane %v3813, 4
      %v3815 = vrot.slane %v3540, 5
      %v3816 = vsel %vm1183, %v3814, %v3815
      %v3817 = vrot.slane %v3778, 5
      %v3818 = vrot.slane %v3817, 4
      %v3819 = vrot.slane %v3542, 5
      %v3820 = vsel %vm1183, %v3818, %v3819
      %v3821 = vrot.slane %v3779, 5
      %v3822 = vrot.slane %v3821, 4
      %v3823 = vrot.slane %v3544, 5
      %v3824 = vsel %vm1183, %v3822, %v3823
      %v3825 = vrot.slane %v3780, 5
      %v3826 = vrot.slane %v3825, 4
      %v3827 = vrot.slane %v3546, 5
      %v3828 = vsel %vm1183, %v3826, %v3827
      %s3829 = scalar_lea.vmem %s7, 80
      %v3830 = vld [vmem:[%s3829] sm:$0xf]
      %v3831 = vld [vmem:[%s3829 + $0x4] sm:$0xf]
      %v3832 = vld [vmem:[%s3829 + $0x8] sm:$0xf]
      %v3833 = vld [vmem:[%s3829 + $0xc] sm:$0xf]
      %v3834 = vunpack.c.l.b16 %v3800
      %v3835 = vunpack.c.l.b16 %v3804
      %v3836 = vunpack.c.l.b16 %v3808
      %v3837 = vunpack.c.l.b16 %v3812
      %v3838 = vunpack.c.l.b16 %v3816
      %v3839 = vunpack.c.l.b16 %v3820
      %v3840 = vunpack.c.l.b16 %v3824
      %v3841 = vunpack.c.l.b16 %v3828
      %v3842 = vpack.c.b16 %v3835, %v3834
      %v3843 = vpack.c.b16 %v3837, %v3836
      %v3844 = vpack.c.b16 %v3839, %v3838
      %v3845 = vpack.c.b16 %v3841, %v3840
      %v3850 = vunpack.c.l.b16 %v3830
      %v3851 = vunpack.c.l.b16 %v3831
      %v3852 = vunpack.c.l.b16 %v3832
      %v3853 = vunpack.c.l.b16 %v3833
      %v3854 = vpack.c.b16 %v3851, %v3850
      %v3855 = vpack.c.b16 %v3853, %v3852
      %v3859 = vsel %vm342, %v3842, 0
      %v3862 = vsel %vm342, %v3843, 0
      %v3865 = vsel %vm342, %v3844, 0
      %v3868 = vsel %vm342, %v3845, 0
      %3870 = vmatprep.subr.bf16.mxu0 0
      %3871 = vmatpush1.bf16.msra.mxu0 %v3854
      %3872 = vmatprep.subr.bf16.mxu0 0
      %3873 = vmatpush1.bf16.msra.mxu0 %v3855
      %3874 = vmatprep.subr.bf16.mxu0 0
      %3875 = vmatpush1.bf16.msra.mxu0 0
      %3876 = vmatprep.subr.bf16.mxu0 0
      %3877 = vmatpush1.bf16.msra.mxu0 0
      %3878 = vmatprep.subr.bf16.mxu0 0
      %3879 = vmatpush1.bf16.msra.mxu0 0
      %3880 = vmatprep.subr.bf16.mxu0 0
      %3881 = vmatpush1.bf16.msra.mxu0 0
      %3882 = vmatprep.subr.bf16.mxu0 0
      %3883 = vmatpush1.bf16.msra.mxu0 0
      %3884 = vmatprep.subr.bf16.mxu0 0
      %3885 = vmatpush1.bf16.msra.mxu0 0
      %3886 = vmatprep.subr.bf16.mxu0 0
      %3887 = vmatpush1.bf16.msra.mxu0 0
      %3888 = vmatprep.subr.bf16.mxu0 0
      %3889 = vmatpush1.bf16.msra.mxu0 0
      %3890 = vmatprep.subr.bf16.mxu0 0
      %3891 = vmatpush1.bf16.msra.mxu0 0
      %3892 = vmatprep.subr.bf16.mxu0 0
      %3893 = vmatpush1.bf16.msra.mxu0 0
      %3894 = vmatprep.subr.bf16.mxu0 0
      %3895 = vmatpush1.bf16.msra.mxu0 0
      %3896 = vmatprep.subr.bf16.mxu0 0
      %3897 = vmatpush1.bf16.msra.mxu0 0
      %3898 = vmatprep.subr.bf16.mxu0 0
      %3899 = vmatpush1.bf16.msra.mxu0 0
      %3900 = vmatprep.subr.bf16.mxu0 0
      %3901 = vmatpush1.bf16.msra.mxu0 0
      %3902 = vmatprep.mubr.bf16.mxu0 0
      %3903 = vmatmul.mubr.bf16.gmra.mrb[0].mxu0 %v3859
      %v3904 = vpop.f32.mrb[0].mxu0
      %v3905 = vadd.f32 0.0, %v3904
      %v3906 = vpop.f32.mrb[0].mxu0
      %v3907 = vpop.f32.mrb[0].mxu0
      %v3908 = vadd.f32 0.0, %v3907
      %v3909 = vpop.f32.mrb[0].mxu0
      %3910 = vmatprep.mubr.bf16.mxu0 0
      %3911 = vmatmul.mubr.bf16.gmra.mrb[0].mxu0 %v3862
      %v3912 = vpop.f32.mrb[0].mxu0
      %v3913 = vadd.f32 0.0, %v3912
      %v3914 = vpop.f32.mrb[0].mxu0
      %v3915 = vpop.f32.mrb[0].mxu0
      %v3916 = vadd.f32 0.0, %v3915
      %v3917 = vpop.f32.mrb[0].mxu0
      %3918 = vmatprep.mubr.bf16.mxu0 0
      %3919 = vmatmul.mubr.bf16.gmra.mrb[0].mxu0 %v3865
      %v3920 = vpop.f32.mrb[0].mxu0
      %v3921 = vadd.f32 0.0, %v3920
      %v3922 = vpop.f32.mrb[0].mxu0
      %v3923 = vpop.f32.mrb[0].mxu0
      %v3924 = vadd.f32 0.0, %v3923
      %v3925 = vpop.f32.mrb[0].mxu0
      %3926 = vmatprep.mubr.bf16.mxu0 0
      %3927 = vmatmul.mubr.bf16.gmra.mrb[0].mxu0 %v3868
      %v3928 = vpop.f32.mrb[0].mxu0
      %v3929 = vadd.f32 0.0, %v3928
      %v3930 = vpop.f32.mrb[0].mxu0
      %v3931 = vpop.f32.mrb[0].mxu0
      %v3932 = vadd.f32 0.0, %v3931
      %v3933 = vpop.f32.mrb[0].mxu0
      %3934 = vdwg.mxu0
      %v3935 = vadd.f32 %v3765, %v3905
      %v3936 = vadd.f32 %v3766, %v3908
      %v3937 = vadd.f32 %v3767, %v3913
      %v3938 = vadd.f32 %v3768, %v3916
      %v3939 = vadd.f32 %v3769, %v3921
      %v3940 = vadd.f32 %v3770, %v3924
      %v3941 = vadd.f32 %v3771, %v3929
      %v3942 = vadd.f32 %v3772, %v3932
      %v3943 = vld [vmem:[%s1872] sm:$0xf]
      %v3944 = vld [vmem:[%s1872 + $0x8] sm:$0xf]
      %v3945 = vld [vmem:[%s1872 + $0x10] sm:$0xf]
      %v3946 = vld [vmem:[%s1872 + $0x18] sm:$0xf]
      %v3947 = vld [vmem:[%s1872 + $0x20] sm:$0xf]
      %v3948 = vld [vmem:[%s1872 + $0x28] sm:$0xf]
      %v3949 = vld [vmem:[%s1872 + $0x30] sm:$0xf]
      %v3950 = vld [vmem:[%s1872 + $0x38] sm:$0xf]
      %s3951 = scalar_lea.vmem %s7, 96
      %v3952 = vld [vmem:[%s3951] sm:$0xf]
      %v3953 = vld [vmem:[%s3951 + $0x4] sm:$0xf]
      %v3954 = vld [vmem:[%s3951 + $0x8] sm:$0xf]
      %v3955 = vld [vmem:[%s3951 + $0xc] sm:$0xf]
      %v3964 = vunpack.c.l.b16 %v3943
      %v3965 = vunpack.c.l.b16 %v3944
      %v3966 = vunpack.c.l.b16 %v3945
      %v3967 = vunpack.c.l.b16 %v3946
      %v3968 = vunpack.c.l.b16 %v3947
      %v3969 = vunpack.c.l.b16 %v3948
      %v3970 = vunpack.c.l.b16 %v3949
      %v3971 = vunpack.c.l.b16 %v3950
      %v3972 = vpack.c.b16 %v3965, %v3964
      %v3973 = vpack.c.b16 %v3967, %v3966
      %v3974 = vpack.c.b16 %v3969, %v3968
      %v3975 = vpack.c.b16 %v3971, %v3970
      %v3980 = vunpack.c.l.b16 %v3952
      %v3981 = vunpack.c.l.b16 %v3953
      %v3982 = vunpack.c.l.b16 %v3954
      %v3983 = vunpack.c.l.b16 %v3955
      %v3984 = vpack.c.b16 %v3981, %v3980
      %v3985 = vpack.c.b16 %v3983, %v3982
      %v3989 = vsel %vm342, %v3972, 0
      %v3992 = vsel %vm342, %v3973, 0
      %v3995 = vsel %vm342, %v3974, 0
      %v3998 = vsel %vm342, %v3975, 0
      %4000 = vmatprep.subr.bf16.mxu0 0
      %4001 = vmatpush1.bf16.msra.mxu0 %v3984
      %4002 = vmatprep.subr.bf16.mxu0 0
      %4003 = vmatpush1.bf16.msra.mxu0 %v3985
      %4004 = vmatprep.subr.bf16.mxu0 0
      %4005 = vmatpush1.bf16.msra.mxu0 0
      %4006 = vmatprep.subr.bf16.mxu0 0
      %4007 = vmatpush1.bf16.msra.mxu0 0
      %4008 = vmatprep.subr.bf16.mxu0 0
      %4009 = vmatpush1.bf16.msra.mxu0 0
      %4010 = vmatprep.subr.bf16.mxu0 0
      %4011 = vmatpush1.bf16.msra.mxu0 0
      %4012 = vmatprep.subr.bf16.mxu0 0
      %4013 = vmatpush1.bf16.msra.mxu0 0
      %4014 = vmatprep.subr.bf16.mxu0 0
      %4015 = vmatpush1.bf16.msra.mxu0 0
      %4016 = vmatprep.subr.bf16.mxu0 0
      %4017 = vmatpush1.bf16.msra.mxu0 0
      %4018 = vmatprep.subr.bf16.mxu0 0
      %4019 = vmatpush1.bf16.msra.mxu0 0
      %4020 = vmatprep.subr.bf16.mxu0 0
      %4021 = vmatpush1.bf16.msra.mxu0 0
      %4022 = vmatprep.subr.bf16.mxu0 0
      %4023 = vmatpush1.bf16.msra.mxu0 0
      %4024 = vmatprep.subr.bf16.mxu0 0
      %4025 = vmatpush1.bf16.msra.mxu0 0
      %4026 = vmatprep.subr.bf16.mxu0 0
      %4027 = vmatpush1.bf16.msra.mxu0 0
      %4028 = vmatprep.subr.bf16.mxu0 0
      %4029 = vmatpush1.bf16.msra.mxu0 0
      %4030 = vmatprep.subr.bf16.mxu0 0
      %4031 = vmatpush1.bf16.msra.mxu0 0
      %4032 = vmatprep.mubr.bf16.mxu0 0
      %4033 = vmatmul.mubr.bf16.gmra.mrb[0].mxu0 %v3989
      %v4034 = vpop.f32.mrb[0].mxu0
      %v4035 = vadd.f32 0.0, %v4034
      %v4036 = vpop.f32.mrb[0].mxu0
      %v4037 = vpop.f32.mrb[0].mxu0
      %v4038 = vadd.f32 0.0, %v4037
      %v4039 = vpop.f32.mrb[0].mxu0
      %4040 = vmatprep.mubr.bf16.mxu0 0
      %4041 = vmatmul.mubr.bf16.gmra.mrb[0].mxu0 %v3992
      %v4042 = vpop.f32.mrb[0].mxu0
      %v4043 = vadd.f32 0.0, %v4042
      %v4044 = vpop.f32.mrb[0].mxu0
      %v4045 = vpop.f32.mrb[0].mxu0
      %v4046 = vadd.f32 0.0, %v4045
      %v4047 = vpop.f32.mrb[0].mxu0
      %4048 = vmatprep.mubr.bf16.mxu0 0
      %4049 = vmatmul.mubr.bf16.gmra.mrb[0].mxu0 %v3995
      %v4050 = vpop.f32.mrb[0].mxu0
      %v4051 = vadd.f32 0.0, %v4050
      %v4052 = vpop.f32.mrb[0].mxu0
      %v4053 = vpop.f32.mrb[0].mxu0
      %v4054 = vadd.f32 0.0, %v4053
      %v4055 = vpop.f32.mrb[0].mxu0
      %4056 = vmatprep.mubr.bf16.mxu0 0
      %4057 = vmatmul.mubr.bf16.gmra.mrb[0].mxu0 %v3998
      %v4058 = vpop.f32.mrb[0].mxu0
      %v4059 = vadd.f32 0.0, %v4058
      %v4060 = vpop.f32.mrb[0].mxu0
      %v4061 = vpop.f32.mrb[0].mxu0
      %v4062 = vadd.f32 0.0, %v4061
      %v4063 = vpop.f32.mrb[0].mxu0
      %4064 = vdwg.mxu0
      %v4065 = vadd.f32 %v3935, %v4035
      %v4066 = vadd.f32 %v3936, %v4038
      %v4067 = vadd.f32 %v3937, %v4043
      %v4068 = vadd.f32 %v3938, %v4046
      %v4069 = vadd.f32 %v3939, %v4051
      %v4070 = vadd.f32 %v3940, %v4054
      %v4071 = vadd.f32 %v3941, %v4059
      %v4072 = vadd.f32 %v3942, %v4062
      %v4073 = vld [vmem:[%s1872] sm:$0xf]
      %v4074 = vld [vmem:[%s1872 + $0x4] sm:$0x1]
      %v4075 = vld [vmem:[%s1872 + $0x8] sm:$0xf]
      %v4076 = vld [vmem:[%s1872 + $0xc] sm:$0x1]
      %v4077 = vld [vmem:[%s1872 + $0x10] sm:$0xf]
      %v4078 = vld [vmem:[%s1872 + $0x14] sm:$0x1]
      %v4079 = vld [vmem:[%s1872 + $0x18] sm:$0xf]
      %v4080 = vld [vmem:[%s1872 + $0x1c] sm:$0x1]
      %v4081 = vld [vmem:[%s1872 + $0x20] sm:$0xf]
      %v4082 = vld [vmem:[%s1872 + $0x24] sm:$0x1]
      %v4083 = vld [vmem:[%s1872 + $0x28] sm:$0xf]
      %v4084 = vld [vmem:[%s1872 + $0x2c] sm:$0x1]
      %v4085 = vld [vmem:[%s1872 + $0x30] sm:$0xf]
      %v4086 = vld [vmem:[%s1872 + $0x34] sm:$0x1]
      %v4087 = vld [vmem:[%s1872 + $0x38] sm:$0xf]
      %v4088 = vld [vmem:[%s1872 + $0x3c] sm:$0x1]
      %v4090 = vshrl.u32 %v4073, 16
      %v4092 = vrot.slane %v4090, 4
      %v4093 = vshll.u32 %v4073, 16
      %v4095 = vrot.slane %v4093, 5
      %v4096 = vor.u32 %v4092, %v4095
      %v4097 = vrot.slane %v4096, 4
      %v4099 = vshll.u32 %v4074, 16
      %v4101 = vrot.slane %v4099, 5
      %v4102 = vsel %vm829, %v4097, %v4101
      %v4104 = vshrl.u32 %v4075, 16
      %v4106 = vrot.slane %v4104, 4
      %v4107 = vshll.u32 %v4075, 16
      %v4109 = vrot.slane %v4107, 5
      %v4110 = vor.u32 %v4106, %v4109
      %v4111 = vrot.slane %v4110, 4
      %v4113 = vshll.u32 %v4076, 16
      %v4115 = vrot.slane %v4113, 5
      %v4116 = vsel %vm829, %v4111, %v4115
      %v4118 = vshrl.u32 %v4077, 16
      %v4120 = vrot.slane %v4118, 4
      %v4121 = vshll.u32 %v4077, 16
      %v4123 = vrot.slane %v4121, 5
      %v4124 = vor.u32 %v4120, %v4123
      %v4125 = vrot.slane %v4124, 4
      %v4127 = vshll.u32 %v4078, 16
      %v4129 = vrot.slane %v4127, 5
      %v4130 = vsel %vm829, %v4125, %v4129
      %v4132 = vshrl.u32 %v4079, 16
      %v4134 = vrot.slane %v4132, 4
      %v4135 = vshll.u32 %v4079, 16
      %v4137 = vrot.slane %v4135, 5
      %v4138 = vor.u32 %v4134, %v4137
      %v4139 = vrot.slane %v4138, 4
      %v4141 = vshll.u32 %v4080, 16
      %v4143 = vrot.slane %v4141, 5
      %v4144 = vsel %vm829, %v4139, %v4143
      %v4146 = vshrl.u32 %v4081, 16
      %v4148 = vrot.slane %v4146, 4
      %v4149 = vshll.u32 %v4081, 16
      %v4151 = vrot.slane %v4149, 5
      %v4152 = vor.u32 %v4148, %v4151
      %v4153 = vrot.slane %v4152, 4
      %v4155 = vshll.u32 %v4082, 16
      %v4157 = vrot.slane %v4155, 5
      %v4158 = vsel %vm829, %v4153, %v4157
      %v4160 = vshrl.u32 %v4083, 16
      %v4162 = vrot.slane %v4160, 4
      %v4163 = vshll.u32 %v4083, 16
      %v4165 = vrot.slane %v4163, 5
      %v4166 = vor.u32 %v4162, %v4165
      %v4167 = vrot.slane %v4166, 4
      %v4169 = vshll.u32 %v4084, 16
      %v4171 = vrot.slane %v4169, 5
      %v4172 = vsel %vm829, %v4167, %v4171
      %v4174 = vshrl.u32 %v4085, 16
      %v4176 = vrot.slane %v4174, 4
      %v4177 = vshll.u32 %v4085, 16
      %v4179 = vrot.slane %v4177, 5
      %v4180 = vor.u32 %v4176, %v4179
      %v4181 = vrot.slane %v4180, 4
      %v4183 = vshll.u32 %v4086, 16
      %v4185 = vrot.slane %v4183, 5
      %v4186 = vsel %vm829, %v4181, %v4185
      %v4188 = vshrl.u32 %v4087, 16
      %v4190 = vrot.slane %v4188, 4
      %v4191 = vshll.u32 %v4087, 16
      %v4193 = vrot.slane %v4191, 5
      %v4194 = vor.u32 %v4190, %v4193
      %v4195 = vrot.slane %v4194, 4
      %v4197 = vshll.u32 %v4088, 16
      %v4199 = vrot.slane %v4197, 5
      %v4200 = vsel %vm829, %v4195, %v4199
      %s4201 = scalar_lea.vmem %s7, 112
      %v4202 = vld [vmem:[%s4201] sm:$0xf]
      %v4203 = vld [vmem:[%s4201 + $0x4] sm:$0xf]
      %v4204 = vld [vmem:[%s4201 + $0x8] sm:$0xf]
      %v4205 = vld [vmem:[%s4201 + $0xc] sm:$0xf]
      %v4206 = vunpack.c.l.b16 %v4102
      %v4207 = vunpack.c.l.b16 %v4116
      %v4208 = vunpack.c.l.b16 %v4130
      %v4209 = vunpack.c.l.b16 %v4144
      %v4210 = vunpack.c.l.b16 %v4158
      %v4211 = vunpack.c.l.b16 %v4172
      %v4212 = vunpack.c.l.b16 %v4186
      %v4213 = vunpack.c.l.b16 %v4200
      %v4214 = vpack.c.b16 %v4207, %v4206
      %v4215 = vpack.c.b16 %v4209, %v4208
      %v4216 = vpack.c.b16 %v4211, %v4210
      %v4217 = vpack.c.b16 %v4213, %v4212
      %v4222 = vunpack.c.l.b16 %v4202
      %v4223 = vunpack.c.l.b16 %v4203
      %v4224 = vunpack.c.l.b16 %v4204
      %v4225 = vunpack.c.l.b16 %v4205
      %v4226 = vpack.c.b16 %v4223, %v4222
      %v4227 = vpack.c.b16 %v4225, %v4224
      %v4231 = vsel %vm342, %v4214, 0
      %v4234 = vsel %vm342, %v4215, 0
      %v4237 = vsel %vm342, %v4216, 0
      %v4240 = vsel %vm342, %v4217, 0
      %4242 = vmatprep.subr.bf16.mxu0 0
      %4243 = vmatpush1.bf16.msra.mxu0 %v4226
      %4244 = vmatprep.subr.bf16.mxu0 0
      %4245 = vmatpush1.bf16.msra.mxu0 %v4227
      %4246 = vmatprep.subr.bf16.mxu0 0
      %4247 = vmatpush1.bf16.msra.mxu0 0
      %4248 = vmatprep.subr.bf16.mxu0 0
      %4249 = vmatpush1.bf16.msra.mxu0 0
      %4250 = vmatprep.subr.bf16.mxu0 0
      %4251 = vmatpush1.bf16.msra.mxu0 0
      %4252 = vmatprep.subr.bf16.mxu0 0
      %4253 = vmatpush1.bf16.msra.mxu0 0
      %4254 = vmatprep.subr.bf16.mxu0 0
      %4255 = vmatpush1.bf16.msra.mxu0 0
      %4256 = vmatprep.subr.bf16.mxu0 0
      %4257 = vmatpush1.bf16.msra.mxu0 0
      %4258 = vmatprep.subr.bf16.mxu0 0
      %4259 = vmatpush1.bf16.msra.mxu0 0
      %4260 = vmatprep.subr.bf16.mxu0 0
      %4261 = vmatpush1.bf16.msra.mxu0 0
      %4262 = vmatprep.subr.bf16.mxu0 0
      %4263 = vmatpush1.bf16.msra.mxu0 0
      %4264 = vmatprep.subr.bf16.mxu0 0
      %4265 = vmatpush1.bf16.msra.mxu0 0
      %4266 = vmatprep.subr.bf16.mxu0 0
      %4267 = vmatpush1.bf16.msra.mxu0 0
      %4268 = vmatprep.subr.bf16.mxu0 0
      %4269 = vmatpush1.bf16.msra.mxu0 0
      %4270 = vmatprep.subr.bf16.mxu0 0
      %4271 = vmatpush1.bf16.msra.mxu0 0
      %4272 = vmatprep.subr.bf16.mxu0 0
      %4273 = vmatpush1.bf16.msra.mxu0 0
      %4274 = vmatprep.mubr.bf16.mxu0 0
      %4275 = vmatmul.mubr.bf16.gmra.mrb[0].mxu0 %v4231
      %v4276 = vpop.f32.mrb[0].mxu0
      %v4277 = vadd.f32 0.0, %v4276
      %v4278 = vpop.f32.mrb[0].mxu0
      %v4279 = vpop.f32.mrb[0].mxu0
      %v4280 = vadd.f32 0.0, %v4279
      %v4281 = vpop.f32.mrb[0].mxu0
      %4282 = vmatprep.mubr.bf16.mxu0 0
      %4283 = vmatmul.mubr.bf16.gmra.mrb[0].mxu0 %v4234
      %v4284 = vpop.f32.mrb[0].mxu0
      %v4285 = vadd.f32 0.0, %v4284
      %v4286 = vpop.f32.mrb[0].mxu0
      %v4287 = vpop.f32.mrb[0].mxu0
      %v4288 = vadd.f32 0.0, %v4287
      %v4289 = vpop.f32.mrb[0].mxu0
      %4290 = vmatprep.mubr.bf16.mxu0 0
      %4291 = vmatmul.mubr.bf16.gmra.mrb[0].mxu0 %v4237
      %v4292 = vpop.f32.mrb[0].mxu0
      %v4293 = vadd.f32 0.0, %v4292
      %v4294 = vpop.f32.mrb[0].mxu0
      %v4295 = vpop.f32.mrb[0].mxu0
      %v4296 = vadd.f32 0.0, %v4295
      %v4297 = vpop.f32.mrb[0].mxu0
      %4298 = vmatprep.mubr.bf16.mxu0 0
      %4299 = vmatmul.mubr.bf16.gmra.mrb[0].mxu0 %v4240
      %v4300 = vpop.f32.mrb[0].mxu0
      %v4301 = vadd.f32 0.0, %v4300
      %v4302 = vpop.f32.mrb[0].mxu0
      %v4303 = vpop.f32.mrb[0].mxu0
      %v4304 = vadd.f32 0.0, %v4303
      %v4305 = vpop.f32.mrb[0].mxu0
      %4306 = vdwg.mxu0
      %v4307 = vadd.f32 %v4065, %v4277
      %v4308 = vadd.f32 %v4066, %v4280
      %v4309 = vadd.f32 %v4067, %v4285
      %v4310 = vadd.f32 %v4068, %v4288
      %v4311 = vadd.f32 %v4069, %v4293
      %v4312 = vadd.f32 %v4070, %v4296
      %v4313 = vadd.f32 %v4071, %v4301
      %v4314 = vadd.f32 %v4072, %v4304
      %v4315 = vld [vmem:[%s1872] sm:$0xe]
      %v4316 = vld [vmem:[%s1872 + $0x8] sm:$0xe]
      %v4317 = vld [vmem:[%s1872 + $0x10] sm:$0xe]
      %v4318 = vld [vmem:[%s1872 + $0x18] sm:$0xe]
      %v4319 = vld [vmem:[%s1872 + $0x20] sm:$0xe]
      %v4320 = vld [vmem:[%s1872 + $0x28] sm:$0xe]
      %v4321 = vld [vmem:[%s1872 + $0x30] sm:$0xe]
      %v4322 = vld [vmem:[%s1872 + $0x38] sm:$0xe]
      %v4339 = vrot.slane %v4315, 5
      %v4340 = vrot.slane %v4339, 4
      %v4341 = vrot.slane %v4074, 5
      %v4342 = vsel %vm1183, %v4340, %v4341
      %v4343 = vrot.slane %v4316, 5
      %v4344 = vrot.slane %v4343, 4
      %v4345 = vrot.slane %v4076, 5
      %v4346 = vsel %vm1183, %v4344, %v4345
      %v4347 = vrot.slane %v4317, 5
      %v4348 = vrot.slane %v4347, 4
      %v4349 = vrot.slane %v4078, 5
      %v4350 = vsel %vm1183, %v4348, %v4349
      %v4351 = vrot.slane %v4318, 5
      %v4352 = vrot.slane %v4351, 4
      %v4353 = vrot.slane %v4080, 5
      %v4354 = vsel %vm1183, %v4352, %v4353
      %v4355 = vrot.slane %v4319, 5
      %v4356 = vrot.slane %v4355, 4
      %v4357 = vrot.slane %v4082, 5
      %v4358 = vsel %vm1183, %v4356, %v4357
      %v4359 = vrot.slane %v4320, 5
      %v4360 = vrot.slane %v4359, 4
      %v4361 = vrot.slane %v4084, 5
      %v4362 = vsel %vm1183, %v4360, %v4361
      %v4363 = vrot.slane %v4321, 5
      %v4364 = vrot.slane %v4363, 4
      %v4365 = vrot.slane %v4086, 5
      %v4366 = vsel %vm1183, %v4364, %v4365
      %v4367 = vrot.slane %v4322, 5
      %v4368 = vrot.slane %v4367, 4
      %v4369 = vrot.slane %v4088, 5
      %v4370 = vsel %vm1183, %v4368, %v4369
      %s4371 = scalar_lea.vmem %s7, 128
      %v4372 = vld [vmem:[%s4371] sm:$0xf]
      %v4373 = vld [vmem:[%s4371 + $0x4] sm:$0xf]
      %v4374 = vld [vmem:[%s4371 + $0x8] sm:$0xf]
      %v4375 = vld [vmem:[%s4371 + $0xc] sm:$0xf]
      %v4376 = vunpack.c.l.b16 %v4342
      %v4377 = vunpack.c.l.b16 %v4346
      %v4378 = vunpack.c.l.b16 %v4350
      %v4379 = vunpack.c.l.b16 %v4354
      %v4380 = vunpack.c.l.b16 %v4358
      %v4381 = vunpack.c.l.b16 %v4362
      %v4382 = vunpack.c.l.b16 %v4366
      %v4383 = vunpack.c.l.b16 %v4370
      %v4384 = vpack.c.b16 %v4377, %v4376
      %v4385 = vpack.c.b16 %v4379, %v4378
      %v4386 = vpack.c.b16 %v4381, %v4380
      %v4387 = vpack.c.b16 %v4383, %v4382
      %v4392 = vunpack.c.l.b16 %v4372
      %v4393 = vunpack.c.l.b16 %v4373
      %v4394 = vunpack.c.l.b16 %v4374
      %v4395 = vunpack.c.l.b16 %v4375
      %v4396 = vpack.c.b16 %v4393, %v4392
      %v4397 = vpack.c.b16 %v4395, %v4394
      %v4401 = vsel %vm342, %v4384, 0
      %v4404 = vsel %vm342, %v4385, 0
      %v4407 = vsel %vm342, %v4386, 0
      %v4410 = vsel %vm342, %v4387, 0
      %4412 = vmatprep.subr.bf16.mxu0 0
      %4413 = vmatpush1.bf16.msra.mxu0 %v4396
      %4414 = vmatprep.subr.bf16.mxu0 0
      %4415 = vmatpush1.bf16.msra.mxu0 %v4397
      %4416 = vmatprep.subr.bf16.mxu0 0
      %4417 = vmatpush1.bf16.msra.mxu0 0
      %4418 = vmatprep.subr.bf16.mxu0 0
      %4419 = vmatpush1.bf16.msra.mxu0 0
      %4420 = vmatprep.subr.bf16.mxu0 0
      %4421 = vmatpush1.bf16.msra.mxu0 0
      %4422 = vmatprep.subr.bf16.mxu0 0
      %4423 = vmatpush1.bf16.msra.mxu0 0
      %4424 = vmatprep.subr.bf16.mxu0 0
      %4425 = vmatpush1.bf16.msra.mxu0 0
      %4426 = vmatprep.subr.bf16.mxu0 0
      %4427 = vmatpush1.bf16.msra.mxu0 0
      %4428 = vmatprep.subr.bf16.mxu0 0
      %4429 = vmatpush1.bf16.msra.mxu0 0
      %4430 = vmatprep.subr.bf16.mxu0 0
      %4431 = vmatpush1.bf16.msra.mxu0 0
      %4432 = vmatprep.subr.bf16.mxu0 0
      %4433 = vmatpush1.bf16.msra.mxu0 0
      %4434 = vmatprep.subr.bf16.mxu0 0
      %4435 = vmatpush1.bf16.msra.mxu0 0
      %4436 = vmatprep.subr.bf16.mxu0 0
      %4437 = vmatpush1.bf16.msra.mxu0 0
      %4438 = vmatprep.subr.bf16.mxu0 0
      %4439 = vmatpush1.bf16.msra.mxu0 0
      %4440 = vmatprep.subr.bf16.mxu0 0
      %4441 = vmatpush1.bf16.msra.mxu0 0
      %4442 = vmatprep.subr.bf16.mxu0 0
      %4443 = vmatpush1.bf16.msra.mxu0 0
      %4444 = vmatprep.mubr.bf16.mxu0 0
      %4445 = vmatmul.mubr.bf16.gmra.mrb[0].mxu0 %v4401
      %v4446 = vpop.f32.mrb[0].mxu0
      %v4447 = vadd.f32 0.0, %v4446
      %v4448 = vpop.f32.mrb[0].mxu0
      %v4449 = vpop.f32.mrb[0].mxu0
      %v4450 = vadd.f32 0.0, %v4449
      %v4451 = vpop.f32.mrb[0].mxu0
      %4452 = vmatprep.mubr.bf16.mxu0 0
      %4453 = vmatmul.mubr.bf16.gmra.mrb[0].mxu0 %v4404
      %v4454 = vpop.f32.mrb[0].mxu0
      %v4455 = vadd.f32 0.0, %v4454
      %v4456 = vpop.f32.mrb[0].mxu0
      %v4457 = vpop.f32.mrb[0].mxu0
      %v4458 = vadd.f32 0.0, %v4457
      %v4459 = vpop.f32.mrb[0].mxu0
      %4460 = vmatprep.mubr.bf16.mxu0 0
      %4461 = vmatmul.mubr.bf16.gmra.mrb[0].mxu0 %v4407
      %v4462 = vpop.f32.mrb[0].mxu0
      %v4463 = vadd.f32 0.0, %v4462
      %v4464 = vpop.f32.mrb[0].mxu0
      %v4465 = vpop.f32.mrb[0].mxu0
      %v4466 = vadd.f32 0.0, %v4465
      %v4467 = vpop.f32.mrb[0].mxu0
      %4468 = vmatprep.mubr.bf16.mxu0 0
      %4469 = vmatmul.mubr.bf16.gmra.mrb[0].mxu0 %v4410
      %v4470 = vpop.f32.mrb[0].mxu0
      %v4471 = vadd.f32 0.0, %v4470
      %v4472 = vpop.f32.mrb[0].mxu0
      %v4473 = vpop.f32.mrb[0].mxu0
      %v4474 = vadd.f32 0.0, %v4473
      %v4475 = vpop.f32.mrb[0].mxu0
      %4476 = vdwg.mxu0
      %v4477 = vadd.f32 %v4307, %v4447
      %v4478 = vadd.f32 %v4308, %v4450
      %v4479 = vadd.f32 %v4309, %v4455
      %v4480 = vadd.f32 %v4310, %v4458
      %v4481 = vadd.f32 %v4311, %v4463
      %v4482 = vadd.f32 %v4312, %v4466
      %v4483 = vadd.f32 %v4313, %v4471
      %v4484 = vadd.f32 %v4314, %v4474
      %v4485 = vld [vmem:[%s8] sm:$0x1]
      %v4487 = vlaneseq
      %v4488 = vshrl.u32 %v4487, 7
      %v4489 = vsub.s32 0, %v4488
      %v4490 = vrot.slane %v4485, %v4489
      %v4492 = vadd.f32 %v4477, %v4490
      %v4493 = vadd.f32 %v4478, %v4490
      %v4494 = vadd.f32 %v4479, %v4490
      %v4495 = vadd.f32 %v4480, %v4490
      %v4496 = vadd.f32 %v4481, %v4490
      %v4497 = vadd.f32 %v4482, %v4490
      %v4498 = vadd.f32 %v4483, %v4490
      %v4499 = vadd.f32 %v4484, %v4490
      %v4500 = vadd.f32 %v4492, %v334
      %v4501 = vadd.f32 %v4493, %v335
      %v4502 = vadd.f32 %v4494, %v336
      %v4503 = vadd.f32 %v4495, %v337
      %v4504 = vadd.f32 %v4496, %v338
      %v4505 = vadd.f32 %v4497, %v339
      %v4506 = vadd.f32 %v4498, %v340
      %v4507 = vadd.f32 %v4499, %v341
      %4508 = vst.msk [vmem:[%s332] sm:$0xff] %vm342, %v4500
      %4509 = vst.msk [vmem:[%s332 + $0x8] sm:$0xff] %vm342, %v4501
      %4510 = vst.msk [vmem:[%s332 + $0x10] sm:$0xff] %vm342, %v4502
      %4511 = vst.msk [vmem:[%s332 + $0x18] sm:$0xff] %vm342, %v4503
      %4512 = vst.msk [vmem:[%s332 + $0x20] sm:$0xff] %vm342, %v4504
      %4513 = vst.msk [vmem:[%s332 + $0x28] sm:$0xff] %vm342, %v4505
      %4514 = vst.msk [vmem:[%s332 + $0x30] sm:$0xff] %vm342, %v4506
      %4515 = vst.msk [vmem:[%s332 + $0x38] sm:$0xff] %vm342, %v4507
      %p4516 = scmp.lt.s32.totalorder %s20, 1
      %s4517 = scalar_select %p4516, %s20, 1
      %s4518 = smul.addr %s4517, 8
      %s4519 = smul.addr %s4518, 8
      %s4520 = scalar_lea.vmem %s9, %s4519
      // Predicated region
      $region57: #{speech_model_forward.11} parent=55 // pred_check
        %p4521 = pneg %p232
      $region58: #{speech_model_forward.11} parent=55 // pred_check_branch
        %4523 = sbr.rel (%p4521) target = $region60
      $region59: #{speech_model_forward.11} parent=55 // pred_region
        _
      $region60: #{speech_model_forward.11} parent=55 // pred_fallthru
        _
    $region56: #{speech_model_forward.11} parent=5 // pred_fallthru
      _
    %p4524 = scmp.le.s32.totalorder 2, %s15
    // Predicated region
    $region61: #{speech_model_forward.11} parent=5 // pred_check
      %p4525 = pneg %p4524
    $region62: #{speech_model_forward.11} parent=5 // pred_check_branch
      %4527 = sbr.rel (%p4525) target = $region64
    $region63: #{speech_model_forward.11} parent=5 // pred_region
      %s4528 = ssub.s32 %s15, 2
      // Predicated region
      $region65: #{speech_model_forward.11} parent=63 // pred_check
        %p4529 = pneg %p238
      $region66: #{speech_model_forward.11} parent=63 // pred_check_branch
        %4531 = sbr.rel (%p4529) target = $region68
      $region67: #{speech_model_forward.11} parent=63 // pred_region
        %p4532 = scmp.lt.s32.totalorder %s21, 1
        %s4533 = scalar_select %p4532, %s21, 1
        %s4534 = smul.addr %s4533, 8
        %s4535 = smul.addr %s4534, 8
        %s4536 = scalar_lea.vmem %s9, %s4535
      $region68: #{speech_model_forward.11} parent=63 // pred_fallthru
        _
    $region64: #{speech_model_forward.11} parent=5 // pred_fallthru
      _
  $region6: #{speech_model_forward.11} parent=0 // loop_footer
    %s19 = sadd.s32 1, %s15
  $region7: #{speech_model_forward.11} parent=0 // loop_footer_branch
    %14 = sbr.rel target = $region3
  $region8: #{speech_model_forward.11} parent=0 // loop_exit
    _

// kernel: speech_model_forward.14
$region0: #{speech_model_forward.14}
  #allocation0 [shape = 'u32[]', space=smem, size = 0x4, offset = 0x4, fixed_abs, tag = 'smem constant byte address 0x4 - core index']
  #allocation1 [shape = 'u32[144,128]{1,0:T(1,128)}', space=vmem, size = 0x12000, scoped, tag = 'internal scratch']
  #allocation2 [shape = 'f32[16,256]{1,0:T(8,128)}', space=vmem, size = 0x4000, scoped, tag = 'scratch operand']
  %s0 = inlined_call_operand.vmem [shape: bf16[16,128], index: 0, kind: input, shape index: {}]
  %s1 = inlined_call_operand.vmem [shape: bf16[128,768], index: 1, kind: input, shape index: {}]
  %s2 = inlined_call_operand.vmem [shape: f32[1,768], index: 2, kind: input, shape index: {}]
  %s3 = inlined_call_operand.vmem [shape: f32[1,128], index: 3, kind: input, shape index: {}]
  %s4 = inlined_call_operand.vmem [shape: f32[1,128], index: 4, kind: input, shape index: {}]
  %s5 = inlined_call_operand.vmem [shape: f32[16,768], index: 5, kind: output, shape index: {}]
  %s6 = sld [smem:[#allocation0]]
  $region118: #{speech_model_forward.14} parent=0
    _
  %s8 = ssub.s32 1, %s6
  %s9 = scalar_select 0, %s8, %s6
  $region1: #{speech_model_forward.14} parent=0
    #allocation3 [shape = 'u8[131072]{0}', space=vmem, size = 0x20000, scoped, tag = 'input window, operand 1']
    #allocation4 [shape = 'u8[32768]{0}', space=vmem, size = 0x8000, scoped, tag = 'output window, operand 0']
    loop: start=0, step=1, limit=5
    $region2: #{speech_model_forward.14} parent=1 // loop_pre_header
      _
    $region3: #{speech_model_forward.14} parent=1 // loop_header
      %s11 = sphi 0, %s15
      %p12 = scmp.ge.s32.totalorder %s11, 5
      %s18 = sphi 0, %s37
      %s19 = sphi 0, %s33
      %s20 = sphi 0, %s29
      %s21 = sphi 0, %s18
      %s22 = sphi 0, %s19
      %s23 = sphi 0, %s20
      %s24 = sphi 0, %s21
      %s25 = sphi 0, %s22
      %s26 = sphi 0, %s23
      %s42 = sphi 0, %s44
      %s45 = sphi 0, %s42
      %s46 = sphi 0, %s45
      %s62 = sphi 0, %s46
      %s70 = sphi 0, %s72
      %s73 = sphi 0, %s70
      %s74 = sphi 0, %s73
      %s90 = sphi 0, %s74
      %s96 = sphi 0, %s98
      %s99 = sphi 0, %s96
      %s100 = sphi 0, %s99
      %s116 = sphi 0, %s100
      %s122 = sphi 0, %s124
      %s125 = sphi 0, %s122
      %s126 = sphi 0, %s125
      %s142 = sphi 0, %s126
      %s148 = sphi 0, %s150
      %s151 = sphi 0, %s148
      %s152 = sphi 0, %s151
      %s168 = sphi 0, %s152
      %s176 = sphi 0, %s178
      %s179 = sphi 0, %s176
      %s180 = sphi 0, %s179
      %s196 = sphi 0, %s180
    $region4: #{speech_model_forward.14} parent=1 // loop_header_branch
      %14 = sbr.rel (%p12) target = $region8
    $region5: #{speech_model_forward.14} parent=1 // loop_body
      %s16 = ssub.s32 %s11, 1
      %s17 = ssub.s32 %s11, 2
      %s27 = sadd.s32 1, %s20
      %p28 = scmp.ge.s32.totalorder %s27, 1
      %s29 = scalar_select %p28, 0, %s27
      %s30 = sadd.s32 1, %s19
      %s31 = scalar_select %p28, %s30, %s19
      %p32 = scmp.ge.s32.totalorder %s31, 3
      %s33 = scalar_select %p32, 0, %s31
      %s34 = sadd.s32 1, %s18
      %s35 = scalar_select %p32, %s34, %s18
      %p36 = scmp.ge.s32.totalorder %s35, 1
      %s37 = scalar_select %p36, 0, %s35
      %s38 = ssub.s32 %s18, %s37
      %s39 = ssub.s32 %s20, %s29
      %s40 = sor.u32 %s38, %s39
      %p41 = scmp.eq.s32.totalorder %s40, 0
      %s43 = sadd.s32 %s42, 1
      %s44 = scalar_select %p41, %s42, %s43
      %p47 = pneg %p41
      %p48 = scmp.eq.s32.totalorder %s11, 2
      %p49 = por %p47, %p48
      %p50 = scmp.ne.s32.totalorder %s42, %s45
      %p51 = scmp.eq.s32.totalorder %s11, 0
      %p52 = por %p50, %p51
      %p53 = scmp.ne.s32.totalorder %s42, %s45
      %p54 = scmp.eq.s32.totalorder %s16, 2
      %p55 = por %p53, %p54
      %p56 = scmp.ne.s32.totalorder %s45, %s46
      %p57 = scmp.eq.s32.totalorder %s16, 0
      %p58 = por %p56, %p57
      %p59 = scmp.ne.s32.totalorder %s45, %s46
      %p60 = scmp.eq.s32.totalorder %s17, 2
      %p61 = por %p59, %p60
      %p63 = scmp.ne.s32.totalorder %s46, %s62
      %p64 = scmp.eq.s32.totalorder %s17, 0
      %p65 = por %p63, %p64
      %s66 = ssub.s32 %s20, %s29
      %s67 = ssub.s32 %s19, %s33
      %s68 = sor.u32 %s66, %s67
      %p69 = scmp.eq.s32.totalorder %s68, 0
      %s71 = sadd.s32 %s70, 1
      %s72 = scalar_select %p69, %s70, %s71
      %p75 = pneg %p69
      %p76 = scmp.eq.s32.totalorder %s11, 2
      %p77 = por %p75, %p76
      %p78 = scmp.ne.s32.totalorder %s70, %s73
      %p79 = scmp.eq.s32.totalorder %s11, 0
      %p80 = por %p78, %p79
      %p81 = scmp.ne.s32.totalorder %s70, %s73
      %p82 = scmp.eq.s32.totalorder %s16, 2
      %p83 = por %p81, %p82
      %p84 = scmp.ne.s32.totalorder %s73, %s74
      %p85 = scmp.eq.s32.totalorder %s16, 0
      %p86 = por %p84, %p85
      %p87 = scmp.ne.s32.totalorder %s73, %s74
      %p88 = scmp.eq.s32.totalorder %s17, 2
      %p89 = por %p87, %p88
      %p91 = scmp.ne.s32.totalorder %s74, %s90
      %p92 = scmp.eq.s32.totalorder %s17, 0
      %p93 = por %p91, %p92
      %s94 = ssub.s32 %s19, %s33
      %p95 = scmp.eq.s32.totalorder %s94, 0
      %s97 = sadd.s32 %s96, 1
      %s98 = scalar_select %p95, %s96, %s97
      %p101 = pneg %p95
      %p102 = scmp.eq.s32.totalorder %s11, 2
      %p103 = por %p101, %p102
      %p104 = scmp.ne.s32.totalorder %s96, %s99
      %p105 = scmp.eq.s32.totalorder %s11, 0
      %p106 = por %p104, %p105
      %p107 = scmp.ne.s32.totalorder %s96, %s99
      %p108 = scmp.eq.s32.totalorder %s16, 2
      %p109 = por %p107, %p108
      %p110 = scmp.ne.s32.totalorder %s99, %s100
      %p111 = scmp.eq.s32.totalorder %s16, 0
      %p112 = por %p110, %p111
      %p113 = scmp.ne.s32.totalorder %s99, %s100
      %p114 = scmp.eq.s32.totalorder %s17, 2
      %p115 = por %p113, %p114
      %p117 = scmp.ne.s32.totalorder %s100, %s116
      %p118 = scmp.eq.s32.totalorder %s17, 0
      %p119 = por %p117, %p118
      %s120 = ssub.s32 %s20, %s29
      %p121 = scmp.eq.s32.totalorder %s120, 0
      %s123 = sadd.s32 %s122, 1
      %s124 = scalar_select %p121, %s122, %s123
      %p127 = pneg %p121
      %p128 = scmp.eq.s32.totalorder %s11, 2
      %p129 = por %p127, %p128
      %p130 = scmp.ne.s32.totalorder %s122, %s125
      %p131 = scmp.eq.s32.totalorder %s11, 0
      %p132 = por %p130, %p131
      %p133 = scmp.ne.s32.totalorder %s122, %s125
      %p134 = scmp.eq.s32.totalorder %s16, 2
      %p135 = por %p133, %p134
      %p136 = scmp.ne.s32.totalorder %s125, %s126
      %p137 = scmp.eq.s32.totalorder %s16, 0
      %p138 = por %p136, %p137
      %p139 = scmp.ne.s32.totalorder %s125, %s126
      %p140 = scmp.eq.s32.totalorder %s17, 2
      %p141 = por %p139, %p140
      %p143 = scmp.ne.s32.totalorder %s126, %s142
      %p144 = scmp.eq.s32.totalorder %s17, 0
      %p145 = por %p143, %p144
      %s146 = ssub.s32 %s20, %s29
      %p147 = scmp.eq.s32.totalorder %s146, 0
      %s149 = sadd.s32 %s148, 1
      %s150 = scalar_select %p147, %s148, %s149
      %p153 = pneg %p147
      %p154 = scmp.eq.s32.totalorder %s11, 2
      %p155 = por %p153, %p154
      %p156 = scmp.ne.s32.totalorder %s148, %s151
      %p157 = scmp.eq.s32.totalorder %s11, 0
      %p158 = por %p156, %p157
      %p159 = scmp.ne.s32.totalorder %s148, %s151
      %p160 = scmp.eq.s32.totalorder %s16, 2
      %p161 = por %p159, %p160
      %p162 = scmp.ne.s32.totalorder %s151, %s152
      %p163 = scmp.eq.s32.totalorder %s16, 0
      %p164 = por %p162, %p163
      %p165 = scmp.ne.s32.totalorder %s151, %s152
      %p166 = scmp.eq.s32.totalorder %s17, 2
      %p167 = por %p165, %p166
      %p169 = scmp.ne.s32.totalorder %s152, %s168
      %p170 = scmp.eq.s32.totalorder %s17, 0
      %p171 = por %p169, %p170
      %s172 = ssub.s32 %s18, %s37
      %s173 = ssub.s32 %s19, %s33
      %s174 = sor.u32 %s172, %s173
      %p175 = scmp.eq.s32.totalorder %s174, 0
      %s177 = sadd.s32 %s176, 1
      %s178 = scalar_select %p175, %s176, %s177
      %p181 = pneg %p175
      %p182 = scmp.eq.s32.totalorder %s11, 2
      %p183 = por %p181, %p182
      %p184 = scmp.ne.s32.totalorder %s176, %s179
      %p185 = scmp.eq.s32.totalorder %s11, 0
      %p186 = por %p184, %p185
      %p187 = scmp.ne.s32.totalorder %s176, %s179
      %p188 = scmp.eq.s32.totalorder %s16, 2
      %p189 = por %p187, %p188
      %p190 = scmp.ne.s32.totalorder %s179, %s180
      %p191 = scmp.eq.s32.totalorder %s16, 0
      %p192 = por %p190, %p191
      %p193 = scmp.ne.s32.totalorder %s179, %s180
      %p194 = scmp.eq.s32.totalorder %s17, 2
      %p195 = por %p193, %p194
      %p197 = scmp.ne.s32.totalorder %s180, %s196
      %p198 = scmp.eq.s32.totalorder %s17, 0
      %p199 = por %p197, %p198
      %p200 = scmp.le.s32.totalorder 1, %s11
      %p201 = scmp.lt.s32.totalorder %s11, 4
      %p202 = pnand %p200, %p201
      %p203 = pneg %p202
      // Predicated region
      $region9: #{speech_model_forward.14} parent=5 // pred_check
        _
      $region10: #{speech_model_forward.14} parent=5 // pred_check_branch
        %205 = sbr.rel (%p202) target = $region12
      $region11: #{speech_model_forward.14} parent=5 // pred_region
        %s206 = ssub.s32 %s11, 1
        // Predicated region
        $region13: #{speech_model_forward.14} parent=11 // pred_check
          %p207 = pneg %p58
        $region14: #{speech_model_forward.14} parent=11 // pred_check_branch
          %209 = sbr.rel (%p207) target = $region16
        $region15: #{speech_model_forward.14} parent=11 // pred_region
          %s210 = smul.u32 2, %s21
          %p211 = scmp.lt.s32.totalorder %s210, 1
          %s212 = scalar_select %p211, %s210, 1
          %p213 = scmp.lt.s32.totalorder %s23, 0
          %s214 = scalar_select %p213, %s23, 0
          %s215 = sadd.s32 %s214, %s212
          %s216 = smul.addr %s215, 4
          %s217 = scalar_lea.vmem %s0, %s216
          %s218 = smul.u32 2, %s21
        $region16: #{speech_model_forward.14} parent=11 // pred_fallthru
          _
        // Predicated region
        $region17: #{speech_model_forward.14} parent=11 // pred_check
          %p219 = pneg %p138
        $region18: #{speech_model_forward.14} parent=11 // pred_check_branch
          %221 = sbr.rel (%p219) target = $region20
        $region19: #{speech_model_forward.14} parent=11 // pred_region
          %p222 = scmp.lt.s32.totalorder %s23, 0
          %s223 = scalar_select %p222, %s23, 0
          %s224 = scalar_lea.vmem %s3, %s223
        $region20: #{speech_model_forward.14} parent=11 // pred_fallthru
          _
        // Predicated region
        $region21: #{speech_model_forward.14} parent=11 // pred_check
          %p225 = pneg %p164
        $region22: #{speech_model_forward.14} parent=11 // pred_check_branch
          %227 = sbr.rel (%p225) target = $region24
        $region23: #{speech_model_forward.14} parent=11 // pred_region
          %p228 = scmp.lt.s32.totalorder %s23, 0
          %s229 = scalar_select %p228, %s23, 0
          %s230 = scalar_lea.vmem %s4, %s229
        $region24: #{speech_model_forward.14} parent=11 // pred_fallthru
          _
      $region12: #{speech_model_forward.14} parent=5 // pred_fallthru
        _
      %p231 = scmp.lt.s32.totalorder %s11, 3
      // Predicated region
      $region25: #{speech_model_forward.14} parent=5 // pred_check
        %p232 = pneg %p231
      $region26: #{speech_model_forward.14} parent=5 // pred_check_branch
        %234 = sbr.rel (%p232) target = $region28
      $region27: #{speech_model_forward.14} parent=5 // pred_region
        // Predicated region
        $region29: #{speech_model_forward.14} parent=27 // pred_check
          %p235 = pneg %p80
        $region30: #{speech_model_forward.14} parent=27 // pred_check_branch
          %237 = sbr.rel (%p235) target = $region32
        $region31: #{speech_model_forward.14} parent=27 // pred_region
          %s238 = sand.u32 %s70, 1
          %s239 = sand.u32 %s70, 1
          %s240 = smul.addr %s239, 128
          %s241 = scalar_lea.vmem [#allocation3], %s240
          %s242 = smul.u32 16, %s20
          %s243 = smul.u32 2, %s19
          %s244 = smul.addr %s242, 6
          %s245 = sadd.s32 %s243, %s244
          %s246 = smul.addr %s245, 4
          %s247 = scalar_lea.vmem %s1, %s246
          // Predicated region
          $region33: #{speech_model_forward.14} parent=31 // pred_check
            _
          $region34: #{speech_model_forward.14} parent=31 // pred_check_branch
            %249 = sbr.rel (0) target = $region36
          $region35: #{speech_model_forward.14} parent=31 // pred_region
            // Predicated region
            $region37: #{speech_model_forward.14} parent=35 // pred_check
              _
            $region38: #{speech_model_forward.14} parent=35 // pred_check_branch
              %251 = sbr.rel (0) target = $region40
            $region39: #{speech_model_forward.14} parent=35 // pred_region
              // Predicated region
              $region52: #{speech_model_forward.14} parent=39 // pred_check
                _
              $region53: #{speech_model_forward.14} parent=39 // pred_check_branch
                %296 = sbr.rel (0) target = $region55
              $region54: #{speech_model_forward.14} parent=39 // pred_region
                loop: start=0, step=1, limit=1
                $region56: #{speech_model_forward.14} parent=54 // loop_pre_header
                  _
                $region57: #{speech_model_forward.14} parent=54 // loop_header
                  %s298 = sphi 0, %s302
                  %p299 = scmp.ge.s32.totalorder %s298, 1
                  %s303 = sphi %s247, %s247
                  %s304 = sphi %s241, %s241
                $region58: #{speech_model_forward.14} parent=54 // loop_header_branch
                  %301 = sbr.rel (%p299) target = $region62
                $region59: #{speech_model_forward.14} parent=54 // loop_body
                  %v305 = vld [vmem:[%s303] sm:$0xff]
                  %306 = vst [vmem:[%s304] sm:$0xff] %v305
                  %v307 = vld [vmem:[%s303 + $0x18] sm:$0xff]
                  %308 = vst [vmem:[%s304 + $0x8] sm:$0xff] %v307
                  %v309 = vld [vmem:[%s303 + $0x30] sm:$0xff]
                  %310 = vst [vmem:[%s304 + $0x10] sm:$0xff] %v309
                  %v311 = vld [vmem:[%s303 + $0x48] sm:$0xff]
                  %312 = vst [vmem:[%s304 + $0x18] sm:$0xff] %v311
                  %v313 = vld [vmem:[%s303 + $0x60] sm:$0xff]
                  %314 = vst [vmem:[%s304 + $0x20] sm:$0xff] %v313
                  %v315 = vld [vmem:[%s303 + $0x78] sm:$0xff]
                  %316 = vst [vmem:[%s304 + $0x28] sm:$0xff] %v315
                  %v317 = vld [vmem:[%s303 + $0x90] sm:$0xff]
                  %318 = vst [vmem:[%s304 + $0x30] sm:$0xff] %v317
                  %v319 = vld [vmem:[%s303 + $0xa8] sm:$0xff]
                  %320 = vst [vmem:[%s304 + $0x38] sm:$0xff] %v319
                  %v321 = vld [vmem:[%s303 + $0xc0] sm:$0xff]
                  %322 = vst [vmem:[%s304 + $0x40] sm:$0xff] %v321
                  %v323 = vld [vmem:[%s303 + $0xd8] sm:$0xff]
                  %324 = vst [vmem:[%s304 + $0x48] sm:$0xff] %v323
                  %v325 = vld [vmem:[%s303 + $0xf0] sm:$0xff]
                  %326 = vst [vmem:[%s304 + $0x50] sm:$0xff] %v325
                  %v327 = vld [vmem:[%s303 + $0x108] sm:$0xff]
                  %328 = vst [vmem:[%s304 + $0x58] sm:$0xff] %v327
                  %v329 = vld [vmem:[%s303 + $0x120] sm:$0xff]
                  %330 = vst [vmem:[%s304 + $0x60] sm:$0xff] %v329
                  %v331 = vld [vmem:[%s303 + $0x138] sm:$0xff]
                  %332 = vst [vmem:[%s304 + $0x68] sm:$0xff] %v331
                  %v333 = vld [vmem:[%s303 + $0x150] sm:$0xff]
                  %334 = vst [vmem:[%s304 + $0x70] sm:$0xff] %v333
                  %v335 = vld [vmem:[%s303 + $0x168] sm:$0xff]
                  %336 = vst [vmem:[%s304 + $0x78] sm:$0xff] %v335
                $region60: #{speech_model_forward.14} parent=54 // loop_footer
                  %s302 = sadd.s32 1, %s298
                $region61: #{speech_model_forward.14} parent=54 // loop_footer_branch
                  %297 = sbr.rel target = $region57
                $region62: #{speech_model_forward.14} parent=54 // loop_exit
                  _
              $region55: #{speech_model_forward.14} parent=39 // pred_fallthru
                _
              // Predicated region
              $region63: #{speech_model_forward.14} parent=39 // pred_check
                _
              $region64: #{speech_model_forward.14} parent=39 // pred_check_branch
                %338 = sbr.rel target = $region66
              $region65: #{speech_model_forward.14} parent=39 // pred_region
                _
              $region66: #{speech_model_forward.14} parent=39 // pred_fallthru
                _
            $region40: #{speech_model_forward.14} parent=35 // pred_fallthru
              _
            // Predicated region
            $region41: #{speech_model_forward.14} parent=35 // pred_check
              _
            $region42: #{speech_model_forward.14} parent=35 // pred_check_branch
              %253 = sbr.rel target = $region44
            $region43: #{speech_model_forward.14} parent=35 // pred_region
              loop: start=0, step=1, limit=1
              $region45: #{speech_model_forward.14} parent=43 // loop_pre_header
                _
              $region46: #{speech_model_forward.14} parent=43 // loop_header
                %s256 = sphi 0, %s260
                %p257 = scmp.ge.s32.totalorder %s256, 1
                %s261 = sphi %s247, %s247
                %s262 = sphi %s241, %s241
              $region47: #{speech_model_forward.14} parent=43 // loop_header_branch
                %259 = sbr.rel (%p257) target = $region51
              $region48: #{speech_model_forward.14} parent=43 // loop_body
                %v263 = vld [vmem:[%s261] sm:$0xff]
                %264 = vst [vmem:[%s262] sm:$0xff] %v263
                %v265 = vld [vmem:[%s261 + $0x18] sm:$0xff]
                %266 = vst [vmem:[%s262 + $0x8] sm:$0xff] %v265
                %v267 = vld [vmem:[%s261 + $0x30] sm:$0xff]
                %268 = vst [vmem:[%s262 + $0x10] sm:$0xff] %v267
                %v269 = vld [vmem:[%s261 + $0x48] sm:$0xff]
                %270 = vst [vmem:[%s262 + $0x18] sm:$0xff] %v269
                %v271 = vld [vmem:[%s261 + $0x60] sm:$0xff]
                %272 = vst [vmem:[%s262 + $0x20] sm:$0xff] %v271
                %v273 = vld [vmem:[%s261 + $0x78] sm:$0xff]
                %274 = vst [vmem:[%s262 + $0x28] sm:$0xff] %v273
                %v275 = vld [vmem:[%s261 + $0x90] sm:$0xff]
                %276 = vst [vmem:[%s262 + $0x30] sm:$0xff] %v275
                %v277 = vld [vmem:[%s261 + $0xa8] sm:$0xff]
                %278 = vst [vmem:[%s262 + $0x38] sm:$0xff] %v277
                %v279 = vld [vmem:[%s261 + $0xc0] sm:$0xff]
                %280 = vst [vmem:[%s262 + $0x40] sm:$0xff] %v279
                %v281 = vld [vmem:[%s261 + $0xd8] sm:$0xff]
                %282 = vst [vmem:[%s262 + $0x48] sm:$0xff] %v281
                %v283 = vld [vmem:[%s261 + $0xf0] sm:$0xff]
                %284 = vst [vmem:[%s262 + $0x50] sm:$0xff] %v283
                %v285 = vld [vmem:[%s261 + $0x108] sm:$0xff]
                %286 = vst [vmem:[%s262 + $0x58] sm:$0xff] %v285
                %v287 = vld [vmem:[%s261 + $0x120] sm:$0xff]
                %288 = vst [vmem:[%s262 + $0x60] sm:$0xff] %v287
                %v289 = vld [vmem:[%s261 + $0x138] sm:$0xff]
                %290 = vst [vmem:[%s262 + $0x68] sm:$0xff] %v289
                %v291 = vld [vmem:[%s261 + $0x150] sm:$0xff]
                %292 = vst [vmem:[%s262 + $0x70] sm:$0xff] %v291
                %v293 = vld [vmem:[%s261 + $0x168] sm:$0xff]
                %294 = vst [vmem:[%s262 + $0x78] sm:$0xff] %v293
              $region49: #{speech_model_forward.14} parent=43 // loop_footer
                %s260 = sadd.s32 1, %s256
              $region50: #{speech_model_forward.14} parent=43 // loop_footer_branch
                %255 = sbr.rel target = $region46
              $region51: #{speech_model_forward.14} parent=43 // loop_exit
                _
            $region44: #{speech_model_forward.14} parent=35 // pred_fallthru
              _
          $region36: #{speech_model_forward.14} parent=31 // pred_fallthru
            _
          %339 = vnop
        $region32: #{speech_model_forward.14} parent=27 // pred_fallthru
          _
        // Predicated region
        $region67: #{speech_model_forward.14} parent=27 // pred_check
          %p340 = pneg %p106
        $region68: #{speech_model_forward.14} parent=27 // pred_check_branch
          %342 = sbr.rel (%p340) target = $region70
        $region69: #{speech_model_forward.14} parent=27 // pred_region
          %s343 = smul.u32 2, %s19
          %p344 = scmp.lt.s32.totalorder %s343, 5
          %s345 = scalar_select %p344, %s343, 5
          %s346 = scalar_lea.vmem %s2, %s345
          %s347 = smul.u32 2, %s19
        $region70: #{speech_model_forward.14} parent=27 // pred_fallthru
          _
      $region28: #{speech_model_forward.14} parent=5 // pred_fallthru
        _
      %p348 = scmp.le.s32.totalorder 1, %s11
      %p349 = scmp.lt.s32.totalorder %s11, 4
      %p350 = pnand %p348, %p349
      %p351 = pneg %p350
      // Predicated region
      $region71: #{speech_model_forward.14} parent=5 // pred_check
        _
      $region72: #{speech_model_forward.14} parent=5 // pred_check_branch
        %353 = sbr.rel (%p350) target = $region74
      $region73: #{speech_model_forward.14} parent=5 // pred_region
        %s354 = ssub.s32 %s11, 1
        %s355 = sand.u32 %s73, 1
        %s356 = sand.u32 %s73, 1
        %s357 = smul.addr %s356, 128
        %s358 = scalar_lea.vmem [#allocation3], %s357
        // Predicated region
        $region75: #{speech_model_forward.14} parent=73 // pred_check
          %p359 = pneg %p86
        $region76: #{speech_model_forward.14} parent=73 // pred_check_branch
          %361 = sbr.rel (%p359) target = $region78
        $region77: #{speech_model_forward.14} parent=73 // pred_region
          _
        $region78: #{speech_model_forward.14} parent=73 // pred_fallthru
          _
        %s362 = smul.u32 2, %s21
        %p363 = scmp.lt.s32.totalorder %s362, 1
        %s364 = scalar_select %p363, %s362, 1
        %p365 = scmp.lt.s32.totalorder %s23, 0
        %s366 = scalar_select %p365, %s23, 0
        %s367 = sadd.s32 %s366, %s364
        %s368 = smul.addr %s367, 4
        %s369 = scalar_lea.vmem %s0, %s368
        %p370 = pneg %p58
        %p371 = pneg %p55
        %s372 = sand.u32 %s73, 1
        %s373 = sand.u32 %s73, 1
        %s374 = smul.addr %s373, 128
        %s375 = scalar_lea.vmem [#allocation3], %s374
        %p376 = pneg %p86
        %p377 = pneg %p83
        %s378 = smul.u32 2, %s22
        %p379 = scmp.lt.s32.totalorder %s378, 5
        %s380 = scalar_select %p379, %s378, 5
        %s381 = scalar_lea.vmem %s2, %s380
        %p382 = pneg %p112
        %p383 = pneg %p109
        %p384 = scmp.lt.s32.totalorder %s23, 0
        %s385 = scalar_select %p384, %s23, 0
        %s386 = scalar_lea.vmem %s3, %s385
        %p387 = pneg %p138
        %p388 = pneg %p135
        %p389 = scmp.lt.s32.totalorder %s23, 0
        %s390 = scalar_select %p389, %s23, 0
        %s391 = scalar_lea.vmem %s4, %s390
        %p392 = pneg %p164
        %p393 = pneg %p161
        %p394 = pneg %p192
        %p395 = pneg %p189
        %s396 = sand.u32 %s179, 1
        %s397 = sand.u32 %s179, 1
        %s398 = smul.addr %s397, 32
        %s399 = scalar_lea.vmem [#allocation4], %s398
        %s400 = smul.u32 2, %s21
        %p401 = scmp.lt.s32.totalorder %s400, 1
        %s402 = scalar_select %p401, %s400, 1
        %p403 = scmp.lt.s32.totalorder %s23, 0
        %s404 = scalar_select %p403, %s23, 0
        %s405 = sadd.s32 %s404, %s402
        %s406 = smul.addr %s405, 4
        %s407 = scalar_lea.vmem %s0, %s406
        %s408 = smul.u32 2, %s21
        %s409 = smul.u32 16, %s23
        %s410 = smul.u32 2, %s22
        %s411 = smul.u32 2, %s22
        %p412 = scmp.lt.s32.totalorder %s411, 5
        %s413 = scalar_select %p412, %s411, 5
        %s414 = scalar_lea.vmem %s2, %s413
        %s415 = smul.u32 2, %s22
        %p416 = scmp.lt.s32.totalorder %s23, 0
        %s417 = scalar_select %p416, %s23, 0
        %s418 = scalar_lea.vmem %s3, %s417
        %p419 = scmp.lt.s32.totalorder %s23, 0
        %s420 = scalar_select %p419, %s23, 0
        %s421 = scalar_lea.vmem %s4, %s420
        %s422 = smul.u32 2, %s21
        %s423 = smul.u32 2, %s22
        %p425 = scmp.eq.s32.totalorder %s23, 0
        // Predicated region
        $region79: #{speech_model_forward.14} parent=73 // pred_check
          %p426 = pneg %p425
        $region80: #{speech_model_forward.14} parent=73 // pred_check_branch
          %428 = sbr.rel (%p426) target = $region82
        $region81: #{speech_model_forward.14} parent=73 // pred_region
          %429 = vst [vmem:[#allocation2] sm:$0xff] 0.0
          %430 = vst [vmem:[#allocation2 + $0x8] sm:$0xff] 0.0
          %431 = vst [vmem:[#allocation2 + $0x10] sm:$0xff] 0.0
          %432 = vst [vmem:[#allocation2 + $0x18] sm:$0xff] 0.0
        $region82: #{speech_model_forward.14} parent=73 // pred_fallthru
          _
        %v433 = vld [vmem:[%s407] sm:$0xf]
        %v434 = vld [vmem:[%s407 + $0x4] sm:$0xf]
        %v435 = vunpack.c.l.bf16 %v433
        %v436 = vunpack.c.l.bf16 %v434
        %437 = vadd.xlane.f32.xlu0 %v435
        %v438 = vpop.xlane.xlu0 %437
        %439 = vadd.xlane.f32.xlu0 %v436
        %v440 = vpop.xlane.xlu0 %439
        %v441 = vmul.f32 %v438, 0.03125
        %v442 = vmul.f32 %v440, 0.03125
        %v443 = vmul.f32 %v435, %v435
        %v444 = vmul.f32 %v436, %v436
        %445 = vadd.xlane.f32.xlu0 %v443
        %v446 = vpop.xlane.xlu0 %445
        %447 = vadd.xlane.f32.xlu0 %v444
        %v448 = vpop.xlane.xlu0 %447
        %v449 = vmul.f32 %v446, 0.03125
        %v450 = vmul.f32 %v448, 0.03125
        %v451 = vmul.f32 %v441, %v441
        %v452 = vmul.f32 %v442, %v442
        %v453 = vsub.f32 %v449, %v451
        %v454 = vsub.f32 %v450, %v452
        %v455 = vmax.f32 %v453, 0.0
        %v456 = vmax.f32 %v454, 0.0
        %v457 = vsub.f32 %v435, %v441
        %v458 = vsub.f32 %v436, %v442
        %v459 = vadd.f32 %v455, 1e-05
        %v460 = vadd.f32 %v456, 1e-05
        %v461 = vrsqrt.pop %v459
        %v462 = vrsqrt.pop %v460
        %v463 = vmul.f32 %v457, %v461
        %v464 = vmul.f32 %v458, %v462
        %v465 = vld [vmem:[%s418] sm:$0x1]
        %v467 = vlaneseq
        %v468 = vshrl.u32 %v467, 7
        %v469 = vsub.s32 0, %v468
        %v470 = vrot.slane %v465, %v469
        %v472 = vmul.f32 %v463, %v470
        %v473 = vmul.f32 %v464, %v470
        %v474 = vld [vmem:[%s421] sm:$0x1]
        %v476 = vlaneseq
        %v477 = vshrl.u32 %v476, 7
        %v478 = vsub.s32 0, %v477
        %v479 = vrot.slane %v474, %v478
        %v481 = vadd.f32 %v472, %v479
        %v482 = vadd.f32 %v473, %v479
        %v483 = vmul.f32 %v481, 0.5
        %v484 = vmul.f32 %v482, 0.5
        %v485 = vmul.f32 %v481, 0.70710677
        %v486 = vmul.f32 %v482, 0.70710677
        %v487 = verf.f32.pop %v485
        %v488 = verf.f32.pop %v486
        %v489 = vadd.f32 %v487, 1.0
        %v490 = vadd.f32 %v488, 1.0
        %v491 = vmul.f32 %v483, %v489
        %v492 = vmul.f32 %v484, %v490
        %v493 = vpack.c.bf16 %v492, %v491
        %v494 = vld [vmem:[#allocation2] sm:$0xff]
        %v495 = vld [vmem:[#allocation2 + $0x8] sm:$0xff]
        %v496 = vld [vmem:[#allocation2 + $0x10] sm:$0xff]
        %v497 = vld [vmem:[#allocation2 + $0x18] sm:$0xff]
        %v498 = vld [vmem:[%s358] sm:$0xff]
        %v499 = vld [vmem:[%s358 + $0x8] sm:$0xff]
        %v500 = vld [vmem:[%s358 + $0x10] sm:$0xff]
        %v501 = vld [vmem:[%s358 + $0x18] sm:$0xff]
        %v502 = vld [vmem:[%s358 + $0x20] sm:$0xff]
        %v503 = vld [vmem:[%s358 + $0x28] sm:$0xff]
        %v504 = vld [vmem:[%s358 + $0x30] sm:$0xff]
        %v505 = vld [vmem:[%s358 + $0x38] sm:$0xff]
        %v506 = vld [vmem:[%s358 + $0x40] sm:$0xff]
        %v507 = vld [vmem:[%s358 + $0x48] sm:$0xff]
        %v508 = vld [vmem:[%s358 + $0x50] sm:$0xff]
        %v509 = vld [vmem:[%s358 + $0x58] sm:$0xff]
        %v510 = vld [vmem:[%s358 + $0x60] sm:$0xff]
        %v511 = vld [vmem:[%s358 + $0x68] sm:$0xff]
        %v512 = vld [vmem:[%s358 + $0x70] sm:$0xff]
        %v513 = vld [vmem:[%s358 + $0x78] sm:$0xff]
        %v530 = vunpack.c.l.b16 %v498
        %v531 = vunpack.c.h.b16 %v498
        %v532 = vunpack.c.l.b16 %v499
        %v533 = vunpack.c.h.b16 %v499
        %v534 = vunpack.c.l.b16 %v500
        %v535 = vunpack.c.h.b16 %v500
        %v536 = vunpack.c.l.b16 %v501
        %v537 = vunpack.c.h.b16 %v501
        %v538 = vunpack.c.l.b16 %v502
        %v539 = vunpack.c.h.b16 %v502
        %v540 = vunpack.c.l.b16 %v503
        %v541 = vunpack.c.h.b16 %v503
        %v542 = vunpack.c.l.b16 %v504
        %v543 = vunpack.c.h.b16 %v504
        %v544 = vunpack.c.l.b16 %v505
        %v545 = vunpack.c.h.b16 %v505
        %v546 = vunpack.c.l.b16 %v506
        %v547 = vunpack.c.h.b16 %v506
        %v548 = vunpack.c.l.b16 %v507
        %v549 = vunpack.c.h.b16 %v507
        %v550 = vunpack.c.l.b16 %v508
        %v551 = vunpack.c.h.b16 %v508
        %v552 = vunpack.c.l.b16 %v509
        %v553 = vunpack.c.h.b16 %v509
        %v554 = vunpack.c.l.b16 %v510
        %v555 = vunpack.c.h.b16 %v510
        %v556 = vunpack.c.l.b16 %v511
        %v557 = vunpack.c.h.b16 %v511
        %v558 = vunpack.c.l.b16 %v512
        %v559 = vunpack.c.h.b16 %v512
        %v560 = vunpack.c.l.b16 %v513
        %v561 = vunpack.c.h.b16 %v513
        %v562 = vpack.c.b16 %v532, %v530
        %v563 = vpack.c.b16 %v533, %v531
        %v564 = vpack.c.b16 %v536, %v534
        %v565 = vpack.c.b16 %v537, %v535
        %v566 = vpack.c.b16 %v540, %v538
        %v567 = vpack.c.b16 %v541, %v539
        %v568 = vpack.c.b16 %v544, %v542
        %v569 = vpack.c.b16 %v545, %v543
        %v570 = vpack.c.b16 %v548, %v546
        %v571 = vpack.c.b16 %v549, %v547
        %v572 = vpack.c.b16 %v552, %v550
        %v573 = vpack.c.b16 %v553, %v551
        %v574 = vpack.c.b16 %v556, %v554
        %v575 = vpack.c.b16 %v557, %v555
        %v576 = vpack.c.b16 %v560, %v558
        %v577 = vpack.c.b16 %v561, %v559
        %594 = vmatprep.subr.bf16.mxu0 %v563
        %595 = vmatpush1.bf16.msra.mxu0 %v562
        %596 = vmatprep.subr.bf16.mxu0 %v565
        %597 = vmatpush1.bf16.msra.mxu0 %v564
        %598 = vmatprep.subr.bf16.mxu0 %v567
        %599 = vmatpush1.bf16.msra.mxu0 %v566
        %600 = vmatprep.subr.bf16.mxu0 %v569
        %601 = vmatpush1.bf16.msra.mxu0 %v568
        %602 = vmatprep.subr.bf16.mxu0 %v571
        %603 = vmatpush1.bf16.msra.mxu0 %v570
        %604 = vmatprep.subr.bf16.mxu0 %v573
        %605 = vmatpush1.bf16.msra.mxu0 %v572
        %606 = vmatprep.subr.bf16.mxu0 %v575
        %607 = vmatpush1.bf16.msra.mxu0 %v574
        %608 = vmatprep.subr.bf16.mxu0 %v577
        %609 = vmatpush1.bf16.msra.mxu0 %v576
        %610 = vmatprep.subr.bf16.mxu0 0
        %611 = vmatpush1.bf16.msra.mxu0 0
        %612 = vmatprep.subr.bf16.mxu0 0
        %613 = vmatpush1.bf16.msra.mxu0 0
        %614 = vmatprep.subr.bf16.mxu0 0
        %615 = vmatpush1.bf16.msra.mxu0 0
        %616 = vmatprep.subr.bf16.mxu0 0
        %617 = vmatpush1.bf16.msra.mxu0 0
        %618 = vmatprep.subr.bf16.mxu0 0
        %619 = vmatpush1.bf16.msra.mxu0 0
        %620 = vmatprep.subr.bf16.mxu0 0
        %621 = vmatpush1.bf16.msra.mxu0 0
        %622 = vmatprep.subr.bf16.mxu0 0
        %623 = vmatpush1.bf16.msra.mxu0 0
        %624 = vmatprep.subr.bf16.mxu0 0
        %625 = vmatpush1.bf16.msra.mxu0 0
        %626 = vmatprep.mubr.bf16.mxu0 0
        %627 = vmatmul.mubr.bf16.gmra.mrb[0].mxu0 %v493
        %v628 = vpop.f32.mrb[0].mxu0
        %v629 = vadd.f32 0.0, %v628
        %v630 = vpop.f32.mrb[0].mxu0
        %v631 = vadd.f32 0.0, %v630
        %v632 = vpop.f32.mrb[0].mxu0
        %v633 = vadd.f32 0.0, %v632
        %v634 = vpop.f32.mrb[0].mxu0
        %v635 = vadd.f32 0.0, %v634
        %636 = vdwg.mxu0
        %v637 = vadd.f32 %v494, %v629
        %v638 = vadd.f32 %v495, %v631
        %v639 = vadd.f32 %v496, %v633
        %v640 = vadd.f32 %v497, %v635
        %641 = vst [vmem:[#allocation2] sm:$0xff] %v637
        %642 = vst [vmem:[#allocation2 + $0x8] sm:$0xff] %v638
        %643 = vst [vmem:[#allocation2 + $0x10] sm:$0xff] %v639
        %644 = vst [vmem:[#allocation2 + $0x18] sm:$0xff] %v640
        // Predicated region
        $region83: #{speech_model_forward.14} parent=73 // pred_check
          %p645 = pneg %p425
        $region84: #{speech_model_forward.14} parent=73 // pred_check_branch
          %647 = sbr.rel (%p645) target = $region86
        $region85: #{speech_model_forward.14} parent=73 // pred_region
          %v648 = vld [vmem:[#allocation2] sm:$0xff]
          %v649 = vld [vmem:[#allocation2 + $0x8] sm:$0xff]
          %v650 = vld [vmem:[#allocation2 + $0x10] sm:$0xff]
          %v651 = vld [vmem:[#allocation2 + $0x18] sm:$0xff]
          %v652 = vld [vmem:[%s414] sm:$0x3]
          %v654 = vlaneseq
          %v655 = vshrl.u32 %v654, 7
          %v656 = vsub.s32 0, %v655
          %v657 = vrot.slane %v652, %v656
          %v658 = vlaneseq
          %v659 = vshrl.u32 %v658, 7
          %v660 = vsub.s32 1, %v659
          %v661 = vrot.slane %v652, %v660
          %v664 = vadd.f32 %v648, %v657
          %v665 = vadd.f32 %v649, %v661
          %v666 = vadd.f32 %v650, %v657
          %v667 = vadd.f32 %v651, %v661
          %668 = vst [vmem:[%s399] sm:$0xff] %v664
          %669 = vst [vmem:[%s399 + $0x8] sm:$0xff] %v665
          %670 = vst [vmem:[%s399 + $0x10] sm:$0xff] %v666
          %671 = vst [vmem:[%s399 + $0x18] sm:$0xff] %v667
        $region86: #{speech_model_forward.14} parent=73 // pred_fallthru
          _
        %s672 = sand.u32 %s179, 1
        %s673 = sand.u32 %s179, 1
        %s674 = smul.addr %s673, 32
        %s675 = scalar_lea.vmem [#allocation4], %s674
        // Predicated region
        $region87: #{speech_model_forward.14} parent=73 // pred_check
          %p676 = pneg %p189
        $region88: #{speech_model_forward.14} parent=73 // pred_check_branch
          %678 = sbr.rel (%p676) target = $region90
        $region89: #{speech_model_forward.14} parent=73 // pred_region
          %s679 = smul.u32 2, %s21
          %s680 = smul.u32 2, %s22
          %s681 = smul.addr %s679, 6
          %s682 = sadd.s32 %s680, %s681
          %s683 = smul.addr %s682, 8
          %s684 = scalar_lea.vmem %s5, %s683
          // Predicated region
          $region91: #{speech_model_forward.14} parent=89 // pred_check
            _
          $region92: #{speech_model_forward.14} parent=89 // pred_check_branch
            %686 = sbr.rel (0) target = $region94
          $region93: #{speech_model_forward.14} parent=89 // pred_region
            // Predicated region
            $region95: #{speech_model_forward.14} parent=93 // pred_check
              _
            $region96: #{speech_model_forward.14} parent=93 // pred_check_branch
              %688 = sbr.rel (0) target = $region98
            $region97: #{speech_model_forward.14} parent=93 // pred_region
              loop: start=0, step=1, limit=1
              $region99: #{speech_model_forward.14} parent=97 // loop_pre_header
                _
              $region100: #{speech_model_forward.14} parent=97 // loop_header
                %s690 = sphi 0, %s694
                %p691 = scmp.ge.s32.totalorder %s690, 1
                %s695 = sphi %s675, %s675
                %s696 = sphi %s684, %s684
              $region101: #{speech_model_forward.14} parent=97 // loop_header_branch
                %693 = sbr.rel (%p691) target = $region105
              $region102: #{speech_model_forward.14} parent=97 // loop_body
                %v697 = vld [vmem:[%s695] sm:$0xff]
                %698 = vst [vmem:[%s696] sm:$0xff] %v697
                %v699 = vld [vmem:[%s695 + $0x8] sm:$0xff]
                %700 = vst [vmem:[%s696 + $0x8] sm:$0xff] %v699
                %v701 = vld [vmem:[%s695 + $0x10] sm:$0xff]
                %702 = vst [vmem:[%s696 + $0x30] sm:$0xff] %v701
                %v703 = vld [vmem:[%s695 + $0x18] sm:$0xff]
                %704 = vst [vmem:[%s696 + $0x38] sm:$0xff] %v703
              $region103: #{speech_model_forward.14} parent=97 // loop_footer
                %s694 = sadd.s32 1, %s690
              $region104: #{speech_model_forward.14} parent=97 // loop_footer_branch
                %689 = sbr.rel target = $region100
              $region105: #{speech_model_forward.14} parent=97 // loop_exit
                _
            $region98: #{speech_model_forward.14} parent=93 // pred_fallthru
              _
            // Predicated region
            $region106: #{speech_model_forward.14} parent=93 // pred_check
              _
            $region107: #{speech_model_forward.14} parent=93 // pred_check_branch
              %706 = sbr.rel target = $region109
            $region108: #{speech_model_forward.14} parent=93 // pred_region
              _
            $region109: #{speech_model_forward.14} parent=93 // pred_fallthru
              _
          $region94: #{speech_model_forward.14} parent=89 // pred_fallthru
            _
          %707 = vnop
        $region90: #{speech_model_forward.14} parent=73 // pred_fallthru
          _
      $region74: #{speech_model_forward.14} parent=5 // pred_fallthru
        _
      %p708 = scmp.le.s32.totalorder 2, %s11
      // Predicated region
      $region110: #{speech_model_forward.14} parent=5 // pred_check
        %p709 = pneg %p708
      $region111: #{speech_model_forward.14} parent=5 // pred_check_branch
        %711 = sbr.rel (%p709) target = $region113
      $region112: #{speech_model_forward.14} parent=5 // pred_region
        %s712 = ssub.s32 %s11, 2
        // Predicated region
        $region114: #{speech_model_forward.14} parent=112 // pred_check
          %p713 = pneg %p195
        $region115: #{speech_model_forward.14} parent=112 // pred_check_branch
          %715 = sbr.rel (%p713) target = $region117
        $region116: #{speech_model_forward.14} parent=112 // pred_region
          %s716 = sand.u32 %s180, 1
          %s717 = sand.u32 %s180, 1
          %s718 = smul.addr %s717, 32
          %s719 = scalar_lea.vmem [#allocation4], %s718
        $region117: #{speech_model_forward.14} parent=112 // pred_fallthru
          _
      $region113: #{speech_model_forward.14} parent=5 // pred_fallthru
        _
    $region6: #{speech_model_forward.14} parent=1 // loop_footer
      %s15 = sadd.s32 1, %s11
    $region7: #{speech_model_forward.14} parent=1 // loop_footer_branch
      %10 = sbr.rel target = $region3
    $region8: #{speech_model_forward.14} parent=1 // loop_exit
      _

// kernel: speech_model_forward.16
$region0: #{speech_model_forward.16}
  #allocation0 [shape = 'u32[]', space=smem, size = 0x4, offset = 0x4, fixed_abs, tag = 'smem constant byte address 0x4 - core index']
  #allocation1 [shape = 'u32[144,128]{1,0:T(1,128)}', space=vmem, size = 0x12000, scoped, tag = 'internal scratch']
  #allocation2 [shape = 'f32[16,256]{1,0:T(8,128)}', space=vmem, size = 0x4000, scoped, tag = 'scratch operand']
  %s0 = inlined_call_operand.vmem [shape: bf16[16,128], index: 0, kind: input, shape index: {}]
  %s1 = inlined_call_operand.vmem [shape: bf16[128,768], index: 1, kind: input, shape index: {}]
  %s2 = inlined_call_operand.vmem [shape: f32[1,768], index: 2, kind: input, shape index: {}]
  %s3 = inlined_call_operand.vmem [shape: f32[1,128], index: 3, kind: input, shape index: {}]
  %s4 = inlined_call_operand.vmem [shape: f32[1,128], index: 4, kind: input, shape index: {}]
  %s5 = inlined_call_operand.vmem [shape: f32[16,768], index: 5, kind: output, shape index: {}]
  %s6 = sld [smem:[#allocation0]]
  $region118: #{speech_model_forward.16} parent=0
    _
  %s8 = ssub.s32 1, %s6
  %s9 = scalar_select 0, %s8, %s6
  $region1: #{speech_model_forward.16} parent=0
    #allocation3 [shape = 'u8[131072]{0}', space=vmem, size = 0x20000, scoped, tag = 'input window, operand 1']
    #allocation4 [shape = 'u8[32768]{0}', space=vmem, size = 0x8000, scoped, tag = 'output window, operand 0']
    loop: start=0, step=1, limit=5
    $region2: #{speech_model_forward.16} parent=1 // loop_pre_header
      _
    $region3: #{speech_model_forward.16} parent=1 // loop_header
      %s11 = sphi 0, %s15
      %p12 = scmp.ge.s32.totalorder %s11, 5
      %s18 = sphi 0, %s37
      %s19 = sphi 0, %s33
      %s20 = sphi 0, %s29
      %s21 = sphi 0, %s18
      %s22 = sphi 0, %s19
      %s23 = sphi 0, %s20
      %s24 = sphi 0, %s21
      %s25 = sphi 0, %s22
      %s26 = sphi 0, %s23
      %s42 = sphi 0, %s44
      %s45 = sphi 0, %s42
      %s46 = sphi 0, %s45
      %s62 = sphi 0, %s46
      %s70 = sphi 0, %s72
      %s73 = sphi 0, %s70
      %s74 = sphi 0, %s73
      %s90 = sphi 0, %s74
      %s96 = sphi 0, %s98
      %s99 = sphi 0, %s96
      %s100 = sphi 0, %s99
      %s116 = sphi 0, %s100
      %s122 = sphi 0, %s124
      %s125 = sphi 0, %s122
      %s126 = sphi 0, %s125
      %s142 = sphi 0, %s126
      %s148 = sphi 0, %s150
      %s151 = sphi 0, %s148
      %s152 = sphi 0, %s151
      %s168 = sphi 0, %s152
      %s176 = sphi 0, %s178
      %s179 = sphi 0, %s176
      %s180 = sphi 0, %s179
      %s196 = sphi 0, %s180
    $region4: #{speech_model_forward.16} parent=1 // loop_header_branch
      %14 = sbr.rel (%p12) target = $region8
    $region5: #{speech_model_forward.16} parent=1 // loop_body
      %s16 = ssub.s32 %s11, 1
      %s17 = ssub.s32 %s11, 2
      %s27 = sadd.s32 1, %s20
      %p28 = scmp.ge.s32.totalorder %s27, 1
      %s29 = scalar_select %p28, 0, %s27
      %s30 = sadd.s32 1, %s19
      %s31 = scalar_select %p28, %s30, %s19
      %p32 = scmp.ge.s32.totalorder %s31, 3
      %s33 = scalar_select %p32, 0, %s31
      %s34 = sadd.s32 1, %s18
      %s35 = scalar_select %p32, %s34, %s18
      %p36 = scmp.ge.s32.totalorder %s35, 1
      %s37 = scalar_select %p36, 0, %s35
      %s38 = ssub.s32 %s18, %s37
      %s39 = ssub.s32 %s20, %s29
      %s40 = sor.u32 %s38, %s39
      %p41 = scmp.eq.s32.totalorder %s40, 0
      %s43 = sadd.s32 %s42, 1
      %s44 = scalar_select %p41, %s42, %s43
      %p47 = pneg %p41
      %p48 = scmp.eq.s32.totalorder %s11, 2
      %p49 = por %p47, %p48
      %p50 = scmp.ne.s32.totalorder %s42, %s45
      %p51 = scmp.eq.s32.totalorder %s11, 0
      %p52 = por %p50, %p51
      %p53 = scmp.ne.s32.totalorder %s42, %s45
      %p54 = scmp.eq.s32.totalorder %s16, 2
      %p55 = por %p53, %p54
      %p56 = scmp.ne.s32.totalorder %s45, %s46
      %p57 = scmp.eq.s32.totalorder %s16, 0
      %p58 = por %p56, %p57
      %p59 = scmp.ne.s32.totalorder %s45, %s46
      %p60 = scmp.eq.s32.totalorder %s17, 2
      %p61 = por %p59, %p60
      %p63 = scmp.ne.s32.totalorder %s46, %s62
      %p64 = scmp.eq.s32.totalorder %s17, 0
      %p65 = por %p63, %p64
      %s66 = ssub.s32 %s20, %s29
      %s67 = ssub.s32 %s19, %s33
      %s68 = sor.u32 %s66, %s67
      %p69 = scmp.eq.s32.totalorder %s68, 0
      %s71 = sadd.s32 %s70, 1
      %s72 = scalar_select %p69, %s70, %s71
      %p75 = pneg %p69
      %p76 = scmp.eq.s32.totalorder %s11, 2
      %p77 = por %p75, %p76
      %p78 = scmp.ne.s32.totalorder %s70, %s73
      %p79 = scmp.eq.s32.totalorder %s11, 0
      %p80 = por %p78, %p79
      %p81 = scmp.ne.s32.totalorder %s70, %s73
      %p82 = scmp.eq.s32.totalorder %s16, 2
      %p83 = por %p81, %p82
      %p84 = scmp.ne.s32.totalorder %s73, %s74
      %p85 = scmp.eq.s32.totalorder %s16, 0
      %p86 = por %p84, %p85
      %p87 = scmp.ne.s32.totalorder %s73, %s74
      %p88 = scmp.eq.s32.totalorder %s17, 2
      %p89 = por %p87, %p88
      %p91 = scmp.ne.s32.totalorder %s74, %s90
      %p92 = scmp.eq.s32.totalorder %s17, 0
      %p93 = por %p91, %p92
      %s94 = ssub.s32 %s19, %s33
      %p95 = scmp.eq.s32.totalorder %s94, 0
      %s97 = sadd.s32 %s96, 1
      %s98 = scalar_select %p95, %s96, %s97
      %p101 = pneg %p95
      %p102 = scmp.eq.s32.totalorder %s11, 2
      %p103 = por %p101, %p102
      %p104 = scmp.ne.s32.totalorder %s96, %s99
      %p105 = scmp.eq.s32.totalorder %s11, 0
      %p106 = por %p104, %p105
      %p107 = scmp.ne.s32.totalorder %s96, %s99
      %p108 = scmp.eq.s32.totalorder %s16, 2
      %p109 = por %p107, %p108
      %p110 = scmp.ne.s32.totalorder %s99, %s100
      %p111 = scmp.eq.s32.totalorder %s16, 0
      %p112 = por %p110, %p111
      %p113 = scmp.ne.s32.totalorder %s99, %s100
      %p114 = scmp.eq.s32.totalorder %s17, 2
      %p115 = por %p113, %p114
      %p117 = scmp.ne.s32.totalorder %s100, %s116
      %p118 = scmp.eq.s32.totalorder %s17, 0
      %p119 = por %p117, %p118
      %s120 = ssub.s32 %s20, %s29
      %p121 = scmp.eq.s32.totalorder %s120, 0
      %s123 = sadd.s32 %s122, 1
      %s124 = scalar_select %p121, %s122, %s123
      %p127 = pneg %p121
      %p128 = scmp.eq.s32.totalorder %s11, 2
      %p129 = por %p127, %p128
      %p130 = scmp.ne.s32.totalorder %s122, %s125
      %p131 = scmp.eq.s32.totalorder %s11, 0
      %p132 = por %p130, %p131
      %p133 = scmp.ne.s32.totalorder %s122, %s125
      %p134 = scmp.eq.s32.totalorder %s16, 2
      %p135 = por %p133, %p134
      %p136 = scmp.ne.s32.totalorder %s125, %s126
      %p137 = scmp.eq.s32.totalorder %s16, 0
      %p138 = por %p136, %p137
      %p139 = scmp.ne.s32.totalorder %s125, %s126
      %p140 = scmp.eq.s32.totalorder %s17, 2
      %p141 = por %p139, %p140
      %p143 = scmp.ne.s32.totalorder %s126, %s142
      %p144 = scmp.eq.s32.totalorder %s17, 0
      %p145 = por %p143, %p144
      %s146 = ssub.s32 %s20, %s29
      %p147 = scmp.eq.s32.totalorder %s146, 0
      %s149 = sadd.s32 %s148, 1
      %s150 = scalar_select %p147, %s148, %s149
      %p153 = pneg %p147
      %p154 = scmp.eq.s32.totalorder %s11, 2
      %p155 = por %p153, %p154
      %p156 = scmp.ne.s32.totalorder %s148, %s151
      %p157 = scmp.eq.s32.totalorder %s11, 0
      %p158 = por %p156, %p157
      %p159 = scmp.ne.s32.totalorder %s148, %s151
      %p160 = scmp.eq.s32.totalorder %s16, 2
      %p161 = por %p159, %p160
      %p162 = scmp.ne.s32.totalorder %s151, %s152
      %p163 = scmp.eq.s32.totalorder %s16, 0
      %p164 = por %p162, %p163
      %p165 = scmp.ne.s32.totalorder %s151, %s152
      %p166 = scmp.eq.s32.totalorder %s17, 2
      %p167 = por %p165, %p166
      %p169 = scmp.ne.s32.totalorder %s152, %s168
      %p170 = scmp.eq.s32.totalorder %s17, 0
      %p171 = por %p169, %p170
      %s172 = ssub.s32 %s18, %s37
      %s173 = ssub.s32 %s19, %s33
      %s174 = sor.u32 %s172, %s173
      %p175 = scmp.eq.s32.totalorder %s174, 0
      %s177 = sadd.s32 %s176, 1
      %s178 = scalar_select %p175, %s176, %s177
      %p181 = pneg %p175
      %p182 = scmp.eq.s32.totalorder %s11, 2
      %p183 = por %p181, %p182
      %p184 = scmp.ne.s32.totalorder %s176, %s179
      %p185 = scmp.eq.s32.totalorder %s11, 0
      %p186 = por %p184, %p185
      %p187 = scmp.ne.s32.totalorder %s176, %s179
      %p188 = scmp.eq.s32.totalorder %s16, 2
      %p189 = por %p187, %p188
      %p190 = scmp.ne.s32.totalorder %s179, %s180
      %p191 = scmp.eq.s32.totalorder %s16, 0
      %p192 = por %p190, %p191
      %p193 = scmp.ne.s32.totalorder %s179, %s180
      %p194 = scmp.eq.s32.totalorder %s17, 2
      %p195 = por %p193, %p194
      %p197 = scmp.ne.s32.totalorder %s180, %s196
      %p198 = scmp.eq.s32.totalorder %s17, 0
      %p199 = por %p197, %p198
      %p200 = scmp.le.s32.totalorder 1, %s11
      %p201 = scmp.lt.s32.totalorder %s11, 4
      %p202 = pnand %p200, %p201
      %p203 = pneg %p202
      // Predicated region
      $region9: #{speech_model_forward.16} parent=5 // pred_check
        _
      $region10: #{speech_model_forward.16} parent=5 // pred_check_branch
        %205 = sbr.rel (%p202) target = $region12
      $region11: #{speech_model_forward.16} parent=5 // pred_region
        %s206 = ssub.s32 %s11, 1
        // Predicated region
        $region13: #{speech_model_forward.16} parent=11 // pred_check
          %p207 = pneg %p58
        $region14: #{speech_model_forward.16} parent=11 // pred_check_branch
          %209 = sbr.rel (%p207) target = $region16
        $region15: #{speech_model_forward.16} parent=11 // pred_region
          %s210 = smul.u32 2, %s21
          %p211 = scmp.lt.s32.totalorder %s210, 1
          %s212 = scalar_select %p211, %s210, 1
          %p213 = scmp.lt.s32.totalorder %s23, 0
          %s214 = scalar_select %p213, %s23, 0
          %s215 = sadd.s32 %s214, %s212
          %s216 = smul.addr %s215, 4
          %s217 = scalar_lea.vmem %s0, %s216
          %s218 = smul.u32 2, %s21
        $region16: #{speech_model_forward.16} parent=11 // pred_fallthru
          _
        // Predicated region
        $region17: #{speech_model_forward.16} parent=11 // pred_check
          %p219 = pneg %p138
        $region18: #{speech_model_forward.16} parent=11 // pred_check_branch
          %221 = sbr.rel (%p219) target = $region20
        $region19: #{speech_model_forward.16} parent=11 // pred_region
          %p222 = scmp.lt.s32.totalorder %s23, 0
          %s223 = scalar_select %p222, %s23, 0
          %s224 = scalar_lea.vmem %s3, %s223
        $region20: #{speech_model_forward.16} parent=11 // pred_fallthru
          _
        // Predicated region
        $region21: #{speech_model_forward.16} parent=11 // pred_check
          %p225 = pneg %p164
        $region22: #{speech_model_forward.16} parent=11 // pred_check_branch
          %227 = sbr.rel (%p225) target = $region24
        $region23: #{speech_model_forward.16} parent=11 // pred_region
          %p228 = scmp.lt.s32.totalorder %s23, 0
          %s229 = scalar_select %p228, %s23, 0
          %s230 = scalar_lea.vmem %s4, %s229
        $region24: #{speech_model_forward.16} parent=11 // pred_fallthru
          _
      $region12: #{speech_model_forward.16} parent=5 // pred_fallthru
        _
      %p231 = scmp.lt.s32.totalorder %s11, 3
      // Predicated region
      $region25: #{speech_model_forward.16} parent=5 // pred_check
        %p232 = pneg %p231
      $region26: #{speech_model_forward.16} parent=5 // pred_check_branch
        %234 = sbr.rel (%p232) target = $region28
      $region27: #{speech_model_forward.16} parent=5 // pred_region
        // Predicated region
        $region29: #{speech_model_forward.16} parent=27 // pred_check
          %p235 = pneg %p80
        $region30: #{speech_model_forward.16} parent=27 // pred_check_branch
          %237 = sbr.rel (%p235) target = $region32
        $region31: #{speech_model_forward.16} parent=27 // pred_region
          %s238 = sand.u32 %s70, 1
          %s239 = sand.u32 %s70, 1
          %s240 = smul.addr %s239, 128
          %s241 = scalar_lea.vmem [#allocation3], %s240
          %s242 = smul.u32 16, %s20
          %s243 = smul.u32 2, %s19
          %s244 = smul.addr %s242, 6
          %s245 = sadd.s32 %s243, %s244
          %s246 = smul.addr %s245, 4
          %s247 = scalar_lea.vmem %s1, %s246
          // Predicated region
          $region33: #{speech_model_forward.16} parent=31 // pred_check
            _
          $region34: #{speech_model_forward.16} parent=31 // pred_check_branch
            %249 = sbr.rel (0) target = $region36
          $region35: #{speech_model_forward.16} parent=31 // pred_region
            // Predicated region
            $region37: #{speech_model_forward.16} parent=35 // pred_check
              _
            $region38: #{speech_model_forward.16} parent=35 // pred_check_branch
              %251 = sbr.rel (0) target = $region40
            $region39: #{speech_model_forward.16} parent=35 // pred_region
              // Predicated region
              $region52: #{speech_model_forward.16} parent=39 // pred_check
                _
              $region53: #{speech_model_forward.16} parent=39 // pred_check_branch
                %296 = sbr.rel (0) target = $region55
              $region54: #{speech_model_forward.16} parent=39 // pred_region
                loop: start=0, step=1, limit=1
                $region56: #{speech_model_forward.16} parent=54 // loop_pre_header
                  _
                $region57: #{speech_model_forward.16} parent=54 // loop_header
                  %s298 = sphi 0, %s302
                  %p299 = scmp.ge.s32.totalorder %s298, 1
                  %s303 = sphi %s247, %s247
                  %s304 = sphi %s241, %s241
                $region58: #{speech_model_forward.16} parent=54 // loop_header_branch
                  %301 = sbr.rel (%p299) target = $region62
                $region59: #{speech_model_forward.16} parent=54 // loop_body
                  %v305 = vld [vmem:[%s303] sm:$0xff]
                  %306 = vst [vmem:[%s304] sm:$0xff] %v305
                  %v307 = vld [vmem:[%s303 + $0x18] sm:$0xff]
                  %308 = vst [vmem:[%s304 + $0x8] sm:$0xff] %v307
                  %v309 = vld [vmem:[%s303 + $0x30] sm:$0xff]
                  %310 = vst [vmem:[%s304 + $0x10] sm:$0xff] %v309
                  %v311 = vld [vmem:[%s303 + $0x48] sm:$0xff]
                  %312 = vst [vmem:[%s304 + $0x18] sm:$0xff] %v311
                  %v313 = vld [vmem:[%s303 + $0x60] sm:$0xff]
                  %314 = vst [vmem:[%s304 + $0x20] sm:$0xff] %v313
                  %v315 = vld [vmem:[%s303 + $0x78] sm:$0xff]
                  %316 = vst [vmem:[%s304 + $0x28] sm:$0xff] %v315
                  %v317 = vld [vmem:[%s303 + $0x90] sm:$0xff]
                  %318 = vst [vmem:[%s304 + $0x30] sm:$0xff] %v317
                  %v319 = vld [vmem:[%s303 + $0xa8] sm:$0xff]
                  %320 = vst [vmem:[%s304 + $0x38] sm:$0xff] %v319
                  %v321 = vld [vmem:[%s303 + $0xc0] sm:$0xff]
                  %322 = vst [vmem:[%s304 + $0x40] sm:$0xff] %v321
                  %v323 = vld [vmem:[%s303 + $0xd8] sm:$0xff]
                  %324 = vst [vmem:[%s304 + $0x48] sm:$0xff] %v323
                  %v325 = vld [vmem:[%s303 + $0xf0] sm:$0xff]
                  %326 = vst [vmem:[%s304 + $0x50] sm:$0xff] %v325
                  %v327 = vld [vmem:[%s303 + $0x108] sm:$0xff]
                  %328 = vst [vmem:[%s304 + $0x58] sm:$0xff] %v327
                  %v329 = vld [vmem:[%s303 + $0x120] sm:$0xff]
                  %330 = vst [vmem:[%s304 + $0x60] sm:$0xff] %v329
                  %v331 = vld [vmem:[%s303 + $0x138] sm:$0xff]
                  %332 = vst [vmem:[%s304 + $0x68] sm:$0xff] %v331
                  %v333 = vld [vmem:[%s303 + $0x150] sm:$0xff]
                  %334 = vst [vmem:[%s304 + $0x70] sm:$0xff] %v333
                  %v335 = vld [vmem:[%s303 + $0x168] sm:$0xff]
                  %336 = vst [vmem:[%s304 + $0x78] sm:$0xff] %v335
                $region60: #{speech_model_forward.16} parent=54 // loop_footer
                  %s302 = sadd.s32 1, %s298
                $region61: #{speech_model_forward.16} parent=54 // loop_footer_branch
                  %297 = sbr.rel target = $region57
                $region62: #{speech_model_forward.16} parent=54 // loop_exit
                  _
              $region55: #{speech_model_forward.16} parent=39 // pred_fallthru
                _
              // Predicated region
              $region63: #{speech_model_forward.16} parent=39 // pred_check
                _
              $region64: #{speech_model_forward.16} parent=39 // pred_check_branch
                %338 = sbr.rel target = $region66
              $region65: #{speech_model_forward.16} parent=39 // pred_region
                _
              $region66: #{speech_model_forward.16} parent=39 // pred_fallthru
                _
            $region40: #{speech_model_forward.16} parent=35 // pred_fallthru
              _
            // Predicated region
            $region41: #{speech_model_forward.16} parent=35 // pred_check
              _
            $region42: #{speech_model_forward.16} parent=35 // pred_check_branch
              %253 = sbr.rel target = $region44
            $region43: #{speech_model_forward.16} parent=35 // pred_region
              loop: start=0, step=1, limit=1
              $region45: #{speech_model_forward.16} parent=43 // loop_pre_header
                _
              $region46: #{speech_model_forward.16} parent=43 // loop_header
                %s256 = sphi 0, %s260
                %p257 = scmp.ge.s32.totalorder %s256, 1
                %s261 = sphi %s247, %s247
                %s262 = sphi %s241, %s241
              $region47: #{speech_model_forward.16} parent=43 // loop_header_branch
                %259 = sbr.rel (%p257) target = $region51
              $region48: #{speech_model_forward.16} parent=43 // loop_body
                %v263 = vld [vmem:[%s261] sm:$0xff]
                %264 = vst [vmem:[%s262] sm:$0xff] %v263
                %v265 = vld [vmem:[%s261 + $0x18] sm:$0xff]
                %266 = vst [vmem:[%s262 + $0x8] sm:$0xff] %v265
                %v267 = vld [vmem:[%s261 + $0x30] sm:$0xff]
                %268 = vst [vmem:[%s262 + $0x10] sm:$0xff] %v267
                %v269 = vld [vmem:[%s261 + $0x48] sm:$0xff]
                %270 = vst [vmem:[%s262 + $0x18] sm:$0xff] %v269
                %v271 = vld [vmem:[%s261 + $0x60] sm:$0xff]
                %272 = vst [vmem:[%s262 + $0x20] sm:$0xff] %v271
                %v273 = vld [vmem:[%s261 + $0x78] sm:$0xff]
                %274 = vst [vmem:[%s262 + $0x28] sm:$0xff] %v273
                %v275 = vld [vmem:[%s261 + $0x90] sm:$0xff]
                %276 = vst [vmem:[%s262 + $0x30] sm:$0xff] %v275
                %v277 = vld [vmem:[%s261 + $0xa8] sm:$0xff]
                %278 = vst [vmem:[%s262 + $0x38] sm:$0xff] %v277
                %v279 = vld [vmem:[%s261 + $0xc0] sm:$0xff]
                %280 = vst [vmem:[%s262 + $0x40] sm:$0xff] %v279
                %v281 = vld [vmem:[%s261 + $0xd8] sm:$0xff]
                %282 = vst [vmem:[%s262 + $0x48] sm:$0xff] %v281
                %v283 = vld [vmem:[%s261 + $0xf0] sm:$0xff]
                %284 = vst [vmem:[%s262 + $0x50] sm:$0xff] %v283
                %v285 = vld [vmem:[%s261 + $0x108] sm:$0xff]
                %286 = vst [vmem:[%s262 + $0x58] sm:$0xff] %v285
                %v287 = vld [vmem:[%s261 + $0x120] sm:$0xff]
                %288 = vst [vmem:[%s262 + $0x60] sm:$0xff] %v287
                %v289 = vld [vmem:[%s261 + $0x138] sm:$0xff]
                %290 = vst [vmem:[%s262 + $0x68] sm:$0xff] %v289
                %v291 = vld [vmem:[%s261 + $0x150] sm:$0xff]
                %292 = vst [vmem:[%s262 + $0x70] sm:$0xff] %v291
                %v293 = vld [vmem:[%s261 + $0x168] sm:$0xff]
                %294 = vst [vmem:[%s262 + $0x78] sm:$0xff] %v293
              $region49: #{speech_model_forward.16} parent=43 // loop_footer
                %s260 = sadd.s32 1, %s256
              $region50: #{speech_model_forward.16} parent=43 // loop_footer_branch
                %255 = sbr.rel target = $region46
              $region51: #{speech_model_forward.16} parent=43 // loop_exit
                _
            $region44: #{speech_model_forward.16} parent=35 // pred_fallthru
              _
          $region36: #{speech_model_forward.16} parent=31 // pred_fallthru
            _
          %339 = vnop
        $region32: #{speech_model_forward.16} parent=27 // pred_fallthru
          _
        // Predicated region
        $region67: #{speech_model_forward.16} parent=27 // pred_check
          %p340 = pneg %p106
        $region68: #{speech_model_forward.16} parent=27 // pred_check_branch
          %342 = sbr.rel (%p340) target = $region70
        $region69: #{speech_model_forward.16} parent=27 // pred_region
          %s343 = smul.u32 2, %s19
          %p344 = scmp.lt.s32.totalorder %s343, 5
          %s345 = scalar_select %p344, %s343, 5
          %s346 = scalar_lea.vmem %s2, %s345
          %s347 = smul.u32 2, %s19
        $region70: #{speech_model_forward.16} parent=27 // pred_fallthru
          _
      $region28: #{speech_model_forward.16} parent=5 // pred_fallthru
        _
      %p348 = scmp.le.s32.totalorder 1, %s11
      %p349 = scmp.lt.s32.totalorder %s11, 4
      %p350 = pnand %p348, %p349
      %p351 = pneg %p350
      // Predicated region
      $region71: #{speech_model_forward.16} parent=5 // pred_check
        _
      $region72: #{speech_model_forward.16} parent=5 // pred_check_branch
        %353 = sbr.rel (%p350) target = $region74
      $region73: #{speech_model_forward.16} parent=5 // pred_region
        %s354 = ssub.s32 %s11, 1
        %s355 = sand.u32 %s73, 1
        %s356 = sand.u32 %s73, 1
        %s357 = smul.addr %s356, 128
        %s358 = scalar_lea.vmem [#allocation3], %s357
        // Predicated region
        $region75: #{speech_model_forward.16} parent=73 // pred_check
          %p359 = pneg %p86
        $region76: #{speech_model_forward.16} parent=73 // pred_check_branch
          %361 = sbr.rel (%p359) target = $region78
        $region77: #{speech_model_forward.16} parent=73 // pred_region
          _
        $region78: #{speech_model_forward.16} parent=73 // pred_fallthru
          _
        %s362 = smul.u32 2, %s21
        %p363 = scmp.lt.s32.totalorder %s362, 1
        %s364 = scalar_select %p363, %s362, 1
        %p365 = scmp.lt.s32.totalorder %s23, 0
        %s366 = scalar_select %p365, %s23, 0
        %s367 = sadd.s32 %s366, %s364
        %s368 = smul.addr %s367, 4
        %s369 = scalar_lea.vmem %s0, %s368
        %p370 = pneg %p58
        %p371 = pneg %p55
        %s372 = sand.u32 %s73, 1
        %s373 = sand.u32 %s73, 1
        %s374 = smul.addr %s373, 128
        %s375 = scalar_lea.vmem [#allocation3], %s374
        %p376 = pneg %p86
        %p377 = pneg %p83
        %s378 = smul.u32 2, %s22
        %p379 = scmp.lt.s32.totalorder %s378, 5
        %s380 = scalar_select %p379, %s378, 5
        %s381 = scalar_lea.vmem %s2, %s380
        %p382 = pneg %p112
        %p383 = pneg %p109
        %p384 = scmp.lt.s32.totalorder %s23, 0
        %s385 = scalar_select %p384, %s23, 0
        %s386 = scalar_lea.vmem %s3, %s385
        %p387 = pneg %p138
        %p388 = pneg %p135
        %p389 = scmp.lt.s32.totalorder %s23, 0
        %s390 = scalar_select %p389, %s23, 0
        %s391 = scalar_lea.vmem %s4, %s390
        %p392 = pneg %p164
        %p393 = pneg %p161
        %p394 = pneg %p192
        %p395 = pneg %p189
        %s396 = sand.u32 %s179, 1
        %s397 = sand.u32 %s179, 1
        %s398 = smul.addr %s397, 32
        %s399 = scalar_lea.vmem [#allocation4], %s398
        %s400 = smul.u32 2, %s21
        %p401 = scmp.lt.s32.totalorder %s400, 1
        %s402 = scalar_select %p401, %s400, 1
        %p403 = scmp.lt.s32.totalorder %s23, 0
        %s404 = scalar_select %p403, %s23, 0
        %s405 = sadd.s32 %s404, %s402
        %s406 = smul.addr %s405, 4
        %s407 = scalar_lea.vmem %s0, %s406
        %s408 = smul.u32 2, %s21
        %s409 = smul.u32 16, %s23
        %s410 = smul.u32 2, %s22
        %s411 = smul.u32 2, %s22
        %p412 = scmp.lt.s32.totalorder %s411, 5
        %s413 = scalar_select %p412, %s411, 5
        %s414 = scalar_lea.vmem %s2, %s413
        %s415 = smul.u32 2, %s22
        %p416 = scmp.lt.s32.totalorder %s23, 0
        %s417 = scalar_select %p416, %s23, 0
        %s418 = scalar_lea.vmem %s3, %s417
        %p419 = scmp.lt.s32.totalorder %s23, 0
        %s420 = scalar_select %p419, %s23, 0
        %s421 = scalar_lea.vmem %s4, %s420
        %s422 = smul.u32 2, %s21
        %s423 = smul.u32 2, %s22
        %p425 = scmp.eq.s32.totalorder %s23, 0
        // Predicated region
        $region79: #{speech_model_forward.16} parent=73 // pred_check
          %p426 = pneg %p425
        $region80: #{speech_model_forward.16} parent=73 // pred_check_branch
          %428 = sbr.rel (%p426) target = $region82
        $region81: #{speech_model_forward.16} parent=73 // pred_region
          %429 = vst [vmem:[#allocation2] sm:$0xff] 0.0
          %430 = vst [vmem:[#allocation2 + $0x8] sm:$0xff] 0.0
          %431 = vst [vmem:[#allocation2 + $0x10] sm:$0xff] 0.0
          %432 = vst [vmem:[#allocation2 + $0x18] sm:$0xff] 0.0
        $region82: #{speech_model_forward.16} parent=73 // pred_fallthru
          _
        %v433 = vld [vmem:[%s407] sm:$0xf]
        %v434 = vld [vmem:[%s407 + $0x4] sm:$0xf]
        %v435 = vunpack.c.l.bf16 %v433
        %v436 = vunpack.c.l.bf16 %v434
        %437 = vadd.xlane.f32.xlu0 %v435
        %v438 = vpop.xlane.xlu0 %437
        %439 = vadd.xlane.f32.xlu0 %v436
        %v440 = vpop.xlane.xlu0 %439
        %v441 = vmul.f32 %v438, 0.015625
        %v442 = vmul.f32 %v440, 0.015625
        %v443 = vmul.f32 %v435, %v435
        %v444 = vmul.f32 %v436, %v436
        %445 = vadd.xlane.f32.xlu0 %v443
        %v446 = vpop.xlane.xlu0 %445
        %447 = vadd.xlane.f32.xlu0 %v444
        %v448 = vpop.xlane.xlu0 %447
        %v449 = vmul.f32 %v446, 0.015625
        %v450 = vmul.f32 %v448, 0.015625
        %v451 = vmul.f32 %v441, %v441
        %v452 = vmul.f32 %v442, %v442
        %v453 = vsub.f32 %v449, %v451
        %v454 = vsub.f32 %v450, %v452
        %v455 = vmax.f32 %v453, 0.0
        %v456 = vmax.f32 %v454, 0.0
        %v457 = vsub.f32 %v435, %v441
        %v458 = vsub.f32 %v436, %v442
        %v459 = vadd.f32 %v455, 1e-05
        %v460 = vadd.f32 %v456, 1e-05
        %v461 = vrsqrt.pop %v459
        %v462 = vrsqrt.pop %v460
        %v463 = vmul.f32 %v457, %v461
        %v464 = vmul.f32 %v458, %v462
        %v465 = vld [vmem:[%s418] sm:$0x1]
        %v467 = vlaneseq
        %v468 = vshrl.u32 %v467, 7
        %v469 = vsub.s32 0, %v468
        %v470 = vrot.slane %v465, %v469
        %v472 = vmul.f32 %v463, %v470
        %v473 = vmul.f32 %v464, %v470
        %v474 = vld [vmem:[%s421] sm:$0x1]
        %v476 = vlaneseq
        %v477 = vshrl.u32 %v476, 7
        %v478 = vsub.s32 0, %v477
        %v479 = vrot.slane %v474, %v478
        %v481 = vadd.f32 %v472, %v479
        %v482 = vadd.f32 %v473, %v479
        %v483 = vmul.f32 %v481, 0.5
        %v484 = vmul.f32 %v482, 0.5
        %v485 = vmul.f32 %v481, 0.70710677
        %v486 = vmul.f32 %v482, 0.70710677
        %v487 = verf.f32.pop %v485
        %v488 = verf.f32.pop %v486
        %v489 = vadd.f32 %v487, 1.0
        %v490 = vadd.f32 %v488, 1.0
        %v491 = vmul.f32 %v483, %v489
        %v492 = vmul.f32 %v484, %v490
        %v493 = vpack.c.bf16 %v492, %v491
        %v494 = vld [vmem:[#allocation2] sm:$0xff]
        %v495 = vld [vmem:[#allocation2 + $0x8] sm:$0xff]
        %v496 = vld [vmem:[#allocation2 + $0x10] sm:$0xff]
        %v497 = vld [vmem:[#allocation2 + $0x18] sm:$0xff]
        %v498 = vld [vmem:[%s358] sm:$0xff]
        %v499 = vld [vmem:[%s358 + $0x8] sm:$0xff]
        %v500 = vld [vmem:[%s358 + $0x10] sm:$0xff]
        %v501 = vld [vmem:[%s358 + $0x18] sm:$0xff]
        %v502 = vld [vmem:[%s358 + $0x20] sm:$0xff]
        %v503 = vld [vmem:[%s358 + $0x28] sm:$0xff]
        %v504 = vld [vmem:[%s358 + $0x30] sm:$0xff]
        %v505 = vld [vmem:[%s358 + $0x38] sm:$0xff]
        %v506 = vld [vmem:[%s358 + $0x40] sm:$0xff]
        %v507 = vld [vmem:[%s358 + $0x48] sm:$0xff]
        %v508 = vld [vmem:[%s358 + $0x50] sm:$0xff]
        %v509 = vld [vmem:[%s358 + $0x58] sm:$0xff]
        %v510 = vld [vmem:[%s358 + $0x60] sm:$0xff]
        %v511 = vld [vmem:[%s358 + $0x68] sm:$0xff]
        %v512 = vld [vmem:[%s358 + $0x70] sm:$0xff]
        %v513 = vld [vmem:[%s358 + $0x78] sm:$0xff]
        %v530 = vunpack.c.l.b16 %v498
        %v531 = vunpack.c.h.b16 %v498
        %v532 = vunpack.c.l.b16 %v499
        %v533 = vunpack.c.h.b16 %v499
        %v534 = vunpack.c.l.b16 %v500
        %v535 = vunpack.c.h.b16 %v500
        %v536 = vunpack.c.l.b16 %v501
        %v537 = vunpack.c.h.b16 %v501
        %v538 = vunpack.c.l.b16 %v502
        %v539 = vunpack.c.h.b16 %v502
        %v540 = vunpack.c.l.b16 %v503
        %v541 = vunpack.c.h.b16 %v503
        %v542 = vunpack.c.l.b16 %v504
        %v543 = vunpack.c.h.b16 %v504
        %v544 = vunpack.c.l.b16 %v505
        %v545 = vunpack.c.h.b16 %v505
        %v546 = vunpack.c.l.b16 %v506
        %v547 = vunpack.c.h.b16 %v506
        %v548 = vunpack.c.l.b16 %v507
        %v549 = vunpack.c.h.b16 %v507
        %v550 = vunpack.c.l.b16 %v508
        %v551 = vunpack.c.h.b16 %v508
        %v552 = vunpack.c.l.b16 %v509
        %v553 = vunpack.c.h.b16 %v509
        %v554 = vunpack.c.l.b16 %v510
        %v555 = vunpack.c.h.b16 %v510
        %v556 = vunpack.c.l.b16 %v511
        %v557 = vunpack.c.h.b16 %v511
        %v558 = vunpack.c.l.b16 %v512
        %v559 = vunpack.c.h.b16 %v512
        %v560 = vunpack.c.l.b16 %v513
        %v561 = vunpack.c.h.b16 %v513
        %v562 = vpack.c.b16 %v532, %v530
        %v563 = vpack.c.b16 %v533, %v531
        %v564 = vpack.c.b16 %v536, %v534
        %v565 = vpack.c.b16 %v537, %v535
        %v566 = vpack.c.b16 %v540, %v538
        %v567 = vpack.c.b16 %v541, %v539
        %v568 = vpack.c.b16 %v544, %v542
        %v569 = vpack.c.b16 %v545, %v543
        %v570 = vpack.c.b16 %v548, %v546
        %v571 = vpack.c.b16 %v549, %v547
        %v572 = vpack.c.b16 %v552, %v550
        %v573 = vpack.c.b16 %v553, %v551
        %v574 = vpack.c.b16 %v556, %v554
        %v575 = vpack.c.b16 %v557, %v555
        %v576 = vpack.c.b16 %v560, %v558
        %v577 = vpack.c.b16 %v561, %v559
        %594 = vmatprep.subr.bf16.mxu0 %v563
        %595 = vmatpush1.bf16.msra.mxu0 %v562
        %596 = vmatprep.subr.bf16.mxu0 %v565
        %597 = vmatpush1.bf16.msra.mxu0 %v564
        %598 = vmatprep.subr.bf16.mxu0 %v567
        %599 = vmatpush1.bf16.msra.mxu0 %v566
        %600 = vmatprep.subr.bf16.mxu0 %v569
        %601 = vmatpush1.bf16.msra.mxu0 %v568
        %602 = vmatprep.subr.bf16.mxu0 %v571
        %603 = vmatpush1.bf16.msra.mxu0 %v570
        %604 = vmatprep.subr.bf16.mxu0 %v573
        %605 = vmatpush1.bf16.msra.mxu0 %v572
        %606 = vmatprep.subr.bf16.mxu0 %v575
        %607 = vmatpush1.bf16.msra.mxu0 %v574
        %608 = vmatprep.subr.bf16.mxu0 %v577
        %609 = vmatpush1.bf16.msra.mxu0 %v576
        %610 = vmatprep.subr.bf16.mxu0 0
        %611 = vmatpush1.bf16.msra.mxu0 0
        %612 = vmatprep.subr.bf16.mxu0 0
        %613 = vmatpush1.bf16.msra.mxu0 0
        %614 = vmatprep.subr.bf16.mxu0 0
        %615 = vmatpush1.bf16.msra.mxu0 0
        %616 = vmatprep.subr.bf16.mxu0 0
        %617 = vmatpush1.bf16.msra.mxu0 0
        %618 = vmatprep.subr.bf16.mxu0 0
        %619 = vmatpush1.bf16.msra.mxu0 0
        %620 = vmatprep.subr.bf16.mxu0 0
        %621 = vmatpush1.bf16.msra.mxu0 0
        %622 = vmatprep.subr.bf16.mxu0 0
        %623 = vmatpush1.bf16.msra.mxu0 0
        %624 = vmatprep.subr.bf16.mxu0 0
        %625 = vmatpush1.bf16.msra.mxu0 0
        %626 = vmatprep.mubr.bf16.mxu0 0
        %627 = vmatmul.mubr.bf16.gmra.mrb[0].mxu0 %v493
        %v628 = vpop.f32.mrb[0].mxu0
        %v629 = vadd.f32 0.0, %v628
        %v630 = vpop.f32.mrb[0].mxu0
        %v631 = vadd.f32 0.0, %v630
        %v632 = vpop.f32.mrb[0].mxu0
        %v633 = vadd.f32 0.0, %v632
        %v634 = vpop.f32.mrb[0].mxu0
        %v635 = vadd.f32 0.0, %v634
        %636 = vdwg.mxu0
        %v637 = vadd.f32 %v494, %v629
        %v638 = vadd.f32 %v495, %v631
        %v639 = vadd.f32 %v496, %v633
        %v640 = vadd.f32 %v497, %v635
        %641 = vst [vmem:[#allocation2] sm:$0xff] %v637
        %642 = vst [vmem:[#allocation2 + $0x8] sm:$0xff] %v638
        %643 = vst [vmem:[#allocation2 + $0x10] sm:$0xff] %v639
        %644 = vst [vmem:[#allocation2 + $0x18] sm:$0xff] %v640
        // Predicated region
        $region83: #{speech_model_forward.16} parent=73 // pred_check
          %p645 = pneg %p425
        $region84: #{speech_model_forward.16} parent=73 // pred_check_branch
          %647 = sbr.rel (%p645) target = $region86
        $region85: #{speech_model_forward.16} parent=73 // pred_region
          %v648 = vld [vmem:[#allocation2] sm:$0xff]
          %v649 = vld [vmem:[#allocation2 + $0x8] sm:$0xff]
          %v650 = vld [vmem:[#allocation2 + $0x10] sm:$0xff]
          %v651 = vld [vmem:[#allocation2 + $0x18] sm:$0xff]
          %v652 = vld [vmem:[%s414] sm:$0x3]
          %v654 = vlaneseq
          %v655 = vshrl.u32 %v654, 7
          %v656 = vsub.s32 0, %v655
          %v657 = vrot.slane %v652, %v656
          %v658 = vlaneseq
          %v659 = vshrl.u32 %v658, 7
          %v660 = vsub.s32 1, %v659
          %v661 = vrot.slane %v652, %v660
          %v664 = vadd.f32 %v648, %v657
          %v665 = vadd.f32 %v649, %v661
          %v666 = vadd.f32 %v650, %v657
          %v667 = vadd.f32 %v651, %v661
          %668 = vst [vmem:[%s399] sm:$0xff] %v664
          %669 = vst [vmem:[%s399 + $0x8] sm:$0xff] %v665
          %670 = vst [vmem:[%s399 + $0x10] sm:$0xff] %v666
          %671 = vst [vmem:[%s399 + $0x18] sm:$0xff] %v667
        $region86: #{speech_model_forward.16} parent=73 // pred_fallthru
          _
        %s672 = sand.u32 %s179, 1
        %s673 = sand.u32 %s179, 1
        %s674 = smul.addr %s673, 32
        %s675 = scalar_lea.vmem [#allocation4], %s674
        // Predicated region
        $region87: #{speech_model_forward.16} parent=73 // pred_check
          %p676 = pneg %p189
        $region88: #{speech_model_forward.16} parent=73 // pred_check_branch
          %678 = sbr.rel (%p676) target = $region90
        $region89: #{speech_model_forward.16} parent=73 // pred_region
          %s679 = smul.u32 2, %s21
          %s680 = smul.u32 2, %s22
          %s681 = smul.addr %s679, 6
          %s682 = sadd.s32 %s680, %s681
          %s683 = smul.addr %s682, 8
          %s684 = scalar_lea.vmem %s5, %s683
          // Predicated region
          $region91: #{speech_model_forward.16} parent=89 // pred_check
            _
          $region92: #{speech_model_forward.16} parent=89 // pred_check_branch
            %686 = sbr.rel (0) target = $region94
          $region93: #{speech_model_forward.16} parent=89 // pred_region
            // Predicated region
            $region95: #{speech_model_forward.16} parent=93 // pred_check
              _
            $region96: #{speech_model_forward.16} parent=93 // pred_check_branch
              %688 = sbr.rel (0) target = $region98
            $region97: #{speech_model_forward.16} parent=93 // pred_region
              loop: start=0, step=1, limit=1
              $region99: #{speech_model_forward.16} parent=97 // loop_pre_header
                _
              $region100: #{speech_model_forward.16} parent=97 // loop_header
                %s690 = sphi 0, %s694
                %p691 = scmp.ge.s32.totalorder %s690, 1
                %s695 = sphi %s675, %s675
                %s696 = sphi %s684, %s684
              $region101: #{speech_model_forward.16} parent=97 // loop_header_branch
                %693 = sbr.rel (%p691) target = $region105
              $region102: #{speech_model_forward.16} parent=97 // loop_body
                %v697 = vld [vmem:[%s695] sm:$0xff]
                %698 = vst [vmem:[%s696] sm:$0xff] %v697
                %v699 = vld [vmem:[%s695 + $0x8] sm:$0xff]
                %700 = vst [vmem:[%s696 + $0x8] sm:$0xff] %v699
                %v701 = vld [vmem:[%s695 + $0x10] sm:$0xff]
                %702 = vst [vmem:[%s696 + $0x30] sm:$0xff] %v701
                %v703 = vld [vmem:[%s695 + $0x18] sm:$0xff]
                %704 = vst [vmem:[%s696 + $0x38] sm:$0xff] %v703
              $region103: #{speech_model_forward.16} parent=97 // loop_footer
                %s694 = sadd.s32 1, %s690
              $region104: #{speech_model_forward.16} parent=97 // loop_footer_branch
                %689 = sbr.rel target = $region100
              $region105: #{speech_model_forward.16} parent=97 // loop_exit
                _
            $region98: #{speech_model_forward.16} parent=93 // pred_fallthru
              _
            // Predicated region
            $region106: #{speech_model_forward.16} parent=93 // pred_check
              _
            $region107: #{speech_model_forward.16} parent=93 // pred_check_branch
              %706 = sbr.rel target = $region109
            $region108: #{speech_model_forward.16} parent=93 // pred_region
              _
            $region109: #{speech_model_forward.16} parent=93 // pred_fallthru
              _
          $region94: #{speech_model_forward.16} parent=89 // pred_fallthru
            _
          %707 = vnop
        $region90: #{speech_model_forward.16} parent=73 // pred_fallthru
          _
      $region74: #{speech_model_forward.16} parent=5 // pred_fallthru
        _
      %p708 = scmp.le.s32.totalorder 2, %s11
      // Predicated region
      $region110: #{speech_model_forward.16} parent=5 // pred_check
        %p709 = pneg %p708
      $region111: #{speech_model_forward.16} parent=5 // pred_check_branch
        %711 = sbr.rel (%p709) target = $region113
      $region112: #{speech_model_forward.16} parent=5 // pred_region
        %s712 = ssub.s32 %s11, 2
        // Predicated region
        $region114: #{speech_model_forward.16} parent=112 // pred_check
          %p713 = pneg %p195
        $region115: #{speech_model_forward.16} parent=112 // pred_check_branch
          %715 = sbr.rel (%p713) target = $region117
        $region116: #{speech_model_forward.16} parent=112 // pred_region
          %s716 = sand.u32 %s180, 1
          %s717 = sand.u32 %s180, 1
          %s718 = smul.addr %s717, 32
          %s719 = scalar_lea.vmem [#allocation4], %s718
        $region117: #{speech_model_forward.16} parent=112 // pred_fallthru
          _
      $region113: #{speech_model_forward.16} parent=5 // pred_fallthru
        _
    $region6: #{speech_model_forward.16} parent=1 // loop_footer
      %s15 = sadd.s32 1, %s11
    $region7: #{speech_model_forward.16} parent=1 // loop_footer_branch
      %10 = sbr.rel target = $region3
    $region8: #{speech_model_forward.16} parent=1 // loop_exit
      _

// kernel: speech_model_forward.15
$region0: #{speech_model_forward.15}
  #allocation0 [shape = 'u32[]', space=smem, size = 0x4, offset = 0x4, fixed_abs, tag = 'smem constant byte address 0x4 - core index']
  #allocation1 [shape = 'u32[144,128]{1,0:T(1,128)}', space=vmem, size = 0x12000, scoped, tag = 'internal scratch']
  #allocation2 [shape = 'f32[2,256]{1,0:T(2,128)}', space=vmem, size = 0x800, scoped, tag = 'scratch operand']
  %s0 = inlined_call_operand.vmem [shape: f32[8,2,768], index: 0, kind: input, shape index: {}]
  %s1 = inlined_call_operand.vmem [shape: bf16[256,768], index: 1, kind: input, shape index: {}]
  %s2 = inlined_call_operand.vmem [shape: f32[1,768], index: 2, kind: input, shape index: {}]
  %s3 = inlined_call_operand.vmem [shape: f32[8,2,128], index: 3, kind: output, shape index: {0}]
  %s4 = inlined_call_operand.vmem [shape: f32[8,2,128], index: 4, kind: output, shape index: {1}]
  %5 = xla_tuple %s3, %s4
  %s6 = sld [smem:[#allocation0]]
  $region37: #{speech_model_forward.15} parent=0
    _
  %s8 = ssub.s32 1, %s6
  %s9 = scalar_select 0, %s8, %s6
  // Predicated region
  $region2: #{speech_model_forward.15} parent=0 // pred_check
    _
  $region3: #{speech_model_forward.15} parent=0 // pred_check_branch
    %11 = sbr.rel (0) target = $region5
  $region4: #{speech_model_forward.15} parent=0 // pred_region
    _
  $region5: #{speech_model_forward.15} parent=0 // pred_fallthru
    _
  // Predicated region
  $region6: #{speech_model_forward.15} parent=0 // pred_check
    _
  $region7: #{speech_model_forward.15} parent=0 // pred_check_branch
    %13 = sbr.rel (0) target = $region9
  $region8: #{speech_model_forward.15} parent=0 // pred_region
    _
  $region9: #{speech_model_forward.15} parent=0 // pred_fallthru
    _
  // Predicated region
  $region10: #{speech_model_forward.15} parent=0 // pred_check
    _
  $region11: #{speech_model_forward.15} parent=0 // pred_check_branch
    %15 = sbr.rel (0) target = $region13
  $region12: #{speech_model_forward.15} parent=0 // pred_region
    _
  $region13: #{speech_model_forward.15} parent=0 // pred_fallthru
    _
  %16 = vst [vmem:[#allocation2] sm:$0xf] 0.0
  loop: start=0, step=1, limit=4
  $region14: #{speech_model_forward.15} parent=0 // loop_pre_header
    _
  $region15: #{speech_model_forward.15} parent=0 // loop_header
    %s18 = sphi 0, %s22
    %p19 = scmp.ge.s32.totalorder %s18, 4
  $region16: #{speech_model_forward.15} parent=0 // loop_header_branch
    %21 = sbr.rel (%p19) target = $region20
  $region17: #{speech_model_forward.15} parent=0 // loop_body
    %s23 = smul.u32 %s18, 2
    %v24 = vld [vmem:[#allocation2] sm:$0xf]
    %v27 = vunpack.c.l.s4 1983009808
    %v28 = vunpack.c.0.s8 %v27
    %v29 = vlaneseq
    %v30 = vshrl.u32 %v29, 7
    %v31 = vsub.s32 %v28, %v30
    %v32 = vrot.slane %v24, %v31
    %v33 = vcombine.high %v32, %v32
    %v36 = vpack.c.bf16 %v32, %v32
    %v37 = vpack.c.bf16 %v33, %v33
    %v38 = vld [vmem:[%s1] sm:$0xff]
    %v39 = vld [vmem:[%s1 + $0x8] sm:$0xff]
    %v40 = vld [vmem:[%s1 + $0x10] sm:$0xff]
    %v41 = vld [vmem:[%s1 + $0x18] sm:$0xff]
    %v42 = vld [vmem:[%s1 + $0x20] sm:$0xff]
    %v43 = vld [vmem:[%s1 + $0x28] sm:$0xff]
    %v44 = vld [vmem:[%s1 + $0x30] sm:$0xff]
    %v45 = vld [vmem:[%s1 + $0x38] sm:$0xff]
    %v46 = vld [vmem:[%s1 + $0x40] sm:$0xff]
    %v47 = vld [vmem:[%s1 + $0x48] sm:$0xff]
    %v48 = vld [vmem:[%s1 + $0x50] sm:$0xff]
    %v49 = vld [vmem:[%s1 + $0x58] sm:$0xff]
    %v50 = vld [vmem:[%s1 + $0x60] sm:$0xff]
    %v51 = vld [vmem:[%s1 + $0x68] sm:$0xff]
    %v52 = vld [vmem:[%s1 + $0x70] sm:$0xff]
    %v53 = vld [vmem:[%s1 + $0x78] sm:$0xff]
    %v54 = vld [vmem:[%s1 + $0x80] sm:$0xff]
    %v55 = vld [vmem:[%s1 + $0x88] sm:$0xff]
    %v56 = vld [vmem:[%s1 + $0x90] sm:$0xff]
    %v57 = vld [vmem:[%s1 + $0x98] sm:$0xff]
    %v58 = vld [vmem:[%s1 + $0xa0] sm:$0xff]
    %v59 = vld [vmem:[%s1 + $0xa8] sm:$0xff]
    %v60 = vld [vmem:[%s1 + $0xb0] sm:$0xff]
    %v61 = vld [vmem:[%s1 + $0xb8] sm:$0xff]
    %v62 = vld [vmem:[%s1 + $0xc0] sm:$0xff]
    %v63 = vld [vmem:[%s1 + $0xc8] sm:$0xff]
    %v64 = vld [vmem:[%s1 + $0xd0] sm:$0xff]
    %v65 = vld [vmem:[%s1 + $0xd8] sm:$0xff]
    %v66 = vld [vmem:[%s1 + $0xe0] sm:$0xff]
    %v67 = vld [vmem:[%s1 + $0xe8] sm:$0xff]
    %v68 = vld [vmem:[%s1 + $0xf0] sm:$0xff]
    %v69 = vld [vmem:[%s1 + $0xf8] sm:$0xff]
    %v70 = vld [vmem:[%s1 + $0x100] sm:$0xff]
    %v71 = vld [vmem:[%s1 + $0x108] sm:$0xff]
    %v72 = vld [vmem:[%s1 + $0x110] sm:$0xff]
    %v73 = vld [vmem:[%s1 + $0x118] sm:$0xff]
    %v74 = vld [vmem:[%s1 + $0x120] sm:$0xff]
    %v75 = vld [vmem:[%s1 + $0x128] sm:$0xff]
    %v76 = vld [vmem:[%s1 + $0x130] sm:$0xff]
    %v77 = vld [vmem:[%s1 + $0x138] sm:$0xff]
    %v78 = vld [vmem:[%s1 + $0x140] sm:$0xff]
    %v79 = vld [vmem:[%s1 + $0x148] sm:$0xff]
    %v80 = vld [vmem:[%s1 + $0x150] sm:$0xff]
    %v81 = vld [vmem:[%s1 + $0x158] sm:$0xff]
    %v82 = vld [vmem:[%s1 + $0x160] sm:$0xff]
    %v83 = vld [vmem:[%s1 + $0x168] sm:$0xff]
    %v84 = vld [vmem:[%s1 + $0x170] sm:$0xff]
    %v85 = vld [vmem:[%s1 + $0x178] sm:$0xff]
    %v86 = vld [vmem:[%s1 + $0x180] sm:$0xff]
    %v87 = vld [vmem:[%s1 + $0x188] sm:$0xff]
    %v88 = vld [vmem:[%s1 + $0x190] sm:$0xff]
    %v89 = vld [vmem:[%s1 + $0x198] sm:$0xff]
    %v90 = vld [vmem:[%s1 + $0x1a0] sm:$0xff]
    %v91 = vld [vmem:[%s1 + $0x1a8] sm:$0xff]
    %v92 = vld [vmem:[%s1 + $0x1b0] sm:$0xff]
    %v93 = vld [vmem:[%s1 + $0x1b8] sm:$0xff]
    %v94 = vld [vmem:[%s1 + $0x1c0] sm:$0xff]
    %v95 = vld [vmem:[%s1 + $0x1c8] sm:$0xff]
    %v96 = vld [vmem:[%s1 + $0x1d0] sm:$0xff]
    %v97 = vld [vmem:[%s1 + $0x1d8] sm:$0xff]
    %v98 = vld [vmem:[%s1 + $0x1e0] sm:$0xff]
    %v99 = vld [vmem:[%s1 + $0x1e8] sm:$0xff]
    %v100 = vld [vmem:[%s1 + $0x1f0] sm:$0xff]
    %v101 = vld [vmem:[%s1 + $0x1f8] sm:$0xff]
    %v102 = vld [vmem:[%s1 + $0x200] sm:$0xff]
    %v103 = vld [vmem:[%s1 + $0x208] sm:$0xff]
    %v104 = vld [vmem:[%s1 + $0x210] sm:$0xff]
    %v105 = vld [vmem:[%s1 + $0x218] sm:$0xff]
    %v106 = vld [vmem:[%s1 + $0x220] sm:$0xff]
    %v107 = vld [vmem:[%s1 + $0x228] sm:$0xff]
    %v108 = vld [vmem:[%s1 + $0x230] sm:$0xff]
    %v109 = vld [vmem:[%s1 + $0x238] sm:$0xff]
    %v110 = vld [vmem:[%s1 + $0x240] sm:$0xff]
    %v111 = vld [vmem:[%s1 + $0x248] sm:$0xff]
    %v112 = vld [vmem:[%s1 + $0x250] sm:$0xff]
    %v113 = vld [vmem:[%s1 + $0x258] sm:$0xff]
    %v114 = vld [vmem:[%s1 + $0x260] sm:$0xff]
    %v115 = vld [vmem:[%s1 + $0x268] sm:$0xff]
    %v116 = vld [vmem:[%s1 + $0x270] sm:$0xff]
    %v117 = vld [vmem:[%s1 + $0x278] sm:$0xff]
    %v118 = vld [vmem:[%s1 + $0x280] sm:$0xff]
    %v119 = vld [vmem:[%s1 + $0x288] sm:$0xff]
    %v120 = vld [vmem:[%s1 + $0x290] sm:$0xff]
    %v121 = vld [vmem:[%s1 + $0x298] sm:$0xff]
    %v122 = vld [vmem:[%s1 + $0x2a0] sm:$0xff]
    %v123 = vld [vmem:[%s1 + $0x2a8] sm:$0xff]
    %v124 = vld [vmem:[%s1 + $0x2b0] sm:$0xff]
    %v125 = vld [vmem:[%s1 + $0x2b8] sm:$0xff]
    %v126 = vld [vmem:[%s1 + $0x2c0] sm:$0xff]
    %v127 = vld [vmem:[%s1 + $0x2c8] sm:$0xff]
    %v128 = vld [vmem:[%s1 + $0x2d0] sm:$0xff]
    %v129 = vld [vmem:[%s1 + $0x2d8] sm:$0xff]
    %v130 = vld [vmem:[%s1 + $0x2e0] sm:$0xff]
    %v131 = vld [vmem:[%s1 + $0x2e8] sm:$0xff]
    %v132 = vld [vmem:[%s1 + $0x2f0] sm:$0xff]
    %v133 = vld [vmem:[%s1 + $0x2f8] sm:$0xff]
    %v134 = vld [vmem:[%s2] sm:$0x3f]
    %v136 = vlaneseq
    %v137 = vshrl.u32 %v136, 7
    %v138 = vsub.s32 0, %v137
    %v139 = vrot.slane %v134, %v138
    %v140 = vlaneseq
    %v141 = vshrl.u32 %v140, 7
    %v142 = vsub.s32 1, %v141
    %v143 = vrot.slane %v134, %v142
    %v144 = vlaneseq
    %v145 = vshrl.u32 %v144, 7
    %v146 = vsub.s32 2, %v145
    %v147 = vrot.slane %v134, %v146
    %v148 = vlaneseq
    %v149 = vshrl.u32 %v148, 7
    %v150 = vsub.s32 3, %v149
    %v151 = vrot.slane %v134, %v150
    %v152 = vlaneseq
    %v153 = vshrl.u32 %v152, 7
    %v154 = vsub.s32 4, %v153
    %v155 = vrot.slane %v134, %v154
    %v156 = vlaneseq
    %v157 = vshrl.u32 %v156, 7
    %v158 = vsub.s32 5, %v157
    %v159 = vrot.slane %v134, %v158
    %v262 = vunpack.c.l.b16 %v38
    %v263 = vunpack.c.h.b16 %v38
    %v264 = vunpack.c.l.b16 %v39
    %v265 = vunpack.c.h.b16 %v39
    %v266 = vunpack.c.l.b16 %v40
    %v267 = vunpack.c.h.b16 %v40
    %v268 = vunpack.c.l.b16 %v41
    %v269 = vunpack.c.h.b16 %v41
    %v270 = vunpack.c.l.b16 %v42
    %v271 = vunpack.c.h.b16 %v42
    %v272 = vunpack.c.l.b16 %v43
    %v273 = vunpack.c.h.b16 %v43
    %v274 = vunpack.c.l.b16 %v44
    %v275 = vunpack.c.h.b16 %v44
    %v276 = vunpack.c.l.b16 %v45
    %v277 = vunpack.c.h.b16 %v45
    %v278 = vunpack.c.l.b16 %v46
    %v279 = vunpack.c.h.b16 %v46
    %v280 = vunpack.c.l.b16 %v47
    %v281 = vunpack.c.h.b16 %v47
    %v282 = vunpack.c.l.b16 %v48
    %v283 = vunpack.c.h.b16 %v48
    %v284 = vunpack.c.l.b16 %v49
    %v285 = vunpack.c.h.b16 %v49
    %v286 = vunpack.c.l.b16 %v50
    %v287 = vunpack.c.h.b16 %v50
    %v288 = vunpack.c.l.b16 %v51
    %v289 = vunpack.c.h.b16 %v51
    %v290 = vunpack.c.l.b16 %v52
    %v291 = vunpack.c.h.b16 %v52
    %v292 = vunpack.c.l.b16 %v53
    %v293 = vunpack.c.h.b16 %v53
    %v294 = vunpack.c.l.b16 %v54
    %v295 = vunpack.c.h.b16 %v54
    %v296 = vunpack.c.l.b16 %v55
    %v297 = vunpack.c.h.b16 %v55
    %v298 = vunpack.c.l.b16 %v56
    %v299 = vunpack.c.h.b16 %v56
    %v300 = vunpack.c.l.b16 %v57
    %v301 = vunpack.c.h.b16 %v57
    %v302 = vunpack.c.l.b16 %v58
    %v303 = vunpack.c.h.b16 %v58
    %v304 = vunpack.c.l.b16 %v59
    %v305 = vunpack.c.h.b16 %v59
    %v306 = vunpack.c.l.b16 %v60
    %v307 = vunpack.c.h.b16 %v60
    %v308 = vunpack.c.l.b16 %v61
    %v309 = vunpack.c.h.b16 %v61
    %v310 = vunpack.c.l.b16 %v62
    %v311 = vunpack.c.h.b16 %v62
    %v312 = vunpack.c.l.b16 %v63
    %v313 = vunpack.c.h.b16 %v63
    %v314 = vunpack.c.l.b16 %v64
    %v315 = vunpack.c.h.b16 %v64
    %v316 = vunpack.c.l.b16 %v65
    %v317 = vunpack.c.h.b16 %v65
    %v318 = vunpack.c.l.b16 %v66
    %v319 = vunpack.c.h.b16 %v66
    %v320 = vunpack.c.l.b16 %v67
    %v321 = vunpack.c.h.b16 %v67
    %v322 = vunpack.c.l.b16 %v68
    %v323 = vunpack.c.h.b16 %v68
    %v324 = vunpack.c.l.b16 %v69
    %v325 = vunpack.c.h.b16 %v69
    %v326 = vunpack.c.l.b16 %v70
    %v327 = vunpack.c.h.b16 %v70
    %v328 = vunpack.c.l.b16 %v71
    %v329 = vunpack.c.h.b16 %v71
    %v330 = vunpack.c.l.b16 %v72
    %v331 = vunpack.c.h.b16 %v72
    %v332 = vunpack.c.l.b16 %v73
    %v333 = vunpack.c.h.b16 %v73
    %v334 = vunpack.c.l.b16 %v74
    %v335 = vunpack.c.h.b16 %v74
    %v336 = vunpack.c.l.b16 %v75
    %v337 = vunpack.c.h.b16 %v75
    %v338 = vunpack.c.l.b16 %v76
    %v339 = vunpack.c.h.b16 %v76
    %v340 = vunpack.c.l.b16 %v77
    %v341 = vunpack.c.h.b16 %v77
    %v342 = vunpack.c.l.b16 %v78
    %v343 = vunpack.c.h.b16 %v78
    %v344 = vunpack.c.l.b16 %v79
    %v345 = vunpack.c.h.b16 %v79
    %v346 = vunpack.c.l.b16 %v80
    %v347 = vunpack.c.h.b16 %v80
    %v348 = vunpack.c.l.b16 %v81
    %v349 = vunpack.c.h.b16 %v81
    %v350 = vunpack.c.l.b16 %v82
    %v351 = vunpack.c.h.b16 %v82
    %v352 = vunpack.c.l.b16 %v83
    %v353 = vunpack.c.h.b16 %v83
    %v354 = vunpack.c.l.b16 %v84
    %v355 = vunpack.c.h.b16 %v84
    %v356 = vunpack.c.l.b16 %v85
    %v357 = vunpack.c.h.b16 %v85
    %v358 = vunpack.c.l.b16 %v86
    %v359 = vunpack.c.h.b16 %v86
    %v360 = vunpack.c.l.b16 %v87
    %v361 = vunpack.c.h.b16 %v87
    %v362 = vunpack.c.l.b16 %v88
    %v363 = vunpack.c.h.b16 %v88
    %v364 = vunpack.c.l.b16 %v89
    %v365 = vunpack.c.h.b16 %v89
    %v366 = vunpack.c.l.b16 %v90
    %v367 = vunpack.c.h.b16 %v90
    %v368 = vunpack.c.l.b16 %v91
    %v369 = vunpack.c.h.b16 %v91
    %v370 = vunpack.c.l.b16 %v92
    %v371 = vunpack.c.h.b16 %v92
    %v372 = vunpack.c.l.b16 %v93
    %v373 = vunpack.c.h.b16 %v93
    %v374 = vunpack.c.l.b16 %v94
    %v375 = vunpack.c.h.b16 %v94
    %v376 = vunpack.c.l.b16 %v95
    %v377 = vunpack.c.h.b16 %v95
    %v378 = vunpack.c.l.b16 %v96
    %v379 = vunpack.c.h.b16 %v96
    %v380 = vunpack.c.l.b16 %v97
    %v381 = vunpack.c.h.b16 %v97
    %v382 = vunpack.c.l.b16 %v98
    %v383 = vunpack.c.h.b16 %v98
    %v384 = vunpack.c.l.b16 %v99
    %v385 = vunpack.c.h.b16 %v99
    %v386 = vunpack.c.l.b16 %v100
    %v387 = vunpack.c.h.b16 %v100
    %v388 = vunpack.c.l.b16 %v101
    %v389 = vunpack.c.h.b16 %v101
    %v390 = vunpack.c.l.b16 %v102
    %v391 = vunpack.c.h.b16 %v102
    %v392 = vunpack.c.l.b16 %v103
    %v393 = vunpack.c.h.b16 %v103
    %v394 = vunpack.c.l.b16 %v104
    %v395 = vunpack.c.h.b16 %v104
    %v396 = vunpack.c.l.b16 %v105
    %v397 = vunpack.c.h.b16 %v105
    %v398 = vunpack.c.l.b16 %v106
    %v399 = vunpack.c.h.b16 %v106
    %v400 = vunpack.c.l.b16 %v107
    %v401 = vunpack.c.h.b16 %v107
    %v402 = vunpack.c.l.b16 %v108
    %v403 = vunpack.c.h.b16 %v108
    %v404 = vunpack.c.l.b16 %v109
    %v405 = vunpack.c.h.b16 %v109
    %v406 = vunpack.c.l.b16 %v110
    %v407 = vunpack.c.h.b16 %v110
    %v408 = vunpack.c.l.b16 %v111
    %v409 = vunpack.c.h.b16 %v111
    %v410 = vunpack.c.l.b16 %v112
    %v411 = vunpack.c.h.b16 %v112
    %v412 = vunpack.c.l.b16 %v113
    %v413 = vunpack.c.h.b16 %v113
    %v414 = vunpack.c.l.b16 %v114
    %v415 = vunpack.c.h.b16 %v114
    %v416 = vunpack.c.l.b16 %v115
    %v417 = vunpack.c.h.b16 %v115
    %v418 = vunpack.c.l.b16 %v116
    %v419 = vunpack.c.h.b16 %v116
    %v420 = vunpack.c.l.b16 %v117
    %v421 = vunpack.c.h.b16 %v117
    %v422 = vunpack.c.l.b16 %v118
    %v423 = vunpack.c.h.b16 %v118
    %v424 = vunpack.c.l.b16 %v119
    %v425 = vunpack.c.h.b16 %v119
    %v426 = vunpack.c.l.b16 %v120
    %v427 = vunpack.c.h.b16 %v120
    %v428 = vunpack.c.l.b16 %v121
    %v429 = vunpack.c.h.b16 %v121
    %v430 = vunpack.c.l.b16 %v122
    %v431 = vunpack.c.h.b16 %v122
    %v432 = vunpack.c.l.b16 %v123
    %v433 = vunpack.c.h.b16 %v123
    %v434 = vunpack.c.l.b16 %v124
    %v435 = vunpack.c.h.b16 %v124
    %v436 = vunpack.c.l.b16 %v125
    %v437 = vunpack.c.h.b16 %v125
    %v438 = vunpack.c.l.b16 %v126
    %v439 = vunpack.c.h.b16 %v126
    %v440 = vunpack.c.l.b16 %v127
    %v441 = vunpack.c.h.b16 %v127
    %v442 = vunpack.c.l.b16 %v128
    %v443 = vunpack.c.h.b16 %v128
    %v444 = vunpack.c.l.b16 %v129
    %v445 = vunpack.c.h.b16 %v129
    %v446 = vunpack.c.l.b16 %v130
    %v447 = vunpack.c.h.b16 %v130
    %v448 = vunpack.c.l.b16 %v131
    %v449 = vunpack.c.h.b16 %v131
    %v450 = vunpack.c.l.b16 %v132
    %v451 = vunpack.c.h.b16 %v132
    %v452 = vunpack.c.l.b16 %v133
    %v453 = vunpack.c.h.b16 %v133
    %v454 = vpack.c.b16 %v268, %v262
    %v455 = vpack.c.b16 %v269, %v263
    %v456 = vpack.c.b16 %v270, %v264
    %v457 = vpack.c.b16 %v271, %v265
    %v458 = vpack.c.b16 %v272, %v266
    %v459 = vpack.c.b16 %v273, %v267
    %v460 = vpack.c.b16 %v280, %v274
    %v461 = vpack.c.b16 %v281, %v275
    %v462 = vpack.c.b16 %v282, %v276
    %v463 = vpack.c.b16 %v283, %v277
    %v464 = vpack.c.b16 %v284, %v278
    %v465 = vpack.c.b16 %v285, %v279
    %v466 = vpack.c.b16 %v292, %v286
    %v467 = vpack.c.b16 %v293, %v287
    %v468 = vpack.c.b16 %v294, %v288
    %v469 = vpack.c.b16 %v295, %v289
    %v470 = vpack.c.b16 %v296, %v290
    %v471 = vpack.c.b16 %v297, %v291
    %v472 = vpack.c.b16 %v304, %v298
    %v473 = vpack.c.b16 %v305, %v299
    %v474 = vpack.c.b16 %v306, %v300
    %v475 = vpack.c.b16 %v307, %v301
    %v476 = vpack.c.b16 %v308, %v302
    %v477 = vpack.c.b16 %v309, %v303
    %v478 = vpack.c.b16 %v316, %v310
    %v479 = vpack.c.b16 %v317, %v311
    %v480 = vpack.c.b16 %v318, %v312
    %v481 = vpack.c.b16 %v319, %v313
    %v482 = vpack.c.b16 %v320, %v314
    %v483 = vpack.c.b16 %v321, %v315
    %v484 = vpack.c.b16 %v328, %v322
    %v485 = vpack.c.b16 %v329, %v323
    %v486 = vpack.c.b16 %v330, %v324
    %v487 = vpack.c.b16 %v331, %v325
    %v488 = vpack.c.b16 %v332, %v326
    %v489 = vpack.c.b16 %v333, %v327
    %v490 = vpack.c.b16 %v340, %v334
    %v491 = vpack.c.b16 %v341, %v335
    %v492 = vpack.c.b16 %v342, %v336
    %v493 = vpack.c.b16 %v343, %v337
    %v494 = vpack.c.b16 %v344, %v338
    %v495 = vpack.c.b16 %v345, %v339
    %v496 = vpack.c.b16 %v352, %v346
    %v497 = vpack.c.b16 %v353, %v347
    %v498 = vpack.c.b16 %v354, %v348
    %v499 = vpack.c.b16 %v355, %v349
    %v500 = vpack.c.b16 %v356, %v350
    %v501 = vpack.c.b16 %v357, %v351
    %v502 = vpack.c.b16 %v364, %v358
    %v503 = vpack.c.b16 %v365, %v359
    %v504 = vpack.c.b16 %v366, %v360
    %v505 = vpack.c.b16 %v367, %v361
    %v506 = vpack.c.b16 %v368, %v362
    %v507 = vpack.c.b16 %v369, %v363
    %v508 = vpack.c.b16 %v376, %v370
    %v509 = vpack.c.b16 %v377, %v371
    %v510 = vpack.c.b16 %v378, %v372
    %v511 = vpack.c.b16 %v379, %v373
    %v512 = vpack.c.b16 %v380, %v374
    %v513 = vpack.c.b16 %v381, %v375
    %v514 = vpack.c.b16 %v388, %v382
    %v515 = vpack.c.b16 %v389, %v383
    %v516 = vpack.c.b16 %v390, %v384
    %v517 = vpack.c.b16 %v391, %v385
    %v518 = vpack.c.b16 %v392, %v386
    %v519 = vpack.c.b16 %v393, %v387
    %v520 = vpack.c.b16 %v400, %v394
    %v521 = vpack.c.b16 %v401, %v395
    %v522 = vpack.c.b16 %v402, %v396
    %v523 = vpack.c.b16 %v403, %v397
    %v524 = vpack.c.b16 %v404, %v398
    %v525 = vpack.c.b16 %v405, %v399
    %v526 = vpack.c.b16 %v412, %v406
    %v527 = vpack.c.b16 %v413, %v407
    %v528 = vpack.c.b16 %v414, %v408
    %v529 = vpack.c.b16 %v415, %v409
    %v530 = vpack.c.b16 %v416, %v410
    %v531 = vpack.c.b16 %v417, %v411
    %v532 = vpack.c.b16 %v424, %v418
    %v533 = vpack.c.b16 %v425, %v419
    %v534 = vpack.c.b16 %v426, %v420
    %v535 = vpack.c.b16 %v427, %v421
    %v536 = vpack.c.b16 %v428, %v422
    %v537 = vpack.c.b16 %v429, %v423
    %v538 = vpack.c.b16 %v436, %v430
    %v539 = vpack.c.b16 %v437, %v431
    %v540 = vpack.c.b16 %v438, %v432
    %v541 = vpack.c.b16 %v439, %v433
    %v542 = vpack.c.b16 %v440, %v434
    %v543 = vpack.c.b16 %v441, %v435
    %v544 = vpack.c.b16 %v448, %v442
    %v545 = vpack.c.b16 %v449, %v443
    %v546 = vpack.c.b16 %v450, %v444
    %v547 = vpack.c.b16 %v451, %v445
    %v548 = vpack.c.b16 %v452, %v446
    %v549 = vpack.c.b16 %v453, %v447
    %646 = vmatprep.subr.bf16.mxu0 %v455
    %647 = vmatpush1.bf16.msra.mxu0 %v454
    %648 = vmatprep.subr.bf16.mxu0 %v461
    %649 = vmatpush1.bf16.msra.mxu0 %v460
    %650 = vmatprep.subr.bf16.mxu0 %v467
    %651 = vmatpush1.bf16.msra.mxu0 %v466
    %652 = vmatprep.subr.bf16.mxu0 %v473
    %653 = vmatpush1.bf16.msra.mxu0 %v472
    %654 = vmatprep.subr.bf16.mxu0 %v479
    %655 = vmatpush1.bf16.msra.mxu0 %v478
    %656 = vmatprep.subr.bf16.mxu0 %v485
    %657 = vmatpush1.bf16.msra.mxu0 %v484
    %658 = vmatprep.subr.bf16.mxu0 %v491
    %659 = vmatpush1.bf16.msra.mxu0 %v490
    %660 = vmatprep.subr.bf16.mxu0 %v497
    %661 = vmatpush1.bf16.msra.mxu0 %v496
    %662 = vmatprep.subr.bf16.mxu0 %v503
    %663 = vmatpush1.bf16.msra.mxu0 %v502
    %664 = vmatprep.subr.bf16.mxu0 %v509
    %665 = vmatpush1.bf16.msra.mxu0 %v508
    %666 = vmatprep.subr.bf16.mxu0 %v515
    %667 = vmatpush1.bf16.msra.mxu0 %v514
    %668 = vmatprep.subr.bf16.mxu0 %v521
    %669 = vmatpush1.bf16.msra.mxu0 %v520
    %670 = vmatprep.subr.bf16.mxu0 %v527
    %671 = vmatpush1.bf16.msra.mxu0 %v526
    %672 = vmatprep.subr.bf16.mxu0 %v533
    %673 = vmatpush1.bf16.msra.mxu0 %v532
    %674 = vmatprep.subr.bf16.mxu0 %v539
    %675 = vmatpush1.bf16.msra.mxu0 %v538
    %676 = vmatprep.subr.bf16.mxu0 %v545
    %677 = vmatpush1.bf16.msra.mxu0 %v544
    %678 = vmatprep.mubr.bf16.mxu0 %v37
    %679 = vmatmul.mubr.bf16.gmra.mrb[0].mxu0 %v36
    %v680 = vpop.f32.mrb[0].mxu0
    %v681 = vadd.f32 %v139, %v680
    %v682 = vpop.f32.mrb[0].mxu0
    %v683 = vadd.f32 %v143, %v682
    %v684 = vpop.f32.mrb[0].mxu0
    %v685 = vpop.f32.mrb[0].mxu0
    %686 = vdwg.mxu0
    %687 = vmatprep.subr.bf16.mxu0 %v457
    %688 = vmatpush1.bf16.msra.mxu0 %v456
    %689 = vmatprep.subr.bf16.mxu0 %v463
    %690 = vmatpush1.bf16.msra.mxu0 %v462
    %691 = vmatprep.subr.bf16.mxu0 %v469
    %692 = vmatpush1.bf16.msra.mxu0 %v468
    %693 = vmatprep.subr.bf16.mxu0 %v475
    %694 = vmatpush1.bf16.msra.mxu0 %v474
    %695 = vmatprep.subr.bf16.mxu0 %v481
    %696 = vmatpush1.bf16.msra.mxu0 %v480
    %697 = vmatprep.subr.bf16.mxu0 %v487
    %698 = vmatpush1.bf16.msra.mxu0 %v486
    %699 = vmatprep.subr.bf16.mxu0 %v493
    %700 = vmatpush1.bf16.msra.mxu0 %v492
    %701 = vmatprep.subr.bf16.mxu0 %v499
    %702 = vmatpush1.bf16.msra.mxu0 %v498
    %703 = vmatprep.subr.bf16.mxu0 %v505
    %704 = vmatpush1.bf16.msra.mxu0 %v504
    %705 = vmatprep.subr.bf16.mxu0 %v511
    %706 = vmatpush1.bf16.msra.mxu0 %v510
    %707 = vmatprep.subr.bf16.mxu0 %v517
    %708 = vmatpush1.bf16.msra.mxu0 %v516
    %709 = vmatprep.subr.bf16.mxu0 %v523
    %710 = vmatpush1.bf16.msra.mxu0 %v522
    %711 = vmatprep.subr.bf16.mxu0 %v529
    %712 = vmatpush1.bf16.msra.mxu0 %v528
    %713 = vmatprep.subr.bf16.mxu0 %v535
    %714 = vmatpush1.bf16.msra.mxu0 %v534
    %715 = vmatprep.subr.bf16.mxu0 %v541
    %716 = vmatpush1.bf16.msra.mxu0 %v540
    %717 = vmatprep.subr.bf16.mxu0 %v547
    %718 = vmatpush1.bf16.msra.mxu0 %v546
    %719 = vmatprep.mubr.bf16.mxu0 %v37
    %720 = vmatmul.mubr.bf16.gmra.mrb[0].mxu0 %v36
    %v721 = vpop.f32.mrb[0].mxu0
    %v722 = vadd.f32 %v147, %v721
    %v723 = vpop.f32.mrb[0].mxu0
    %v724 = vadd.f32 %v151, %v723
    %v725 = vpop.f32.mrb[0].mxu0
    %v726 = vpop.f32.mrb[0].mxu0
    %727 = vdwg.mxu0
    %728 = vmatprep.subr.bf16.mxu0 %v459
    %729 = vmatpush1.bf16.msra.mxu0 %v458
    %730 = vmatprep.subr.bf16.mxu0 %v465
    %731 = vmatpush1.bf16.msra.mxu0 %v464
    %732 = vmatprep.subr.bf16.mxu0 %v471
    %733 = vmatpush1.bf16.msra.mxu0 %v470
    %734 = vmatprep.subr.bf16.mxu0 %v477
    %735 = vmatpush1.bf16.msra.mxu0 %v476
    %736 = vmatprep.subr.bf16.mxu0 %v483
    %737 = vmatpush1.bf16.msra.mxu0 %v482
    %738 = vmatprep.subr.bf16.mxu0 %v489
    %739 = vmatpush1.bf16.msra.mxu0 %v488
    %740 = vmatprep.subr.bf16.mxu0 %v495
    %741 = vmatpush1.bf16.msra.mxu0 %v494
    %742 = vmatprep.subr.bf16.mxu0 %v501
    %743 = vmatpush1.bf16.msra.mxu0 %v500
    %744 = vmatprep.subr.bf16.mxu0 %v507
    %745 = vmatpush1.bf16.msra.mxu0 %v506
    %746 = vmatprep.subr.bf16.mxu0 %v513
    %747 = vmatpush1.bf16.msra.mxu0 %v512
    %748 = vmatprep.subr.bf16.mxu0 %v519
    %749 = vmatpush1.bf16.msra.mxu0 %v518
    %750 = vmatprep.subr.bf16.mxu0 %v525
    %751 = vmatpush1.bf16.msra.mxu0 %v524
    %752 = vmatprep.subr.bf16.mxu0 %v531
    %753 = vmatpush1.bf16.msra.mxu0 %v530
    %754 = vmatprep.subr.bf16.mxu0 %v537
    %755 = vmatpush1.bf16.msra.mxu0 %v536
    %756 = vmatprep.subr.bf16.mxu0 %v543
    %757 = vmatpush1.bf16.msra.mxu0 %v542
    %758 = vmatprep.subr.bf16.mxu0 %v549
    %759 = vmatpush1.bf16.msra.mxu0 %v548
    %760 = vmatprep.mubr.bf16.mxu0 %v37
    %761 = vmatmul.mubr.bf16.gmra.mrb[0].mxu0 %v36
    %v762 = vpop.f32.mrb[0].mxu0
    %v763 = vadd.f32 %v155, %v762
    %v764 = vpop.f32.mrb[0].mxu0
    %v765 = vadd.f32 %v159, %v764
    %v766 = vpop.f32.mrb[0].mxu0
    %v767 = vpop.f32.mrb[0].mxu0
    %768 = vdwg.mxu0
    %s769 = smul.u32 %s23, 6
    %s770 = smul.addr %s769, 2
    %s771 = scalar_lea.vmem %s0, %s770
    %v772 = vld [vmem:[%s771] sm:$0xff]
    %s773 = ssub.s32 7, %s23
    %s774 = smul.u32 %s773, 6
    %s775 = smul.addr %s774, 2
    %s776 = scalar_lea.vmem %s0, %s775
    %v777 = vld [vmem:[%s776] sm:$0xff]
    %v778 = vld [vmem:[%s776 + $0x8] sm:$0xf]
    %v779 = vadd.f32 %v772, %v681
    %v780 = vxor.u32 %v779, 2147483648
    %v781 = vmul.f32 %v780, 1.442695
    %v782 = vpow.pop %v781
    %v783 = vadd.f32 %v782, 1.0
    %v784 = vrcp.pop %v783
    %v785 = vmul.f32 1.0, %v784
    %v787 = vrot.slane %v772, 2
    %v789 = vadd.f32 %v787, %v683
    %v790 = vxor.u32 %v789, 2147483648
    %v791 = vmul.f32 %v790, 1.442695
    %v792 = vpow.pop %v791
    %v793 = vadd.f32 %v792, 1.0
    %v794 = vrcp.pop %v793
    %v795 = vmul.f32 1.0, %v794
    %v796 = vmul.f32 %v785, %v722
    %v797 = vrot.slane %v772, 4
    %v799 = vadd.f32 %v797, %v796
    %v800 = vtanh.pop %v799
    %v801 = vsub.f32 1.0, %v795
    %v802 = vmul.f32 %v801, %v800
    %v803 = vmul.f32 %v795, %v24
    %v804 = vadd.f32 %v802, %v803
    %v806 = vrot.slane %v777, 6
    %v808 = vadd.f32 %v806, %v724
    %v809 = vxor.u32 %v808, 2147483648
    %v810 = vmul.f32 %v809, 1.442695
    %v811 = vpow.pop %v810
    %v812 = vadd.f32 %v811, 1.0
    %v813 = vrcp.pop %v812
    %v814 = vmul.f32 1.0, %v813
    %v815 = vadd.f32 %v778, %v763
    %v816 = vxor.u32 %v815, 2147483648
    %v817 = vmul.f32 %v816, 1.442695
    %v818 = vpow.pop %v817
    %v819 = vadd.f32 %v818, 1.0
    %v820 = vrcp.pop %v819
    %v821 = vmul.f32 1.0, %v820
    %v822 = vmul.f32 %v814, %v765
    %v824 = vrot.slane %v778, 2
    %v826 = vadd.f32 %v824, %v822
    %v827 = vtanh.pop %v826
    %v828 = vsub.f32 1.0, %v821
    %v829 = vmul.f32 %v828, %v827
    %v830 = vrot.slane %v24, 2
    %v832 = vmul.f32 %v821, %v830
    %v833 = vadd.f32 %v829, %v832
    %834 = vst [vmem:[#allocation2] sm:$0x3] %v804
    %835 = vst [vmem:[#allocation2 + $0x2] sm:$0x3] %v833
    %s836 = smul.u32 %s23, 2
    %s837 = scalar_lea.vmem %s3, %s836
    %838 = vst [vmem:[%s837] sm:$0x3] %v804
    %s839 = smul.u32 %s773, 2
    %s840 = scalar_lea.vmem %s4, %s839
    %841 = vst [vmem:[%s840] sm:$0x3] %v833
    %s842 = sadd.s32 %s23, 1
    %v843 = vld [vmem:[#allocation2] sm:$0xf]
    %v846 = vunpack.c.l.s4 1983009808
    %v847 = vunpack.c.0.s8 %v846
    %v848 = vlaneseq
    %v849 = vshrl.u32 %v848, 7
    %v850 = vsub.s32 %v847, %v849
    %v851 = vrot.slane %v843, %v850
    %v852 = vcombine.high %v851, %v851
    %v855 = vpack.c.bf16 %v851, %v851
    %v856 = vpack.c.bf16 %v852, %v852
    %v857 = vld [vmem:[%s1] sm:$0xff]
    %v858 = vld [vmem:[%s1 + $0x8] sm:$0xff]
    %v859 = vld [vmem:[%s1 + $0x10] sm:$0xff]
    %v860 = vld [vmem:[%s1 + $0x18] sm:$0xff]
    %v861 = vld [vmem:[%s1 + $0x20] sm:$0xff]
    %v862 = vld [vmem:[%s1 + $0x28] sm:$0xff]
    %v863 = vld [vmem:[%s1 + $0x30] sm:$0xff]
    %v864 = vld [vmem:[%s1 + $0x38] sm:$0xff]
    %v865 = vld [vmem:[%s1 + $0x40] sm:$0xff]
    %v866 = vld [vmem:[%s1 + $0x48] sm:$0xff]
    %v867 = vld [vmem:[%s1 + $0x50] sm:$0xff]
    %v868 = vld [vmem:[%s1 + $0x58] sm:$0xff]
    %v869 = vld [vmem:[%s1 + $0x60] sm:$0xff]
    %v870 = vld [vmem:[%s1 + $0x68] sm:$0xff]
    %v871 = vld [vmem:[%s1 + $0x70] sm:$0xff]
    %v872 = vld [vmem:[%s1 + $0x78] sm:$0xff]
    %v873 = vld [vmem:[%s1 + $0x80] sm:$0xff]
    %v874 = vld [vmem:[%s1 + $0x88] sm:$0xff]
    %v875 = vld [vmem:[%s1 + $0x90] sm:$0xff]
    %v876 = vld [vmem:[%s1 + $0x98] sm:$0xff]
    %v877 = vld [vmem:[%s1 + $0xa0] sm:$0xff]
    %v878 = vld [vmem:[%s1 + $0xa8] sm:$0xff]
    %v879 = vld [vmem:[%s1 + $0xb0] sm:$0xff]
    %v880 = vld [vmem:[%s1 + $0xb8] sm:$0xff]
    %v881 = vld [vmem:[%s1 + $0xc0] sm:$0xff]
    %v882 = vld [vmem:[%s1 + $0xc8] sm:$0xff]
    %v883 = vld [vmem:[%s1 + $0xd0] sm:$0xff]
    %v884 = vld [vmem:[%s1 + $0xd8] sm:$0xff]
    %v885 = vld [vmem:[%s1 + $0xe0] sm:$0xff]
    %v886 = vld [vmem:[%s1 + $0xe8] sm:$0xff]
    %v887 = vld [vmem:[%s1 + $0xf0] sm:$0xff]
    %v888 = vld [vmem:[%s1 + $0xf8] sm:$0xff]
    %v889 = vld [vmem:[%s1 + $0x100] sm:$0xff]
    %v890 = vld [vmem:[%s1 + $0x108] sm:$0xff]
    %v891 = vld [vmem:[%s1 + $0x110] sm:$0xff]
    %v892 = vld [vmem:[%s1 + $0x118] sm:$0xff]
    %v893 = vld [vmem:[%s1 + $0x120] sm:$0xff]
    %v894 = vld [vmem:[%s1 + $0x128] sm:$0xff]
    %v895 = vld [vmem:[%s1 + $0x130] sm:$0xff]
    %v896 = vld [vmem:[%s1 + $0x138] sm:$0xff]
    %v897 = vld [vmem:[%s1 + $0x140] sm:$0xff]
    %v898 = vld [vmem:[%s1 + $0x148] sm:$0xff]
    %v899 = vld [vmem:[%s1 + $0x150] sm:$0xff]
    %v900 = vld [vmem:[%s1 + $0x158] sm:$0xff]
    %v901 = vld [vmem:[%s1 + $0x160] sm:$0xff]
    %v902 = vld [vmem:[%s1 + $0x168] sm:$0xff]
    %v903 = vld [vmem:[%s1 + $0x170] sm:$0xff]
    %v904 = vld [vmem:[%s1 + $0x178] sm:$0xff]
    %v905 = vld [vmem:[%s1 + $0x180] sm:$0xff]
    %v906 = vld [vmem:[%s1 + $0x188] sm:$0xff]
    %v907 = vld [vmem:[%s1 + $0x190] sm:$0xff]
    %v908 = vld [vmem:[%s1 + $0x198] sm:$0xff]
    %v909 = vld [vmem:[%s1 + $0x1a0] sm:$0xff]
    %v910 = vld [vmem:[%s1 + $0x1a8] sm:$0xff]
    %v911 = vld [vmem:[%s1 + $0x1b0] sm:$0xff]
    %v912 = vld [vmem:[%s1 + $0x1b8] sm:$0xff]
    %v913 = vld [vmem:[%s1 + $0x1c0] sm:$0xff]
    %v914 = vld [vmem:[%s1 + $0x1c8] sm:$0xff]
    %v915 = vld [vmem:[%s1 + $0x1d0] sm:$0xff]
    %v916 = vld [vmem:[%s1 + $0x1d8] sm:$0xff]
    %v917 = vld [vmem:[%s1 + $0x1e0] sm:$0xff]
    %v918 = vld [vmem:[%s1 + $0x1e8] sm:$0xff]
    %v919 = vld [vmem:[%s1 + $0x1f0] sm:$0xff]
    %v920 = vld [vmem:[%s1 + $0x1f8] sm:$0xff]
    %v921 = vld [vmem:[%s1 + $0x200] sm:$0xff]
    %v922 = vld [vmem:[%s1 + $0x208] sm:$0xff]
    %v923 = vld [vmem:[%s1 + $0x210] sm:$0xff]
    %v924 = vld [vmem:[%s1 + $0x218] sm:$0xff]
    %v925 = vld [vmem:[%s1 + $0x220] sm:$0xff]
    %v926 = vld [vmem:[%s1 + $0x228] sm:$0xff]
    %v927 = vld [vmem:[%s1 + $0x230] sm:$0xff]
    %v928 = vld [vmem:[%s1 + $0x238] sm:$0xff]
    %v929 = vld [vmem:[%s1 + $0x240] sm:$0xff]
    %v930 = vld [vmem:[%s1 + $0x248] sm:$0xff]
    %v931 = vld [vmem:[%s1 + $0x250] sm:$0xff]
    %v932 = vld [vmem:[%s1 + $0x258] sm:$0xff]
    %v933 = vld [vmem:[%s1 + $0x260] sm:$0xff]
    %v934 = vld [vmem:[%s1 + $0x268] sm:$0xff]
    %v935 = vld [vmem:[%s1 + $0x270] sm:$0xff]
    %v936 = vld [vmem:[%s1 + $0x278] sm:$0xff]
    %v937 = vld [vmem:[%s1 + $0x280] sm:$0xff]
    %v938 = vld [vmem:[%s1 + $0x288] sm:$0xff]
    %v939 = vld [vmem:[%s1 + $0x290] sm:$0xff]
    %v940 = vld [vmem:[%s1 + $0x298] sm:$0xff]
    %v941 = vld [vmem:[%s1 + $0x2a0] sm:$0xff]
    %v942 = vld [vmem:[%s1 + $0x2a8] sm:$0xff]
    %v943 = vld [vmem:[%s1 + $0x2b0] sm:$0xff]
    %v944 = vld [vmem:[%s1 + $0x2b8] sm:$0xff]
    %v945 = vld [vmem:[%s1 + $0x2c0] sm:$0xff]
    %v946 = vld [vmem:[%s1 + $0x2c8] sm:$0xff]
    %v947 = vld [vmem:[%s1 + $0x2d0] sm:$0xff]
    %v948 = vld [vmem:[%s1 + $0x2d8] sm:$0xff]
    %v949 = vld [vmem:[%s1 + $0x2e0] sm:$0xff]
    %v950 = vld [vmem:[%s1 + $0x2e8] sm:$0xff]
    %v951 = vld [vmem:[%s1 + $0x2f0] sm:$0xff]
    %v952 = vld [vmem:[%s1 + $0x2f8] sm:$0xff]
    %v953 = vld [vmem:[%s2] sm:$0x3f]
    %v955 = vlaneseq
    %v956 = vshrl.u32 %v955, 7
    %v957 = vsub.s32 0, %v956
    %v958 = vrot.slane %v953, %v957
    %v959 = vlaneseq
    %v960 = vshrl.u32 %v959, 7
    %v961 = vsub.s32 1, %v960
    %v962 = vrot.slane %v953, %v961
    %v963 = vlaneseq
    %v964 = vshrl.u32 %v963, 7
    %v965 = vsub.s32 2, %v964
    %v966 = vrot.slane %v953, %v965
    %v967 = vlaneseq
    %v968 = vshrl.u32 %v967, 7
    %v969 = vsub.s32 3, %v968
    %v970 = vrot.slane %v953, %v969
    %v971 = vlaneseq
    %v972 = vshrl.u32 %v971, 7
    %v973 = vsub.s32 4, %v972
    %v974 = vrot.slane %v953, %v973
    %v975 = vlaneseq
    %v976 = vshrl.u32 %v975, 7
    %v977 = vsub.s32 5, %v976
    %v978 = vrot.slane %v953, %v977
    %v1081 = vunpack.c.l.b16 %v857
    %v1082 = vunpack.c.h.b16 %v857
    %v1083 = vunpack.c.l.b16 %v858
    %v1084 = vunpack.c.h.b16 %v858
    %v1085 = vunpack.c.l.b16 %v859
    %v1086 = vunpack.c.h.b16 %v859
    %v1087 = vunpack.c.l.b16 %v860
    %v1088 = vunpack.c.h.b16 %v860
    %v1089 = vunpack.c.l.b16 %v861
    %v1090 = vunpack.c.h.b16 %v861
    %v1091 = vunpack.c.l.b16 %v862
    %v1092 = vunpack.c.h.b16 %v862
    %v1093 = vunpack.c.l.b16 %v863
    %v1094 = vunpack.c.h.b16 %v863
    %v1095 = vunpack.c.l.b16 %v864
    %v1096 = vunpack.c.h.b16 %v864
    %v1097 = vunpack.c.l.b16 %v865
    %v1098 = vunpack.c.h.b16 %v865
    %v1099 = vunpack.c.l.b16 %v866
    %v1100 = vunpack.c.h.b16 %v866
    %v1101 = vunpack.c.l.b16 %v867
    %v1102 = vunpack.c.h.b16 %v867
    %v1103 = vunpack.c.l.b16 %v868
    %v1104 = vunpack.c.h.b16 %v868
    %v1105 = vunpack.c.l.b16 %v869
    %v1106 = vunpack.c.h.b16 %v869
    %v1107 = vunpack.c.l.b16 %v870
    %v1108 = vunpack.c.h.b16 %v870
    %v1109 = vunpack.c.l.b16 %v871
    %v1110 = vunpack.c.h.b16 %v871
    %v1111 = vunpack.c.l.b16 %v872
    %v1112 = vunpack.c.h.b16 %v872
    %v1113 = vunpack.c.l.b16 %v873
    %v1114 = vunpack.c.h.b16 %v873
    %v1115 = vunpack.c.l.b16 %v874
    %v1116 = vunpack.c.h.b16 %v874
    %v1117 = vunpack.c.l.b16 %v875
    %v1118 = vunpack.c.h.b16 %v875
    %v1119 = vunpack.c.l.b16 %v876
    %v1120 = vunpack.c.h.b16 %v876
    %v1121 = vunpack.c.l.b16 %v877
    %v1122 = vunpack.c.h.b16 %v877
    %v1123 = vunpack.c.l.b16 %v878
    %v1124 = vunpack.c.h.b16 %v878
    %v1125 = vunpack.c.l.b16 %v879
    %v1126 = vunpack.c.h.b16 %v879
    %v1127 = vunpack.c.l.b16 %v880
    %v1128 = vunpack.c.h.b16 %v880
    %v1129 = vunpack.c.l.b16 %v881
    %v1130 = vunpack.c.h.b16 %v881
    %v1131 = vunpack.c.l.b16 %v882
    %v1132 = vunpack.c.h.b16 %v882
    %v1133 = vunpack.c.l.b16 %v883
    %v1134 = vunpack.c.h.b16 %v883
    %v1135 = vunpack.c.l.b16 %v884
    %v1136 = vunpack.c.h.b16 %v884
    %v1137 = vunpack.c.l.b16 %v885
    %v1138 = vunpack.c.h.b16 %v885
    %v1139 = vunpack.c.l.b16 %v886
    %v1140 = vunpack.c.h.b16 %v886
    %v1141 = vunpack.c.l.b16 %v887
    %v1142 = vunpack.c.h.b16 %v887
    %v1143 = vunpack.c.l.b16 %v888
    %v1144 = vunpack.c.h.b16 %v888
    %v1145 = vunpack.c.l.b16 %v889
    %v1146 = vunpack.c.h.b16 %v889
    %v1147 = vunpack.c.l.b16 %v890
    %v1148 = vunpack.c.h.b16 %v890
    %v1149 = vunpack.c.l.b16 %v891
    %v1150 = vunpack.c.h.b16 %v891
    %v1151 = vunpack.c.l.b16 %v892
    %v1152 = vunpack.c.h.b16 %v892
    %v1153 = vunpack.c.l.b16 %v893
    %v1154 = vunpack.c.h.b16 %v893
    %v1155 = vunpack.c.l.b16 %v894
    %v1156 = vunpack.c.h.b16 %v894
    %v1157 = vunpack.c.l.b16 %v895
    %v1158 = vunpack.c.h.b16 %v895
    %v1159 = vunpack.c.l.b16 %v896
    %v1160 = vunpack.c.h.b16 %v896
    %v1161 = vunpack.c.l.b16 %v897
    %v1162 = vunpack.c.h.b16 %v897
    %v1163 = vunpack.c.l.b16 %v898
    %v1164 = vunpack.c.h.b16 %v898
    %v1165 = vunpack.c.l.b16 %v899
    %v1166 = vunpack.c.h.b16 %v899
    %v1167 = vunpack.c.l.b16 %v900
    %v1168 = vunpack.c.h.b16 %v900
    %v1169 = vunpack.c.l.b16 %v901
    %v1170 = vunpack.c.h.b16 %v901
    %v1171 = vunpack.c.l.b16 %v902
    %v1172 = vunpack.c.h.b16 %v902
    %v1173 = vunpack.c.l.b16 %v903
    %v1174 = vunpack.c.h.b16 %v903
    %v1175 = vunpack.c.l.b16 %v904
    %v1176 = vunpack.c.h.b16 %v904
    %v1177 = vunpack.c.l.b16 %v905
    %v1178 = vunpack.c.h.b16 %v905
    %v1179 = vunpack.c.l.b16 %v906
    %v1180 = vunpack.c.h.b16 %v906
    %v1181 = vunpack.c.l.b16 %v907
    %v1182 = vunpack.c.h.b16 %v907
    %v1183 = vunpack.c.l.b16 %v908
    %v1184 = vunpack.c.h.b16 %v908
    %v1185 = vunpack.c.l.b16 %v909
    %v1186 = vunpack.c.h.b16 %v909
    %v1187 = vunpack.c.l.b16 %v910
    %v1188 = vunpack.c.h.b16 %v910
    %v1189 = vunpack.c.l.b16 %v911
    %v1190 = vunpack.c.h.b16 %v911
    %v1191 = vunpack.c.l.b16 %v912
    %v1192 = vunpack.c.h.b16 %v912
    %v1193 = vunpack.c.l.b16 %v913
    %v1194 = vunpack.c.h.b16 %v913
    %v1195 = vunpack.c.l.b16 %v914
    %v1196 = vunpack.c.h.b16 %v914
    %v1197 = vunpack.c.l.b16 %v915
    %v1198 = vunpack.c.h.b16 %v915
    %v1199 = vunpack.c.l.b16 %v916
    %v1200 = vunpack.c.h.b16 %v916
    %v1201 = vunpack.c.l.b16 %v917
    %v1202 = vunpack.c.h.b16 %v917
    %v1203 = vunpack.c.l.b16 %v918
    %v1204 = vunpack.c.h.b16 %v918
    %v1205 = vunpack.c.l.b16 %v919
    %v1206 = vunpack.c.h.b16 %v919
    %v1207 = vunpack.c.l.b16 %v920
    %v1208 = vunpack.c.h.b16 %v920
    %v1209 = vunpack.c.l.b16 %v921
    %v1210 = vunpack.c.h.b16 %v921
    %v1211 = vunpack.c.l.b16 %v922
    %v1212 = vunpack.c.h.b16 %v922
    %v1213 = vunpack.c.l.b16 %v923
    %v1214 = vunpack.c.h.b16 %v923
    %v1215 = vunpack.c.l.b16 %v924
    %v1216 = vunpack.c.h.b16 %v924
    %v1217 = vunpack.c.l.b16 %v925
    %v1218 = vunpack.c.h.b16 %v925
    %v1219 = vunpack.c.l.b16 %v926
    %v1220 = vunpack.c.h.b16 %v926
    %v1221 = vunpack.c.l.b16 %v927
    %v1222 = vunpack.c.h.b16 %v927
    %v1223 = vunpack.c.l.b16 %v928
    %v1224 = vunpack.c.h.b16 %v928
    %v1225 = vunpack.c.l.b16 %v929
    %v1226 = vunpack.c.h.b16 %v929
    %v1227 = vunpack.c.l.b16 %v930
    %v1228 = vunpack.c.h.b16 %v930
    %v1229 = vunpack.c.l.b16 %v931
    %v1230 = vunpack.c.h.b16 %v931
    %v1231 = vunpack.c.l.b16 %v932
    %v1232 = vunpack.c.h.b16 %v932
    %v1233 = vunpack.c.l.b16 %v933
    %v1234 = vunpack.c.h.b16 %v933
    %v1235 = vunpack.c.l.b16 %v934
    %v1236 = vunpack.c.h.b16 %v934
    %v1237 = vunpack.c.l.b16 %v935
    %v1238 = vunpack.c.h.b16 %v935
    %v1239 = vunpack.c.l.b16 %v936
    %v1240 = vunpack.c.h.b16 %v936
    %v1241 = vunpack.c.l.b16 %v937
    %v1242 = vunpack.c.h.b16 %v937
    %v1243 = vunpack.c.l.b16 %v938
    %v1244 = vunpack.c.h.b16 %v938
    %v1245 = vunpack.c.l.b16 %v939
    %v1246 = vunpack.c.h.b16 %v939
    %v1247 = vunpack.c.l.b16 %v940
    %v1248 = vunpack.c.h.b16 %v940
    %v1249 = vunpack.c.l.b16 %v941
    %v1250 = vunpack.c.h.b16 %v941
    %v1251 = vunpack.c.l.b16 %v942
    %v1252 = vunpack.c.h.b16 %v942
    %v1253 = vunpack.c.l.b16 %v943
    %v1254 = vunpack.c.h.b16 %v943
    %v1255 = vunpack.c.l.b16 %v944
    %v1256 = vunpack.c.h.b16 %v944
    %v1257 = vunpack.c.l.b16 %v945
    %v1258 = vunpack.c.h.b16 %v945
    %v1259 = vunpack.c.l.b16 %v946
    %v1260 = vunpack.c.h.b16 %v946
    %v1261 = vunpack.c.l.b16 %v947
    %v1262 = vunpack.c.h.b16 %v947
    %v1263 = vunpack.c.l.b16 %v948
    %v1264 = vunpack.c.h.b16 %v948
    %v1265 = vunpack.c.l.b16 %v949
    %v1266 = vunpack.c.h.b16 %v949
    %v1267 = vunpack.c.l.b16 %v950
    %v1268 = vunpack.c.h.b16 %v950
    %v1269 = vunpack.c.l.b16 %v951
    %v1270 = vunpack.c.h.b16 %v951
    %v1271 = vunpack.c.l.b16 %v952
    %v1272 = vunpack.c.h.b16 %v952
    %v1273 = vpack.c.b16 %v1087, %v1081
    %v1274 = vpack.c.b16 %v1088, %v1082
    %v1275 = vpack.c.b16 %v1089, %v1083
    %v1276 = vpack.c.b16 %v1090, %v1084
    %v1277 = vpack.c.b16 %v1091, %v1085
    %v1278 = vpack.c.b16 %v1092, %v1086
    %v1279 = vpack.c.b16 %v1099, %v1093
    %v1280 = vpack.c.b16 %v1100, %v1094
    %v1281 = vpack.c.b16 %v1101, %v1095
    %v1282 = vpack.c.b16 %v1102, %v1096
    %v1283 = vpack.c.b16 %v1103, %v1097
    %v1284 = vpack.c.b16 %v1104, %v1098
    %v1285 = vpack.c.b16 %v1111, %v1105
    %v1286 = vpack.c.b16 %v1112, %v1106
    %v1287 = vpack.c.b16 %v1113, %v1107
    %v1288 = vpack.c.b16 %v1114, %v1108
    %v1289 = vpack.c.b16 %v1115, %v1109
    %v1290 = vpack.c.b16 %v1116, %v1110
    %v1291 = vpack.c.b16 %v1123, %v1117
    %v1292 = vpack.c.b16 %v1124, %v1118
    %v1293 = vpack.c.b16 %v1125, %v1119
    %v1294 = vpack.c.b16 %v1126, %v1120
    %v1295 = vpack.c.b16 %v1127, %v1121
    %v1296 = vpack.c.b16 %v1128, %v1122
    %v1297 = vpack.c.b16 %v1135, %v1129
    %v1298 = vpack.c.b16 %v1136, %v1130
    %v1299 = vpack.c.b16 %v1137, %v1131
    %v1300 = vpack.c.b16 %v1138, %v1132
    %v1301 = vpack.c.b16 %v1139, %v1133
    %v1302 = vpack.c.b16 %v1140, %v1134
    %v1303 = vpack.c.b16 %v1147, %v1141
    %v1304 = vpack.c.b16 %v1148, %v1142
    %v1305 = vpack.c.b16 %v1149, %v1143
    %v1306 = vpack.c.b16 %v1150, %v1144
    %v1307 = vpack.c.b16 %v1151, %v1145
    %v1308 = vpack.c.b16 %v1152, %v1146
    %v1309 = vpack.c.b16 %v1159, %v1153
    %v1310 = vpack.c.b16 %v1160, %v1154
    %v1311 = vpack.c.b16 %v1161, %v1155
    %v1312 = vpack.c.b16 %v1162, %v1156
    %v1313 = vpack.c.b16 %v1163, %v1157
    %v1314 = vpack.c.b16 %v1164, %v1158
    %v1315 = vpack.c.b16 %v1171, %v1165
    %v1316 = vpack.c.b16 %v1172, %v1166
    %v1317 = vpack.c.b16 %v1173, %v1167
    %v1318 = vpack.c.b16 %v1174, %v1168
    %v1319 = vpack.c.b16 %v1175, %v1169
    %v1320 = vpack.c.b16 %v1176, %v1170
    %v1321 = vpack.c.b16 %v1183, %v1177
    %v1322 = vpack.c.b16 %v1184, %v1178
    %v1323 = vpack.c.b16 %v1185, %v1179
    %v1324 = vpack.c.b16 %v1186, %v1180
    %v1325 = vpack.c.b16 %v1187, %v1181
    %v1326 = vpack.c.b16 %v1188, %v1182
    %v1327 = vpack.c.b16 %v1195, %v1189
    %v1328 = vpack.c.b16 %v1196, %v1190
    %v1329 = vpack.c.b16 %v1197, %v1191
    %v1330 = vpack.c.b16 %v1198, %v1192
    %v1331 = vpack.c.b16 %v1199, %v1193
    %v1332 = vpack.c.b16 %v1200, %v1194
    %v1333 = vpack.c.b16 %v1207, %v1201
    %v1334 = vpack.c.b16 %v1208, %v1202
    %v1335 = vpack.c.b16 %v1209, %v1203
    %v1336 = vpack.c.b16 %v1210, %v1204
    %v1337 = vpack.c.b16 %v1211, %v1205
    %v1338 = vpack.c.b16 %v1212, %v1206
    %v1339 = vpack.c.b16 %v1219, %v1213
    %v1340 = vpack.c.b16 %v1220, %v1214
    %v1341 = vpack.c.b16 %v1221, %v1215
    %v1342 = vpack.c.b16 %v1222, %v1216
    %v1343 = vpack.c.b16 %v1223, %v1217
    %v1344 = vpack.c.b16 %v1224, %v1218
    %v1345 = vpack.c.b16 %v1231, %v1225
    %v1346 = vpack.c.b16 %v1232, %v1226
    %v1347 = vpack.c.b16 %v1233, %v1227
    %v1348 = vpack.c.b16 %v1234, %v1228
    %v1349 = vpack.c.b16 %v1235, %v1229
    %v1350 = vpack.c.b16 %v1236, %v1230
    %v1351 = vpack.c.b16 %v1243, %v1237
    %v1352 = vpack.c.b16 %v1244, %v1238
    %v1353 = vpack.c.b16 %v1245, %v1239
    %v1354 = vpack.c.b16 %v1246, %v1240
    %v1355 = vpack.c.b16 %v1247, %v1241
    %v1356 = vpack.c.b16 %v1248, %v1242
    %v1357 = vpack.c.b16 %v1255, %v1249
    %v1358 = vpack.c.b16 %v1256, %v1250
    %v1359 = vpack.c.b16 %v1257, %v1251
    %v1360 = vpack.c.b16 %v1258, %v1252
    %v1361 = vpack.c.b16 %v1259, %v1253
    %v1362 = vpack.c.b16 %v1260, %v1254
    %v1363 = vpack.c.b16 %v1267, %v1261
    %v1364 = vpack.c.b16 %v1268, %v1262
    %v1365 = vpack.c.b16 %v1269, %v1263
    %v1366 = vpack.c.b16 %v1270, %v1264
    %v1367 = vpack.c.b16 %v1271, %v1265
    %v1368 = vpack.c.b16 %v1272, %v1266
    %1465 = vmatprep.subr.bf16.mxu0 %v1274
    %1466 = vmatpush1.bf16.msra.mxu0 %v1273
    %1467 = vmatprep.subr.bf16.mxu0 %v1280
    %1468 = vmatpush1.bf16.msra.mxu0 %v1279
    %1469 = vmatprep.subr.bf16.mxu0 %v1286
    %1470 = vmatpush1.bf16.msra.mxu0 %v1285
    %1471 = vmatprep.subr.bf16.mxu0 %v1292
    %1472 = vmatpush1.bf16.msra.mxu0 %v1291
    %1473 = vmatprep.subr.bf16.mxu0 %v1298
    %1474 = vmatpush1.bf16.msra.mxu0 %v1297
    %1475 = vmatprep.subr.bf16.mxu0 %v1304
    %1476 = vmatpush1.bf16.msra.mxu0 %v1303
    %1477 = vmatprep.subr.bf16.mxu0 %v1310
    %1478 = vmatpush1.bf16.msra.mxu0 %v1309
    %1479 = vmatprep.subr.bf16.mxu0 %v1316
    %1480 = vmatpush1.bf16.msra.mxu0 %v1315
    %1481 = vmatprep.subr.bf16.mxu0 %v1322
    %1482 = vmatpush1.bf16.msra.mxu0 %v1321
    %1483 = vmatprep.subr.bf16.mxu0 %v1328
    %1484 = vmatpush1.bf16.msra.mxu0 %v1327
    %1485 = vmatprep.subr.bf16.mxu0 %v1334
    %1486 = vmatpush1.bf16.msra.mxu0 %v1333
    %1487 = vmatprep.subr.bf16.mxu0 %v1340
    %1488 = vmatpush1.bf16.msra.mxu0 %v1339
    %1489 = vmatprep.subr.bf16.mxu0 %v1346
    %1490 = vmatpush1.bf16.msra.mxu0 %v1345
    %1491 = vmatprep.subr.bf16.mxu0 %v1352
    %1492 = vmatpush1.bf16.msra.mxu0 %v1351
    %1493 = vmatprep.subr.bf16.mxu0 %v1358
    %1494 = vmatpush1.bf16.msra.mxu0 %v1357
    %1495 = vmatprep.subr.bf16.mxu0 %v1364
    %1496 = vmatpush1.bf16.msra.mxu0 %v1363
    %1497 = vmatprep.mubr.bf16.mxu0 %v856
    %1498 = vmatmul.mubr.bf16.gmra.mrb[0].mxu0 %v855
    %v1499 = vpop.f32.mrb[0].mxu0
    %v1500 = vadd.f32 %v958, %v1499
    %v1501 = vpop.f32.mrb[0].mxu0
    %v1502 = vadd.f32 %v962, %v1501
    %v1503 = vpop.f32.mrb[0].mxu0
    %v1504 = vpop.f32.mrb[0].mxu0
    %1505 = vdwg.mxu0
    %1506 = vmatprep.subr.bf16.mxu0 %v1276
    %1507 = vmatpush1.bf16.msra.mxu0 %v1275
    %1508 = vmatprep.subr.bf16.mxu0 %v1282
    %1509 = vmatpush1.bf16.msra.mxu0 %v1281
    %1510 = vmatprep.subr.bf16.mxu0 %v1288
    %1511 = vmatpush1.bf16.msra.mxu0 %v1287
    %1512 = vmatprep.subr.bf16.mxu0 %v1294
    %1513 = vmatpush1.bf16.msra.mxu0 %v1293
    %1514 = vmatprep.subr.bf16.mxu0 %v1300
    %1515 = vmatpush1.bf16.msra.mxu0 %v1299
    %1516 = vmatprep.subr.bf16.mxu0 %v1306
    %1517 = vmatpush1.bf16.msra.mxu0 %v1305
    %1518 = vmatprep.subr.bf16.mxu0 %v1312
    %1519 = vmatpush1.bf16.msra.mxu0 %v1311
    %1520 = vmatprep.subr.bf16.mxu0 %v1318
    %1521 = vmatpush1.bf16.msra.mxu0 %v1317
    %1522 = vmatprep.subr.bf16.mxu0 %v1324
    %1523 = vmatpush1.bf16.msra.mxu0 %v1323
    %1524 = vmatprep.subr.bf16.mxu0 %v1330
    %1525 = vmatpush1.bf16.msra.mxu0 %v1329
    %1526 = vmatprep.subr.bf16.mxu0 %v1336
    %1527 = vmatpush1.bf16.msra.mxu0 %v1335
    %1528 = vmatprep.subr.bf16.mxu0 %v1342
    %1529 = vmatpush1.bf16.msra.mxu0 %v1341
    %1530 = vmatprep.subr.bf16.mxu0 %v1348
    %1531 = vmatpush1.bf16.msra.mxu0 %v1347
    %1532 = vmatprep.subr.bf16.mxu0 %v1354
    %1533 = vmatpush1.bf16.msra.mxu0 %v1353
    %1534 = vmatprep.subr.bf16.mxu0 %v1360
    %1535 = vmatpush1.bf16.msra.mxu0 %v1359
    %1536 = vmatprep.subr.bf16.mxu0 %v1366
    %1537 = vmatpush1.bf16.msra.mxu0 %v1365
    %1538 = vmatprep.mubr.bf16.mxu0 %v856
    %1539 = vmatmul.mubr.bf16.gmra.mrb[0].mxu0 %v855
    %v1540 = vpop.f32.mrb[0].mxu0
    %v1541 = vadd.f32 %v966, %v1540
    %v1542 = vpop.f32.mrb[0].mxu0
    %v1543 = vadd.f32 %v970, %v1542
    %v1544 = vpop.f32.mrb[0].mxu0
    %v1545 = vpop.f32.mrb[0].mxu0
    %1546 = vdwg.mxu0
    %1547 = vmatprep.subr.bf16.mxu0 %v1278
    %1548 = vmatpush1.bf16.msra.mxu0 %v1277
    %1549 = vmatprep.subr.bf16.mxu0 %v1284
    %1550 = vmatpush1.bf16.msra.mxu0 %v1283
    %1551 = vmatprep.subr.bf16.mxu0 %v1290
    %1552 = vmatpush1.bf16.msra.mxu0 %v1289
    %1553 = vmatprep.subr.bf16.mxu0 %v1296
    %1554 = vmatpush1.bf16.msra.mxu0 %v1295
    %1555 = vmatprep.subr.bf16.mxu0 %v1302
    %1556 = vmatpush1.bf16.msra.mxu0 %v1301
    %1557 = vmatprep.subr.bf16.mxu0 %v1308
    %1558 = vmatpush1.bf16.msra.mxu0 %v1307
    %1559 = vmatprep.subr.bf16.mxu0 %v1314
    %1560 = vmatpush1.bf16.msra.mxu0 %v1313
    %1561 = vmatprep.subr.bf16.mxu0 %v1320
    %1562 = vmatpush1.bf16.msra.mxu0 %v1319
    %1563 = vmatprep.subr.bf16.mxu0 %v1326
    %1564 = vmatpush1.bf16.msra.mxu0 %v1325
    %1565 = vmatprep.subr.bf16.mxu0 %v1332
    %1566 = vmatpush1.bf16.msra.mxu0 %v1331
    %1567 = vmatprep.subr.bf16.mxu0 %v1338
    %1568 = vmatpush1.bf16.msra.mxu0 %v1337
    %1569 = vmatprep.subr.bf16.mxu0 %v1344
    %1570 = vmatpush1.bf16.msra.mxu0 %v1343
    %1571 = vmatprep.subr.bf16.mxu0 %v1350
    %1572 = vmatpush1.bf16.msra.mxu0 %v1349
    %1573 = vmatprep.subr.bf16.mxu0 %v1356
    %1574 = vmatpush1.bf16.msra.mxu0 %v1355
    %1575 = vmatprep.subr.bf16.mxu0 %v1362
    %1576 = vmatpush1.bf16.msra.mxu0 %v1361
    %1577 = vmatprep.subr.bf16.mxu0 %v1368
    %1578 = vmatpush1.bf16.msra.mxu0 %v1367
    %1579 = vmatprep.mubr.bf16.mxu0 %v856
    %1580 = vmatmul.mubr.bf16.gmra.mrb[0].mxu0 %v855
    %v1581 = vpop.f32.mrb[0].mxu0
    %v1582 = vadd.f32 %v974, %v1581
    %v1583 = vpop.f32.mrb[0].mxu0
    %v1584 = vadd.f32 %v978, %v1583
    %v1585 = vpop.f32.mrb[0].mxu0
    %v1586 = vpop.f32.mrb[0].mxu0
    %1587 = vdwg.mxu0
    %s1588 = smul.u32 %s842, 6
    %s1589 = smul.addr %s1588, 2
    %s1590 = scalar_lea.vmem %s0, %s1589
    %v1591 = vld [vmem:[%s1590] sm:$0xff]
    %s1592 = ssub.s32 6, %s23
    %s1593 = smul.u32 %s1592, 6
    %s1594 = smul.addr %s1593, 2
    %s1595 = scalar_lea.vmem %s0, %s1594
    %v1596 = vld [vmem:[%s1595] sm:$0xff]
    %v1597 = vld [vmem:[%s1595 + $0x8] sm:$0xf]
    %v1598 = vadd.f32 %v1591, %v1500
    %v1599 = vxor.u32 %v1598, 2147483648
    %v1600 = vmul.f32 %v1599, 1.442695
    %v1601 = vpow.pop %v1600
    %v1602 = vadd.f32 %v1601, 1.0
    %v1603 = vrcp.pop %v1602
    %v1604 = vmul.f32 1.0, %v1603
    %v1606 = vrot.slane %v1591, 2
    %v1608 = vadd.f32 %v1606, %v1502
    %v1609 = vxor.u32 %v1608, 2147483648
    %v1610 = vmul.f32 %v1609, 1.442695
    %v1611 = vpow.pop %v1610
    %v1612 = vadd.f32 %v1611, 1.0
    %v1613 = vrcp.pop %v1612
    %v1614 = vmul.f32 1.0, %v1613
    %v1615 = vmul.f32 %v1604, %v1541
    %v1616 = vrot.slane %v1591, 4
    %v1618 = vadd.f32 %v1616, %v1615
    %v1619 = vtanh.pop %v1618
    %v1620 = vsub.f32 1.0, %v1614
    %v1621 = vmul.f32 %v1620, %v1619
    %v1622 = vmul.f32 %v1614, %v843
    %v1623 = vadd.f32 %v1621, %v1622
    %v1625 = vrot.slane %v1596, 6
    %v1627 = vadd.f32 %v1625, %v1543
    %v1628 = vxor.u32 %v1627, 2147483648
    %v1629 = vmul.f32 %v1628, 1.442695
    %v1630 = vpow.pop %v1629
    %v1631 = vadd.f32 %v1630, 1.0
    %v1632 = vrcp.pop %v1631
    %v1633 = vmul.f32 1.0, %v1632
    %v1634 = vadd.f32 %v1597, %v1582
    %v1635 = vxor.u32 %v1634, 2147483648
    %v1636 = vmul.f32 %v1635, 1.442695
    %v1637 = vpow.pop %v1636
    %v1638 = vadd.f32 %v1637, 1.0
    %v1639 = vrcp.pop %v1638
    %v1640 = vmul.f32 1.0, %v1639
    %v1641 = vmul.f32 %v1633, %v1584
    %v1643 = vrot.slane %v1597, 2
    %v1645 = vadd.f32 %v1643, %v1641
    %v1646 = vtanh.pop %v1645
    %v1647 = vsub.f32 1.0, %v1640
    %v1648 = vmul.f32 %v1647, %v1646
    %v1649 = vrot.slane %v843, 2
    %v1651 = vmul.f32 %v1640, %v1649
    %v1652 = vadd.f32 %v1648, %v1651
    %1653 = vst [vmem:[#allocation2] sm:$0x3] %v1623
    %1654 = vst [vmem:[#allocation2 + $0x2] sm:$0x3] %v1652
    %s1655 = smul.u32 %s842, 2
    %s1656 = scalar_lea.vmem %s3, %s1655
    %1657 = vst [vmem:[%s1656] sm:$0x3] %v1623
    %s1658 = smul.u32 %s1592, 2
    %s1659 = scalar_lea.vmem %s4, %s1658
    %1660 = vst [vmem:[%s1659] sm:$0x3] %v1652
  $region18: #{speech_model_forward.15} parent=0 // loop_footer
    %s22 = sadd.s32 1, %s18
  $region19: #{speech_model_forward.15} parent=0 // loop_footer_branch
    %17 = sbr.rel target = $region15
  $region20: #{speech_model_forward.15} parent=0 // loop_exit
    _
  // Predicated region
  $region21: #{speech_model_forward.15} parent=0 // pred_check
    _
  $region22: #{speech_model_forward.15} parent=0 // pred_check_branch
    %1662 = sbr.rel (0) target = $region24
  $region23: #{speech_model_forward.15} parent=0 // pred_region
    _
  $region24: #{speech_model_forward.15} parent=0 // pred_fallthru
    _
  // Predicated region
  $region25: #{speech_model_forward.15} parent=0 // pred_check
    _
  $region26: #{speech_model_forward.15} parent=0 // pred_check_branch
    %1664 = sbr.rel (0) target = $region28
  $region27: #{speech_model_forward.15} parent=0 // pred_region
    _
  $region28: #{speech_model_forward.15} parent=0 // pred_fallthru
    _
  // Predicated region
  $region29: #{speech_model_forward.15} parent=0 // pred_check
    _
  $region30: #{speech_model_forward.15} parent=0 // pred_check_branch
    %1666 = sbr.rel (0) target = $region32
  $region31: #{speech_model_forward.15} parent=0 // pred_region
    _
  $region32: #{speech_model_forward.15} parent=0 // pred_fallthru
    _
  // Predicated region
  $region33: #{speech_model_forward.15} parent=0 // pred_check
    _
  $region34: #{speech_model_forward.15} parent=0 // pred_check_branch
    %1668 = sbr.rel (0) target = $region36
  $region35: #{speech_model_forward.15} parent=0 // pred_region
    _
  $region36: #{speech_model_forward.15} parent=0 // pred_fallthru
    _

// kernel: speech_model_forward.19
$region0: #{speech_model_forward.19}
  #allocation0 [shape = 'u32[]', space=smem, size = 0x4, offset = 0x4, fixed_abs, tag = 'smem constant byte address 0x4 - core index']
  #allocation1 [shape = 'u32[144,128]{1,0:T(1,128)}', space=vmem, size = 0x12000, scoped, tag = 'internal scratch']
  #allocation2 [shape = 'f32[16,128]{1,0:T(8,128)}', space=vmem, size = 0x2000, scoped, tag = 'scratch operand']
  %s0 = inlined_call_operand.vmem [shape: bf16[16,128], index: 0, kind: input, shape index: {}]
  %s1 = inlined_call_operand.vmem [shape: bf16[128,128], index: 1, kind: input, shape index: {}]
  %s2 = inlined_call_operand.vmem [shape: f32[1,128], index: 2, kind: input, shape index: {}]
  %s3 = inlined_call_operand.vmem [shape: f32[16,128], index: 3, kind: output, shape index: {}]
  %s4 = sld [smem:[#allocation0]]
  $region30: #{speech_model_forward.19} parent=0
    _
  %s6 = ssub.s32 1, %s4
  %s7 = scalar_select 0, %s6, %s4
  // Predicated region
  $region2: #{speech_model_forward.19} parent=0 // pred_check
    _
  $region3: #{speech_model_forward.19} parent=0 // pred_check_branch
    %9 = sbr.rel (0) target = $region5
  $region4: #{speech_model_forward.19} parent=0 // pred_region
    _
  $region5: #{speech_model_forward.19} parent=0 // pred_fallthru
    _
  // Predicated region
  $region6: #{speech_model_forward.19} parent=0 // pred_check
    _
  $region7: #{speech_model_forward.19} parent=0 // pred_check_branch
    %11 = sbr.rel (0) target = $region9
  $region8: #{speech_model_forward.19} parent=0 // pred_region
    _
  $region9: #{speech_model_forward.19} parent=0 // pred_fallthru
    _
  // Predicated region
  $region10: #{speech_model_forward.19} parent=0 // pred_check
    _
  $region11: #{speech_model_forward.19} parent=0 // pred_check_branch
    %13 = sbr.rel (0) target = $region13
  $region12: #{speech_model_forward.19} parent=0 // pred_region
    _
  $region13: #{speech_model_forward.19} parent=0 // pred_fallthru
    _
  %p15 = scmp.eq.s32.totalorder 0, 0
  // Predicated region
  $region14: #{speech_model_forward.19} parent=0 // pred_check
    %p16 = pneg %p15
  $region15: #{speech_model_forward.19} parent=0 // pred_check_branch
    %18 = sbr.rel (%p16) target = $region17
  $region16: #{speech_model_forward.19} parent=0 // pred_region
    %19 = vst [vmem:[#allocation2] sm:$0xff] 0.0
    %20 = vst [vmem:[#allocation2 + $0x8] sm:$0xff] 0.0
  $region17: #{speech_model_forward.19} parent=0 // pred_fallthru
    _
  %v21 = vld [vmem:[%s0] sm:$0xf]
  %v22 = vld [vmem:[%s0 + $0x4] sm:$0xf]
  %v23 = vld [vmem:[#allocation2] sm:$0xff]
  %v24 = vld [vmem:[#allocation2 + $0x8] sm:$0xff]
  %v25 = vld [vmem:[%s1] sm:$0xf]
  %v26 = vld [vmem:[%s1 + $0x4] sm:$0xf]
  %v27 = vld [vmem:[%s1 + $0x8] sm:$0xf]
  %v28 = vld [vmem:[%s1 + $0xc] sm:$0xf]
  %v29 = vld [vmem:[%s1 + $0x10] sm:$0xf]
  %v30 = vld [vmem:[%s1 + $0x14] sm:$0xf]
  %v31 = vld [vmem:[%s1 + $0x18] sm:$0xf]
  %v32 = vld [vmem:[%s1 + $0x1c] sm:$0xf]
  %v33 = vld [vmem:[%s1 + $0x20] sm:$0xf]
  %v34 = vld [vmem:[%s1 + $0x24] sm:$0xf]
  %v35 = vld [vmem:[%s1 + $0x28] sm:$0xf]
  %v36 = vld [vmem:[%s1 + $0x2c] sm:$0xf]
  %v37 = vld [vmem:[%s1 + $0x30] sm:$0xf]
  %v38 = vld [vmem:[%s1 + $0x34] sm:$0xf]
  %v39 = vld [vmem:[%s1 + $0x38] sm:$0xf]
  %v40 = vld [vmem:[%s1 + $0x3c] sm:$0xf]
  %v43 = vunpack.c.l.b16 %v21
  %v44 = vunpack.c.l.b16 %v22
  %v45 = vpack.c.b16 %v44, %v43
  %v63 = vunpack.c.l.b16 %v25
  %v64 = vunpack.c.l.b16 %v26
  %v65 = vunpack.c.l.b16 %v27
  %v66 = vunpack.c.l.b16 %v28
  %v67 = vunpack.c.l.b16 %v29
  %v68 = vunpack.c.l.b16 %v30
  %v69 = vunpack.c.l.b16 %v31
  %v70 = vunpack.c.l.b16 %v32
  %v71 = vunpack.c.l.b16 %v33
  %v72 = vunpack.c.l.b16 %v34
  %v73 = vunpack.c.l.b16 %v35
  %v74 = vunpack.c.l.b16 %v36
  %v75 = vunpack.c.l.b16 %v37
  %v76 = vunpack.c.l.b16 %v38
  %v77 = vunpack.c.l.b16 %v39
  %v78 = vunpack.c.l.b16 %v40
  %v79 = vpack.c.b16 %v64, %v63
  %v80 = vpack.c.b16 %v66, %v65
  %v81 = vpack.c.b16 %v68, %v67
  %v82 = vpack.c.b16 %v70, %v69
  %v83 = vpack.c.b16 %v72, %v71
  %v84 = vpack.c.b16 %v74, %v73
  %v85 = vpack.c.b16 %v76, %v75
  %v86 = vpack.c.b16 %v78, %v77
  %95 = vmatprep.subr.bf16.mxu0 0
  %96 = vmatpush1.bf16.msra.mxu0 %v79
  %97 = vmatprep.subr.bf16.mxu0 0
  %98 = vmatpush1.bf16.msra.mxu0 %v80
  %99 = vmatprep.subr.bf16.mxu0 0
  %100 = vmatpush1.bf16.msra.mxu0 %v81
  %101 = vmatprep.subr.bf16.mxu0 0
  %102 = vmatpush1.bf16.msra.mxu0 %v82
  %103 = vmatprep.subr.bf16.mxu0 0
  %104 = vmatpush1.bf16.msra.mxu0 %v83
  %105 = vmatprep.subr.bf16.mxu0 0
  %106 = vmatpush1.bf16.msra.mxu0 %v84
  %107 = vmatprep.subr.bf16.mxu0 0
  %108 = vmatpush1.bf16.msra.mxu0 %v85
  %109 = vmatprep.subr.bf16.mxu0 0
  %110 = vmatpush1.bf16.msra.mxu0 %v86
  %111 = vmatprep.subr.bf16.mxu0 0
  %112 = vmatpush1.bf16.msra.mxu0 0
  %113 = vmatprep.subr.bf16.mxu0 0
  %114 = vmatpush1.bf16.msra.mxu0 0
  %115 = vmatprep.subr.bf16.mxu0 0
  %116 = vmatpush1.bf16.msra.mxu0 0
  %117 = vmatprep.subr.bf16.mxu0 0
  %118 = vmatpush1.bf16.msra.mxu0 0
  %119 = vmatprep.subr.bf16.mxu0 0
  %120 = vmatpush1.bf16.msra.mxu0 0
  %121 = vmatprep.subr.bf16.mxu0 0
  %122 = vmatpush1.bf16.msra.mxu0 0
  %123 = vmatprep.subr.bf16.mxu0 0
  %124 = vmatpush1.bf16.msra.mxu0 0
  %125 = vmatprep.subr.bf16.mxu0 0
  %126 = vmatpush1.bf16.msra.mxu0 0
  %127 = vmatprep.mubr.bf16.mxu0 0
  %128 = vmatmul.mubr.bf16.gmra.mrb[0].mxu0 %v45
  %v129 = vpop.f32.mrb[0].mxu0
  %v130 = vadd.f32 0.0, %v129
  %v131 = vpop.f32.mrb[0].mxu0
  %v132 = vpop.f32.mrb[0].mxu0
  %v133 = vadd.f32 0.0, %v132
  %v134 = vpop.f32.mrb[0].mxu0
  %135 = vdwg.mxu0
  %v136 = vadd.f32 %v23, %v130
  %v137 = vadd.f32 %v24, %v133
  %138 = vst [vmem:[#allocation2] sm:$0xff] %v136
  %139 = vst [vmem:[#allocation2 + $0x8] sm:$0xff] %v137
  // Predicated region
  $region18: #{speech_model_forward.19} parent=0 // pred_check
    %p140 = pneg %p15
  $region19: #{speech_model_forward.19} parent=0 // pred_check_branch
    %142 = sbr.rel (%p140) target = $region21
  $region20: #{speech_model_forward.19} parent=0 // pred_region
    %v143 = vld [vmem:[#allocation2] sm:$0xff]
    %v144 = vld [vmem:[#allocation2 + $0x8] sm:$0xff]
    %v145 = vld [vmem:[%s2] sm:$0x1]
    %v147 = vlaneseq
    %v148 = vshrl.u32 %v147, 7
    %v149 = vsub.s32 0, %v148
    %v150 = vrot.slane %v145, %v149
    %v152 = vadd.f32 %v143, %v150
    %v153 = vadd.f32 %v144, %v150
    %154 = vst [vmem:[%s3] sm:$0xff] %v152
    %155 = vst [vmem:[%s3 + $0x8] sm:$0xff] %v153
  $region21: #{speech_model_forward.19} parent=0 // pred_fallthru
    _
  // Predicated region
  $region22: #{speech_model_forward.19} parent=0 // pred_check
    _
  $region23: #{speech_model_forward.19} parent=0 // pred_check_branch
    %157 = sbr.rel (0) target = $region25
  $region24: #{speech_model_forward.19} parent=0 // pred_region
    _
  $region25: #{speech_model_forward.19} parent=0 // pred_fallthru
    _
  // Predicated region
  $region26: #{speech_model_forward.19} parent=0 // pred_check
    _
  $region27: #{speech_model_forward.19} parent=0 // pred_check_branch
    %159 = sbr.rel (0) target = $region29
  $region28: #{speech_model_forward.19} parent=0 // pred_region
    _
  $region29: #{speech_model_forward.19} parent=0 // pred_fallthru
    _

// kernel: speech_model_forward.18
$region0: #{speech_model_forward.18}
  #allocation0 [shape = 'u32[]', space=smem, size = 0x4, offset = 0x4, fixed_abs, tag = 'smem constant byte address 0x4 - core index']
  #allocation1 [shape = 'u32[144,128]{1,0:T(1,128)}', space=vmem, size = 0x12000, scoped, tag = 'internal scratch']
  #allocation2 [shape = 'f32[16,128]{1,0:T(8,128)}', space=vmem, size = 0x2000, scoped, tag = 'scratch operand']
  %s0 = inlined_call_operand.vmem [shape: bf16[16,128], index: 0, kind: input, shape index: {}]
  %s1 = inlined_call_operand.vmem [shape: bf16[128,128], index: 1, kind: input, shape index: {}]
  %s2 = inlined_call_operand.vmem [shape: f32[1,128], index: 2, kind: input, shape index: {}]
  %s3 = inlined_call_operand.vmem [shape: f32[16,128], index: 3, kind: output, shape index: {}]
  %s4 = sld [smem:[#allocation0]]
  $region30: #{speech_model_forward.18} parent=0
    _
  %s6 = ssub.s32 1, %s4
  %s7 = scalar_select 0, %s6, %s4
  // Predicated region
  $region2: #{speech_model_forward.18} parent=0 // pred_check
    _
  $region3: #{speech_model_forward.18} parent=0 // pred_check_branch
    %9 = sbr.rel (0) target = $region5
  $region4: #{speech_model_forward.18} parent=0 // pred_region
    _
  $region5: #{speech_model_forward.18} parent=0 // pred_fallthru
    _
  // Predicated region
  $region6: #{speech_model_forward.18} parent=0 // pred_check
    _
  $region7: #{speech_model_forward.18} parent=0 // pred_check_branch
    %11 = sbr.rel (0) target = $region9
  $region8: #{speech_model_forward.18} parent=0 // pred_region
    _
  $region9: #{speech_model_forward.18} parent=0 // pred_fallthru
    _
  // Predicated region
  $region10: #{speech_model_forward.18} parent=0 // pred_check
    _
  $region11: #{speech_model_forward.18} parent=0 // pred_check_branch
    %13 = sbr.rel (0) target = $region13
  $region12: #{speech_model_forward.18} parent=0 // pred_region
    _
  $region13: #{speech_model_forward.18} parent=0 // pred_fallthru
    _
  %p15 = scmp.eq.s32.totalorder 0, 0
  // Predicated region
  $region14: #{speech_model_forward.18} parent=0 // pred_check
    %p16 = pneg %p15
  $region15: #{speech_model_forward.18} parent=0 // pred_check_branch
    %18 = sbr.rel (%p16) target = $region17
  $region16: #{speech_model_forward.18} parent=0 // pred_region
    %19 = vst [vmem:[#allocation2] sm:$0xff] 0.0
    %20 = vst [vmem:[#allocation2 + $0x8] sm:$0xff] 0.0
  $region17: #{speech_model_forward.18} parent=0 // pred_fallthru
    _
  %v21 = vld [vmem:[%s0] sm:$0xf]
  %v22 = vld [vmem:[%s0 + $0x4] sm:$0xf]
  %v23 = vld [vmem:[#allocation2] sm:$0xff]
  %v24 = vld [vmem:[#allocation2 + $0x8] sm:$0xff]
  %v25 = vld [vmem:[%s1] sm:$0xf]
  %v26 = vld [vmem:[%s1 + $0x4] sm:$0xf]
  %v27 = vld [vmem:[%s1 + $0x8] sm:$0xf]
  %v28 = vld [vmem:[%s1 + $0xc] sm:$0xf]
  %v29 = vld [vmem:[%s1 + $0x10] sm:$0xf]
  %v30 = vld [vmem:[%s1 + $0x14] sm:$0xf]
  %v31 = vld [vmem:[%s1 + $0x18] sm:$0xf]
  %v32 = vld [vmem:[%s1 + $0x1c] sm:$0xf]
  %v33 = vld [vmem:[%s1 + $0x20] sm:$0xf]
  %v34 = vld [vmem:[%s1 + $0x24] sm:$0xf]
  %v35 = vld [vmem:[%s1 + $0x28] sm:$0xf]
  %v36 = vld [vmem:[%s1 + $0x2c] sm:$0xf]
  %v37 = vld [vmem:[%s1 + $0x30] sm:$0xf]
  %v38 = vld [vmem:[%s1 + $0x34] sm:$0xf]
  %v39 = vld [vmem:[%s1 + $0x38] sm:$0xf]
  %v40 = vld [vmem:[%s1 + $0x3c] sm:$0xf]
  %v43 = vunpack.c.l.b16 %v21
  %v44 = vunpack.c.l.b16 %v22
  %v45 = vpack.c.b16 %v44, %v43
  %v63 = vunpack.c.l.b16 %v25
  %v64 = vunpack.c.l.b16 %v26
  %v65 = vunpack.c.l.b16 %v27
  %v66 = vunpack.c.l.b16 %v28
  %v67 = vunpack.c.l.b16 %v29
  %v68 = vunpack.c.l.b16 %v30
  %v69 = vunpack.c.l.b16 %v31
  %v70 = vunpack.c.l.b16 %v32
  %v71 = vunpack.c.l.b16 %v33
  %v72 = vunpack.c.l.b16 %v34
  %v73 = vunpack.c.l.b16 %v35
  %v74 = vunpack.c.l.b16 %v36
  %v75 = vunpack.c.l.b16 %v37
  %v76 = vunpack.c.l.b16 %v38
  %v77 = vunpack.c.l.b16 %v39
  %v78 = vunpack.c.l.b16 %v40
  %v79 = vpack.c.b16 %v64, %v63
  %v80 = vpack.c.b16 %v66, %v65
  %v81 = vpack.c.b16 %v68, %v67
  %v82 = vpack.c.b16 %v70, %v69
  %v83 = vpack.c.b16 %v72, %v71
  %v84 = vpack.c.b16 %v74, %v73
  %v85 = vpack.c.b16 %v76, %v75
  %v86 = vpack.c.b16 %v78, %v77
  %95 = vmatprep.subr.bf16.mxu0 0
  %96 = vmatpush1.bf16.msra.mxu0 %v79
  %97 = vmatprep.subr.bf16.mxu0 0
  %98 = vmatpush1.bf16.msra.mxu0 %v80
  %99 = vmatprep.subr.bf16.mxu0 0
  %100 = vmatpush1.bf16.msra.mxu0 %v81
  %101 = vmatprep.subr.bf16.mxu0 0
  %102 = vmatpush1.bf16.msra.mxu0 %v82
  %103 = vmatprep.subr.bf16.mxu0 0
  %104 = vmatpush1.bf16.msra.mxu0 %v83
  %105 = vmatprep.subr.bf16.mxu0 0
  %106 = vmatpush1.bf16.msra.mxu0 %v84
  %107 = vmatprep.subr.bf16.mxu0 0
  %108 = vmatpush1.bf16.msra.mxu0 %v85
  %109 = vmatprep.subr.bf16.mxu0 0
  %110 = vmatpush1.bf16.msra.mxu0 %v86
  %111 = vmatprep.subr.bf16.mxu0 0
  %112 = vmatpush1.bf16.msra.mxu0 0
  %113 = vmatprep.subr.bf16.mxu0 0
  %114 = vmatpush1.bf16.msra.mxu0 0
  %115 = vmatprep.subr.bf16.mxu0 0
  %116 = vmatpush1.bf16.msra.mxu0 0
  %117 = vmatprep.subr.bf16.mxu0 0
  %118 = vmatpush1.bf16.msra.mxu0 0
  %119 = vmatprep.subr.bf16.mxu0 0
  %120 = vmatpush1.bf16.msra.mxu0 0
  %121 = vmatprep.subr.bf16.mxu0 0
  %122 = vmatpush1.bf16.msra.mxu0 0
  %123 = vmatprep.subr.bf16.mxu0 0
  %124 = vmatpush1.bf16.msra.mxu0 0
  %125 = vmatprep.subr.bf16.mxu0 0
  %126 = vmatpush1.bf16.msra.mxu0 0
  %127 = vmatprep.mubr.bf16.mxu0 0
  %128 = vmatmul.mubr.bf16.gmra.mrb[0].mxu0 %v45
  %v129 = vpop.f32.mrb[0].mxu0
  %v130 = vadd.f32 0.0, %v129
  %v131 = vpop.f32.mrb[0].mxu0
  %v132 = vpop.f32.mrb[0].mxu0
  %v133 = vadd.f32 0.0, %v132
  %v134 = vpop.f32.mrb[0].mxu0
  %135 = vdwg.mxu0
  %v136 = vadd.f32 %v23, %v130
  %v137 = vadd.f32 %v24, %v133
  %138 = vst [vmem:[#allocation2] sm:$0xff] %v136
  %139 = vst [vmem:[#allocation2 + $0x8] sm:$0xff] %v137
  // Predicated region
  $region18: #{speech_model_forward.18} parent=0 // pred_check
    %p140 = pneg %p15
  $region19: #{speech_model_forward.18} parent=0 // pred_check_branch
    %142 = sbr.rel (%p140) target = $region21
  $region20: #{speech_model_forward.18} parent=0 // pred_region
    %v143 = vld [vmem:[#allocation2] sm:$0xff]
    %v144 = vld [vmem:[#allocation2 + $0x8] sm:$0xff]
    %v145 = vld [vmem:[%s2] sm:$0x1]
    %v147 = vlaneseq
    %v148 = vshrl.u32 %v147, 7
    %v149 = vsub.s32 0, %v148
    %v150 = vrot.slane %v145, %v149
    %v152 = vadd.f32 %v143, %v150
    %v153 = vadd.f32 %v144, %v150
    %v154 = vmul.f32 %v152, 0.5
    %v155 = vmul.f32 %v153, 0.5
    %v156 = vmul.f32 %v152, 0.70710677
    %v157 = vmul.f32 %v153, 0.70710677
    %v158 = verf.f32.pop %v156
    %v159 = verf.f32.pop %v157
    %v160 = vadd.f32 %v158, 1.0
    %v161 = vadd.f32 %v159, 1.0
    %v162 = vmul.f32 %v154, %v160
    %v163 = vmul.f32 %v155, %v161
    %164 = vst [vmem:[%s3] sm:$0xff] %v162
    %165 = vst [vmem:[%s3 + $0x8] sm:$0xff] %v163
  $region21: #{speech_model_forward.18} parent=0 // pred_fallthru
    _
  // Predicated region
  $region22: #{speech_model_forward.18} parent=0 // pred_check
    _
  $region23: #{speech_model_forward.18} parent=0 // pred_check_branch
    %167 = sbr.rel (0) target = $region25
  $region24: #{speech_model_forward.18} parent=0 // pred_region
    _
  $region25: #{speech_model_forward.18} parent=0 // pred_fallthru
    _
  // Predicated region
  $region26: #{speech_model_forward.18} parent=0 // pred_check
    _
  $region27: #{speech_model_forward.18} parent=0 // pred_check_branch
    %169 = sbr.rel (0) target = $region29
  $region28: #{speech_model_forward.18} parent=0 // pred_region
    _
  $region29: #{speech_model_forward.18} parent=0 // pred_fallthru
    _

// kernel: speech_model_forward.17
$region0: #{speech_model_forward.17}
  #allocation0 [shape = 'u32[]', space=smem, size = 0x4, offset = 0x4, fixed_abs, tag = 'smem constant byte address 0x4 - core index']
  #allocation1 [shape = 'u32[144,128]{1,0:T(1,128)}', space=vmem, size = 0x12000, scoped, tag = 'internal scratch']
  #allocation2 [shape = 'f32[8,256]{1,0:T(8,128)}', space=vmem, size = 0x2000, scoped, tag = 'scratch operand']
  %s0 = inlined_call_operand.vmem [shape: f32[2,8,768], index: 0, kind: input, shape index: {}]
  %s1 = inlined_call_operand.vmem [shape: bf16[256,768], index: 1, kind: input, shape index: {}]
  %s2 = inlined_call_operand.vmem [shape: f32[1,768], index: 2, kind: input, shape index: {}]
  %s3 = inlined_call_operand.vmem [shape: f32[2,8,128], index: 3, kind: output, shape index: {0}]
  %s4 = inlined_call_operand.vmem [shape: f32[2,8,128], index: 4, kind: output, shape index: {1}]
  %5 = xla_tuple %s3, %s4
  %s6 = sld [smem:[#allocation0]]
  $region30: #{speech_model_forward.17} parent=0
    _
  %s8 = ssub.s32 1, %s6
  %s9 = scalar_select 0, %s8, %s6
  // Predicated region
  $region2: #{speech_model_forward.17} parent=0 // pred_check
    _
  $region3: #{speech_model_forward.17} parent=0 // pred_check_branch
    %11 = sbr.rel (0) target = $region5
  $region4: #{speech_model_forward.17} parent=0 // pred_region
    _
  $region5: #{speech_model_forward.17} parent=0 // pred_fallthru
    _
  // Predicated region
  $region6: #{speech_model_forward.17} parent=0 // pred_check
    _
  $region7: #{speech_model_forward.17} parent=0 // pred_check_branch
    %13 = sbr.rel (0) target = $region9
  $region8: #{speech_model_forward.17} parent=0 // pred_region
    _
  $region9: #{speech_model_forward.17} parent=0 // pred_fallthru
    _
  // Predicated region
  $region10: #{speech_model_forward.17} parent=0 // pred_check
    _
  $region11: #{speech_model_forward.17} parent=0 // pred_check_branch
    %15 = sbr.rel (0) target = $region13
  $region12: #{speech_model_forward.17} parent=0 // pred_region
    _
  $region13: #{speech_model_forward.17} parent=0 // pred_fallthru
    _
  %16 = vst [vmem:[#allocation2] sm:$0xff] 0.0
  %17 = vst [vmem:[#allocation2 + $0x8] sm:$0xff] 0.0
  %v18 = vld [vmem:[#allocation2] sm:$0xff]
  %v19 = vld [vmem:[#allocation2 + $0x8] sm:$0xff]
  %v20 = vpack.c.bf16 %v18, %v18
  %v21 = vpack.c.bf16 %v19, %v19
  %v22 = vld [vmem:[%s1] sm:$0xff]
  %v23 = vld [vmem:[%s1 + $0x8] sm:$0xff]
  %v24 = vld [vmem:[%s1 + $0x10] sm:$0xff]
  %v25 = vld [vmem:[%s1 + $0x18] sm:$0xff]
  %v26 = vld [vmem:[%s1 + $0x20] sm:$0xff]
  %v27 = vld [vmem:[%s1 + $0x28] sm:$0xff]
  %v28 = vld [vmem:[%s1 + $0x30] sm:$0xff]
  %v29 = vld [vmem:[%s1 + $0x38] sm:$0xff]
  %v30 = vld [vmem:[%s1 + $0x40] sm:$0xff]
  %v31 = vld [vmem:[%s1 + $0x48] sm:$0xff]
  %v32 = vld [vmem:[%s1 + $0x50] sm:$0xff]
  %v33 = vld [vmem:[%s1 + $0x58] sm:$0xff]
  %v34 = vld [vmem:[%s1 + $0x60] sm:$0xff]
  %v35 = vld [vmem:[%s1 + $0x68] sm:$0xff]
  %v36 = vld [vmem:[%s1 + $0x70] sm:$0xff]
  %v37 = vld [vmem:[%s1 + $0x78] sm:$0xff]
  %v38 = vld [vmem:[%s1 + $0x80] sm:$0xff]
  %v39 = vld [vmem:[%s1 + $0x88] sm:$0xff]
  %v40 = vld [vmem:[%s1 + $0x90] sm:$0xff]
  %v41 = vld [vmem:[%s1 + $0x98] sm:$0xff]
  %v42 = vld [vmem:[%s1 + $0xa0] sm:$0xff]
  %v43 = vld [vmem:[%s1 + $0xa8] sm:$0xff]
  %v44 = vld [vmem:[%s1 + $0xb0] sm:$0xff]
  %v45 = vld [vmem:[%s1 + $0xb8] sm:$0xff]
  %v46 = vld [vmem:[%s1 + $0xc0] sm:$0xff]
  %v47 = vld [vmem:[%s1 + $0xc8] sm:$0xff]
  %v48 = vld [vmem:[%s1 + $0xd0] sm:$0xff]
  %v49 = vld [vmem:[%s1 + $0xd8] sm:$0xff]
  %v50 = vld [vmem:[%s1 + $0xe0] sm:$0xff]
  %v51 = vld [vmem:[%s1 + $0xe8] sm:$0xff]
  %v52 = vld [vmem:[%s1 + $0xf0] sm:$0xff]
  %v53 = vld [vmem:[%s1 + $0xf8] sm:$0xff]
  %v54 = vld [vmem:[%s1 + $0x100] sm:$0xff]
  %v55 = vld [vmem:[%s1 + $0x108] sm:$0xff]
  %v56 = vld [vmem:[%s1 + $0x110] sm:$0xff]
  %v57 = vld [vmem:[%s1 + $0x118] sm:$0xff]
  %v58 = vld [vmem:[%s1 + $0x120] sm:$0xff]
  %v59 = vld [vmem:[%s1 + $0x128] sm:$0xff]
  %v60 = vld [vmem:[%s1 + $0x130] sm:$0xff]
  %v61 = vld [vmem:[%s1 + $0x138] sm:$0xff]
  %v62 = vld [vmem:[%s1 + $0x140] sm:$0xff]
  %v63 = vld [vmem:[%s1 + $0x148] sm:$0xff]
  %v64 = vld [vmem:[%s1 + $0x150] sm:$0xff]
  %v65 = vld [vmem:[%s1 + $0x158] sm:$0xff]
  %v66 = vld [vmem:[%s1 + $0x160] sm:$0xff]
  %v67 = vld [vmem:[%s1 + $0x168] sm:$0xff]
  %v68 = vld [vmem:[%s1 + $0x170] sm:$0xff]
  %v69 = vld [vmem:[%s1 + $0x178] sm:$0xff]
  %v70 = vld [vmem:[%s1 + $0x180] sm:$0xff]
  %v71 = vld [vmem:[%s1 + $0x188] sm:$0xff]
  %v72 = vld [vmem:[%s1 + $0x190] sm:$0xff]
  %v73 = vld [vmem:[%s1 + $0x198] sm:$0xff]
  %v74 = vld [vmem:[%s1 + $0x1a0] sm:$0xff]
  %v75 = vld [vmem:[%s1 + $0x1a8] sm:$0xff]
  %v76 = vld [vmem:[%s1 + $0x1b0] sm:$0xff]
  %v77 = vld [vmem:[%s1 + $0x1b8] sm:$0xff]
  %v78 = vld [vmem:[%s1 + $0x1c0] sm:$0xff]
  %v79 = vld [vmem:[%s1 + $0x1c8] sm:$0xff]
  %v80 = vld [vmem:[%s1 + $0x1d0] sm:$0xff]
  %v81 = vld [vmem:[%s1 + $0x1d8] sm:$0xff]
  %v82 = vld [vmem:[%s1 + $0x1e0] sm:$0xff]
  %v83 = vld [vmem:[%s1 + $0x1e8] sm:$0xff]
  %v84 = vld [vmem:[%s1 + $0x1f0] sm:$0xff]
  %v85 = vld [vmem:[%s1 + $0x1f8] sm:$0xff]
  %v86 = vld [vmem:[%s1 + $0x200] sm:$0xff]
  %v87 = vld [vmem:[%s1 + $0x208] sm:$0xff]
  %v88 = vld [vmem:[%s1 + $0x210] sm:$0xff]
  %v89 = vld [vmem:[%s1 + $0x218] sm:$0xff]
  %v90 = vld [vmem:[%s1 + $0x220] sm:$0xff]
  %v91 = vld [vmem:[%s1 + $0x228] sm:$0xff]
  %v92 = vld [vmem:[%s1 + $0x230] sm:$0xff]
  %v93 = vld [vmem:[%s1 + $0x238] sm:$0xff]
  %v94 = vld [vmem:[%s1 + $0x240] sm:$0xff]
  %v95 = vld [vmem:[%s1 + $0x248] sm:$0xff]
  %v96 = vld [vmem:[%s1 + $0x250] sm:$0xff]
  %v97 = vld [vmem:[%s1 + $0x258] sm:$0xff]
  %v98 = vld [vmem:[%s1 + $0x260] sm:$0xff]
  %v99 = vld [vmem:[%s1 + $0x268] sm:$0xff]
  %v100 = vld [vmem:[%s1 + $0x270] sm:$0xff]
  %v101 = vld [vmem:[%s1 + $0x278] sm:$0xff]
  %v102 = vld [vmem:[%s1 + $0x280] sm:$0xff]
  %v103 = vld [vmem:[%s1 + $0x288] sm:$0xff]
  %v104 = vld [vmem:[%s1 + $0x290] sm:$0xff]
  %v105 = vld [vmem:[%s1 + $0x298] sm:$0xff]
  %v106 = vld [vmem:[%s1 + $0x2a0] sm:$0xff]
  %v107 = vld [vmem:[%s1 + $0x2a8] sm:$0xff]
  %v108 = vld [vmem:[%s1 + $0x2b0] sm:$0xff]
  %v109 = vld [vmem:[%s1 + $0x2b8] sm:$0xff]
  %v110 = vld [vmem:[%s1 + $0x2c0] sm:$0xff]
  %v111 = vld [vmem:[%s1 + $0x2c8] sm:$0xff]
  %v112 = vld [vmem:[%s1 + $0x2d0] sm:$0xff]
  %v113 = vld [vmem:[%s1 + $0x2d8] sm:$0xff]
  %v114 = vld [vmem:[%s1 + $0x2e0] sm:$0xff]
  %v115 = vld [vmem:[%s1 + $0x2e8] sm:$0xff]
  %v116 = vld [vmem:[%s1 + $0x2f0] sm:$0xff]
  %v117 = vld [vmem:[%s1 + $0x2f8] sm:$0xff]
  %v118 = vld [vmem:[%s2] sm:$0x3f]
  %v120 = vlaneseq
  %v121 = vshrl.u32 %v120, 7
  %v122 = vsub.s32 0, %v121
  %v123 = vrot.slane %v118, %v122
  %v124 = vlaneseq
  %v125 = vshrl.u32 %v124, 7
  %v126 = vsub.s32 1, %v125
  %v127 = vrot.slane %v118, %v126
  %v128 = vlaneseq
  %v129 = vshrl.u32 %v128, 7
  %v130 = vsub.s32 2, %v129
  %v131 = vrot.slane %v118, %v130
  %v132 = vlaneseq
  %v133 = vshrl.u32 %v132, 7
  %v134 = vsub.s32 3, %v133
  %v135 = vrot.slane %v118, %v134
  %v136 = vlaneseq
  %v137 = vshrl.u32 %v136, 7
  %v138 = vsub.s32 4, %v137
  %v139 = vrot.slane %v118, %v138
  %v140 = vlaneseq
  %v141 = vshrl.u32 %v140, 7
  %v142 = vsub.s32 5, %v141
  %v143 = vrot.slane %v118, %v142
  %v246 = vunpack.c.l.b16 %v22
  %v247 = vunpack.c.h.b16 %v22
  %v248 = vunpack.c.l.b16 %v23
  %v249 = vunpack.c.h.b16 %v23
  %v250 = vunpack.c.l.b16 %v24
  %v251 = vunpack.c.h.b16 %v24
  %v252 = vunpack.c.l.b16 %v25
  %v253 = vunpack.c.h.b16 %v25
  %v254 = vunpack.c.l.b16 %v26
  %v255 = vunpack.c.h.b16 %v26
  %v256 = vunpack.c.l.b16 %v27
  %v257 = vunpack.c.h.b16 %v27
  %v258 = vunpack.c.l.b16 %v28
  %v259 = vunpack.c.h.b16 %v28
  %v260 = vunpack.c.l.b16 %v29
  %v261 = vunpack.c.h.b16 %v29
  %v262 = vunpack.c.l.b16 %v30
  %v263 = vunpack.c.h.b16 %v30
  %v264 = vunpack.c.l.b16 %v31
  %v265 = vunpack.c.h.b16 %v31
  %v266 = vunpack.c.l.b16 %v32
  %v267 = vunpack.c.h.b16 %v32
  %v268 = vunpack.c.l.b16 %v33
  %v269 = vunpack.c.h.b16 %v33
  %v270 = vunpack.c.l.b16 %v34
  %v271 = vunpack.c.h.b16 %v34
  %v272 = vunpack.c.l.b16 %v35
  %v273 = vunpack.c.h.b16 %v35
  %v274 = vunpack.c.l.b16 %v36
  %v275 = vunpack.c.h.b16 %v36
  %v276 = vunpack.c.l.b16 %v37
  %v277 = vunpack.c.h.b16 %v37
  %v278 = vunpack.c.l.b16 %v38
  %v279 = vunpack.c.h.b16 %v38
  %v280 = vunpack.c.l.b16 %v39
  %v281 = vunpack.c.h.b16 %v39
  %v282 = vunpack.c.l.b16 %v40
  %v283 = vunpack.c.h.b16 %v40
  %v284 = vunpack.c.l.b16 %v41
  %v285 = vunpack.c.h.b16 %v41
  %v286 = vunpack.c.l.b16 %v42
  %v287 = vunpack.c.h.b16 %v42
  %v288 = vunpack.c.l.b16 %v43
  %v289 = vunpack.c.h.b16 %v43
  %v290 = vunpack.c.l.b16 %v44
  %v291 = vunpack.c.h.b16 %v44
  %v292 = vunpack.c.l.b16 %v45
  %v293 = vunpack.c.h.b16 %v45
  %v294 = vunpack.c.l.b16 %v46
  %v295 = vunpack.c.h.b16 %v46
  %v296 = vunpack.c.l.b16 %v47
  %v297 = vunpack.c.h.b16 %v47
  %v298 = vunpack.c.l.b16 %v48
  %v299 = vunpack.c.h.b16 %v48
  %v300 = vunpack.c.l.b16 %v49
  %v301 = vunpack.c.h.b16 %v49
  %v302 = vunpack.c.l.b16 %v50
  %v303 = vunpack.c.h.b16 %v50
  %v304 = vunpack.c.l.b16 %v51
  %v305 = vunpack.c.h.b16 %v51
  %v306 = vunpack.c.l.b16 %v52
  %v307 = vunpack.c.h.b16 %v52
  %v308 = vunpack.c.l.b16 %v53
  %v309 = vunpack.c.h.b16 %v53
  %v310 = vunpack.c.l.b16 %v54
  %v311 = vunpack.c.h.b16 %v54
  %v312 = vunpack.c.l.b16 %v55
  %v313 = vunpack.c.h.b16 %v55
  %v314 = vunpack.c.l.b16 %v56
  %v315 = vunpack.c.h.b16 %v56
  %v316 = vunpack.c.l.b16 %v57
  %v317 = vunpack.c.h.b16 %v57
  %v318 = vunpack.c.l.b16 %v58
  %v319 = vunpack.c.h.b16 %v58
  %v320 = vunpack.c.l.b16 %v59
  %v321 = vunpack.c.h.b16 %v59
  %v322 = vunpack.c.l.b16 %v60
  %v323 = vunpack.c.h.b16 %v60
  %v324 = vunpack.c.l.b16 %v61
  %v325 = vunpack.c.h.b16 %v61
  %v326 = vunpack.c.l.b16 %v62
  %v327 = vunpack.c.h.b16 %v62
  %v328 = vunpack.c.l.b16 %v63
  %v329 = vunpack.c.h.b16 %v63
  %v330 = vunpack.c.l.b16 %v64
  %v331 = vunpack.c.h.b16 %v64
  %v332 = vunpack.c.l.b16 %v65
  %v333 = vunpack.c.h.b16 %v65
  %v334 = vunpack.c.l.b16 %v66
  %v335 = vunpack.c.h.b16 %v66
  %v336 = vunpack.c.l.b16 %v67
  %v337 = vunpack.c.h.b16 %v67
  %v338 = vunpack.c.l.b16 %v68
  %v339 = vunpack.c.h.b16 %v68
  %v340 = vunpack.c.l.b16 %v69
  %v341 = vunpack.c.h.b16 %v69
  %v342 = vunpack.c.l.b16 %v70
  %v343 = vunpack.c.h.b16 %v70
  %v344 = vunpack.c.l.b16 %v71
  %v345 = vunpack.c.h.b16 %v71
  %v346 = vunpack.c.l.b16 %v72
  %v347 = vunpack.c.h.b16 %v72
  %v348 = vunpack.c.l.b16 %v73
  %v349 = vunpack.c.h.b16 %v73
  %v350 = vunpack.c.l.b16 %v74
  %v351 = vunpack.c.h.b16 %v74
  %v352 = vunpack.c.l.b16 %v75
  %v353 = vunpack.c.h.b16 %v75
  %v354 = vunpack.c.l.b16 %v76
  %v355 = vunpack.c.h.b16 %v76
  %v356 = vunpack.c.l.b16 %v77
  %v357 = vunpack.c.h.b16 %v77
  %v358 = vunpack.c.l.b16 %v78
  %v359 = vunpack.c.h.b16 %v78
  %v360 = vunpack.c.l.b16 %v79
  %v361 = vunpack.c.h.b16 %v79
  %v362 = vunpack.c.l.b16 %v80
  %v363 = vunpack.c.h.b16 %v80
  %v364 = vunpack.c.l.b16 %v81
  %v365 = vunpack.c.h.b16 %v81
  %v366 = vunpack.c.l.b16 %v82
  %v367 = vunpack.c.h.b16 %v82
  %v368 = vunpack.c.l.b16 %v83
  %v369 = vunpack.c.h.b16 %v83
  %v370 = vunpack.c.l.b16 %v84
  %v371 = vunpack.c.h.b16 %v84
  %v372 = vunpack.c.l.b16 %v85
  %v373 = vunpack.c.h.b16 %v85
  %v374 = vunpack.c.l.b16 %v86
  %v375 = vunpack.c.h.b16 %v86
  %v376 = vunpack.c.l.b16 %v87
  %v377 = vunpack.c.h.b16 %v87
  %v378 = vunpack.c.l.b16 %v88
  %v379 = vunpack.c.h.b16 %v88
  %v380 = vunpack.c.l.b16 %v89
  %v381 = vunpack.c.h.b16 %v89
  %v382 = vunpack.c.l.b16 %v90
  %v383 = vunpack.c.h.b16 %v90
  %v384 = vunpack.c.l.b16 %v91
  %v385 = vunpack.c.h.b16 %v91
  %v386 = vunpack.c.l.b16 %v92
  %v387 = vunpack.c.h.b16 %v92
  %v388 = vunpack.c.l.b16 %v93
  %v389 = vunpack.c.h.b16 %v93
  %v390 = vunpack.c.l.b16 %v94
  %v391 = vunpack.c.h.b16 %v94
  %v392 = vunpack.c.l.b16 %v95
  %v393 = vunpack.c.h.b16 %v95
  %v394 = vunpack.c.l.b16 %v96
  %v395 = vunpack.c.h.b16 %v96
  %v396 = vunpack.c.l.b16 %v97
  %v397 = vunpack.c.h.b16 %v97
  %v398 = vunpack.c.l.b16 %v98
  %v399 = vunpack.c.h.b16 %v98
  %v400 = vunpack.c.l.b16 %v99
  %v401 = vunpack.c.h.b16 %v99
  %v402 = vunpack.c.l.b16 %v100
  %v403 = vunpack.c.h.b16 %v100
  %v404 = vunpack.c.l.b16 %v101
  %v405 = vunpack.c.h.b16 %v101
  %v406 = vunpack.c.l.b16 %v102
  %v407 = vunpack.c.h.b16 %v102
  %v408 = vunpack.c.l.b16 %v103
  %v409 = vunpack.c.h.b16 %v103
  %v410 = vunpack.c.l.b16 %v104
  %v411 = vunpack.c.h.b16 %v104
  %v412 = vunpack.c.l.b16 %v105
  %v413 = vunpack.c.h.b16 %v105
  %v414 = vunpack.c.l.b16 %v106
  %v415 = vunpack.c.h.b16 %v106
  %v416 = vunpack.c.l.b16 %v107
  %v417 = vunpack.c.h.b16 %v107
  %v418 = vunpack.c.l.b16 %v108
  %v419 = vunpack.c.h.b16 %v108
  %v420 = vunpack.c.l.b16 %v109
  %v421 = vunpack.c.h.b16 %v109
  %v422 = vunpack.c.l.b16 %v110
  %v423 = vunpack.c.h.b16 %v110
  %v424 = vunpack.c.l.b16 %v111
  %v425 = vunpack.c.h.b16 %v111
  %v426 = vunpack.c.l.b16 %v112
  %v427 = vunpack.c.h.b16 %v112
  %v428 = vunpack.c.l.b16 %v113
  %v429 = vunpack.c.h.b16 %v113
  %v430 = vunpack.c.l.b16 %v114
  %v431 = vunpack.c.h.b16 %v114
  %v432 = vunpack.c.l.b16 %v115
  %v433 = vunpack.c.h.b16 %v115
  %v434 = vunpack.c.l.b16 %v116
  %v435 = vunpack.c.h.b16 %v116
  %v436 = vunpack.c.l.b16 %v117
  %v437 = vunpack.c.h.b16 %v117
  %v438 = vpack.c.b16 %v252, %v246
  %v439 = vpack.c.b16 %v253, %v247
  %v440 = vpack.c.b16 %v254, %v248
  %v441 = vpack.c.b16 %v255, %v249
  %v442 = vpack.c.b16 %v256, %v250
  %v443 = vpack.c.b16 %v257, %v251
  %v444 = vpack.c.b16 %v264, %v258
  %v445 = vpack.c.b16 %v265, %v259
  %v446 = vpack.c.b16 %v266, %v260
  %v447 = vpack.c.b16 %v267, %v261
  %v448 = vpack.c.b16 %v268, %v262
  %v449 = vpack.c.b16 %v269, %v263
  %v450 = vpack.c.b16 %v276, %v270
  %v451 = vpack.c.b16 %v277, %v271
  %v452 = vpack.c.b16 %v278, %v272
  %v453 = vpack.c.b16 %v279, %v273
  %v454 = vpack.c.b16 %v280, %v274
  %v455 = vpack.c.b16 %v281, %v275
  %v456 = vpack.c.b16 %v288, %v282
  %v457 = vpack.c.b16 %v289, %v283
  %v458 = vpack.c.b16 %v290, %v284
  %v459 = vpack.c.b16 %v291, %v285
  %v460 = vpack.c.b16 %v292, %v286
  %v461 = vpack.c.b16 %v293, %v287
  %v462 = vpack.c.b16 %v300, %v294
  %v463 = vpack.c.b16 %v301, %v295
  %v464 = vpack.c.b16 %v302, %v296
  %v465 = vpack.c.b16 %v303, %v297
  %v466 = vpack.c.b16 %v304, %v298
  %v467 = vpack.c.b16 %v305, %v299
  %v468 = vpack.c.b16 %v312, %v306
  %v469 = vpack.c.b16 %v313, %v307
  %v470 = vpack.c.b16 %v314, %v308
  %v471 = vpack.c.b16 %v315, %v309
  %v472 = vpack.c.b16 %v316, %v310
  %v473 = vpack.c.b16 %v317, %v311
  %v474 = vpack.c.b16 %v324, %v318
  %v475 = vpack.c.b16 %v325, %v319
  %v476 = vpack.c.b16 %v326, %v320
  %v477 = vpack.c.b16 %v327, %v321
  %v478 = vpack.c.b16 %v328, %v322
  %v479 = vpack.c.b16 %v329, %v323
  %v480 = vpack.c.b16 %v336, %v330
  %v481 = vpack.c.b16 %v337, %v331
  %v482 = vpack.c.b16 %v338, %v332
  %v483 = vpack.c.b16 %v339, %v333
  %v484 = vpack.c.b16 %v340, %v334
  %v485 = vpack.c.b16 %v341, %v335
  %v486 = vpack.c.b16 %v348, %v342
  %v487 = vpack.c.b16 %v349, %v343
  %v488 = vpack.c.b16 %v350, %v344
  %v489 = vpack.c.b16 %v351, %v345
  %v490 = vpack.c.b16 %v352, %v346
  %v491 = vpack.c.b16 %v353, %v347
  %v492 = vpack.c.b16 %v360, %v354
  %v493 = vpack.c.b16 %v361, %v355
  %v494 = vpack.c.b16 %v362, %v356
  %v495 = vpack.c.b16 %v363, %v357
  %v496 = vpack.c.b16 %v364, %v358
  %v497 = vpack.c.b16 %v365, %v359
  %v498 = vpack.c.b16 %v372, %v366
  %v499 = vpack.c.b16 %v373, %v367
  %v500 = vpack.c.b16 %v374, %v368
  %v501 = vpack.c.b16 %v375, %v369
  %v502 = vpack.c.b16 %v376, %v370
  %v503 = vpack.c.b16 %v377, %v371
  %v504 = vpack.c.b16 %v384, %v378
  %v505 = vpack.c.b16 %v385, %v379
  %v506 = vpack.c.b16 %v386, %v380
  %v507 = vpack.c.b16 %v387, %v381
  %v508 = vpack.c.b16 %v388, %v382
  %v509 = vpack.c.b16 %v389, %v383
  %v510 = vpack.c.b16 %v396, %v390
  %v511 = vpack.c.b16 %v397, %v391
  %v512 = vpack.c.b16 %v398, %v392
  %v513 = vpack.c.b16 %v399, %v393
  %v514 = vpack.c.b16 %v400, %v394
  %v515 = vpack.c.b16 %v401, %v395
  %v516 = vpack.c.b16 %v408, %v402
  %v517 = vpack.c.b16 %v409, %v403
  %v518 = vpack.c.b16 %v410, %v404
  %v519 = vpack.c.b16 %v411, %v405
  %v520 = vpack.c.b16 %v412, %v406
  %v521 = vpack.c.b16 %v413, %v407
  %v522 = vpack.c.b16 %v420, %v414
  %v523 = vpack.c.b16 %v421, %v415
  %v524 = vpack.c.b16 %v422, %v416
  %v525 = vpack.c.b16 %v423, %v417
  %v526 = vpack.c.b16 %v424, %v418
  %v527 = vpack.c.b16 %v425, %v419
  %v528 = vpack.c.b16 %v432, %v426
  %v529 = vpack.c.b16 %v433, %v427
  %v530 = vpack.c.b16 %v434, %v428
  %v531 = vpack.c.b16 %v435, %v429
  %v532 = vpack.c.b16 %v436, %v430
  %v533 = vpack.c.b16 %v437, %v431
  %630 = vmatprep.subr.bf16.mxu0 %v439
  %631 = vmatpush1.bf16.msra.mxu0 %v438
  %632 = vmatprep.subr.bf16.mxu0 %v445
  %633 = vmatpush1.bf16.msra.mxu0 %v444
  %634 = vmatprep.subr.bf16.mxu0 %v451
  %635 = vmatpush1.bf16.msra.mxu0 %v450
  %636 = vmatprep.subr.bf16.mxu0 %v457
  %637 = vmatpush1.bf16.msra.mxu0 %v456
  %638 = vmatprep.subr.bf16.mxu0 %v463
  %639 = vmatpush1.bf16.msra.mxu0 %v462
  %640 = vmatprep.subr.bf16.mxu0 %v469
  %641 = vmatpush1.bf16.msra.mxu0 %v468
  %642 = vmatprep.subr.bf16.mxu0 %v475
  %643 = vmatpush1.bf16.msra.mxu0 %v474
  %644 = vmatprep.subr.bf16.mxu0 %v481
  %645 = vmatpush1.bf16.msra.mxu0 %v480
  %646 = vmatprep.subr.bf16.mxu0 %v487
  %647 = vmatpush1.bf16.msra.mxu0 %v486
  %648 = vmatprep.subr.bf16.mxu0 %v493
  %649 = vmatpush1.bf16.msra.mxu0 %v492
  %650 = vmatprep.subr.bf16.mxu0 %v499
  %651 = vmatpush1.bf16.msra.mxu0 %v498
  %652 = vmatprep.subr.bf16.mxu0 %v505
  %653 = vmatpush1.bf16.msra.mxu0 %v504
  %654 = vmatprep.subr.bf16.mxu0 %v511
  %655 = vmatpush1.bf16.msra.mxu0 %v510
  %656 = vmatprep.subr.bf16.mxu0 %v517
  %657 = vmatpush1.bf16.msra.mxu0 %v516
  %658 = vmatprep.subr.bf16.mxu0 %v523
  %659 = vmatpush1.bf16.msra.mxu0 %v522
  %660 = vmatprep.subr.bf16.mxu0 %v529
  %661 = vmatpush1.bf16.msra.mxu0 %v528
  %662 = vmatprep.mubr.bf16.mxu0 %v21
  %663 = vmatmul.mubr.bf16.gmra.mrb[0].mxu0 %v20
  %v664 = vpop.f32.mrb[0].mxu0
  %v665 = vadd.f32 %v123, %v664
  %v666 = vpop.f32.mrb[0].mxu0
  %v667 = vadd.f32 %v127, %v666
  %v668 = vpop.f32.mrb[0].mxu0
  %v669 = vpop.f32.mrb[0].mxu0
  %670 = vdwg.mxu0
  %671 = vmatprep.subr.bf16.mxu0 %v441
  %672 = vmatpush1.bf16.msra.mxu0 %v440
  %673 = vmatprep.subr.bf16.mxu0 %v447
  %674 = vmatpush1.bf16.msra.mxu0 %v446
  %675 = vmatprep.subr.bf16.mxu0 %v453
  %676 = vmatpush1.bf16.msra.mxu0 %v452
  %677 = vmatprep.subr.bf16.mxu0 %v459
  %678 = vmatpush1.bf16.msra.mxu0 %v458
  %679 = vmatprep.subr.bf16.mxu0 %v465
  %680 = vmatpush1.bf16.msra.mxu0 %v464
  %681 = vmatprep.subr.bf16.mxu0 %v471
  %682 = vmatpush1.bf16.msra.mxu0 %v470
  %683 = vmatprep.subr.bf16.mxu0 %v477
  %684 = vmatpush1.bf16.msra.mxu0 %v476
  %685 = vmatprep.subr.bf16.mxu0 %v483
  %686 = vmatpush1.bf16.msra.mxu0 %v482
  %687 = vmatprep.subr.bf16.mxu0 %v489
  %688 = vmatpush1.bf16.msra.mxu0 %v488
  %689 = vmatprep.subr.bf16.mxu0 %v495
  %690 = vmatpush1.bf16.msra.mxu0 %v494
  %691 = vmatprep.subr.bf16.mxu0 %v501
  %692 = vmatpush1.bf16.msra.mxu0 %v500
  %693 = vmatprep.subr.bf16.mxu0 %v507
  %694 = vmatpush1.bf16.msra.mxu0 %v506
  %695 = vmatprep.subr.bf16.mxu0 %v513
  %696 = vmatpush1.bf16.msra.mxu0 %v512
  %697 = vmatprep.subr.bf16.mxu0 %v519
  %698 = vmatpush1.bf16.msra.mxu0 %v518
  %699 = vmatprep.subr.bf16.mxu0 %v525
  %700 = vmatpush1.bf16.msra.mxu0 %v524
  %701 = vmatprep.subr.bf16.mxu0 %v531
  %702 = vmatpush1.bf16.msra.mxu0 %v530
  %703 = vmatprep.mubr.bf16.mxu0 %v21
  %704 = vmatmul.mubr.bf16.gmra.mrb[0].mxu0 %v20
  %v705 = vpop.f32.mrb[0].mxu0
  %v706 = vadd.f32 %v131, %v705
  %v707 = vpop.f32.mrb[0].mxu0
  %v708 = vadd.f32 %v135, %v707
  %v709 = vpop.f32.mrb[0].mxu0
  %v710 = vpop.f32.mrb[0].mxu0
  %711 = vdwg.mxu0
  %712 = vmatprep.subr.bf16.mxu0 %v443
  %713 = vmatpush1.bf16.msra.mxu0 %v442
  %714 = vmatprep.subr.bf16.mxu0 %v449
  %715 = vmatpush1.bf16.msra.mxu0 %v448
  %716 = vmatprep.subr.bf16.mxu0 %v455
  %717 = vmatpush1.bf16.msra.mxu0 %v454
  %718 = vmatprep.subr.bf16.mxu0 %v461
  %719 = vmatpush1.bf16.msra.mxu0 %v460
  %720 = vmatprep.subr.bf16.mxu0 %v467
  %721 = vmatpush1.bf16.msra.mxu0 %v466
  %722 = vmatprep.subr.bf16.mxu0 %v473
  %723 = vmatpush1.bf16.msra.mxu0 %v472
  %724 = vmatprep.subr.bf16.mxu0 %v479
  %725 = vmatpush1.bf16.msra.mxu0 %v478
  %726 = vmatprep.subr.bf16.mxu0 %v485
  %727 = vmatpush1.bf16.msra.mxu0 %v484
  %728 = vmatprep.subr.bf16.mxu0 %v491
  %729 = vmatpush1.bf16.msra.mxu0 %v490
  %730 = vmatprep.subr.bf16.mxu0 %v497
  %731 = vmatpush1.bf16.msra.mxu0 %v496
  %732 = vmatprep.subr.bf16.mxu0 %v503
  %733 = vmatpush1.bf16.msra.mxu0 %v502
  %734 = vmatprep.subr.bf16.mxu0 %v509
  %735 = vmatpush1.bf16.msra.mxu0 %v508
  %736 = vmatprep.subr.bf16.mxu0 %v515
  %737 = vmatpush1.bf16.msra.mxu0 %v514
  %738 = vmatprep.subr.bf16.mxu0 %v521
  %739 = vmatpush1.bf16.msra.mxu0 %v520
  %740 = vmatprep.subr.bf16.mxu0 %v527
  %741 = vmatpush1.bf16.msra.mxu0 %v526
  %742 = vmatprep.subr.bf16.mxu0 %v533
  %743 = vmatpush1.bf16.msra.mxu0 %v532
  %744 = vmatprep.mubr.bf16.mxu0 %v21
  %745 = vmatmul.mubr.bf16.gmra.mrb[0].mxu0 %v20
  %v746 = vpop.f32.mrb[0].mxu0
  %v747 = vadd.f32 %v139, %v746
  %v748 = vpop.f32.mrb[0].mxu0
  %v749 = vadd.f32 %v143, %v748
  %v750 = vpop.f32.mrb[0].mxu0
  %v751 = vpop.f32.mrb[0].mxu0
  %752 = vdwg.mxu0
  %v753 = vld [vmem:[%s0] sm:$0xff]
  %v754 = vld [vmem:[%s0 + $0x8] sm:$0xff]
  %v755 = vld [vmem:[%s0 + $0x10] sm:$0xff]
  %s756 = scalar_lea.vmem %s0, 48
  %v757 = vld [vmem:[%s756 + $0x18] sm:$0xff]
  %v758 = vld [vmem:[%s756 + $0x20] sm:$0xff]
  %v759 = vld [vmem:[%s756 + $0x28] sm:$0xff]
  %v760 = vadd.f32 %v753, %v665
  %v761 = vxor.u32 %v760, 2147483648
  %v762 = vmul.f32 %v761, 1.442695
  %v763 = vpow.pop %v762
  %v764 = vadd.f32 %v763, 1.0
  %v765 = vrcp.pop %v764
  %v766 = vmul.f32 1.0, %v765
  %v767 = vadd.f32 %v754, %v667
  %v768 = vxor.u32 %v767, 2147483648
  %v769 = vmul.f32 %v768, 1.442695
  %v770 = vpow.pop %v769
  %v771 = vadd.f32 %v770, 1.0
  %v772 = vrcp.pop %v771
  %v773 = vmul.f32 1.0, %v772
  %v774 = vmul.f32 %v766, %v706
  %v775 = vadd.f32 %v755, %v774
  %v776 = vtanh.pop %v775
  %v777 = vsub.f32 1.0, %v773
  %v778 = vmul.f32 %v777, %v776
  %v779 = vmul.f32 %v773, %v18
  %v780 = vadd.f32 %v778, %v779
  %v781 = vadd.f32 %v757, %v708
  %v782 = vxor.u32 %v781, 2147483648
  %v783 = vmul.f32 %v782, 1.442695
  %v784 = vpow.pop %v783
  %v785 = vadd.f32 %v784, 1.0
  %v786 = vrcp.pop %v785
  %v787 = vmul.f32 1.0, %v786
  %v788 = vadd.f32 %v758, %v747
  %v789 = vxor.u32 %v788, 2147483648
  %v790 = vmul.f32 %v789, 1.442695
  %v791 = vpow.pop %v790
  %v792 = vadd.f32 %v791, 1.0
  %v793 = vrcp.pop %v792
  %v794 = vmul.f32 1.0, %v793
  %v795 = vmul.f32 %v787, %v749
  %v796 = vadd.f32 %v759, %v795
  %v797 = vtanh.pop %v796
  %v798 = vsub.f32 1.0, %v794
  %v799 = vmul.f32 %v798, %v797
  %v800 = vmul.f32 %v794, %v19
  %v801 = vadd.f32 %v799, %v800
  %802 = vst [vmem:[#allocation2] sm:$0xff] %v780
  %803 = vst [vmem:[#allocation2 + $0x8] sm:$0xff] %v801
  %804 = vst [vmem:[%s3] sm:$0xff] %v780
  %s805 = scalar_lea.vmem %s4, 8
  %806 = vst [vmem:[%s805] sm:$0xff] %v801
  %v807 = vld [vmem:[#allocation2] sm:$0xff]
  %v808 = vld [vmem:[#allocation2 + $0x8] sm:$0xff]
  %v809 = vpack.c.bf16 %v807, %v807
  %v810 = vpack.c.bf16 %v808, %v808
  %v811 = vld [vmem:[%s1] sm:$0xff]
  %v812 = vld [vmem:[%s1 + $0x8] sm:$0xff]
  %v813 = vld [vmem:[%s1 + $0x10] sm:$0xff]
  %v814 = vld [vmem:[%s1 + $0x18] sm:$0xff]
  %v815 = vld [vmem:[%s1 + $0x20] sm:$0xff]
  %v816 = vld [vmem:[%s1 + $0x28] sm:$0xff]
  %v817 = vld [vmem:[%s1 + $0x30] sm:$0xff]
  %v818 = vld [vmem:[%s1 + $0x38] sm:$0xff]
  %v819 = vld [vmem:[%s1 + $0x40] sm:$0xff]
  %v820 = vld [vmem:[%s1 + $0x48] sm:$0xff]
  %v821 = vld [vmem:[%s1 + $0x50] sm:$0xff]
  %v822 = vld [vmem:[%s1 + $0x58] sm:$0xff]
  %v823 = vld [vmem:[%s1 + $0x60] sm:$0xff]
  %v824 = vld [vmem:[%s1 + $0x68] sm:$0xff]
  %v825 = vld [vmem:[%s1 + $0x70] sm:$0xff]
  %v826 = vld [vmem:[%s1 + $0x78] sm:$0xff]
  %v827 = vld [vmem:[%s1 + $0x80] sm:$0xff]
  %v828 = vld [vmem:[%s1 + $0x88] sm:$0xff]
  %v829 = vld [vmem:[%s1 + $0x90] sm:$0xff]
  %v830 = vld [vmem:[%s1 + $0x98] sm:$0xff]
  %v831 = vld [vmem:[%s1 + $0xa0] sm:$0xff]
  %v832 = vld [vmem:[%s1 + $0xa8] sm:$0xff]
  %v833 = vld [vmem:[%s1 + $0xb0] sm:$0xff]
  %v834 = vld [vmem:[%s1 + $0xb8] sm:$0xff]
  %v835 = vld [vmem:[%s1 + $0xc0] sm:$0xff]
  %v836 = vld [vmem:[%s1 + $0xc8] sm:$0xff]
  %v837 = vld [vmem:[%s1 + $0xd0] sm:$0xff]
  %v838 = vld [vmem:[%s1 + $0xd8] sm:$0xff]
  %v839 = vld [vmem:[%s1 + $0xe0] sm:$0xff]
  %v840 = vld [vmem:[%s1 + $0xe8] sm:$0xff]
  %v841 = vld [vmem:[%s1 + $0xf0] sm:$0xff]
  %v842 = vld [vmem:[%s1 + $0xf8] sm:$0xff]
  %v843 = vld [vmem:[%s1 + $0x100] sm:$0xff]
  %v844 = vld [vmem:[%s1 + $0x108] sm:$0xff]
  %v845 = vld [vmem:[%s1 + $0x110] sm:$0xff]
  %v846 = vld [vmem:[%s1 + $0x118] sm:$0xff]
  %v847 = vld [vmem:[%s1 + $0x120] sm:$0xff]
  %v848 = vld [vmem:[%s1 + $0x128] sm:$0xff]
  %v849 = vld [vmem:[%s1 + $0x130] sm:$0xff]
  %v850 = vld [vmem:[%s1 + $0x138] sm:$0xff]
  %v851 = vld [vmem:[%s1 + $0x140] sm:$0xff]
  %v852 = vld [vmem:[%s1 + $0x148] sm:$0xff]
  %v853 = vld [vmem:[%s1 + $0x150] sm:$0xff]
  %v854 = vld [vmem:[%s1 + $0x158] sm:$0xff]
  %v855 = vld [vmem:[%s1 + $0x160] sm:$0xff]
  %v856 = vld [vmem:[%s1 + $0x168] sm:$0xff]
  %v857 = vld [vmem:[%s1 + $0x170] sm:$0xff]
  %v858 = vld [vmem:[%s1 + $0x178] sm:$0xff]
  %v859 = vld [vmem:[%s1 + $0x180] sm:$0xff]
  %v860 = vld [vmem:[%s1 + $0x188] sm:$0xff]
  %v861 = vld [vmem:[%s1 + $0x190] sm:$0xff]
  %v862 = vld [vmem:[%s1 + $0x198] sm:$0xff]
  %v863 = vld [vmem:[%s1 + $0x1a0] sm:$0xff]
  %v864 = vld [vmem:[%s1 + $0x1a8] sm:$0xff]
  %v865 = vld [vmem:[%s1 + $0x1b0] sm:$0xff]
  %v866 = vld [vmem:[%s1 + $0x1b8] sm:$0xff]
  %v867 = vld [vmem:[%s1 + $0x1c0] sm:$0xff]
  %v868 = vld [vmem:[%s1 + $0x1c8] sm:$0xff]
  %v869 = vld [vmem:[%s1 + $0x1d0] sm:$0xff]
  %v870 = vld [vmem:[%s1 + $0x1d8] sm:$0xff]
  %v871 = vld [vmem:[%s1 + $0x1e0] sm:$0xff]
  %v872 = vld [vmem:[%s1 + $0x1e8] sm:$0xff]
  %v873 = vld [vmem:[%s1 + $0x1f0] sm:$0xff]
  %v874 = vld [vmem:[%s1 + $0x1f8] sm:$0xff]
  %v875 = vld [vmem:[%s1 + $0x200] sm:$0xff]
  %v876 = vld [vmem:[%s1 + $0x208] sm:$0xff]
  %v877 = vld [vmem:[%s1 + $0x210] sm:$0xff]
  %v878 = vld [vmem:[%s1 + $0x218] sm:$0xff]
  %v879 = vld [vmem:[%s1 + $0x220] sm:$0xff]
  %v880 = vld [vmem:[%s1 + $0x228] sm:$0xff]
  %v881 = vld [vmem:[%s1 + $0x230] sm:$0xff]
  %v882 = vld [vmem:[%s1 + $0x238] sm:$0xff]
  %v883 = vld [vmem:[%s1 + $0x240] sm:$0xff]
  %v884 = vld [vmem:[%s1 + $0x248] sm:$0xff]
  %v885 = vld [vmem:[%s1 + $0x250] sm:$0xff]
  %v886 = vld [vmem:[%s1 + $0x258] sm:$0xff]
  %v887 = vld [vmem:[%s1 + $0x260] sm:$0xff]
  %v888 = vld [vmem:[%s1 + $0x268] sm:$0xff]
  %v889 = vld [vmem:[%s1 + $0x270] sm:$0xff]
  %v890 = vld [vmem:[%s1 + $0x278] sm:$0xff]
  %v891 = vld [vmem:[%s1 + $0x280] sm:$0xff]
  %v892 = vld [vmem:[%s1 + $0x288] sm:$0xff]
  %v893 = vld [vmem:[%s1 + $0x290] sm:$0xff]
  %v894 = vld [vmem:[%s1 + $0x298] sm:$0xff]
  %v895 = vld [vmem:[%s1 + $0x2a0] sm:$0xff]
  %v896 = vld [vmem:[%s1 + $0x2a8] sm:$0xff]
  %v897 = vld [vmem:[%s1 + $0x2b0] sm:$0xff]
  %v898 = vld [vmem:[%s1 + $0x2b8] sm:$0xff]
  %v899 = vld [vmem:[%s1 + $0x2c0] sm:$0xff]
  %v900 = vld [vmem:[%s1 + $0x2c8] sm:$0xff]
  %v901 = vld [vmem:[%s1 + $0x2d0] sm:$0xff]
  %v902 = vld [vmem:[%s1 + $0x2d8] sm:$0xff]
  %v903 = vld [vmem:[%s1 + $0x2e0] sm:$0xff]
  %v904 = vld [vmem:[%s1 + $0x2e8] sm:$0xff]
  %v905 = vld [vmem:[%s1 + $0x2f0] sm:$0xff]
  %v906 = vld [vmem:[%s1 + $0x2f8] sm:$0xff]
  %v907 = vld [vmem:[%s2] sm:$0x3f]
  %v909 = vlaneseq
  %v910 = vshrl.u32 %v909, 7
  %v911 = vsub.s32 0, %v910
  %v912 = vrot.slane %v907, %v911
  %v913 = vlaneseq
  %v914 = vshrl.u32 %v913, 7
  %v915 = vsub.s32 1, %v914
  %v916 = vrot.slane %v907, %v915
  %v917 = vlaneseq
  %v918 = vshrl.u32 %v917, 7
  %v919 = vsub.s32 2, %v918
  %v920 = vrot.slane %v907, %v919
  %v921 = vlaneseq
  %v922 = vshrl.u32 %v921, 7
  %v923 = vsub.s32 3, %v922
  %v924 = vrot.slane %v907, %v923
  %v925 = vlaneseq
  %v926 = vshrl.u32 %v925, 7
  %v927 = vsub.s32 4, %v926
  %v928 = vrot.slane %v907, %v927
  %v929 = vlaneseq
  %v930 = vshrl.u32 %v929, 7
  %v931 = vsub.s32 5, %v930
  %v932 = vrot.slane %v907, %v931
  %v1035 = vunpack.c.l.b16 %v811
  %v1036 = vunpack.c.h.b16 %v811
  %v1037 = vunpack.c.l.b16 %v812
  %v1038 = vunpack.c.h.b16 %v812
  %v1039 = vunpack.c.l.b16 %v813
  %v1040 = vunpack.c.h.b16 %v813
  %v1041 = vunpack.c.l.b16 %v814
  %v1042 = vunpack.c.h.b16 %v814
  %v1043 = vunpack.c.l.b16 %v815
  %v1044 = vunpack.c.h.b16 %v815
  %v1045 = vunpack.c.l.b16 %v816
  %v1046 = vunpack.c.h.b16 %v816
  %v1047 = vunpack.c.l.b16 %v817
  %v1048 = vunpack.c.h.b16 %v817
  %v1049 = vunpack.c.l.b16 %v818
  %v1050 = vunpack.c.h.b16 %v818
  %v1051 = vunpack.c.l.b16 %v819
  %v1052 = vunpack.c.h.b16 %v819
  %v1053 = vunpack.c.l.b16 %v820
  %v1054 = vunpack.c.h.b16 %v820
  %v1055 = vunpack.c.l.b16 %v821
  %v1056 = vunpack.c.h.b16 %v821
  %v1057 = vunpack.c.l.b16 %v822
  %v1058 = vunpack.c.h.b16 %v822
  %v1059 = vunpack.c.l.b16 %v823
  %v1060 = vunpack.c.h.b16 %v823
  %v1061 = vunpack.c.l.b16 %v824
  %v1062 = vunpack.c.h.b16 %v824
  %v1063 = vunpack.c.l.b16 %v825
  %v1064 = vunpack.c.h.b16 %v825
  %v1065 = vunpack.c.l.b16 %v826
  %v1066 = vunpack.c.h.b16 %v826
  %v1067 = vunpack.c.l.b16 %v827
  %v1068 = vunpack.c.h.b16 %v827
  %v1069 = vunpack.c.l.b16 %v828
  %v1070 = vunpack.c.h.b16 %v828
  %v1071 = vunpack.c.l.b16 %v829
  %v1072 = vunpack.c.h.b16 %v829
  %v1073 = vunpack.c.l.b16 %v830
  %v1074 = vunpack.c.h.b16 %v830
  %v1075 = vunpack.c.l.b16 %v831
  %v1076 = vunpack.c.h.b16 %v831
  %v1077 = vunpack.c.l.b16 %v832
  %v1078 = vunpack.c.h.b16 %v832
  %v1079 = vunpack.c.l.b16 %v833
  %v1080 = vunpack.c.h.b16 %v833
  %v1081 = vunpack.c.l.b16 %v834
  %v1082 = vunpack.c.h.b16 %v834
  %v1083 = vunpack.c.l.b16 %v835
  %v1084 = vunpack.c.h.b16 %v835
  %v1085 = vunpack.c.l.b16 %v836
  %v1086 = vunpack.c.h.b16 %v836
  %v1087 = vunpack.c.l.b16 %v837
  %v1088 = vunpack.c.h.b16 %v837
  %v1089 = vunpack.c.l.b16 %v838
  %v1090 = vunpack.c.h.b16 %v838
  %v1091 = vunpack.c.l.b16 %v839
  %v1092 = vunpack.c.h.b16 %v839
  %v1093 = vunpack.c.l.b16 %v840
  %v1094 = vunpack.c.h.b16 %v840
  %v1095 = vunpack.c.l.b16 %v841
  %v1096 = vunpack.c.h.b16 %v841
  %v1097 = vunpack.c.l.b16 %v842
  %v1098 = vunpack.c.h.b16 %v842
  %v1099 = vunpack.c.l.b16 %v843
  %v1100 = vunpack.c.h.b16 %v843
  %v1101 = vunpack.c.l.b16 %v844
  %v1102 = vunpack.c.h.b16 %v844
  %v1103 = vunpack.c.l.b16 %v845
  %v1104 = vunpack.c.h.b16 %v845
  %v1105 = vunpack.c.l.b16 %v846
  %v1106 = vunpack.c.h.b16 %v846
  %v1107 = vunpack.c.l.b16 %v847
  %v1108 = vunpack.c.h.b16 %v847
  %v1109 = vunpack.c.l.b16 %v848
  %v1110 = vunpack.c.h.b16 %v848
  %v1111 = vunpack.c.l.b16 %v849
  %v1112 = vunpack.c.h.b16 %v849
  %v1113 = vunpack.c.l.b16 %v850
  %v1114 = vunpack.c.h.b16 %v850
  %v1115 = vunpack.c.l.b16 %v851
  %v1116 = vunpack.c.h.b16 %v851
  %v1117 = vunpack.c.l.b16 %v852
  %v1118 = vunpack.c.h.b16 %v852
  %v1119 = vunpack.c.l.b16 %v853
  %v1120 = vunpack.c.h.b16 %v853
  %v1121 = vunpack.c.l.b16 %v854
  %v1122 = vunpack.c.h.b16 %v854
  %v1123 = vunpack.c.l.b16 %v855
  %v1124 = vunpack.c.h.b16 %v855
  %v1125 = vunpack.c.l.b16 %v856
  %v1126 = vunpack.c.h.b16 %v856
  %v1127 = vunpack.c.l.b16 %v857
  %v1128 = vunpack.c.h.b16 %v857
  %v1129 = vunpack.c.l.b16 %v858
  %v1130 = vunpack.c.h.b16 %v858
  %v1131 = vunpack.c.l.b16 %v859
  %v1132 = vunpack.c.h.b16 %v859
  %v1133 = vunpack.c.l.b16 %v860
  %v1134 = vunpack.c.h.b16 %v860
  %v1135 = vunpack.c.l.b16 %v861
  %v1136 = vunpack.c.h.b16 %v861
  %v1137 = vunpack.c.l.b16 %v862
  %v1138 = vunpack.c.h.b16 %v862
  %v1139 = vunpack.c.l.b16 %v863
  %v1140 = vunpack.c.h.b16 %v863
  %v1141 = vunpack.c.l.b16 %v864
  %v1142 = vunpack.c.h.b16 %v864
  %v1143 = vunpack.c.l.b16 %v865
  %v1144 = vunpack.c.h.b16 %v865
  %v1145 = vunpack.c.l.b16 %v866
  %v1146 = vunpack.c.h.b16 %v866
  %v1147 = vunpack.c.l.b16 %v867
  %v1148 = vunpack.c.h.b16 %v867
  %v1149 = vunpack.c.l.b16 %v868
  %v1150 = vunpack.c.h.b16 %v868
  %v1151 = vunpack.c.l.b16 %v869
  %v1152 = vunpack.c.h.b16 %v869
  %v1153 = vunpack.c.l.b16 %v870
  %v1154 = vunpack.c.h.b16 %v870
  %v1155 = vunpack.c.l.b16 %v871
  %v1156 = vunpack.c.h.b16 %v871
  %v1157 = vunpack.c.l.b16 %v872
  %v1158 = vunpack.c.h.b16 %v872
  %v1159 = vunpack.c.l.b16 %v873
  %v1160 = vunpack.c.h.b16 %v873
  %v1161 = vunpack.c.l.b16 %v874
  %v1162 = vunpack.c.h.b16 %v874
  %v1163 = vunpack.c.l.b16 %v875
  %v1164 = vunpack.c.h.b16 %v875
  %v1165 = vunpack.c.l.b16 %v876
  %v1166 = vunpack.c.h.b16 %v876
  %v1167 = vunpack.c.l.b16 %v877
  %v1168 = vunpack.c.h.b16 %v877
  %v1169 = vunpack.c.l.b16 %v878
  %v1170 = vunpack.c.h.b16 %v878
  %v1171 = vunpack.c.l.b16 %v879
  %v1172 = vunpack.c.h.b16 %v879
  %v1173 = vunpack.c.l.b16 %v880
  %v1174 = vunpack.c.h.b16 %v880
  %v1175 = vunpack.c.l.b16 %v881
  %v1176 = vunpack.c.h.b16 %v881
  %v1177 = vunpack.c.l.b16 %v882
  %v1178 = vunpack.c.h.b16 %v882
  %v1179 = vunpack.c.l.b16 %v883
  %v1180 = vunpack.c.h.b16 %v883
  %v1181 = vunpack.c.l.b16 %v884
  %v1182 = vunpack.c.h.b16 %v884
  %v1183 = vunpack.c.l.b16 %v885
  %v1184 = vunpack.c.h.b16 %v885
  %v1185 = vunpack.c.l.b16 %v886
  %v1186 = vunpack.c.h.b16 %v886
  %v1187 = vunpack.c.l.b16 %v887
  %v1188 = vunpack.c.h.b16 %v887
  %v1189 = vunpack.c.l.b16 %v888
  %v1190 = vunpack.c.h.b16 %v888
  %v1191 = vunpack.c.l.b16 %v889
  %v1192 = vunpack.c.h.b16 %v889
  %v1193 = vunpack.c.l.b16 %v890
  %v1194 = vunpack.c.h.b16 %v890
  %v1195 = vunpack.c.l.b16 %v891
  %v1196 = vunpack.c.h.b16 %v891
  %v1197 = vunpack.c.l.b16 %v892
  %v1198 = vunpack.c.h.b16 %v892
  %v1199 = vunpack.c.l.b16 %v893
  %v1200 = vunpack.c.h.b16 %v893
  %v1201 = vunpack.c.l.b16 %v894
  %v1202 = vunpack.c.h.b16 %v894
  %v1203 = vunpack.c.l.b16 %v895
  %v1204 = vunpack.c.h.b16 %v895
  %v1205 = vunpack.c.l.b16 %v896
  %v1206 = vunpack.c.h.b16 %v896
  %v1207 = vunpack.c.l.b16 %v897
  %v1208 = vunpack.c.h.b16 %v897
  %v1209 = vunpack.c.l.b16 %v898
  %v1210 = vunpack.c.h.b16 %v898
  %v1211 = vunpack.c.l.b16 %v899
  %v1212 = vunpack.c.h.b16 %v899
  %v1213 = vunpack.c.l.b16 %v900
  %v1214 = vunpack.c.h.b16 %v900
  %v1215 = vunpack.c.l.b16 %v901
  %v1216 = vunpack.c.h.b16 %v901
  %v1217 = vunpack.c.l.b16 %v902
  %v1218 = vunpack.c.h.b16 %v902
  %v1219 = vunpack.c.l.b16 %v903
  %v1220 = vunpack.c.h.b16 %v903
  %v1221 = vunpack.c.l.b16 %v904
  %v1222 = vunpack.c.h.b16 %v904
  %v1223 = vunpack.c.l.b16 %v905
  %v1224 = vunpack.c.h.b16 %v905
  %v1225 = vunpack.c.l.b16 %v906
  %v1226 = vunpack.c.h.b16 %v906
  %v1227 = vpack.c.b16 %v1041, %v1035
  %v1228 = vpack.c.b16 %v1042, %v1036
  %v1229 = vpack.c.b16 %v1043, %v1037
  %v1230 = vpack.c.b16 %v1044, %v1038
  %v1231 = vpack.c.b16 %v1045, %v1039
  %v1232 = vpack.c.b16 %v1046, %v1040
  %v1233 = vpack.c.b16 %v1053, %v1047
  %v1234 = vpack.c.b16 %v1054, %v1048
  %v1235 = vpack.c.b16 %v1055, %v1049
  %v1236 = vpack.c.b16 %v1056, %v1050
  %v1237 = vpack.c.b16 %v1057, %v1051
  %v1238 = vpack.c.b16 %v1058, %v1052
  %v1239 = vpack.c.b16 %v1065, %v1059
  %v1240 = vpack.c.b16 %v1066, %v1060
  %v1241 = vpack.c.b16 %v1067, %v1061
  %v1242 = vpack.c.b16 %v1068, %v1062
  %v1243 = vpack.c.b16 %v1069, %v1063
  %v1244 = vpack.c.b16 %v1070, %v1064
  %v1245 = vpack.c.b16 %v1077, %v1071
  %v1246 = vpack.c.b16 %v1078, %v1072
  %v1247 = vpack.c.b16 %v1079, %v1073
  %v1248 = vpack.c.b16 %v1080, %v1074
  %v1249 = vpack.c.b16 %v1081, %v1075
  %v1250 = vpack.c.b16 %v1082, %v1076
  %v1251 = vpack.c.b16 %v1089, %v1083
  %v1252 = vpack.c.b16 %v1090, %v1084
  %v1253 = vpack.c.b16 %v1091, %v1085
  %v1254 = vpack.c.b16 %v1092, %v1086
  %v1255 = vpack.c.b16 %v1093, %v1087
  %v1256 = vpack.c.b16 %v1094, %v1088
  %v1257 = vpack.c.b16 %v1101, %v1095
  %v1258 = vpack.c.b16 %v1102, %v1096
  %v1259 = vpack.c.b16 %v1103, %v1097
  %v1260 = vpack.c.b16 %v1104, %v1098
  %v1261 = vpack.c.b16 %v1105, %v1099
  %v1262 = vpack.c.b16 %v1106, %v1100
  %v1263 = vpack.c.b16 %v1113, %v1107
  %v1264 = vpack.c.b16 %v1114, %v1108
  %v1265 = vpack.c.b16 %v1115, %v1109
  %v1266 = vpack.c.b16 %v1116, %v1110
  %v1267 = vpack.c.b16 %v1117, %v1111
  %v1268 = vpack.c.b16 %v1118, %v1112
  %v1269 = vpack.c.b16 %v1125, %v1119
  %v1270 = vpack.c.b16 %v1126, %v1120
  %v1271 = vpack.c.b16 %v1127, %v1121
  %v1272 = vpack.c.b16 %v1128, %v1122
  %v1273 = vpack.c.b16 %v1129, %v1123
  %v1274 = vpack.c.b16 %v1130, %v1124
  %v1275 = vpack.c.b16 %v1137, %v1131
  %v1276 = vpack.c.b16 %v1138, %v1132
  %v1277 = vpack.c.b16 %v1139, %v1133
  %v1278 = vpack.c.b16 %v1140, %v1134
  %v1279 = vpack.c.b16 %v1141, %v1135
  %v1280 = vpack.c.b16 %v1142, %v1136
  %v1281 = vpack.c.b16 %v1149, %v1143
  %v1282 = vpack.c.b16 %v1150, %v1144
  %v1283 = vpack.c.b16 %v1151, %v1145
  %v1284 = vpack.c.b16 %v1152, %v1146
  %v1285 = vpack.c.b16 %v1153, %v1147
  %v1286 = vpack.c.b16 %v1154, %v1148
  %v1287 = vpack.c.b16 %v1161, %v1155
  %v1288 = vpack.c.b16 %v1162, %v1156
  %v1289 = vpack.c.b16 %v1163, %v1157
  %v1290 = vpack.c.b16 %v1164, %v1158
  %v1291 = vpack.c.b16 %v1165, %v1159
  %v1292 = vpack.c.b16 %v1166, %v1160
  %v1293 = vpack.c.b16 %v1173, %v1167
  %v1294 = vpack.c.b16 %v1174, %v1168
  %v1295 = vpack.c.b16 %v1175, %v1169
  %v1296 = vpack.c.b16 %v1176, %v1170
  %v1297 = vpack.c.b16 %v1177, %v1171
  %v1298 = vpack.c.b16 %v1178, %v1172
  %v1299 = vpack.c.b16 %v1185, %v1179
  %v1300 = vpack.c.b16 %v1186, %v1180
  %v1301 = vpack.c.b16 %v1187, %v1181
  %v1302 = vpack.c.b16 %v1188, %v1182
  %v1303 = vpack.c.b16 %v1189, %v1183
  %v1304 = vpack.c.b16 %v1190, %v1184
  %v1305 = vpack.c.b16 %v1197, %v1191
  %v1306 = vpack.c.b16 %v1198, %v1192
  %v1307 = vpack.c.b16 %v1199, %v1193
  %v1308 = vpack.c.b16 %v1200, %v1194
  %v1309 = vpack.c.b16 %v1201, %v1195
  %v1310 = vpack.c.b16 %v1202, %v1196
  %v1311 = vpack.c.b16 %v1209, %v1203
  %v1312 = vpack.c.b16 %v1210, %v1204
  %v1313 = vpack.c.b16 %v1211, %v1205
  %v1314 = vpack.c.b16 %v1212, %v1206
  %v1315 = vpack.c.b16 %v1213, %v1207
  %v1316 = vpack.c.b16 %v1214, %v1208
  %v1317 = vpack.c.b16 %v1221, %v1215
  %v1318 = vpack.c.b16 %v1222, %v1216
  %v1319 = vpack.c.b16 %v1223, %v1217
  %v1320 = vpack.c.b16 %v1224, %v1218
  %v1321 = vpack.c.b16 %v1225, %v1219
  %v1322 = vpack.c.b16 %v1226, %v1220
  %1419 = vmatprep.subr.bf16.mxu0 %v1228
  %1420 = vmatpush1.bf16.msra.mxu0 %v1227
  %1421 = vmatprep.subr.bf16.mxu0 %v1234
  %1422 = vmatpush1.bf16.msra.mxu0 %v1233
  %1423 = vmatprep.subr.bf16.mxu0 %v1240
  %1424 = vmatpush1.bf16.msra.mxu0 %v1239
  %1425 = vmatprep.subr.bf16.mxu0 %v1246
  %1426 = vmatpush1.bf16.msra.mxu0 %v1245
  %1427 = vmatprep.subr.bf16.mxu0 %v1252
  %1428 = vmatpush1.bf16.msra.mxu0 %v1251
  %1429 = vmatprep.subr.bf16.mxu0 %v1258
  %1430 = vmatpush1.bf16.msra.mxu0 %v1257
  %1431 = vmatprep.subr.bf16.mxu0 %v1264
  %1432 = vmatpush1.bf16.msra.mxu0 %v1263
  %1433 = vmatprep.subr.bf16.mxu0 %v1270
  %1434 = vmatpush1.bf16.msra.mxu0 %v1269
  %1435 = vmatprep.subr.bf16.mxu0 %v1276
  %1436 = vmatpush1.bf16.msra.mxu0 %v1275
  %1437 = vmatprep.subr.bf16.mxu0 %v1282
  %1438 = vmatpush1.bf16.msra.mxu0 %v1281
  %1439 = vmatprep.subr.bf16.mxu0 %v1288
  %1440 = vmatpush1.bf16.msra.mxu0 %v1287
  %1441 = vmatprep.subr.bf16.mxu0 %v1294
  %1442 = vmatpush1.bf16.msra.mxu0 %v1293
  %1443 = vmatprep.subr.bf16.mxu0 %v1300
  %1444 = vmatpush1.bf16.msra.mxu0 %v1299
  %1445 = vmatprep.subr.bf16.mxu0 %v1306
  %1446 = vmatpush1.bf16.msra.mxu0 %v1305
  %1447 = vmatprep.subr.bf16.mxu0 %v1312
  %1448 = vmatpush1.bf16.msra.mxu0 %v1311
  %1449 = vmatprep.subr.bf16.mxu0 %v1318
  %1450 = vmatpush1.bf16.msra.mxu0 %v1317
  %1451 = vmatprep.mubr.bf16.mxu0 %v810
  %1452 = vmatmul.mubr.bf16.gmra.mrb[0].mxu0 %v809
  %v1453 = vpop.f32.mrb[0].mxu0
  %v1454 = vadd.f32 %v912, %v1453
  %v1455 = vpop.f32.mrb[0].mxu0
  %v1456 = vadd.f32 %v916, %v1455
  %v1457 = vpop.f32.mrb[0].mxu0
  %v1458 = vpop.f32.mrb[0].mxu0
  %1459 = vdwg.mxu0
  %1460 = vmatprep.subr.bf16.mxu0 %v1230
  %1461 = vmatpush1.bf16.msra.mxu0 %v1229
  %1462 = vmatprep.subr.bf16.mxu0 %v1236
  %1463 = vmatpush1.bf16.msra.mxu0 %v1235
  %1464 = vmatprep.subr.bf16.mxu0 %v1242
  %1465 = vmatpush1.bf16.msra.mxu0 %v1241
  %1466 = vmatprep.subr.bf16.mxu0 %v1248
  %1467 = vmatpush1.bf16.msra.mxu0 %v1247
  %1468 = vmatprep.subr.bf16.mxu0 %v1254
  %1469 = vmatpush1.bf16.msra.mxu0 %v1253
  %1470 = vmatprep.subr.bf16.mxu0 %v1260
  %1471 = vmatpush1.bf16.msra.mxu0 %v1259
  %1472 = vmatprep.subr.bf16.mxu0 %v1266
  %1473 = vmatpush1.bf16.msra.mxu0 %v1265
  %1474 = vmatprep.subr.bf16.mxu0 %v1272
  %1475 = vmatpush1.bf16.msra.mxu0 %v1271
  %1476 = vmatprep.subr.bf16.mxu0 %v1278
  %1477 = vmatpush1.bf16.msra.mxu0 %v1277
  %1478 = vmatprep.subr.bf16.mxu0 %v1284
  %1479 = vmatpush1.bf16.msra.mxu0 %v1283
  %1480 = vmatprep.subr.bf16.mxu0 %v1290
  %1481 = vmatpush1.bf16.msra.mxu0 %v1289
  %1482 = vmatprep.subr.bf16.mxu0 %v1296
  %1483 = vmatpush1.bf16.msra.mxu0 %v1295
  %1484 = vmatprep.subr.bf16.mxu0 %v1302
  %1485 = vmatpush1.bf16.msra.mxu0 %v1301
  %1486 = vmatprep.subr.bf16.mxu0 %v1308
  %1487 = vmatpush1.bf16.msra.mxu0 %v1307
  %1488 = vmatprep.subr.bf16.mxu0 %v1314
  %1489 = vmatpush1.bf16.msra.mxu0 %v1313
  %1490 = vmatprep.subr.bf16.mxu0 %v1320
  %1491 = vmatpush1.bf16.msra.mxu0 %v1319
  %1492 = vmatprep.mubr.bf16.mxu0 %v810
  %1493 = vmatmul.mubr.bf16.gmra.mrb[0].mxu0 %v809
  %v1494 = vpop.f32.mrb[0].mxu0
  %v1495 = vadd.f32 %v920, %v1494
  %v1496 = vpop.f32.mrb[0].mxu0
  %v1497 = vadd.f32 %v924, %v1496
  %v1498 = vpop.f32.mrb[0].mxu0
  %v1499 = vpop.f32.mrb[0].mxu0
  %1500 = vdwg.mxu0
  %1501 = vmatprep.subr.bf16.mxu0 %v1232
  %1502 = vmatpush1.bf16.msra.mxu0 %v1231
  %1503 = vmatprep.subr.bf16.mxu0 %v1238
  %1504 = vmatpush1.bf16.msra.mxu0 %v1237
  %1505 = vmatprep.subr.bf16.mxu0 %v1244
  %1506 = vmatpush1.bf16.msra.mxu0 %v1243
  %1507 = vmatprep.subr.bf16.mxu0 %v1250
  %1508 = vmatpush1.bf16.msra.mxu0 %v1249
  %1509 = vmatprep.subr.bf16.mxu0 %v1256
  %1510 = vmatpush1.bf16.msra.mxu0 %v1255
  %1511 = vmatprep.subr.bf16.mxu0 %v1262
  %1512 = vmatpush1.bf16.msra.mxu0 %v1261
  %1513 = vmatprep.subr.bf16.mxu0 %v1268
  %1514 = vmatpush1.bf16.msra.mxu0 %v1267
  %1515 = vmatprep.subr.bf16.mxu0 %v1274
  %1516 = vmatpush1.bf16.msra.mxu0 %v1273
  %1517 = vmatprep.subr.bf16.mxu0 %v1280
  %1518 = vmatpush1.bf16.msra.mxu0 %v1279
  %1519 = vmatprep.subr.bf16.mxu0 %v1286
  %1520 = vmatpush1.bf16.msra.mxu0 %v1285
  %1521 = vmatprep.subr.bf16.mxu0 %v1292
  %1522 = vmatpush1.bf16.msra.mxu0 %v1291
  %1523 = vmatprep.subr.bf16.mxu0 %v1298
  %1524 = vmatpush1.bf16.msra.mxu0 %v1297
  %1525 = vmatprep.subr.bf16.mxu0 %v1304
  %1526 = vmatpush1.bf16.msra.mxu0 %v1303
  %1527 = vmatprep.subr.bf16.mxu0 %v1310
  %1528 = vmatpush1.bf16.msra.mxu0 %v1309
  %1529 = vmatprep.subr.bf16.mxu0 %v1316
  %1530 = vmatpush1.bf16.msra.mxu0 %v1315
  %1531 = vmatprep.subr.bf16.mxu0 %v1322
  %1532 = vmatpush1.bf16.msra.mxu0 %v1321
  %1533 = vmatprep.mubr.bf16.mxu0 %v810
  %1534 = vmatmul.mubr.bf16.gmra.mrb[0].mxu0 %v809
  %v1535 = vpop.f32.mrb[0].mxu0
  %v1536 = vadd.f32 %v928, %v1535
  %v1537 = vpop.f32.mrb[0].mxu0
  %v1538 = vadd.f32 %v932, %v1537
  %v1539 = vpop.f32.mrb[0].mxu0
  %v1540 = vpop.f32.mrb[0].mxu0
  %1541 = vdwg.mxu0
  %v1542 = vld [vmem:[%s756] sm:$0xff]
  %v1543 = vld [vmem:[%s756 + $0x8] sm:$0xff]
  %v1544 = vld [vmem:[%s756 + $0x10] sm:$0xff]
  %v1545 = vld [vmem:[%s0 + $0x18] sm:$0xff]
  %v1546 = vld [vmem:[%s0 + $0x20] sm:$0xff]
  %v1547 = vld [vmem:[%s0 + $0x28] sm:$0xff]
  %v1548 = vadd.f32 %v1542, %v1454
  %v1549 = vxor.u32 %v1548, 2147483648
  %v1550 = vmul.f32 %v1549, 1.442695
  %v1551 = vpow.pop %v1550
  %v1552 = vadd.f32 %v1551, 1.0
  %v1553 = vrcp.pop %v1552
  %v1554 = vmul.f32 1.0, %v1553
  %v1555 = vadd.f32 %v1543, %v1456
  %v1556 = vxor.u32 %v1555, 2147483648
  %v1557 = vmul.f32 %v1556, 1.442695
  %v1558 = vpow.pop %v1557
  %v1559 = vadd.f32 %v1558, 1.0
  %v1560 = vrcp.pop %v1559
  %v1561 = vmul.f32 1.0, %v1560
  %v1562 = vmul.f32 %v1554, %v1495
  %v1563 = vadd.f32 %v1544, %v1562
  %v1564 = vtanh.pop %v1563
  %v1565 = vsub.f32 1.0, %v1561
  %v1566 = vmul.f32 %v1565, %v1564
  %v1567 = vmul.f32 %v1561, %v807
  %v1568 = vadd.f32 %v1566, %v1567
  %v1569 = vadd.f32 %v1545, %v1497
  %v1570 = vxor.u32 %v1569, 2147483648
  %v1571 = vmul.f32 %v1570, 1.442695
  %v1572 = vpow.pop %v1571
  %v1573 = vadd.f32 %v1572, 1.0
  %v1574 = vrcp.pop %v1573
  %v1575 = vmul.f32 1.0, %v1574
  %v1576 = vadd.f32 %v1546, %v1536
  %v1577 = vxor.u32 %v1576, 2147483648
  %v1578 = vmul.f32 %v1577, 1.442695
  %v1579 = vpow.pop %v1578
  %v1580 = vadd.f32 %v1579, 1.0
  %v1581 = vrcp.pop %v1580
  %v1582 = vmul.f32 1.0, %v1581
  %v1583 = vmul.f32 %v1575, %v1538
  %v1584 = vadd.f32 %v1547, %v1583
  %v1585 = vtanh.pop %v1584
  %v1586 = vsub.f32 1.0, %v1582
  %v1587 = vmul.f32 %v1586, %v1585
  %v1588 = vmul.f32 %v1582, %v808
  %v1589 = vadd.f32 %v1587, %v1588
  %1590 = vst [vmem:[#allocation2] sm:$0xff] %v1568
  %1591 = vst [vmem:[#allocation2 + $0x8] sm:$0xff] %v1589
  %s1592 = scalar_lea.vmem %s3, 8
  %1593 = vst [vmem:[%s1592] sm:$0xff] %v1568
  %1594 = vst [vmem:[%s4] sm:$0xff] %v1589
  // Predicated region
  $region14: #{speech_model_forward.17} parent=0 // pred_check
    _
  $region15: #{speech_model_forward.17} parent=0 // pred_check_branch
    %1596 = sbr.rel (0) target = $region17
  $region16: #{speech_model_forward.17} parent=0 // pred_region
    _
  $region17: #{speech_model_forward.17} parent=0 // pred_fallthru
    _
  // Predicated region
  $region18: #{speech_model_forward.17} parent=0 // pred_check
    _
  $region19: #{speech_model_forward.17} parent=0 // pred_check_branch
    %1598 = sbr.rel (0) target = $region21
  $region20: #{speech_model_forward.17} parent=0 // pred_region
    _
  $region21: #{speech_model_forward.17} parent=0 // pred_fallthru
    _
  // Predicated region
  $region22: #{speech_model_forward.17} parent=0 // pred_check
    _
  $region23: #{speech_model_forward.17} parent=0 // pred_check_branch
    %1600 = sbr.rel (0) target = $region25
  $region24: #{speech_model_forward.17} parent=0 // pred_region
    _
  $region25: #{speech_model_forward.17} parent=0 // pred_fallthru
    _
  // Predicated region
  $region26: #{speech_model_forward.17} parent=0 // pred_check
    _
  $region27: #{speech_model_forward.17} parent=0 // pred_check_branch
    %1602 = sbr.rel (0) target = $region29
  $region28: #{speech_model_forward.17} parent=0 // pred_region
    _
  $region29: #{speech_model_forward.17} parent=0 // pred_fallthru
    _

</llo_original>
